<compile_context>
chip_gen: v7x
topology: tpu7x:2x2x1
jax: 0.10.0
libtpu: 0.0.40
codegen_flags: <defaults>
</compile_context>

<pallas_src>
import numpy as np
import jax
import jax.numpy as jnp
from jax import lax
from jax.experimental import pallas as pl
from jax.experimental.pallas import tpu as pltpu

TB = 8           # images per grid step (raise to 16-32 on v7x, 64+ on v5e/v6e)
T7 = TB * 7      # rows per mod-4 phase block per grid step


def cnn_fused_kernel(x_ref, w1_ref, b1_ref, w2_ref, b2_ref,
                     wf1_ref, bf1_ref, wf2_ref, bf2_ref, out_ref):
    # x_ref: (4, TB*7, 128). Phase p = h mod 4 blocks; rows ordered (t = h//4
    # major, image minor); lanes = image width (28 real cols, zero-padded).
    x0, x1, x2, x3 = x_ref[0], x_ref[1], x_ref[2], x_ref[3]

    def next_t(a):   # row (t, n) -> row (t+1, n); wrap only pollutes garbage rows
        return jnp.concatenate([a[TB:], a[:TB]], axis=0)

    x0n, x1n = next_t(x0), next_t(x1)

    # ---- conv1 as ONE MXU dot: K = 3 row-taps x 128 lanes, Toeplitz weights ----
    # rows grouped by conv-row phase q = h mod 4  (h = 4t + q)
    p1 = jnp.concatenate([
        jnp.concatenate([x0, x1, x2], axis=1),      # q = 0
        jnp.concatenate([x1, x2, x3], axis=1),      # q = 1
        jnp.concatenate([x2, x3, x0n], axis=1),     # q = 2
        jnp.concatenate([x3, x0n, x1n], axis=1),    # q = 3
    ], axis=0)                                      # (4*T7, 384)
    c1 = jnp.dot(p1, w1_ref[...], preferred_element_type=jnp.float32)  # (4*T7, 1024)

    # maxpool 2x2 + bias + ReLU  (relu(max(z)+b) == maxpool(relu(z+b)))
    c1e = jnp.maximum(c1[0 * T7:1 * T7], c1[1 * T7:2 * T7])   # pooled rows i = 2s
    c1o = jnp.maximum(c1[2 * T7:3 * T7], c1[3 * T7:4 * T7])   # pooled rows i = 2s+1
    p1e = jnp.maximum(jnp.maximum(c1e[:, :512], c1e[:, 512:]) + b1_ref[...], 0.0)
    p1o = jnp.maximum(jnp.maximum(c1o[:, :512], c1o[:, 512:]) + b1_ref[...], 0.0)

    # ---- conv2 as ONE MXU dot: K = 3 row-taps x 512 lanes ----
    p1en, p1on = next_t(p1e), next_t(p1o)
    p2 = jnp.concatenate([
        jnp.concatenate([p1e, p1o, p1en], axis=1),    # conv rows r2 = 2u
        jnp.concatenate([p1o, p1en, p1on], axis=1),   # conv rows r2 = 2u+1
    ], axis=0)                                        # (2*T7, 1536)
    c2 = jnp.dot(p2, w2_ref[...], preferred_element_type=jnp.float32)   # (2*T7, 512)

    c2m = jnp.maximum(c2[:T7], c2[T7:])
    pooled2 = jnp.maximum(jnp.maximum(c2m[:, :256], c2m[:, 256:]) + b2_ref[...], 0.0)

    # ---- flatten: 5 aligned lane-concats of the valid row bands u = 0..4;
    #      fc1 rows were pre-permuted in prepare_params to this order ----
    flat = jnp.concatenate([pooled2[u * TB:(u + 1) * TB] for u in range(5)],
                           axis=1)                                       # (TB, 1280)

    h = jnp.maximum(jnp.dot(flat, wf1_ref[...],
                            preferred_element_type=jnp.float32) + bf1_ref[...], 0.0)
    out_ref[...] = (jnp.dot(h, wf2_ref[...],
                            preferred_element_type=jnp.float32) + bf2_ref[...])


def prepare_params(params):
    """One-time weight reshuffling into Toeplitz / lane-padded matrices."""
    c1w = np.asarray(params["c1_w"], np.float32)   # (30, 1, 3, 3)
    c1b = np.asarray(params["c1_b"], np.float32)
    c2w = np.asarray(params["c2_w"], np.float32)   # (50, 30, 3, 3)
    c2b = np.asarray(params["c2_b"], np.float32)
    f1w = np.asarray(params["fc1_w"], np.float32)  # (100, 1250)
    f1b = np.asarray(params["fc1_b"], np.float32)
    f2w = np.asarray(params["fc2_w"], np.float32)  # (10, 100)
    f2b = np.asarray(params["fc2_b"], np.float32)
    C1, C2 = 30, 50

    # conv1 Toeplitz: rows (kh, w_in<128), cols (dj block of 512, j*30 + c)
    W1 = np.zeros((3 * 128, 2 * 512), np.float32)
    for kh in range(3):
        for j in range(13):
            for dj in range(2):
                for kw in range(3):
                    w_in = 2 * j + dj + kw
                    col = dj * 512 + j * C1
                    W1[kh * 128 + w_in, col:col + C1] = c1w[:, 0, kh, kw]
    b1row = np.zeros((1, 512), np.float32)
    for j in range(13):
        b1row[0, j * C1:(j + 1) * C1] = c1b

    # conv2 Toeplitz: rows (kh, j_in*30 + cin), cols (dv block of 256, v*50 + cout)
    W2 = np.zeros((3 * 512, 2 * 256), np.float32)
    for kh in range(3):
        for v in range(5):
            for dv in range(2):
                for kw in range(3):
                    j_in = 2 * v + dv + kw
                    col = dv * 256 + v * C2
                    for cin in range(C1):
                        W2[kh * 512 + j_in * C1 + cin, col:col + C2] = c2w[:, cin, kh, kw]
    b2row = np.zeros((1, 256), np.float32)
    for v in range(5):
        b2row[0, v * C2:(v + 1) * C2] = c2b

    # fc1: rows (u*256 + v*50 + cout) map to torch feature cout*25 + u*5 + v
    Wf1 = np.zeros((5 * 256, 128), np.float32)
    for u in range(5):
        for v in range(5):
            for cout in range(C2):
                Wf1[u * 256 + v * C2 + cout, :100] = f1w[:, cout * 25 + u * 5 + v]
    bf1 = np.zeros((1, 128), np.float32)
    bf1[0, :100] = f1b

    Wf2 = np.zeros((128, 128), np.float32)
    Wf2[:100, :10] = f2w.T
    bf2 = np.zeros((1, 128), np.float32)
    bf2[0, :10] = f2b

    keys = ["w1", "b1", "w2", "b2", "wf1", "bf1", "wf2", "bf2"]
    vals = [W1, b1row, W2, b2row, Wf1, bf1, Wf2, bf2]
    return {k: jnp.asarray(v) for k, v in zip(keys, vals)}


@jax.jit
def cnn_forward(x_nchw, prepped):
    x = x_nchw.astype(jnp.float32)[:, 0]                 # (B, 28, 28), Cin = 1
    B = x.shape[0]
    G = -(-B // TB)
    Bp = G * TB
    if Bp != B:
        x = jnp.pad(x, ((0, Bp - B), (0, 0), (0, 0)))
    # mod-4 row split + lane pad (free XLA layout work, done outside the kernel):
    # x4[p, g*7*TB + t*TB + n, w] = x[g*TB + n, 4t + p, w]
    x4 = x.reshape(G, TB, 7, 4, 28).transpose(3, 0, 2, 1, 4).reshape(4, Bp * 7, 28)
    x4 = jnp.pad(x4, ((0, 0), (0, 0), (0, 128 - 28)))

    logits = pl.pallas_call(
        cnn_fused_kernel,
        out_shape=jax.ShapeDtypeStruct((Bp, 128), jnp.float32),
        grid=(G,),
        in_specs=[
            pl.BlockSpec((4, T7, 128), lambda g: (0, g, 0)),
            pl.BlockSpec((384, 1024), lambda g: (0, 0)),
            pl.BlockSpec((1, 512), lambda g: (0, 0)),
            pl.BlockSpec((1536, 512), lambda g: (0, 0)),
            pl.BlockSpec((1, 256), lambda g: (0, 0)),
            pl.BlockSpec((1280, 128), lambda g: (0, 0)),
            pl.BlockSpec((1, 128), lambda g: (0, 0)),
            pl.BlockSpec((128, 128), lambda g: (0, 0)),
            pl.BlockSpec((1, 128), lambda g: (0, 0)),
        ],
        out_specs=pl.BlockSpec((TB, 128), lambda g: (g, 0)),
        compiler_params=pltpu.CompilerParams(
            dimension_semantics=("parallel",),       # batch steps are independent
            vmem_limit_bytes=48 * 1024 * 1024,
        ),
    )(x4, prepped["w1"], prepped["b1"], prepped["w2"], prepped["b2"],
      prepped["wf1"], prepped["bf1"], prepped["wf2"], prepped["bf2"])

    # log_softmax over dim=0 (batch) exactly as the torch module, done on the
    # tiny (B, 10) result outside the kernel (keeps the grid fully parallel).
    return jax.nn.log_softmax(logits[:B, :10], axis=0)


def init_params(key):
    ks = jax.random.split(key, 8)

    def u(k, shape, fan_in):
        bound = 1.0 / float(fan_in) ** 0.5
        return jax.random.uniform(k, shape, jnp.float32, -bound, bound)

    return {
        "c1_w": u(ks[0], (30, 1, 3, 3), 9),
        "c1_b": u(ks[1], (30,), 9),
        "c2_w": u(ks[2], (50, 30, 3, 3), 270),
        "c2_b": u(ks[3], (50,), 270),
        "fc1_w": u(ks[4], (100, 1250), 1250),
        "fc1_b": u(ks[5], (100,), 1250),
        "fc2_w": u(ks[6], (10, 100), 100),
        "fc2_b": u(ks[7], (10,), 100),
    }


def cnn_reference(x_nchw, params):
    # pure-JAX reference mirroring the torch module (sanity check only)
    x = x_nchw.astype(jnp.float32)

    def conv_block(x, w, b):
        y = lax.conv_general_dilated(x, w, (1, 1), "VALID",
                                     dimension_numbers=("NCHW", "OIHW", "NCHW"))
        y = jax.nn.relu(y + b.reshape(1, -1, 1, 1))
        return lax.reduce_window(y, -jnp.inf, lax.max,
                                 (1, 1, 2, 2), (1, 1, 2, 2), "VALID")

    x = conv_block(x, params["c1_w"], params["c1_b"])
    x = conv_block(x, params["c2_w"], params["c2_b"])
    x = x.reshape(x.shape[0], -1)
    x = jax.nn.relu(x @ params["fc1_w"].T + params["fc1_b"])
    x = x @ params["fc2_w"].T + params["fc2_b"]
    return jax.nn.log_softmax(x, axis=0)


if __name__ == "__main__":
    key = jax.random.PRNGKey(0)
    pkey, xkey = jax.random.split(key)
    params = init_params(pkey)
    prepped = prepare_params(params)        # one-time weight prep

    # fc1 expects 1250 = 50*5*5 features -> 28x28 single-channel input.
    # B=12 exercises batch padding (12 -> 16) and a 2-step grid.
    x = jax.random.normal(xkey, (12, 1, 28, 28), jnp.float32)

    out = jax.block_until_ready(cnn_forward(x, prepped))
    ref = jax.block_until_ready(cnn_reference(x, params))

    assert out.shape == (12, 10), out.shape
    assert bool(jnp.all(jnp.isfinite(out)))
    err = float(jnp.max(jnp.abs(out - ref)))
    assert err < 1e-2, err
    print("KERNEL_OK")
</pallas_src>

<mosaic_0001>
module attributes {stable_mosaic.version = 11 : i64} {
  func.func @cnn_fused_kernel(%arg0: i32, %arg1: memref<4x56x128xf32, #tpu.memory_space<vmem>>, %arg2: memref<384x1024xf32, #tpu.memory_space<vmem>>, %arg3: memref<1x512xf32, #tpu.memory_space<vmem>>, %arg4: memref<1536x512xf32, #tpu.memory_space<vmem>>, %arg5: memref<1x256xf32, #tpu.memory_space<vmem>>, %arg6: memref<1280x128xf32, #tpu.memory_space<vmem>>, %arg7: memref<1x128xf32, #tpu.memory_space<vmem>>, %arg8: memref<128x128xf32, #tpu.memory_space<vmem>>, %arg9: memref<1x128xf32, #tpu.memory_space<vmem>>, %arg10: memref<8x128xf32, #tpu.memory_space<vmem>>) attributes {dimension_semantics = [#tpu.dimension_semantics<parallel>], iteration_bounds = array<i64: 2>, scalar_prefetch = 0 : i64, scratch_operands = 0 : i64, tpu.core_type = #tpu.core_type<tc>, window_params = [{transform_indices = @transform_0, window_bounds = array<i64: 4, 56, 128>}, {pipeline_mode = #tpu.pipeline_mode<synchronous>, transform_indices = @transform_1, window_bounds = array<i64: 384, 1024>}, {pipeline_mode = #tpu.pipeline_mode<synchronous>, transform_indices = @transform_2, window_bounds = array<i64: 1, 512>}, {pipeline_mode = #tpu.pipeline_mode<synchronous>, transform_indices = @transform_3, window_bounds = array<i64: 1536, 512>}, {pipeline_mode = #tpu.pipeline_mode<synchronous>, transform_indices = @transform_4, window_bounds = array<i64: 1, 256>}, {pipeline_mode = #tpu.pipeline_mode<synchronous>, transform_indices = @transform_5, window_bounds = array<i64: 1280, 128>}, {pipeline_mode = #tpu.pipeline_mode<synchronous>, transform_indices = @transform_6, window_bounds = array<i64: 1, 128>}, {pipeline_mode = #tpu.pipeline_mode<synchronous>, transform_indices = @transform_7, window_bounds = array<i64: 128, 128>}, {pipeline_mode = #tpu.pipeline_mode<synchronous>, transform_indices = @transform_8, window_bounds = array<i64: 1, 128>}, {transform_indices = @transform_9, window_bounds = array<i64: 8, 128>}]} {
    %c0 = arith.constant 0 : index
    %c0_0 = arith.constant 0 : index
    %c0_1 = arith.constant 0 : index
    %0 = vector.load %arg1[%c0, %c0_0, %c0_1] : memref<4x56x128xf32, #tpu.memory_space<vmem>>, vector<1x56x128xf32>
    %1 = vector.shape_cast %0 : vector<1x56x128xf32> to vector<56x128xf32>
    %c1 = arith.constant 1 : index
    %c0_2 = arith.constant 0 : index
    %c0_3 = arith.constant 0 : index
    %2 = vector.load %arg1[%c1, %c0_2, %c0_3] : memref<4x56x128xf32, #tpu.memory_space<vmem>>, vector<1x56x128xf32>
    %3 = vector.shape_cast %2 : vector<1x56x128xf32> to vector<56x128xf32>
    %c2 = arith.constant 2 : index
    %c0_4 = arith.constant 0 : index
    %c0_5 = arith.constant 0 : index
    %4 = vector.load %arg1[%c2, %c0_4, %c0_5] : memref<4x56x128xf32, #tpu.memory_space<vmem>>, vector<1x56x128xf32>
    %5 = vector.shape_cast %4 : vector<1x56x128xf32> to vector<56x128xf32>
    %c3 = arith.constant 3 : index
    %c0_6 = arith.constant 0 : index
    %c0_7 = arith.constant 0 : index
    %6 = vector.load %arg1[%c3, %c0_6, %c0_7] : memref<4x56x128xf32, #tpu.memory_space<vmem>>, vector<1x56x128xf32>
    %7 = vector.shape_cast %6 : vector<1x56x128xf32> to vector<56x128xf32>
    %8 = vector.extract_strided_slice %1 {offsets = [8, 0], sizes = [48, 128], strides = [1, 1]} : vector<56x128xf32> to vector<48x128xf32>
    %9 = vector.extract_strided_slice %1 {offsets = [0, 0], sizes = [8, 128], strides = [1, 1]} : vector<56x128xf32> to vector<8x128xf32>
    %10 = tpu.concatenate %8, %9 in 0 : vector<48x128xf32>, vector<8x128xf32> -> vector<56x128xf32>
    %11 = vector.extract_strided_slice %3 {offsets = [8, 0], sizes = [48, 128], strides = [1, 1]} : vector<56x128xf32> to vector<48x128xf32>
    %12 = vector.extract_strided_slice %3 {offsets = [0, 0], sizes = [8, 128], strides = [1, 1]} : vector<56x128xf32> to vector<8x128xf32>
    %13 = tpu.concatenate %11, %12 in 0 : vector<48x128xf32>, vector<8x128xf32> -> vector<56x128xf32>
    %14 = tpu.concatenate %1, %3, %5 in 1 : vector<56x128xf32>, vector<56x128xf32>, vector<56x128xf32> -> vector<56x384xf32>
    %15 = tpu.concatenate %3, %5, %7 in 1 : vector<56x128xf32>, vector<56x128xf32>, vector<56x128xf32> -> vector<56x384xf32>
    %16 = tpu.concatenate %5, %7, %10 in 1 : vector<56x128xf32>, vector<56x128xf32>, vector<56x128xf32> -> vector<56x384xf32>
    %17 = tpu.concatenate %7, %10, %13 in 1 : vector<56x128xf32>, vector<56x128xf32>, vector<56x128xf32> -> vector<56x384xf32>
    %18 = tpu.concatenate %14, %15, %16, %17 in 0 : vector<56x384xf32>, vector<56x384xf32>, vector<56x384xf32>, vector<56x384xf32> -> vector<224x384xf32>
    %c0_8 = arith.constant 0 : index
    %c0_9 = arith.constant 0 : index
    %19 = vector.load %arg2[%c0_8, %c0_9] : memref<384x1024xf32, #tpu.memory_space<vmem>>, vector<384x1024xf32>
    %cst = arith.constant dense<0.000000e+00> : vector<224x1024xf32>
    %20 = tpu.matmul %18, %19, %cst {dimension_numbers = #tpu.dot_dimension_numbers<[1], [0], [0], [1], [0, 0, 1, 1], [], []>} : vector<224x384xf32>, vector<384x1024xf32>, vector<224x1024xf32> -> vector<224x1024xf32>
    %21 = vector.extract_strided_slice %20 {offsets = [0, 0], sizes = [56, 1024], strides = [1, 1]} : vector<224x1024xf32> to vector<56x1024xf32>
    %22 = vector.extract_strided_slice %20 {offsets = [56, 0], sizes = [56, 1024], strides = [1, 1]} : vector<224x1024xf32> to vector<56x1024xf32>
    %23 = arith.maximumf %21, %22 : vector<56x1024xf32>
    %24 = vector.extract_strided_slice %20 {offsets = [112, 0], sizes = [56, 1024], strides = [1, 1]} : vector<224x1024xf32> to vector<56x1024xf32>
    %25 = vector.extract_strided_slice %20 {offsets = [168, 0], sizes = [56, 1024], strides = [1, 1]} : vector<224x1024xf32> to vector<56x1024xf32>
    %26 = arith.maximumf %24, %25 : vector<56x1024xf32>
    %27 = vector.extract_strided_slice %23 {offsets = [0, 0], sizes = [56, 512], strides = [1, 1]} : vector<56x1024xf32> to vector<56x512xf32>
    %28 = vector.extract_strided_slice %23 {offsets = [0, 512], sizes = [56, 512], strides = [1, 1]} : vector<56x1024xf32> to vector<56x512xf32>
    %29 = arith.maximumf %27, %28 : vector<56x512xf32>
    %c0_10 = arith.constant 0 : index
    %c0_11 = arith.constant 0 : index
    %30 = vector.load %arg3[%c0_10, %c0_11] : memref<1x512xf32, #tpu.memory_space<vmem>>, vector<1x512xf32>
    %31 = vector.broadcast %30 : vector<1x512xf32> to vector<56x512xf32>
    %32 = arith.addf %29, %31 : vector<56x512xf32>
    %cst_12 = arith.constant 0.000000e+00 : f32
    %33 = vector.broadcast %cst_12 : f32 to vector<56x512xf32>
    %34 = arith.maximumf %32, %33 : vector<56x512xf32>
    %35 = vector.extract_strided_slice %26 {offsets = [0, 0], sizes = [56, 512], strides = [1, 1]} : vector<56x1024xf32> to vector<56x512xf32>
    %36 = vector.extract_strided_slice %26 {offsets = [0, 512], sizes = [56, 512], strides = [1, 1]} : vector<56x1024xf32> to vector<56x512xf32>
    %37 = arith.maximumf %35, %36 : vector<56x512xf32>
    %c0_13 = arith.constant 0 : index
    %c0_14 = arith.constant 0 : index
    %38 = vector.load %arg3[%c0_13, %c0_14] : memref<1x512xf32, #tpu.memory_space<vmem>>, vector<1x512xf32>
    %39 = vector.broadcast %38 : vector<1x512xf32> to vector<56x512xf32>
    %40 = arith.addf %37, %39 : vector<56x512xf32>
    %cst_15 = arith.constant 0.000000e+00 : f32
    %41 = vector.broadcast %cst_15 : f32 to vector<56x512xf32>
    %42 = arith.maximumf %40, %41 : vector<56x512xf32>
    %43 = vector.extract_strided_slice %34 {offsets = [8, 0], sizes = [48, 512], strides = [1, 1]} : vector<56x512xf32> to vector<48x512xf32>
    %44 = vector.extract_strided_slice %34 {offsets = [0, 0], sizes = [8, 512], strides = [1, 1]} : vector<56x512xf32> to vector<8x512xf32>
    %45 = tpu.concatenate %43, %44 in 0 : vector<48x512xf32>, vector<8x512xf32> -> vector<56x512xf32>
    %46 = vector.extract_strided_slice %42 {offsets = [8, 0], sizes = [48, 512], strides = [1, 1]} : vector<56x512xf32> to vector<48x512xf32>
    %47 = vector.extract_strided_slice %42 {offsets = [0, 0], sizes = [8, 512], strides = [1, 1]} : vector<56x512xf32> to vector<8x512xf32>
    %48 = tpu.concatenate %46, %47 in 0 : vector<48x512xf32>, vector<8x512xf32> -> vector<56x512xf32>
    %49 = tpu.concatenate %34, %42, %45 in 1 : vector<56x512xf32>, vector<56x512xf32>, vector<56x512xf32> -> vector<56x1536xf32>
    %50 = tpu.concatenate %42, %45, %48 in 1 : vector<56x512xf32>, vector<56x512xf32>, vector<56x512xf32> -> vector<56x1536xf32>
    %51 = tpu.concatenate %49, %50 in 0 : vector<56x1536xf32>, vector<56x1536xf32> -> vector<112x1536xf32>
    %c0_16 = arith.constant 0 : index
    %c0_17 = arith.constant 0 : index
    %52 = vector.load %arg4[%c0_16, %c0_17] : memref<1536x512xf32, #tpu.memory_space<vmem>>, vector<1536x512xf32>
    %cst_18 = arith.constant dense<0.000000e+00> : vector<112x512xf32>
    %53 = tpu.matmul %51, %52, %cst_18 {dimension_numbers = #tpu.dot_dimension_numbers<[1], [0], [0], [1], [0, 0, 1, 1], [], []>} : vector<112x1536xf32>, vector<1536x512xf32>, vector<112x512xf32> -> vector<112x512xf32>
    %54 = vector.extract_strided_slice %53 {offsets = [0, 0], sizes = [56, 512], strides = [1, 1]} : vector<112x512xf32> to vector<56x512xf32>
    %55 = vector.extract_strided_slice %53 {offsets = [56, 0], sizes = [56, 512], strides = [1, 1]} : vector<112x512xf32> to vector<56x512xf32>
    %56 = arith.maximumf %54, %55 : vector<56x512xf32>
    %57 = vector.extract_strided_slice %56 {offsets = [0, 0], sizes = [56, 256], strides = [1, 1]} : vector<56x512xf32> to vector<56x256xf32>
    %58 = vector.extract_strided_slice %56 {offsets = [0, 256], sizes = [56, 256], strides = [1, 1]} : vector<56x512xf32> to vector<56x256xf32>
    %59 = arith.maximumf %57, %58 : vector<56x256xf32>
    %c0_19 = arith.constant 0 : index
    %c0_20 = arith.constant 0 : index
    %60 = vector.load %arg5[%c0_19, %c0_20] : memref<1x256xf32, #tpu.memory_space<vmem>>, vector<1x256xf32>
    %61 = vector.broadcast %60 : vector<1x256xf32> to vector<56x256xf32>
    %62 = arith.addf %59, %61 : vector<56x256xf32>
    %cst_21 = arith.constant 0.000000e+00 : f32
    %63 = vector.broadcast %cst_21 : f32 to vector<56x256xf32>
    %64 = arith.maximumf %62, %63 : vector<56x256xf32>
    %65 = vector.extract_strided_slice %64 {offsets = [0, 0], sizes = [8, 256], strides = [1, 1]} : vector<56x256xf32> to vector<8x256xf32>
    %66 = vector.extract_strided_slice %64 {offsets = [8, 0], sizes = [8, 256], strides = [1, 1]} : vector<56x256xf32> to vector<8x256xf32>
    %67 = vector.extract_strided_slice %64 {offsets = [16, 0], sizes = [8, 256], strides = [1, 1]} : vector<56x256xf32> to vector<8x256xf32>
    %68 = vector.extract_strided_slice %64 {offsets = [24, 0], sizes = [8, 256], strides = [1, 1]} : vector<56x256xf32> to vector<8x256xf32>
    %69 = vector.extract_strided_slice %64 {offsets = [32, 0], sizes = [8, 256], strides = [1, 1]} : vector<56x256xf32> to vector<8x256xf32>
    %70 = tpu.concatenate %65, %66, %67, %68, %69 in 1 : vector<8x256xf32>, vector<8x256xf32>, vector<8x256xf32>, vector<8x256xf32>, vector<8x256xf32> -> vector<8x1280xf32>
    %c0_22 = arith.constant 0 : index
    %c0_23 = arith.constant 0 : index
    %71 = vector.load %arg6[%c0_22, %c0_23] : memref<1280x128xf32, #tpu.memory_space<vmem>>, vector<1280x128xf32>
    %cst_24 = arith.constant dense<0.000000e+00> : vector<8x128xf32>
    %72 = tpu.matmul %70, %71, %cst_24 {dimension_numbers = #tpu.dot_dimension_numbers<[1], [0], [0], [1], [0, 0, 1, 1], [], []>} : vector<8x1280xf32>, vector<1280x128xf32>, vector<8x128xf32> -> vector<8x128xf32>
    %c0_25 = arith.constant 0 : index
    %c0_26 = arith.constant 0 : index
    %73 = vector.load %arg7[%c0_25, %c0_26] : memref<1x128xf32, #tpu.memory_space<vmem>>, vector<1x128xf32>
    %74 = vector.broadcast %73 : vector<1x128xf32> to vector<8x128xf32>
    %75 = arith.addf %72, %74 : vector<8x128xf32>
    %cst_27 = arith.constant 0.000000e+00 : f32
    %76 = vector.broadcast %cst_27 : f32 to vector<8x128xf32>
    %77 = arith.maximumf %75, %76 : vector<8x128xf32>
    %c0_28 = arith.constant 0 : index
    %c0_29 = arith.constant 0 : index
    %78 = vector.load %arg8[%c0_28, %c0_29] : memref<128x128xf32, #tpu.memory_space<vmem>>, vector<128x128xf32>
    %cst_30 = arith.constant dense<0.000000e+00> : vector<8x128xf32>
    %79 = tpu.matmul %77, %78, %cst_30 {dimension_numbers = #tpu.dot_dimension_numbers<[1], [0], [0], [1], [0, 0, 1, 1], [], []>} : vector<8x128xf32>, vector<128x128xf32>, vector<8x128xf32> -> vector<8x128xf32>
    %c0_31 = arith.constant 0 : index
    %c0_32 = arith.constant 0 : index
    %80 = vector.load %arg9[%c0_31, %c0_32] : memref<1x128xf32, #tpu.memory_space<vmem>>, vector<1x128xf32>
    %81 = vector.broadcast %80 : vector<1x128xf32> to vector<8x128xf32>
    %82 = arith.addf %79, %81 : vector<8x128xf32>
    %c0_33 = arith.constant 0 : index
    %c0_34 = arith.constant 0 : index
    %83 = vector.load %arg10[%c0_33, %c0_34] : memref<8x128xf32, #tpu.memory_space<vmem>>, vector<8x128xf32>
    tpu.vector_store %arg10[%c0_33, %c0_34], %82 {strides = array<i32>} : memref<8x128xf32, #tpu.memory_space<vmem>>, vector<8x128xf32>,
    return
  }
  func.func @transform_0(%arg0: i32) -> (i32, i32, i32) {
    %c0_i32 = arith.constant 0 : i32
    %c0_i32_0 = arith.constant 0 : i32
    %c0_i32_1 = arith.constant 0 : i32
    return %c0_i32, %arg0, %c0_i32_0 : i32, i32, i32
  }
  func.func @transform_1(%arg0: i32) -> (i32, i32) {
    %c0_i32 = arith.constant 0 : i32
    %c0_i32_0 = arith.constant 0 : i32
    %c0_i32_1 = arith.constant 0 : i32
    return %c0_i32, %c0_i32_0 : i32, i32
  }
  func.func @transform_2(%arg0: i32) -> (i32, i32) {
    %c0_i32 = arith.constant 0 : i32
    %c0_i32_0 = arith.constant 0 : i32
    %c0_i32_1 = arith.constant 0 : i32
    return %c0_i32, %c0_i32_0 : i32, i32
  }
  func.func @transform_3(%arg0: i32) -> (i32, i32) {
    %c0_i32 = arith.constant 0 : i32
    %c0_i32_0 = arith.constant 0 : i32
    %c0_i32_1 = arith.constant 0 : i32
    return %c0_i32, %c0_i32_0 : i32, i32
  }
  func.func @transform_4(%arg0: i32) -> (i32, i32) {
    %c0_i32 = arith.constant 0 : i32
    %c0_i32_0 = arith.constant 0 : i32
    %c0_i32_1 = arith.constant 0 : i32
    return %c0_i32, %c0_i32_0 : i32, i32
  }
  func.func @transform_5(%arg0: i32) -> (i32, i32) {
    %c0_i32 = arith.constant 0 : i32
    %c0_i32_0 = arith.constant 0 : i32
    %c0_i32_1 = arith.constant 0 : i32
    return %c0_i32, %c0_i32_0 : i32, i32
  }
  func.func @transform_6(%arg0: i32) -> (i32, i32) {
    %c0_i32 = arith.constant 0 : i32
    %c0_i32_0 = arith.constant 0 : i32
    %c0_i32_1 = arith.constant 0 : i32
    return %c0_i32, %c0_i32_0 : i32, i32
  }
  func.func @transform_7(%arg0: i32) -> (i32, i32) {
    %c0_i32 = arith.constant 0 : i32
    %c0_i32_0 = arith.constant 0 : i32
    %c0_i32_1 = arith.constant 0 : i32
    return %c0_i32, %c0_i32_0 : i32, i32
  }
  func.func @transform_8(%arg0: i32) -> (i32, i32) {
    %c0_i32 = arith.constant 0 : i32
    %c0_i32_0 = arith.constant 0 : i32
    %c0_i32_1 = arith.constant 0 : i32
    return %c0_i32, %c0_i32_0 : i32, i32
  }
  func.func @transform_9(%arg0: i32) -> (i32, i32) {
    %c0_i32 = arith.constant 0 : i32
    %c0_i32_0 = arith.constant 0 : i32
    return %arg0, %c0_i32 : i32, i32
  }
}

</mosaic_0001>

<llo_original>
// kernel: cnn_forward.1
$region0: #{cnn_forward.1}
  #allocation0 [shape = 'u32[]', space=smem, size = 0x4, offset = 0x4, fixed_abs, tag = 'smem constant byte address 0x4 - core index']
  #allocation1 [shape = 'u32[144,128]{1,0:T(1,128)}', space=vmem, size = 0x12000, scoped, tag = 'internal scratch']
  %s0 = inlined_call_operand.vmem [shape: f32[4,112,128], index: 0, kind: input, shape index: {}]
  %s1 = inlined_call_operand.hbm [shape: f32[384,1024], index: 1, kind: input, shape index: {}]
  %s2 = inlined_call_operand.hbm [shape: f32[1,512], index: 2, kind: input, shape index: {}]
  %s3 = inlined_call_operand.hbm [shape: f32[1536,512], index: 3, kind: input, shape index: {}]
  %s4 = inlined_call_operand.hbm [shape: f32[1,256], index: 4, kind: input, shape index: {}]
  %s5 = inlined_call_operand.hbm [shape: f32[1280,128], index: 5, kind: input, shape index: {}]
  %s6 = inlined_call_operand.hbm [shape: f32[1,128], index: 6, kind: input, shape index: {}]
  %s7 = inlined_call_operand.hbm [shape: f32[128,128], index: 7, kind: input, shape index: {}]
  %s8 = inlined_call_operand.hbm [shape: f32[1,128], index: 8, kind: input, shape index: {}]
  %s9 = inlined_call_operand.vmem [shape: f32[16,128], index: 9, kind: output, shape index: {}]
  %s10 = sld [smem:[#allocation0]]
  $region139: #{cnn_forward.1} parent=0
    _
  %s12 = ssub.s32 1, %s10
  %s13 = scalar_select 0, %s12, %s10
  $region1: #{cnn_forward.1} parent=0
    #allocation2 [shape = 'u8[229376]{0}', space=vmem, size = 0x38000, scoped, tag = 'input window, operand 0']
    #allocation3 [shape = 'u8[1572864]{0}', space=vmem, size = 0x180000, scoped, tag = 'input window, operand 1, single buffered']
    #allocation4 [shape = 's32[2]{0}', space=sflag, size = 0x8, scoped, tag = 'scoped memory for cnn_forward.1']
    #allocation5 [shape = 'u8[2048]{0}', space=vmem, size = 0x800, scoped, tag = 'input window, operand 2, single buffered']
    #allocation6 [shape = 's32[1]{0}', space=sflag, size = 0x4, scoped, tag = 'scoped memory for cnn_forward.1']
    #allocation7 [shape = 'u8[3145728]{0}', space=vmem, size = 0x300000, scoped, tag = 'input window, operand 3, single buffered']
    #allocation8 [shape = 'u8[1024]{0}', space=vmem, size = 0x400, scoped, tag = 'input window, operand 4, single buffered']
    #allocation9 [shape = 's32[1]{0}', space=sflag, size = 0x4, scoped, tag = 'scoped memory for cnn_forward.1']
    #allocation10 [shape = 'u8[655360]{0}', space=vmem, size = 0xa0000, scoped, tag = 'input window, operand 5, single buffered']
    #allocation11 [shape = 'u8[512]{0}', space=vmem, size = 0x400, scoped, tag = 'input window, operand 6, single buffered']
    #allocation12 [shape = 's32[1]{0}', space=sflag, size = 0x4, scoped, tag = 'scoped memory for cnn_forward.1']
    #allocation13 [shape = 'u8[65536]{0}', space=vmem, size = 0x10000, scoped, tag = 'input window, operand 7, single buffered']
    #allocation14 [shape = 'u8[512]{0}', space=vmem, size = 0x400, scoped, tag = 'input window, operand 8, single buffered']
    #allocation15 [shape = 's32[1]{0}', space=sflag, size = 0x4, scoped, tag = 'scoped memory for cnn_forward.1']
    %14 = vsyncpa [#allocation4], 0
    %15 = vsyncpa [#allocation6], 0
    %16 = vsyncpa [#allocation9], 0
    %17 = vsyncpa [#allocation12], 0
    %18 = vsyncpa [#allocation15], 0
    loop: start=0, step=1, limit=4
    $region2: #{cnn_forward.1} parent=1 // loop_pre_header
      _
    $region3: #{cnn_forward.1} parent=1 // loop_header
      %s20 = sphi 0, %s24
      %p21 = scmp.ge.s32.totalorder %s20, 4
      %s30 = sphi 0, %s32
      %s33 = sphi 0, %s30
      %s34 = sphi 0, %s33
      %s50 = sphi 0, %s34
      %s54 = sphi 0, %s54
      %s56 = sphi 0, %s54
      %s57 = sphi 0, %s56
      %s71 = sphi 0, %s57
      %s75 = sphi 0, %s75
      %s77 = sphi 0, %s75
      %s78 = sphi 0, %s77
      %s92 = sphi 0, %s78
      %s96 = sphi 0, %s96
      %s98 = sphi 0, %s96
      %s99 = sphi 0, %s98
      %s113 = sphi 0, %s99
      %s117 = sphi 0, %s117
      %s119 = sphi 0, %s117
      %s120 = sphi 0, %s119
      %s134 = sphi 0, %s120
      %s138 = sphi 0, %s138
      %s140 = sphi 0, %s138
      %s141 = sphi 0, %s140
      %s155 = sphi 0, %s141
      %s159 = sphi 0, %s159
      %s161 = sphi 0, %s159
      %s162 = sphi 0, %s161
      %s176 = sphi 0, %s162
      %s180 = sphi 0, %s180
      %s182 = sphi 0, %s180
      %s183 = sphi 0, %s182
      %s197 = sphi 0, %s183
      %s201 = sphi 0, %s201
      %s203 = sphi 0, %s201
      %s204 = sphi 0, %s203
      %s218 = sphi 0, %s204
      %s224 = sphi 0, %s226
      %s227 = sphi 0, %s224
      %s228 = sphi 0, %s227
      %s244 = sphi 0, %s228
    $region4: #{cnn_forward.1} parent=1 // loop_header_branch
      %23 = sbr.rel (%p21) target = $region8
    $region5: #{cnn_forward.1} parent=1 // loop_body
      %s25 = ssub.s32 %s20, 1
      %s26 = ssub.s32 %s20, 2
      %s27 = sadd.s32 %s20, 1
      %s28 = ssub.s32 %s20, %s27
      %p29 = scmp.eq.s32.totalorder %s28, 0
      %s31 = sadd.s32 %s30, 1
      %s32 = scalar_select %p29, %s30, %s31
      %p35 = pneg %p29
      %p36 = scmp.eq.s32.totalorder %s20, 1
      %p37 = por %p35, %p36
      %p38 = scmp.ne.s32.totalorder %s30, %s33
      %p39 = scmp.eq.s32.totalorder %s20, 0
      %p40 = por %p38, %p39
      %p41 = scmp.ne.s32.totalorder %s30, %s33
      %p42 = scmp.eq.s32.totalorder %s25, 1
      %p43 = por %p41, %p42
      %p44 = scmp.ne.s32.totalorder %s33, %s34
      %p45 = scmp.eq.s32.totalorder %s25, 0
      %p46 = por %p44, %p45
      %p47 = scmp.ne.s32.totalorder %s33, %s34
      %p48 = scmp.eq.s32.totalorder %s26, 1
      %p49 = por %p47, %p48
      %p51 = scmp.ne.s32.totalorder %s34, %s50
      %p52 = scmp.eq.s32.totalorder %s26, 0
      %p53 = por %p51, %p52
      %s55 = sadd.s32 %s54, 1
      %p58 = scmp.eq.s32.totalorder %s20, 1
      %p59 = scmp.ne.s32.totalorder %s54, %s56
      %p60 = scmp.eq.s32.totalorder %s20, 0
      %p61 = por %p59, %p60
      %p62 = scmp.ne.s32.totalorder %s54, %s56
      %p63 = scmp.eq.s32.totalorder %s25, 1
      %p64 = por %p62, %p63
      %p65 = scmp.ne.s32.totalorder %s56, %s57
      %p66 = scmp.eq.s32.totalorder %s25, 0
      %p67 = por %p65, %p66
      %p68 = scmp.ne.s32.totalorder %s56, %s57
      %p69 = scmp.eq.s32.totalorder %s26, 1
      %p70 = por %p68, %p69
      %p72 = scmp.ne.s32.totalorder %s57, %s71
      %p73 = scmp.eq.s32.totalorder %s26, 0
      %p74 = por %p72, %p73
      %s76 = sadd.s32 %s75, 1
      %p79 = scmp.eq.s32.totalorder %s20, 1
      %p80 = scmp.ne.s32.totalorder %s75, %s77
      %p81 = scmp.eq.s32.totalorder %s20, 0
      %p82 = por %p80, %p81
      %p83 = scmp.ne.s32.totalorder %s75, %s77
      %p84 = scmp.eq.s32.totalorder %s25, 1
      %p85 = por %p83, %p84
      %p86 = scmp.ne.s32.totalorder %s77, %s78
      %p87 = scmp.eq.s32.totalorder %s25, 0
      %p88 = por %p86, %p87
      %p89 = scmp.ne.s32.totalorder %s77, %s78
      %p90 = scmp.eq.s32.totalorder %s26, 1
      %p91 = por %p89, %p90
      %p93 = scmp.ne.s32.totalorder %s78, %s92
      %p94 = scmp.eq.s32.totalorder %s26, 0
      %p95 = por %p93, %p94
      %s97 = sadd.s32 %s96, 1
      %p100 = scmp.eq.s32.totalorder %s20, 1
      %p101 = scmp.ne.s32.totalorder %s96, %s98
      %p102 = scmp.eq.s32.totalorder %s20, 0
      %p103 = por %p101, %p102
      %p104 = scmp.ne.s32.totalorder %s96, %s98
      %p105 = scmp.eq.s32.totalorder %s25, 1
      %p106 = por %p104, %p105
      %p107 = scmp.ne.s32.totalorder %s98, %s99
      %p108 = scmp.eq.s32.totalorder %s25, 0
      %p109 = por %p107, %p108
      %p110 = scmp.ne.s32.totalorder %s98, %s99
      %p111 = scmp.eq.s32.totalorder %s26, 1
      %p112 = por %p110, %p111
      %p114 = scmp.ne.s32.totalorder %s99, %s113
      %p115 = scmp.eq.s32.totalorder %s26, 0
      %p116 = por %p114, %p115
      %s118 = sadd.s32 %s117, 1
      %p121 = scmp.eq.s32.totalorder %s20, 1
      %p122 = scmp.ne.s32.totalorder %s117, %s119
      %p123 = scmp.eq.s32.totalorder %s20, 0
      %p124 = por %p122, %p123
      %p125 = scmp.ne.s32.totalorder %s117, %s119
      %p126 = scmp.eq.s32.totalorder %s25, 1
      %p127 = por %p125, %p126
      %p128 = scmp.ne.s32.totalorder %s119, %s120
      %p129 = scmp.eq.s32.totalorder %s25, 0
      %p130 = por %p128, %p129
      %p131 = scmp.ne.s32.totalorder %s119, %s120
      %p132 = scmp.eq.s32.totalorder %s26, 1
      %p133 = por %p131, %p132
      %p135 = scmp.ne.s32.totalorder %s120, %s134
      %p136 = scmp.eq.s32.totalorder %s26, 0
      %p137 = por %p135, %p136
      %s139 = sadd.s32 %s138, 1
      %p142 = scmp.eq.s32.totalorder %s20, 1
      %p143 = scmp.ne.s32.totalorder %s138, %s140
      %p144 = scmp.eq.s32.totalorder %s20, 0
      %p145 = por %p143, %p144
      %p146 = scmp.ne.s32.totalorder %s138, %s140
      %p147 = scmp.eq.s32.totalorder %s25, 1
      %p148 = por %p146, %p147
      %p149 = scmp.ne.s32.totalorder %s140, %s141
      %p150 = scmp.eq.s32.totalorder %s25, 0
      %p151 = por %p149, %p150
      %p152 = scmp.ne.s32.totalorder %s140, %s141
      %p153 = scmp.eq.s32.totalorder %s26, 1
      %p154 = por %p152, %p153
      %p156 = scmp.ne.s32.totalorder %s141, %s155
      %p157 = scmp.eq.s32.totalorder %s26, 0
      %p158 = por %p156, %p157
      %s160 = sadd.s32 %s159, 1
      %p163 = scmp.eq.s32.totalorder %s20, 1
      %p164 = scmp.ne.s32.totalorder %s159, %s161
      %p165 = scmp.eq.s32.totalorder %s20, 0
      %p166 = por %p164, %p165
      %p167 = scmp.ne.s32.totalorder %s159, %s161
      %p168 = scmp.eq.s32.totalorder %s25, 1
      %p169 = por %p167, %p168
      %p170 = scmp.ne.s32.totalorder %s161, %s162
      %p171 = scmp.eq.s32.totalorder %s25, 0
      %p172 = por %p170, %p171
      %p173 = scmp.ne.s32.totalorder %s161, %s162
      %p174 = scmp.eq.s32.totalorder %s26, 1
      %p175 = por %p173, %p174
      %p177 = scmp.ne.s32.totalorder %s162, %s176
      %p178 = scmp.eq.s32.totalorder %s26, 0
      %p179 = por %p177, %p178
      %s181 = sadd.s32 %s180, 1
      %p184 = scmp.eq.s32.totalorder %s20, 1
      %p185 = scmp.ne.s32.totalorder %s180, %s182
      %p186 = scmp.eq.s32.totalorder %s20, 0
      %p187 = por %p185, %p186
      %p188 = scmp.ne.s32.totalorder %s180, %s182
      %p189 = scmp.eq.s32.totalorder %s25, 1
      %p190 = por %p188, %p189
      %p191 = scmp.ne.s32.totalorder %s182, %s183
      %p192 = scmp.eq.s32.totalorder %s25, 0
      %p193 = por %p191, %p192
      %p194 = scmp.ne.s32.totalorder %s182, %s183
      %p195 = scmp.eq.s32.totalorder %s26, 1
      %p196 = por %p194, %p195
      %p198 = scmp.ne.s32.totalorder %s183, %s197
      %p199 = scmp.eq.s32.totalorder %s26, 0
      %p200 = por %p198, %p199
      %s202 = sadd.s32 %s201, 1
      %p205 = scmp.eq.s32.totalorder %s20, 1
      %p206 = scmp.ne.s32.totalorder %s201, %s203
      %p207 = scmp.eq.s32.totalorder %s20, 0
      %p208 = por %p206, %p207
      %p209 = scmp.ne.s32.totalorder %s201, %s203
      %p210 = scmp.eq.s32.totalorder %s25, 1
      %p211 = por %p209, %p210
      %p212 = scmp.ne.s32.totalorder %s203, %s204
      %p213 = scmp.eq.s32.totalorder %s25, 0
      %p214 = por %p212, %p213
      %p215 = scmp.ne.s32.totalorder %s203, %s204
      %p216 = scmp.eq.s32.totalorder %s26, 1
      %p217 = por %p215, %p216
      %p219 = scmp.ne.s32.totalorder %s204, %s218
      %p220 = scmp.eq.s32.totalorder %s26, 0
      %p221 = por %p219, %p220
      %s222 = ssub.s32 %s20, %s27
      %p223 = scmp.eq.s32.totalorder %s222, 0
      %s225 = sadd.s32 %s224, 1
      %s226 = scalar_select %p223, %s224, %s225
      %p229 = pneg %p223
      %p230 = scmp.eq.s32.totalorder %s20, 1
      %p231 = por %p229, %p230
      %p232 = scmp.ne.s32.totalorder %s224, %s227
      %p233 = scmp.eq.s32.totalorder %s20, 0
      %p234 = por %p232, %p233
      %p235 = scmp.ne.s32.totalorder %s224, %s227
      %p236 = scmp.eq.s32.totalorder %s25, 1
      %p237 = por %p235, %p236
      %p238 = scmp.ne.s32.totalorder %s227, %s228
      %p239 = scmp.eq.s32.totalorder %s25, 0
      %p240 = por %p238, %p239
      %p241 = scmp.ne.s32.totalorder %s227, %s228
      %p242 = scmp.eq.s32.totalorder %s26, 1
      %p243 = por %p241, %p242
      %p245 = scmp.ne.s32.totalorder %s228, %s244
      %p246 = scmp.eq.s32.totalorder %s26, 0
      %p247 = por %p245, %p246
      %p248 = scmp.le.s32.totalorder 1, %s20
      %p249 = scmp.lt.s32.totalorder %s20, 3
      %p250 = pnand %p248, %p249
      %p251 = pneg %p250
      // Predicated region
      $region9: #{cnn_forward.1} parent=5 // pred_check
        _
      $region10: #{cnn_forward.1} parent=5 // pred_check_branch
        %253 = sbr.rel (%p250) target = $region12
      $region11: #{cnn_forward.1} parent=5 // pred_region
        %s254 = ssub.s32 %s20, 1
        // Predicated region
        $region13: #{cnn_forward.1} parent=11 // pred_check
          %p255 = pneg %p67
        $region14: #{cnn_forward.1} parent=11 // pred_check_branch
          %257 = sbr.rel (%p255) target = $region16
        $region15: #{cnn_forward.1} parent=11 // pred_region
          %s259 = ssub.s32 49152, 49152
          %260 = vsyncadd [#allocation4], %s259
          %s261 = sshll.u32 [#allocation3], 4
          %s262 = int_to_ptr.vmem [resolvable:$true] %s261
          %267 = dma.hbm_to_vmem [thread:$0]  %s1, 49152, %s262, [#allocation4], 1024, 1024, 64
        $region16: #{cnn_forward.1} parent=11 // pred_fallthru
          _
        // Predicated region
        $region17: #{cnn_forward.1} parent=11 // pred_check
          %p268 = pneg %p88
        $region18: #{cnn_forward.1} parent=11 // pred_check_branch
          %270 = sbr.rel (%p268) target = $region20
        $region19: #{cnn_forward.1} parent=11 // pred_region
          %s272 = ssub.s32 64, 64
          %273 = vsyncadd [#allocation6], %s272
          %s275 = sshll.u32 [#allocation5], 4
          %s276 = int_to_ptr.vmem [resolvable:$true] %s275
          %278 = dma.hbm_to_vmem [thread:$0]  %s2, 64, %s276, [#allocation6]
        $region20: #{cnn_forward.1} parent=11 // pred_fallthru
          _
        // Predicated region
        $region21: #{cnn_forward.1} parent=11 // pred_check
          %p279 = pneg %p109
        $region22: #{cnn_forward.1} parent=11 // pred_check_branch
          %281 = sbr.rel (%p279) target = $region24
        $region23: #{cnn_forward.1} parent=11 // pred_region
          %s283 = ssub.s32 98304, 98304
          %284 = vsyncadd [#allocation6], %s283
          %s285 = sshll.u32 [#allocation7], 4
          %s286 = int_to_ptr.vmem [resolvable:$true] %s285
          %291 = dma.hbm_to_vmem [thread:$0]  %s3, 98304, %s286, [#allocation6], 512, 512, 32
        $region24: #{cnn_forward.1} parent=11 // pred_fallthru
          _
        // Predicated region
        $region25: #{cnn_forward.1} parent=11 // pred_check
          %p292 = pneg %p130
        $region26: #{cnn_forward.1} parent=11 // pred_check_branch
          %294 = sbr.rel (%p292) target = $region28
        $region27: #{cnn_forward.1} parent=11 // pred_region
          %s296 = ssub.s32 32, 32
          %297 = vsyncadd [#allocation9], %s296
          %s299 = sshll.u32 [#allocation8], 4
          %s300 = int_to_ptr.vmem [resolvable:$true] %s299
          %302 = dma.hbm_to_vmem [thread:$0]  %s4, 32, %s300, [#allocation9]
        $region28: #{cnn_forward.1} parent=11 // pred_fallthru
          _
        // Predicated region
        $region29: #{cnn_forward.1} parent=11 // pred_check
          %p303 = pneg %p151
        $region30: #{cnn_forward.1} parent=11 // pred_check_branch
          %305 = sbr.rel (%p303) target = $region32
        $region31: #{cnn_forward.1} parent=11 // pred_region
          %s307 = ssub.s32 20480, 20480
          %308 = vsyncadd [#allocation9], %s307
          %s309 = sshll.u32 [#allocation10], 4
          %s310 = int_to_ptr.vmem [resolvable:$true] %s309
          %315 = dma.hbm_to_vmem [thread:$0]  %s5, 20480, %s310, [#allocation9], 128, 128, 8
        $region32: #{cnn_forward.1} parent=11 // pred_fallthru
          _
        // Predicated region
        $region33: #{cnn_forward.1} parent=11 // pred_check
          %p316 = pneg %p172
        $region34: #{cnn_forward.1} parent=11 // pred_check_branch
          %318 = sbr.rel (%p316) target = $region36
        $region35: #{cnn_forward.1} parent=11 // pred_region
          %s320 = ssub.s32 16, 16
          %321 = vsyncadd [#allocation12], %s320
          %s323 = sshll.u32 [#allocation11], 4
          %s324 = int_to_ptr.vmem [resolvable:$true] %s323
          %326 = dma.hbm_to_vmem [thread:$0]  %s6, 16, %s324, [#allocation12]
        $region36: #{cnn_forward.1} parent=11 // pred_fallthru
          _
        // Predicated region
        $region37: #{cnn_forward.1} parent=11 // pred_check
          %p327 = pneg %p193
        $region38: #{cnn_forward.1} parent=11 // pred_check_branch
          %329 = sbr.rel (%p327) target = $region40
        $region39: #{cnn_forward.1} parent=11 // pred_region
          %s331 = ssub.s32 2048, 2048
          %332 = vsyncadd [#allocation12], %s331
          %s333 = sshll.u32 [#allocation13], 4
          %s334 = int_to_ptr.vmem [resolvable:$true] %s333
          %339 = dma.hbm_to_vmem [thread:$0]  %s7, 2048, %s334, [#allocation12], 128, 128, 8
        $region40: #{cnn_forward.1} parent=11 // pred_fallthru
          _
        // Predicated region
        $region41: #{cnn_forward.1} parent=11 // pred_check
          %p340 = pneg %p214
        $region42: #{cnn_forward.1} parent=11 // pred_check_branch
          %342 = sbr.rel (%p340) target = $region44
        $region43: #{cnn_forward.1} parent=11 // pred_region
          %s344 = ssub.s32 16, 16
          %345 = vsyncadd [#allocation15], %s344
          %s347 = sshll.u32 [#allocation14], 4
          %s348 = int_to_ptr.vmem [resolvable:$true] %s347
          %350 = dma.hbm_to_vmem [thread:$0]  %s8, 16, %s348, [#allocation15]
        $region44: #{cnn_forward.1} parent=11 // pred_fallthru
          _
      $region12: #{cnn_forward.1} parent=5 // pred_fallthru
        _
      %p351 = scmp.lt.s32.totalorder %s20, 2
      // Predicated region
      $region45: #{cnn_forward.1} parent=5 // pred_check
        %p352 = pneg %p351
      $region46: #{cnn_forward.1} parent=5 // pred_check_branch
        %354 = sbr.rel (%p352) target = $region48
      $region47: #{cnn_forward.1} parent=5 // pred_region
        // Predicated region
        $region49: #{cnn_forward.1} parent=47 // pred_check
          %p355 = pneg %p40
        $region50: #{cnn_forward.1} parent=47 // pred_check_branch
          %357 = sbr.rel (%p355) target = $region52
        $region51: #{cnn_forward.1} parent=47 // pred_region
          %s358 = sand.u32 %s30, 1
          %s359 = sand.u32 %s30, 1
          %s360 = smul.addr %s359, 224
          %s361 = scalar_lea.vmem [#allocation2], %s360
          %s362 = smul.u32 7, %s20
          %s363 = smul.addr %s362, 8
          %s364 = scalar_lea.vmem %s0, %s363
          // Predicated region
          $region53: #{cnn_forward.1} parent=51 // pred_check
            _
          $region54: #{cnn_forward.1} parent=51 // pred_check_branch
            %366 = sbr.rel (0) target = $region56
          $region55: #{cnn_forward.1} parent=51 // pred_region
            // Predicated region
            $region57: #{cnn_forward.1} parent=55 // pred_check
              _
            $region58: #{cnn_forward.1} parent=55 // pred_check_branch
              %368 = sbr.rel (0) target = $region60
            $region59: #{cnn_forward.1} parent=55 // pred_region
              // Predicated region
              $region72: #{cnn_forward.1} parent=59 // pred_check
                _
              $region73: #{cnn_forward.1} parent=59 // pred_check_branch
                %437 = sbr.rel (0) target = $region75
              $region74: #{cnn_forward.1} parent=59 // pred_region
                loop: start=0, step=1, limit=1
                $region76: #{cnn_forward.1} parent=74 // loop_pre_header
                  _
                $region77: #{cnn_forward.1} parent=74 // loop_header
                  %s439 = sphi 0, %s443
                  %p440 = scmp.ge.s32.totalorder %s439, 1
                  %s444 = sphi %s364, %s364
                  %s445 = sphi %s361, %s361
                $region78: #{cnn_forward.1} parent=74 // loop_header_branch
                  %442 = sbr.rel (%p440) target = $region82
                $region79: #{cnn_forward.1} parent=74 // loop_body
                  %v446 = vld [vmem:[%s444] sm:$0xff]
                  %447 = vst [vmem:[%s445] sm:$0xff] %v446
                  %v448 = vld [vmem:[%s444 + $0x8] sm:$0xff]
                  %449 = vst [vmem:[%s445 + $0x8] sm:$0xff] %v448
                  %v450 = vld [vmem:[%s444 + $0x10] sm:$0xff]
                  %451 = vst [vmem:[%s445 + $0x10] sm:$0xff] %v450
                  %v452 = vld [vmem:[%s444 + $0x18] sm:$0xff]
                  %453 = vst [vmem:[%s445 + $0x18] sm:$0xff] %v452
                  %v454 = vld [vmem:[%s444 + $0x20] sm:$0xff]
                  %455 = vst [vmem:[%s445 + $0x20] sm:$0xff] %v454
                  %v456 = vld [vmem:[%s444 + $0x28] sm:$0xff]
                  %457 = vst [vmem:[%s445 + $0x28] sm:$0xff] %v456
                  %v458 = vld [vmem:[%s444 + $0x30] sm:$0xff]
                  %459 = vst [vmem:[%s445 + $0x30] sm:$0xff] %v458
                  %v460 = vld [vmem:[%s444 + $0x70] sm:$0xff]
                  %461 = vst [vmem:[%s445 + $0x38] sm:$0xff] %v460
                  %v462 = vld [vmem:[%s444 + $0x78] sm:$0xff]
                  %463 = vst [vmem:[%s445 + $0x40] sm:$0xff] %v462
                  %v464 = vld [vmem:[%s444 + $0x80] sm:$0xff]
                  %465 = vst [vmem:[%s445 + $0x48] sm:$0xff] %v464
                  %v466 = vld [vmem:[%s444 + $0x88] sm:$0xff]
                  %467 = vst [vmem:[%s445 + $0x50] sm:$0xff] %v466
                  %v468 = vld [vmem:[%s444 + $0x90] sm:$0xff]
                  %469 = vst [vmem:[%s445 + $0x58] sm:$0xff] %v468
                  %v470 = vld [vmem:[%s444 + $0x98] sm:$0xff]
                  %471 = vst [vmem:[%s445 + $0x60] sm:$0xff] %v470
                  %v472 = vld [vmem:[%s444 + $0xa0] sm:$0xff]
                  %473 = vst [vmem:[%s445 + $0x68] sm:$0xff] %v472
                  %v474 = vld [vmem:[%s444 + $0xe0] sm:$0xff]
                  %475 = vst [vmem:[%s445 + $0x70] sm:$0xff] %v474
                  %v476 = vld [vmem:[%s444 + $0xe8] sm:$0xff]
                  %477 = vst [vmem:[%s445 + $0x78] sm:$0xff] %v476
                  %v478 = vld [vmem:[%s444 + $0xf0] sm:$0xff]
                  %479 = vst [vmem:[%s445 + $0x80] sm:$0xff] %v478
                  %v480 = vld [vmem:[%s444 + $0xf8] sm:$0xff]
                  %481 = vst [vmem:[%s445 + $0x88] sm:$0xff] %v480
                  %v482 = vld [vmem:[%s444 + $0x100] sm:$0xff]
                  %483 = vst [vmem:[%s445 + $0x90] sm:$0xff] %v482
                  %v484 = vld [vmem:[%s444 + $0x108] sm:$0xff]
                  %485 = vst [vmem:[%s445 + $0x98] sm:$0xff] %v484
                  %v486 = vld [vmem:[%s444 + $0x110] sm:$0xff]
                  %487 = vst [vmem:[%s445 + $0xa0] sm:$0xff] %v486
                  %v488 = vld [vmem:[%s444 + $0x150] sm:$0xff]
                  %489 = vst [vmem:[%s445 + $0xa8] sm:$0xff] %v488
                  %v490 = vld [vmem:[%s444 + $0x158] sm:$0xff]
                  %491 = vst [vmem:[%s445 + $0xb0] sm:$0xff] %v490
                  %v492 = vld [vmem:[%s444 + $0x160] sm:$0xff]
                  %493 = vst [vmem:[%s445 + $0xb8] sm:$0xff] %v492
                  %v494 = vld [vmem:[%s444 + $0x168] sm:$0xff]
                  %495 = vst [vmem:[%s445 + $0xc0] sm:$0xff] %v494
                  %v496 = vld [vmem:[%s444 + $0x170] sm:$0xff]
                  %497 = vst [vmem:[%s445 + $0xc8] sm:$0xff] %v496
                  %v498 = vld [vmem:[%s444 + $0x178] sm:$0xff]
                  %499 = vst [vmem:[%s445 + $0xd0] sm:$0xff] %v498
                  %v500 = vld [vmem:[%s444 + $0x180] sm:$0xff]
                  %501 = vst [vmem:[%s445 + $0xd8] sm:$0xff] %v500
                $region80: #{cnn_forward.1} parent=74 // loop_footer
                  %s443 = sadd.s32 1, %s439
                $region81: #{cnn_forward.1} parent=74 // loop_footer_branch
                  %438 = sbr.rel target = $region77
                $region82: #{cnn_forward.1} parent=74 // loop_exit
                  _
              $region75: #{cnn_forward.1} parent=59 // pred_fallthru
                _
              // Predicated region
              $region83: #{cnn_forward.1} parent=59 // pred_check
                _
              $region84: #{cnn_forward.1} parent=59 // pred_check_branch
                %503 = sbr.rel target = $region86
              $region85: #{cnn_forward.1} parent=59 // pred_region
                _
              $region86: #{cnn_forward.1} parent=59 // pred_fallthru
                _
            $region60: #{cnn_forward.1} parent=55 // pred_fallthru
              _
            // Predicated region
            $region61: #{cnn_forward.1} parent=55 // pred_check
              _
            $region62: #{cnn_forward.1} parent=55 // pred_check_branch
              %370 = sbr.rel target = $region64
            $region63: #{cnn_forward.1} parent=55 // pred_region
              loop: start=0, step=1, limit=1
              $region65: #{cnn_forward.1} parent=63 // loop_pre_header
                _
              $region66: #{cnn_forward.1} parent=63 // loop_header
                %s373 = sphi 0, %s377
                %p374 = scmp.ge.s32.totalorder %s373, 1
                %s378 = sphi %s364, %s364
                %s379 = sphi %s361, %s361
              $region67: #{cnn_forward.1} parent=63 // loop_header_branch
                %376 = sbr.rel (%p374) target = $region71
              $region68: #{cnn_forward.1} parent=63 // loop_body
                %v380 = vld [vmem:[%s378] sm:$0xff]
                %381 = vst [vmem:[%s379] sm:$0xff] %v380
                %v382 = vld [vmem:[%s378 + $0x8] sm:$0xff]
                %383 = vst [vmem:[%s379 + $0x8] sm:$0xff] %v382
                %v384 = vld [vmem:[%s378 + $0x10] sm:$0xff]
                %385 = vst [vmem:[%s379 + $0x10] sm:$0xff] %v384
                %v386 = vld [vmem:[%s378 + $0x18] sm:$0xff]
                %387 = vst [vmem:[%s379 + $0x18] sm:$0xff] %v386
                %v388 = vld [vmem:[%s378 + $0x20] sm:$0xff]
                %389 = vst [vmem:[%s379 + $0x20] sm:$0xff] %v388
                %v390 = vld [vmem:[%s378 + $0x28] sm:$0xff]
                %391 = vst [vmem:[%s379 + $0x28] sm:$0xff] %v390
                %v392 = vld [vmem:[%s378 + $0x30] sm:$0xff]
                %393 = vst [vmem:[%s379 + $0x30] sm:$0xff] %v392
                %v394 = vld [vmem:[%s378 + $0x70] sm:$0xff]
                %395 = vst [vmem:[%s379 + $0x38] sm:$0xff] %v394
                %v396 = vld [vmem:[%s378 + $0x78] sm:$0xff]
                %397 = vst [vmem:[%s379 + $0x40] sm:$0xff] %v396
                %v398 = vld [vmem:[%s378 + $0x80] sm:$0xff]
                %399 = vst [vmem:[%s379 + $0x48] sm:$0xff] %v398
                %v400 = vld [vmem:[%s378 + $0x88] sm:$0xff]
                %401 = vst [vmem:[%s379 + $0x50] sm:$0xff] %v400
                %v402 = vld [vmem:[%s378 + $0x90] sm:$0xff]
                %403 = vst [vmem:[%s379 + $0x58] sm:$0xff] %v402
                %v404 = vld [vmem:[%s378 + $0x98] sm:$0xff]
                %405 = vst [vmem:[%s379 + $0x60] sm:$0xff] %v404
                %v406 = vld [vmem:[%s378 + $0xa0] sm:$0xff]
                %407 = vst [vmem:[%s379 + $0x68] sm:$0xff] %v406
                %v408 = vld [vmem:[%s378 + $0xe0] sm:$0xff]
                %409 = vst [vmem:[%s379 + $0x70] sm:$0xff] %v408
                %v410 = vld [vmem:[%s378 + $0xe8] sm:$0xff]
                %411 = vst [vmem:[%s379 + $0x78] sm:$0xff] %v410
                %v412 = vld [vmem:[%s378 + $0xf0] sm:$0xff]
                %413 = vst [vmem:[%s379 + $0x80] sm:$0xff] %v412
                %v414 = vld [vmem:[%s378 + $0xf8] sm:$0xff]
                %415 = vst [vmem:[%s379 + $0x88] sm:$0xff] %v414
                %v416 = vld [vmem:[%s378 + $0x100] sm:$0xff]
                %417 = vst [vmem:[%s379 + $0x90] sm:$0xff] %v416
                %v418 = vld [vmem:[%s378 + $0x108] sm:$0xff]
                %419 = vst [vmem:[%s379 + $0x98] sm:$0xff] %v418
                %v420 = vld [vmem:[%s378 + $0x110] sm:$0xff]
                %421 = vst [vmem:[%s379 + $0xa0] sm:$0xff] %v420
                %v422 = vld [vmem:[%s378 + $0x150] sm:$0xff]
                %423 = vst [vmem:[%s379 + $0xa8] sm:$0xff] %v422
                %v424 = vld [vmem:[%s378 + $0x158] sm:$0xff]
                %425 = vst [vmem:[%s379 + $0xb0] sm:$0xff] %v424
                %v426 = vld [vmem:[%s378 + $0x160] sm:$0xff]
                %427 = vst [vmem:[%s379 + $0xb8] sm:$0xff] %v426
                %v428 = vld [vmem:[%s378 + $0x168] sm:$0xff]
                %429 = vst [vmem:[%s379 + $0xc0] sm:$0xff] %v428
                %v430 = vld [vmem:[%s378 + $0x170] sm:$0xff]
                %431 = vst [vmem:[%s379 + $0xc8] sm:$0xff] %v430
                %v432 = vld [vmem:[%s378 + $0x178] sm:$0xff]
                %433 = vst [vmem:[%s379 + $0xd0] sm:$0xff] %v432
                %v434 = vld [vmem:[%s378 + $0x180] sm:$0xff]
                %435 = vst [vmem:[%s379 + $0xd8] sm:$0xff] %v434
              $region69: #{cnn_forward.1} parent=63 // loop_footer
                %s377 = sadd.s32 1, %s373
              $region70: #{cnn_forward.1} parent=63 // loop_footer_branch
                %372 = sbr.rel target = $region66
              $region71: #{cnn_forward.1} parent=63 // loop_exit
                _
            $region64: #{cnn_forward.1} parent=55 // pred_fallthru
              _
          $region56: #{cnn_forward.1} parent=51 // pred_fallthru
            _
          %504 = vnop
        $region52: #{cnn_forward.1} parent=47 // pred_fallthru
          _
      $region48: #{cnn_forward.1} parent=5 // pred_fallthru
        _
      %p505 = scmp.le.s32.totalorder 1, %s20
      %p506 = scmp.lt.s32.totalorder %s20, 3
      %p507 = pnand %p505, %p506
      %p508 = pneg %p507
      // Predicated region
      $region87: #{cnn_forward.1} parent=5 // pred_check
        _
      $region88: #{cnn_forward.1} parent=5 // pred_check_branch
        %510 = sbr.rel (%p507) target = $region90
      $region89: #{cnn_forward.1} parent=5 // pred_region
        %s511 = ssub.s32 %s20, 1
        %s512 = sand.u32 %s33, 1
        %s513 = sand.u32 %s33, 1
        %s514 = smul.addr %s513, 224
        %s515 = scalar_lea.vmem [#allocation2], %s514
        // Predicated region
        $region91: #{cnn_forward.1} parent=89 // pred_check
          %p516 = pneg %p46
        $region92: #{cnn_forward.1} parent=89 // pred_check_branch
          %518 = sbr.rel (%p516) target = $region94
        $region93: #{cnn_forward.1} parent=89 // pred_region
          _
        $region94: #{cnn_forward.1} parent=89 // pred_fallthru
          _
        // Predicated region
        $region95: #{cnn_forward.1} parent=89 // pred_check
          %p519 = pneg %p67
        $region96: #{cnn_forward.1} parent=89 // pred_check_branch
          %521 = sbr.rel (%p519) target = $region98
        $region97: #{cnn_forward.1} parent=89 // pred_region
          %522 = dma.done [#allocation4], 49152
        $region98: #{cnn_forward.1} parent=89 // pred_fallthru
          _
        // Predicated region
        $region99: #{cnn_forward.1} parent=89 // pred_check
          %p523 = pneg %p88
        $region100: #{cnn_forward.1} parent=89 // pred_check_branch
          %525 = sbr.rel (%p523) target = $region102
        $region101: #{cnn_forward.1} parent=89 // pred_region
          %526 = dma.done [#allocation6], 64
        $region102: #{cnn_forward.1} parent=89 // pred_fallthru
          _
        // Predicated region
        $region103: #{cnn_forward.1} parent=89 // pred_check
          %p527 = pneg %p109
        $region104: #{cnn_forward.1} parent=89 // pred_check_branch
          %529 = sbr.rel (%p527) target = $region106
        $region105: #{cnn_forward.1} parent=89 // pred_region
          %530 = dma.done [#allocation6], 98304
        $region106: #{cnn_forward.1} parent=89 // pred_fallthru
          _
        // Predicated region
        $region107: #{cnn_forward.1} parent=89 // pred_check
          %p531 = pneg %p130
        $region108: #{cnn_forward.1} parent=89 // pred_check_branch
          %533 = sbr.rel (%p531) target = $region110
        $region109: #{cnn_forward.1} parent=89 // pred_region
          %534 = dma.done [#allocation9], 32
        $region110: #{cnn_forward.1} parent=89 // pred_fallthru
          _
        // Predicated region
        $region111: #{cnn_forward.1} parent=89 // pred_check
          %p535 = pneg %p151
        $region112: #{cnn_forward.1} parent=89 // pred_check_branch
          %537 = sbr.rel (%p535) target = $region114
        $region113: #{cnn_forward.1} parent=89 // pred_region
          %538 = dma.done [#allocation9], 20480
        $region114: #{cnn_forward.1} parent=89 // pred_fallthru
          _
        // Predicated region
        $region115: #{cnn_forward.1} parent=89 // pred_check
          %p539 = pneg %p172
        $region116: #{cnn_forward.1} parent=89 // pred_check_branch
          %541 = sbr.rel (%p539) target = $region118
        $region117: #{cnn_forward.1} parent=89 // pred_region
          %542 = dma.done [#allocation12], 16
        $region118: #{cnn_forward.1} parent=89 // pred_fallthru
          _
        // Predicated region
        $region119: #{cnn_forward.1} parent=89 // pred_check
          %p543 = pneg %p193
        $region120: #{cnn_forward.1} parent=89 // pred_check_branch
          %545 = sbr.rel (%p543) target = $region122
        $region121: #{cnn_forward.1} parent=89 // pred_region
          %546 = dma.done [#allocation12], 2048
        $region122: #{cnn_forward.1} parent=89 // pred_fallthru
          _
        // Predicated region
        $region123: #{cnn_forward.1} parent=89 // pred_check
          %p547 = pneg %p214
        $region124: #{cnn_forward.1} parent=89 // pred_check_branch
          %549 = sbr.rel (%p547) target = $region126
        $region125: #{cnn_forward.1} parent=89 // pred_region
          %550 = dma.done [#allocation15], 16
        $region126: #{cnn_forward.1} parent=89 // pred_fallthru
          _
        %s551 = sand.u32 %s33, 1
        %s552 = sand.u32 %s33, 1
        %s553 = smul.addr %s552, 224
        %s554 = scalar_lea.vmem [#allocation2], %s553
        %p555 = pneg %p46
        %p556 = pneg %p43
        %p557 = pneg %p67
        %p558 = pneg %p64
        %p559 = pneg %p88
        %p560 = pneg %p85
        %p561 = pneg %p109
        %p562 = pneg %p106
        %p563 = pneg %p130
        %p564 = pneg %p127
        %p565 = pneg %p151
        %p566 = pneg %p148
        %p567 = pneg %p172
        %p568 = pneg %p169
        %p569 = pneg %p193
        %p570 = pneg %p190
        %p571 = pneg %p214
        %p572 = pneg %p211
        %p573 = pneg %p240
        %p574 = pneg %p237
        %p575 = scmp.lt.s32.totalorder %s25, 1
        %s576 = scalar_select %p575, %s25, 1
        %s577 = smul.addr %s576, 8
        %s578 = scalar_lea.vmem %s9, %s577
        %s579 = smul.u32 7, %s25
        %p580 = scmp.lt.s32.totalorder %s25, 1
        %s581 = scalar_select %p580, %s25, 1
        %s582 = smul.addr %s581, 8
        %s583 = scalar_lea.vmem %s9, %s582
        %v584 = vld [vmem:[%s515] sm:$0xff]
        %v585 = vld [vmem:[%s515 + $0x8] sm:$0xff]
        %v586 = vld [vmem:[%s515 + $0x10] sm:$0xff]
        %v587 = vld [vmem:[%s515 + $0x18] sm:$0xff]
        %v588 = vld [vmem:[%s515 + $0x20] sm:$0xff]
        %v589 = vld [vmem:[%s515 + $0x28] sm:$0xff]
        %v590 = vld [vmem:[%s515 + $0x30] sm:$0xff]
        %s591 = scalar_lea.vmem %s515, 56 [#allocation2]
        %v592 = vld [vmem:[%s591] sm:$0xff]
        %v593 = vld [vmem:[%s591 + $0x8] sm:$0xff]
        %v594 = vld [vmem:[%s591 + $0x10] sm:$0xff]
        %v595 = vld [vmem:[%s591 + $0x18] sm:$0xff]
        %v596 = vld [vmem:[%s591 + $0x20] sm:$0xff]
        %v597 = vld [vmem:[%s591 + $0x28] sm:$0xff]
        %v598 = vld [vmem:[%s591 + $0x30] sm:$0xff]
        %s599 = scalar_lea.vmem %s515, 112 [#allocation2]
        %v600 = vld [vmem:[%s599] sm:$0xff]
        %v601 = vld [vmem:[%s599 + $0x8] sm:$0xff]
        %v602 = vld [vmem:[%s599 + $0x10] sm:$0xff]
        %v603 = vld [vmem:[%s599 + $0x18] sm:$0xff]
        %v604 = vld [vmem:[%s599 + $0x20] sm:$0xff]
        %v605 = vld [vmem:[%s599 + $0x28] sm:$0xff]
        %v606 = vld [vmem:[%s599 + $0x30] sm:$0xff]
        %s607 = scalar_lea.vmem %s515, 168 [#allocation2]
        %v608 = vld [vmem:[%s607] sm:$0xff]
        %v609 = vld [vmem:[%s607 + $0x8] sm:$0xff]
        %v610 = vld [vmem:[%s607 + $0x10] sm:$0xff]
        %v611 = vld [vmem:[%s607 + $0x18] sm:$0xff]
        %v612 = vld [vmem:[%s607 + $0x20] sm:$0xff]
        %v613 = vld [vmem:[%s607 + $0x28] sm:$0xff]
        %v614 = vld [vmem:[%s607 + $0x30] sm:$0xff]
        %v615 = vld [vmem:[#allocation3] sm:$0xff]
        %v616 = vld [vmem:[#allocation3 + $0x8] sm:$0xff]
        %v617 = vld [vmem:[#allocation3 + $0x10] sm:$0xff]
        %v618 = vld [vmem:[#allocation3 + $0x18] sm:$0xff]
        %v619 = vld [vmem:[#allocation3 + $0x20] sm:$0xff]
        %v620 = vld [vmem:[#allocation3 + $0x28] sm:$0xff]
        %v621 = vld [vmem:[#allocation3 + $0x30] sm:$0xff]
        %v622 = vld [vmem:[#allocation3 + $0x38] sm:$0xff]
        %v623 = vld [vmem:[#allocation3 + $0x40] sm:$0xff]
        %v624 = vld [vmem:[#allocation3 + $0x48] sm:$0xff]
        %v625 = vld [vmem:[#allocation3 + $0x50] sm:$0xff]
        %v626 = vld [vmem:[#allocation3 + $0x58] sm:$0xff]
        %v627 = vld [vmem:[#allocation3 + $0x60] sm:$0xff]
        %v628 = vld [vmem:[#allocation3 + $0x68] sm:$0xff]
        %v629 = vld [vmem:[#allocation3 + $0x70] sm:$0xff]
        %v630 = vld [vmem:[#allocation3 + $0x78] sm:$0xff]
        %v631 = vld [vmem:[#allocation3 + $0x80] sm:$0xff]
        %v632 = vld [vmem:[#allocation3 + $0x88] sm:$0xff]
        %v633 = vld [vmem:[#allocation3 + $0x90] sm:$0xff]
        %v634 = vld [vmem:[#allocation3 + $0x98] sm:$0xff]
        %v635 = vld [vmem:[#allocation3 + $0xa0] sm:$0xff]
        %v636 = vld [vmem:[#allocation3 + $0xa8] sm:$0xff]
        %v637 = vld [vmem:[#allocation3 + $0xb0] sm:$0xff]
        %v638 = vld [vmem:[#allocation3 + $0xb8] sm:$0xff]
        %v639 = vld [vmem:[#allocation3 + $0xc0] sm:$0xff]
        %v640 = vld [vmem:[#allocation3 + $0xc8] sm:$0xff]
        %v641 = vld [vmem:[#allocation3 + $0xd0] sm:$0xff]
        %v642 = vld [vmem:[#allocation3 + $0xd8] sm:$0xff]
        %v643 = vld [vmem:[#allocation3 + $0xe0] sm:$0xff]
        %v644 = vld [vmem:[#allocation3 + $0xe8] sm:$0xff]
        %v645 = vld [vmem:[#allocation3 + $0xf0] sm:$0xff]
        %v646 = vld [vmem:[#allocation3 + $0xf8] sm:$0xff]
        %v647 = vld [vmem:[#allocation3 + $0x100] sm:$0xff]
        %v648 = vld [vmem:[#allocation3 + $0x108] sm:$0xff]
        %v649 = vld [vmem:[#allocation3 + $0x110] sm:$0xff]
        %v650 = vld [vmem:[#allocation3 + $0x118] sm:$0xff]
        %v651 = vld [vmem:[#allocation3 + $0x120] sm:$0xff]
        %v652 = vld [vmem:[#allocation3 + $0x128] sm:$0xff]
        %v653 = vld [vmem:[#allocation3 + $0x130] sm:$0xff]
        %v654 = vld [vmem:[#allocation3 + $0x138] sm:$0xff]
        %v655 = vld [vmem:[#allocation3 + $0x140] sm:$0xff]
        %v656 = vld [vmem:[#allocation3 + $0x148] sm:$0xff]
        %v657 = vld [vmem:[#allocation3 + $0x150] sm:$0xff]
        %v658 = vld [vmem:[#allocation3 + $0x158] sm:$0xff]
        %v659 = vld [vmem:[#allocation3 + $0x160] sm:$0xff]
        %v660 = vld [vmem:[#allocation3 + $0x168] sm:$0xff]
        %v661 = vld [vmem:[#allocation3 + $0x170] sm:$0xff]
        %v662 = vld [vmem:[#allocation3 + $0x178] sm:$0xff]
        %v663 = vld [vmem:[#allocation3 + $0x180] sm:$0xff]
        %v664 = vld [vmem:[#allocation3 + $0x188] sm:$0xff]
        %v665 = vld [vmem:[#allocation3 + $0x190] sm:$0xff]
        %v666 = vld [vmem:[#allocation3 + $0x198] sm:$0xff]
        %v667 = vld [vmem:[#allocation3 + $0x1a0] sm:$0xff]
        %v668 = vld [vmem:[#allocation3 + $0x1a8] sm:$0xff]
        %v669 = vld [vmem:[#allocation3 + $0x1b0] sm:$0xff]
        %v670 = vld [vmem:[#allocation3 + $0x1b8] sm:$0xff]
        %v671 = vld [vmem:[#allocation3 + $0x1c0] sm:$0xff]
        %v672 = vld [vmem:[#allocation3 + $0x1c8] sm:$0xff]
        %v673 = vld [vmem:[#allocation3 + $0x1d0] sm:$0xff]
        %v674 = vld [vmem:[#allocation3 + $0x1d8] sm:$0xff]
        %v675 = vld [vmem:[#allocation3 + $0x1e0] sm:$0xff]
        %v676 = vld [vmem:[#allocation3 + $0x1e8] sm:$0xff]
        %v677 = vld [vmem:[#allocation3 + $0x1f0] sm:$0xff]
        %v678 = vld [vmem:[#allocation3 + $0x1f8] sm:$0xff]
        %v679 = vld [vmem:[#allocation3 + $0x200] sm:$0xff]
        %v680 = vld [vmem:[#allocation3 + $0x208] sm:$0xff]
        %v681 = vld [vmem:[#allocation3 + $0x210] sm:$0xff]
        %v682 = vld [vmem:[#allocation3 + $0x218] sm:$0xff]
        %v683 = vld [vmem:[#allocation3 + $0x220] sm:$0xff]
        %v684 = vld [vmem:[#allocation3 + $0x228] sm:$0xff]
        %v685 = vld [vmem:[#allocation3 + $0x230] sm:$0xff]
        %v686 = vld [vmem:[#allocation3 + $0x238] sm:$0xff]
        %v687 = vld [vmem:[#allocation3 + $0x240] sm:$0xff]
        %v688 = vld [vmem:[#allocation3 + $0x248] sm:$0xff]
        %v689 = vld [vmem:[#allocation3 + $0x250] sm:$0xff]
        %v690 = vld [vmem:[#allocation3 + $0x258] sm:$0xff]
        %v691 = vld [vmem:[#allocation3 + $0x260] sm:$0xff]
        %v692 = vld [vmem:[#allocation3 + $0x268] sm:$0xff]
        %v693 = vld [vmem:[#allocation3 + $0x270] sm:$0xff]
        %v694 = vld [vmem:[#allocation3 + $0x278] sm:$0xff]
        %v695 = vld [vmem:[#allocation3 + $0x280] sm:$0xff]
        %v696 = vld [vmem:[#allocation3 + $0x288] sm:$0xff]
        %v697 = vld [vmem:[#allocation3 + $0x290] sm:$0xff]
        %v698 = vld [vmem:[#allocation3 + $0x298] sm:$0xff]
        %v699 = vld [vmem:[#allocation3 + $0x2a0] sm:$0xff]
        %v700 = vld [vmem:[#allocation3 + $0x2a8] sm:$0xff]
        %v701 = vld [vmem:[#allocation3 + $0x2b0] sm:$0xff]
        %v702 = vld [vmem:[#allocation3 + $0x2b8] sm:$0xff]
        %v703 = vld [vmem:[#allocation3 + $0x2c0] sm:$0xff]
        %v704 = vld [vmem:[#allocation3 + $0x2c8] sm:$0xff]
        %v705 = vld [vmem:[#allocation3 + $0x2d0] sm:$0xff]
        %v706 = vld [vmem:[#allocation3 + $0x2d8] sm:$0xff]
        %v707 = vld [vmem:[#allocation3 + $0x2e0] sm:$0xff]
        %v708 = vld [vmem:[#allocation3 + $0x2e8] sm:$0xff]
        %v709 = vld [vmem:[#allocation3 + $0x2f0] sm:$0xff]
        %v710 = vld [vmem:[#allocation3 + $0x2f8] sm:$0xff]
        %v711 = vld [vmem:[#allocation3 + $0x300] sm:$0xff]
        %v712 = vld [vmem:[#allocation3 + $0x308] sm:$0xff]
        %v713 = vld [vmem:[#allocation3 + $0x310] sm:$0xff]
        %v714 = vld [vmem:[#allocation3 + $0x318] sm:$0xff]
        %v715 = vld [vmem:[#allocation3 + $0x320] sm:$0xff]
        %v716 = vld [vmem:[#allocation3 + $0x328] sm:$0xff]
        %v717 = vld [vmem:[#allocation3 + $0x330] sm:$0xff]
        %v718 = vld [vmem:[#allocation3 + $0x338] sm:$0xff]
        %v719 = vld [vmem:[#allocation3 + $0x340] sm:$0xff]
        %v720 = vld [vmem:[#allocation3 + $0x348] sm:$0xff]
        %v721 = vld [vmem:[#allocation3 + $0x350] sm:$0xff]
        %v722 = vld [vmem:[#allocation3 + $0x358] sm:$0xff]
        %v723 = vld [vmem:[#allocation3 + $0x360] sm:$0xff]
        %v724 = vld [vmem:[#allocation3 + $0x368] sm:$0xff]
        %v725 = vld [vmem:[#allocation3 + $0x370] sm:$0xff]
        %v726 = vld [vmem:[#allocation3 + $0x378] sm:$0xff]
        %v727 = vld [vmem:[#allocation3 + $0x380] sm:$0xff]
        %v728 = vld [vmem:[#allocation3 + $0x388] sm:$0xff]
        %v729 = vld [vmem:[#allocation3 + $0x390] sm:$0xff]
        %v730 = vld [vmem:[#allocation3 + $0x398] sm:$0xff]
        %v731 = vld [vmem:[#allocation3 + $0x3a0] sm:$0xff]
        %v732 = vld [vmem:[#allocation3 + $0x3a8] sm:$0xff]
        %v733 = vld [vmem:[#allocation3 + $0x3b0] sm:$0xff]
        %v734 = vld [vmem:[#allocation3 + $0x3b8] sm:$0xff]
        %v735 = vld [vmem:[#allocation3 + $0x3c0] sm:$0xff]
        %v736 = vld [vmem:[#allocation3 + $0x3c8] sm:$0xff]
        %v737 = vld [vmem:[#allocation3 + $0x3d0] sm:$0xff]
        %v738 = vld [vmem:[#allocation3 + $0x3d8] sm:$0xff]
        %v739 = vld [vmem:[#allocation3 + $0x3e0] sm:$0xff]
        %v740 = vld [vmem:[#allocation3 + $0x3e8] sm:$0xff]
        %v741 = vld [vmem:[#allocation3 + $0x3f0] sm:$0xff]
        %v742 = vld [vmem:[#allocation3 + $0x3f8] sm:$0xff]
        %v743 = vld [vmem:[#allocation3 + $0x400] sm:$0xff]
        %v744 = vld [vmem:[#allocation3 + $0x408] sm:$0xff]
        %v745 = vld [vmem:[#allocation3 + $0x410] sm:$0xff]
        %v746 = vld [vmem:[#allocation3 + $0x418] sm:$0xff]
        %v747 = vld [vmem:[#allocation3 + $0x420] sm:$0xff]
        %v748 = vld [vmem:[#allocation3 + $0x428] sm:$0xff]
        %v749 = vld [vmem:[#allocation3 + $0x430] sm:$0xff]
        %v750 = vld [vmem:[#allocation3 + $0x438] sm:$0xff]
        %v751 = vld [vmem:[#allocation3 + $0x440] sm:$0xff]
        %v752 = vld [vmem:[#allocation3 + $0x448] sm:$0xff]
        %v753 = vld [vmem:[#allocation3 + $0x450] sm:$0xff]
        %v754 = vld [vmem:[#allocation3 + $0x458] sm:$0xff]
        %v755 = vld [vmem:[#allocation3 + $0x460] sm:$0xff]
        %v756 = vld [vmem:[#allocation3 + $0x468] sm:$0xff]
        %v757 = vld [vmem:[#allocation3 + $0x470] sm:$0xff]
        %v758 = vld [vmem:[#allocation3 + $0x478] sm:$0xff]
        %v759 = vld [vmem:[#allocation3 + $0x480] sm:$0xff]
        %v760 = vld [vmem:[#allocation3 + $0x488] sm:$0xff]
        %v761 = vld [vmem:[#allocation3 + $0x490] sm:$0xff]
        %v762 = vld [vmem:[#allocation3 + $0x498] sm:$0xff]
        %v763 = vld [vmem:[#allocation3 + $0x4a0] sm:$0xff]
        %v764 = vld [vmem:[#allocation3 + $0x4a8] sm:$0xff]
        %v765 = vld [vmem:[#allocation3 + $0x4b0] sm:$0xff]
        %v766 = vld [vmem:[#allocation3 + $0x4b8] sm:$0xff]
        %v767 = vld [vmem:[#allocation3 + $0x4c0] sm:$0xff]
        %v768 = vld [vmem:[#allocation3 + $0x4c8] sm:$0xff]
        %v769 = vld [vmem:[#allocation3 + $0x4d0] sm:$0xff]
        %v770 = vld [vmem:[#allocation3 + $0x4d8] sm:$0xff]
        %v771 = vld [vmem:[#allocation3 + $0x4e0] sm:$0xff]
        %v772 = vld [vmem:[#allocation3 + $0x4e8] sm:$0xff]
        %v773 = vld [vmem:[#allocation3 + $0x4f0] sm:$0xff]
        %v774 = vld [vmem:[#allocation3 + $0x4f8] sm:$0xff]
        %v775 = vld [vmem:[#allocation3 + $0x500] sm:$0xff]
        %v776 = vld [vmem:[#allocation3 + $0x508] sm:$0xff]
        %v777 = vld [vmem:[#allocation3 + $0x510] sm:$0xff]
        %v778 = vld [vmem:[#allocation3 + $0x518] sm:$0xff]
        %v779 = vld [vmem:[#allocation3 + $0x520] sm:$0xff]
        %v780 = vld [vmem:[#allocation3 + $0x528] sm:$0xff]
        %v781 = vld [vmem:[#allocation3 + $0x530] sm:$0xff]
        %v782 = vld [vmem:[#allocation3 + $0x538] sm:$0xff]
        %v783 = vld [vmem:[#allocation3 + $0x540] sm:$0xff]
        %v784 = vld [vmem:[#allocation3 + $0x548] sm:$0xff]
        %v785 = vld [vmem:[#allocation3 + $0x550] sm:$0xff]
        %v786 = vld [vmem:[#allocation3 + $0x558] sm:$0xff]
        %v787 = vld [vmem:[#allocation3 + $0x560] sm:$0xff]
        %v788 = vld [vmem:[#allocation3 + $0x568] sm:$0xff]
        %v789 = vld [vmem:[#allocation3 + $0x570] sm:$0xff]
        %v790 = vld [vmem:[#allocation3 + $0x578] sm:$0xff]
        %v791 = vld [vmem:[#allocation3 + $0x580] sm:$0xff]
        %v792 = vld [vmem:[#allocation3 + $0x588] sm:$0xff]
        %v793 = vld [vmem:[#allocation3 + $0x590] sm:$0xff]
        %v794 = vld [vmem:[#allocation3 + $0x598] sm:$0xff]
        %v795 = vld [vmem:[#allocation3 + $0x5a0] sm:$0xff]
        %v796 = vld [vmem:[#allocation3 + $0x5a8] sm:$0xff]
        %v797 = vld [vmem:[#allocation3 + $0x5b0] sm:$0xff]
        %v798 = vld [vmem:[#allocation3 + $0x5b8] sm:$0xff]
        %v799 = vld [vmem:[#allocation3 + $0x5c0] sm:$0xff]
        %v800 = vld [vmem:[#allocation3 + $0x5c8] sm:$0xff]
        %v801 = vld [vmem:[#allocation3 + $0x5d0] sm:$0xff]
        %v802 = vld [vmem:[#allocation3 + $0x5d8] sm:$0xff]
        %v803 = vld [vmem:[#allocation3 + $0x5e0] sm:$0xff]
        %v804 = vld [vmem:[#allocation3 + $0x5e8] sm:$0xff]
        %v805 = vld [vmem:[#allocation3 + $0x5f0] sm:$0xff]
        %v806 = vld [vmem:[#allocation3 + $0x5f8] sm:$0xff]
        %v807 = vld [vmem:[#allocation3 + $0x600] sm:$0xff]
        %v808 = vld [vmem:[#allocation3 + $0x608] sm:$0xff]
        %v809 = vld [vmem:[#allocation3 + $0x610] sm:$0xff]
        %v810 = vld [vmem:[#allocation3 + $0x618] sm:$0xff]
        %v811 = vld [vmem:[#allocation3 + $0x620] sm:$0xff]
        %v812 = vld [vmem:[#allocation3 + $0x628] sm:$0xff]
        %v813 = vld [vmem:[#allocation3 + $0x630] sm:$0xff]
        %v814 = vld [vmem:[#allocation3 + $0x638] sm:$0xff]
        %v815 = vld [vmem:[#allocation3 + $0x640] sm:$0xff]
        %v816 = vld [vmem:[#allocation3 + $0x648] sm:$0xff]
        %v817 = vld [vmem:[#allocation3 + $0x650] sm:$0xff]
        %v818 = vld [vmem:[#allocation3 + $0x658] sm:$0xff]
        %v819 = vld [vmem:[#allocation3 + $0x660] sm:$0xff]
        %v820 = vld [vmem:[#allocation3 + $0x668] sm:$0xff]
        %v821 = vld [vmem:[#allocation3 + $0x670] sm:$0xff]
        %v822 = vld [vmem:[#allocation3 + $0x678] sm:$0xff]
        %v823 = vld [vmem:[#allocation3 + $0x680] sm:$0xff]
        %v824 = vld [vmem:[#allocation3 + $0x688] sm:$0xff]
        %v825 = vld [vmem:[#allocation3 + $0x690] sm:$0xff]
        %v826 = vld [vmem:[#allocation3 + $0x698] sm:$0xff]
        %v827 = vld [vmem:[#allocation3 + $0x6a0] sm:$0xff]
        %v828 = vld [vmem:[#allocation3 + $0x6a8] sm:$0xff]
        %v829 = vld [vmem:[#allocation3 + $0x6b0] sm:$0xff]
        %v830 = vld [vmem:[#allocation3 + $0x6b8] sm:$0xff]
        %v831 = vld [vmem:[#allocation3 + $0x6c0] sm:$0xff]
        %v832 = vld [vmem:[#allocation3 + $0x6c8] sm:$0xff]
        %v833 = vld [vmem:[#allocation3 + $0x6d0] sm:$0xff]
        %v834 = vld [vmem:[#allocation3 + $0x6d8] sm:$0xff]
        %v835 = vld [vmem:[#allocation3 + $0x6e0] sm:$0xff]
        %v836 = vld [vmem:[#allocation3 + $0x6e8] sm:$0xff]
        %v837 = vld [vmem:[#allocation3 + $0x6f0] sm:$0xff]
        %v838 = vld [vmem:[#allocation3 + $0x6f8] sm:$0xff]
        %v839 = vld [vmem:[#allocation3 + $0x700] sm:$0xff]
        %v840 = vld [vmem:[#allocation3 + $0x708] sm:$0xff]
        %v841 = vld [vmem:[#allocation3 + $0x710] sm:$0xff]
        %v842 = vld [vmem:[#allocation3 + $0x718] sm:$0xff]
        %v843 = vld [vmem:[#allocation3 + $0x720] sm:$0xff]
        %v844 = vld [vmem:[#allocation3 + $0x728] sm:$0xff]
        %v845 = vld [vmem:[#allocation3 + $0x730] sm:$0xff]
        %v846 = vld [vmem:[#allocation3 + $0x738] sm:$0xff]
        %v847 = vld [vmem:[#allocation3 + $0x740] sm:$0xff]
        %v848 = vld [vmem:[#allocation3 + $0x748] sm:$0xff]
        %v849 = vld [vmem:[#allocation3 + $0x750] sm:$0xff]
        %v850 = vld [vmem:[#allocation3 + $0x758] sm:$0xff]
        %v851 = vld [vmem:[#allocation3 + $0x760] sm:$0xff]
        %v852 = vld [vmem:[#allocation3 + $0x768] sm:$0xff]
        %v853 = vld [vmem:[#allocation3 + $0x770] sm:$0xff]
        %v854 = vld [vmem:[#allocation3 + $0x778] sm:$0xff]
        %v855 = vld [vmem:[#allocation3 + $0x780] sm:$0xff]
        %v856 = vld [vmem:[#allocation3 + $0x788] sm:$0xff]
        %v857 = vld [vmem:[#allocation3 + $0x790] sm:$0xff]
        %v858 = vld [vmem:[#allocation3 + $0x798] sm:$0xff]
        %v859 = vld [vmem:[#allocation3 + $0x7a0] sm:$0xff]
        %v860 = vld [vmem:[#allocation3 + $0x7a8] sm:$0xff]
        %v861 = vld [vmem:[#allocation3 + $0x7b0] sm:$0xff]
        %v862 = vld [vmem:[#allocation3 + $0x7b8] sm:$0xff]
        %v863 = vld [vmem:[#allocation3 + $0x7c0] sm:$0xff]
        %v864 = vld [vmem:[#allocation3 + $0x7c8] sm:$0xff]
        %v865 = vld [vmem:[#allocation3 + $0x7d0] sm:$0xff]
        %v866 = vld [vmem:[#allocation3 + $0x7d8] sm:$0xff]
        %v867 = vld [vmem:[#allocation3 + $0x7e0] sm:$0xff]
        %v868 = vld [vmem:[#allocation3 + $0x7e8] sm:$0xff]
        %v869 = vld [vmem:[#allocation3 + $0x7f0] sm:$0xff]
        %v870 = vld [vmem:[#allocation3 + $0x7f8] sm:$0xff]
        %v871 = vld [vmem:[#allocation3 + $0x800] sm:$0xff]
        %v872 = vld [vmem:[#allocation3 + $0x808] sm:$0xff]
        %v873 = vld [vmem:[#allocation3 + $0x810] sm:$0xff]
        %v874 = vld [vmem:[#allocation3 + $0x818] sm:$0xff]
        %v875 = vld [vmem:[#allocation3 + $0x820] sm:$0xff]
        %v876 = vld [vmem:[#allocation3 + $0x828] sm:$0xff]
        %v877 = vld [vmem:[#allocation3 + $0x830] sm:$0xff]
        %v878 = vld [vmem:[#allocation3 + $0x838] sm:$0xff]
        %v879 = vld [vmem:[#allocation3 + $0x840] sm:$0xff]
        %v880 = vld [vmem:[#allocation3 + $0x848] sm:$0xff]
        %v881 = vld [vmem:[#allocation3 + $0x850] sm:$0xff]
        %v882 = vld [vmem:[#allocation3 + $0x858] sm:$0xff]
        %v883 = vld [vmem:[#allocation3 + $0x860] sm:$0xff]
        %v884 = vld [vmem:[#allocation3 + $0x868] sm:$0xff]
        %v885 = vld [vmem:[#allocation3 + $0x870] sm:$0xff]
        %v886 = vld [vmem:[#allocation3 + $0x878] sm:$0xff]
        %v887 = vld [vmem:[#allocation3 + $0x880] sm:$0xff]
        %v888 = vld [vmem:[#allocation3 + $0x888] sm:$0xff]
        %v889 = vld [vmem:[#allocation3 + $0x890] sm:$0xff]
        %v890 = vld [vmem:[#allocation3 + $0x898] sm:$0xff]
        %v891 = vld [vmem:[#allocation3 + $0x8a0] sm:$0xff]
        %v892 = vld [vmem:[#allocation3 + $0x8a8] sm:$0xff]
        %v893 = vld [vmem:[#allocation3 + $0x8b0] sm:$0xff]
        %v894 = vld [vmem:[#allocation3 + $0x8b8] sm:$0xff]
        %v895 = vld [vmem:[#allocation3 + $0x8c0] sm:$0xff]
        %v896 = vld [vmem:[#allocation3 + $0x8c8] sm:$0xff]
        %v897 = vld [vmem:[#allocation3 + $0x8d0] sm:$0xff]
        %v898 = vld [vmem:[#allocation3 + $0x8d8] sm:$0xff]
        %v899 = vld [vmem:[#allocation3 + $0x8e0] sm:$0xff]
        %v900 = vld [vmem:[#allocation3 + $0x8e8] sm:$0xff]
        %v901 = vld [vmem:[#allocation3 + $0x8f0] sm:$0xff]
        %v902 = vld [vmem:[#allocation3 + $0x8f8] sm:$0xff]
        %v903 = vld [vmem:[#allocation3 + $0x900] sm:$0xff]
        %v904 = vld [vmem:[#allocation3 + $0x908] sm:$0xff]
        %v905 = vld [vmem:[#allocation3 + $0x910] sm:$0xff]
        %v906 = vld [vmem:[#allocation3 + $0x918] sm:$0xff]
        %v907 = vld [vmem:[#allocation3 + $0x920] sm:$0xff]
        %v908 = vld [vmem:[#allocation3 + $0x928] sm:$0xff]
        %v909 = vld [vmem:[#allocation3 + $0x930] sm:$0xff]
        %v910 = vld [vmem:[#allocation3 + $0x938] sm:$0xff]
        %v911 = vld [vmem:[#allocation3 + $0x940] sm:$0xff]
        %v912 = vld [vmem:[#allocation3 + $0x948] sm:$0xff]
        %v913 = vld [vmem:[#allocation3 + $0x950] sm:$0xff]
        %v914 = vld [vmem:[#allocation3 + $0x958] sm:$0xff]
        %v915 = vld [vmem:[#allocation3 + $0x960] sm:$0xff]
        %v916 = vld [vmem:[#allocation3 + $0x968] sm:$0xff]
        %v917 = vld [vmem:[#allocation3 + $0x970] sm:$0xff]
        %v918 = vld [vmem:[#allocation3 + $0x978] sm:$0xff]
        %v919 = vld [vmem:[#allocation3 + $0x980] sm:$0xff]
        %v920 = vld [vmem:[#allocation3 + $0x988] sm:$0xff]
        %v921 = vld [vmem:[#allocation3 + $0x990] sm:$0xff]
        %v922 = vld [vmem:[#allocation3 + $0x998] sm:$0xff]
        %v923 = vld [vmem:[#allocation3 + $0x9a0] sm:$0xff]
        %v924 = vld [vmem:[#allocation3 + $0x9a8] sm:$0xff]
        %v925 = vld [vmem:[#allocation3 + $0x9b0] sm:$0xff]
        %v926 = vld [vmem:[#allocation3 + $0x9b8] sm:$0xff]
        %v927 = vld [vmem:[#allocation3 + $0x9c0] sm:$0xff]
        %v928 = vld [vmem:[#allocation3 + $0x9c8] sm:$0xff]
        %v929 = vld [vmem:[#allocation3 + $0x9d0] sm:$0xff]
        %v930 = vld [vmem:[#allocation3 + $0x9d8] sm:$0xff]
        %v931 = vld [vmem:[#allocation3 + $0x9e0] sm:$0xff]
        %v932 = vld [vmem:[#allocation3 + $0x9e8] sm:$0xff]
        %v933 = vld [vmem:[#allocation3 + $0x9f0] sm:$0xff]
        %v934 = vld [vmem:[#allocation3 + $0x9f8] sm:$0xff]
        %v935 = vld [vmem:[#allocation3 + $0xa00] sm:$0xff]
        %v936 = vld [vmem:[#allocation3 + $0xa08] sm:$0xff]
        %v937 = vld [vmem:[#allocation3 + $0xa10] sm:$0xff]
        %v938 = vld [vmem:[#allocation3 + $0xa18] sm:$0xff]
        %v939 = vld [vmem:[#allocation3 + $0xa20] sm:$0xff]
        %v940 = vld [vmem:[#allocation3 + $0xa28] sm:$0xff]
        %v941 = vld [vmem:[#allocation3 + $0xa30] sm:$0xff]
        %v942 = vld [vmem:[#allocation3 + $0xa38] sm:$0xff]
        %v943 = vld [vmem:[#allocation3 + $0xa40] sm:$0xff]
        %v944 = vld [vmem:[#allocation3 + $0xa48] sm:$0xff]
        %v945 = vld [vmem:[#allocation3 + $0xa50] sm:$0xff]
        %v946 = vld [vmem:[#allocation3 + $0xa58] sm:$0xff]
        %v947 = vld [vmem:[#allocation3 + $0xa60] sm:$0xff]
        %v948 = vld [vmem:[#allocation3 + $0xa68] sm:$0xff]
        %v949 = vld [vmem:[#allocation3 + $0xa70] sm:$0xff]
        %v950 = vld [vmem:[#allocation3 + $0xa78] sm:$0xff]
        %v951 = vld [vmem:[#allocation3 + $0xa80] sm:$0xff]
        %v952 = vld [vmem:[#allocation3 + $0xa88] sm:$0xff]
        %v953 = vld [vmem:[#allocation3 + $0xa90] sm:$0xff]
        %v954 = vld [vmem:[#allocation3 + $0xa98] sm:$0xff]
        %v955 = vld [vmem:[#allocation3 + $0xaa0] sm:$0xff]
        %v956 = vld [vmem:[#allocation3 + $0xaa8] sm:$0xff]
        %v957 = vld [vmem:[#allocation3 + $0xab0] sm:$0xff]
        %v958 = vld [vmem:[#allocation3 + $0xab8] sm:$0xff]
        %v959 = vld [vmem:[#allocation3 + $0xac0] sm:$0xff]
        %v960 = vld [vmem:[#allocation3 + $0xac8] sm:$0xff]
        %v961 = vld [vmem:[#allocation3 + $0xad0] sm:$0xff]
        %v962 = vld [vmem:[#allocation3 + $0xad8] sm:$0xff]
        %v963 = vld [vmem:[#allocation3 + $0xae0] sm:$0xff]
        %v964 = vld [vmem:[#allocation3 + $0xae8] sm:$0xff]
        %v965 = vld [vmem:[#allocation3 + $0xaf0] sm:$0xff]
        %v966 = vld [vmem:[#allocation3 + $0xaf8] sm:$0xff]
        %v967 = vld [vmem:[#allocation3 + $0xb00] sm:$0xff]
        %v968 = vld [vmem:[#allocation3 + $0xb08] sm:$0xff]
        %v969 = vld [vmem:[#allocation3 + $0xb10] sm:$0xff]
        %v970 = vld [vmem:[#allocation3 + $0xb18] sm:$0xff]
        %v971 = vld [vmem:[#allocation3 + $0xb20] sm:$0xff]
        %v972 = vld [vmem:[#allocation3 + $0xb28] sm:$0xff]
        %v973 = vld [vmem:[#allocation3 + $0xb30] sm:$0xff]
        %v974 = vld [vmem:[#allocation3 + $0xb38] sm:$0xff]
        %v975 = vld [vmem:[#allocation3 + $0xb40] sm:$0xff]
        %v976 = vld [vmem:[#allocation3 + $0xb48] sm:$0xff]
        %v977 = vld [vmem:[#allocation3 + $0xb50] sm:$0xff]
        %v978 = vld [vmem:[#allocation3 + $0xb58] sm:$0xff]
        %v979 = vld [vmem:[#allocation3 + $0xb60] sm:$0xff]
        %v980 = vld [vmem:[#allocation3 + $0xb68] sm:$0xff]
        %v981 = vld [vmem:[#allocation3 + $0xb70] sm:$0xff]
        %v982 = vld [vmem:[#allocation3 + $0xb78] sm:$0xff]
        %v983 = vld [vmem:[#allocation3 + $0xb80] sm:$0xff]
        %v984 = vld [vmem:[#allocation3 + $0xb88] sm:$0xff]
        %v985 = vld [vmem:[#allocation3 + $0xb90] sm:$0xff]
        %v986 = vld [vmem:[#allocation3 + $0xb98] sm:$0xff]
        %v987 = vld [vmem:[#allocation3 + $0xba0] sm:$0xff]
        %v988 = vld [vmem:[#allocation3 + $0xba8] sm:$0xff]
        %v989 = vld [vmem:[#allocation3 + $0xbb0] sm:$0xff]
        %v990 = vld [vmem:[#allocation3 + $0xbb8] sm:$0xff]
        %v991 = vld [vmem:[#allocation3 + $0xbc0] sm:$0xff]
        %v992 = vld [vmem:[#allocation3 + $0xbc8] sm:$0xff]
        %v993 = vld [vmem:[#allocation3 + $0xbd0] sm:$0xff]
        %v994 = vld [vmem:[#allocation3 + $0xbd8] sm:$0xff]
        %v995 = vld [vmem:[#allocation3 + $0xbe0] sm:$0xff]
        %v996 = vld [vmem:[#allocation3 + $0xbe8] sm:$0xff]
        %v997 = vld [vmem:[#allocation3 + $0xbf0] sm:$0xff]
        %v998 = vld [vmem:[#allocation3 + $0xbf8] sm:$0xff]
        %999 = vmatprep.subr.mxu0 %v616
        %1000 = vmatpush1.msra.mxu0 %v615
        %1001 = vmatprep.subr.mxu0 %v624
        %1002 = vmatpush1.msra.mxu0 %v623
        %1003 = vmatprep.subr.mxu0 %v632
        %1004 = vmatpush1.msra.mxu0 %v631
        %1005 = vmatprep.subr.mxu0 %v640
        %1006 = vmatpush1.msra.mxu0 %v639
        %1007 = vmatprep.subr.mxu0 %v648
        %1008 = vmatpush1.msra.mxu0 %v647
        %1009 = vmatprep.subr.mxu0 %v656
        %1010 = vmatpush1.msra.mxu0 %v655
        %1011 = vmatprep.subr.mxu0 %v664
        %1012 = vmatpush1.msra.mxu0 %v663
        %1013 = vmatprep.subr.mxu0 %v672
        %1014 = vmatpush1.msra.mxu0 %v671
        %1015 = vmatprep.subr.mxu0 %v680
        %1016 = vmatpush1.msra.mxu0 %v679
        %1017 = vmatprep.subr.mxu0 %v688
        %1018 = vmatpush1.msra.mxu0 %v687
        %1019 = vmatprep.subr.mxu0 %v696
        %1020 = vmatpush1.msra.mxu0 %v695
        %1021 = vmatprep.subr.mxu0 %v704
        %1022 = vmatpush1.msra.mxu0 %v703
        %1023 = vmatprep.subr.mxu0 %v712
        %1024 = vmatpush1.msra.mxu0 %v711
        %1025 = vmatprep.subr.mxu0 %v720
        %1026 = vmatpush1.msra.mxu0 %v719
        %1027 = vmatprep.subr.mxu0 %v728
        %1028 = vmatpush1.msra.mxu0 %v727
        %1029 = vmatprep.subr.mxu0 %v736
        %1030 = vmatpush1.msra.mxu0 %v735
        %1031 = vmatprep.subr.mxu0 %v744
        %1032 = vmatpush1.msra.mxu0 %v743
        %1033 = vmatprep.subr.mxu0 %v752
        %1034 = vmatpush1.msra.mxu0 %v751
        %1035 = vmatprep.subr.mxu0 %v760
        %1036 = vmatpush1.msra.mxu0 %v759
        %1037 = vmatprep.subr.mxu0 %v768
        %1038 = vmatpush1.msra.mxu0 %v767
        %1039 = vmatprep.subr.mxu0 %v776
        %1040 = vmatpush1.msra.mxu0 %v775
        %1041 = vmatprep.subr.mxu0 %v784
        %1042 = vmatpush1.msra.mxu0 %v783
        %1043 = vmatprep.subr.mxu0 %v792
        %1044 = vmatpush1.msra.mxu0 %v791
        %1045 = vmatprep.subr.mxu0 %v800
        %1046 = vmatpush1.msra.mxu0 %v799
        %1047 = vmatprep.subr.mxu0 %v808
        %1048 = vmatpush1.msra.mxu0 %v807
        %1049 = vmatprep.subr.mxu0 %v816
        %1050 = vmatpush1.msra.mxu0 %v815
        %1051 = vmatprep.subr.mxu0 %v824
        %1052 = vmatpush1.msra.mxu0 %v823
        %1053 = vmatprep.subr.mxu0 %v832
        %1054 = vmatpush1.msra.mxu0 %v831
        %1055 = vmatprep.subr.mxu0 %v840
        %1056 = vmatpush1.msra.mxu0 %v839
        %1057 = vmatprep.subr.mxu0 %v848
        %1058 = vmatpush1.msra.mxu0 %v847
        %1059 = vmatprep.subr.mxu0 %v856
        %1060 = vmatpush1.msra.mxu0 %v855
        %1061 = vmatprep.subr.mxu0 %v864
        %1062 = vmatpush1.msra.mxu0 %v863
        %1063 = vmatprep.mubr.f32.mxu0 %v592
        %1064 = vmatmul.mubr.f32.gmra.mrb[0].mxu0 %v584
        %v1065 = vpop.f32.mrb[0].mxu0
        %v1066 = vadd.f32 0.0, %v1065
        %v1067 = vpop.f32.mrb[0].mxu0
        %v1068 = vadd.f32 0.0, %v1067
        %1069 = vmatprep.mubr.f32.mxu0 %v593
        %1070 = vmatmul.mubr.f32.gmra.mrb[0].mxu0 %v585
        %v1071 = vpop.f32.mrb[0].mxu0
        %v1072 = vadd.f32 0.0, %v1071
        %v1073 = vpop.f32.mrb[0].mxu0
        %v1074 = vadd.f32 0.0, %v1073
        %1075 = vmatprep.mubr.f32.mxu0 %v594
        %1076 = vmatmul.mubr.f32.gmra.mrb[0].mxu0 %v586
        %v1077 = vpop.f32.mrb[0].mxu0
        %v1078 = vadd.f32 0.0, %v1077
        %v1079 = vpop.f32.mrb[0].mxu0
        %v1080 = vadd.f32 0.0, %v1079
        %1081 = vmatprep.mubr.f32.mxu0 %v595
        %1082 = vmatmul.mubr.f32.gmra.mrb[0].mxu0 %v587
        %v1083 = vpop.f32.mrb[0].mxu0
        %v1084 = vadd.f32 0.0, %v1083
        %v1085 = vpop.f32.mrb[0].mxu0
        %v1086 = vadd.f32 0.0, %v1085
        %1087 = vmatprep.mubr.f32.mxu0 %v596
        %1088 = vmatmul.mubr.f32.gmra.mrb[0].mxu0 %v588
        %v1089 = vpop.f32.mrb[0].mxu0
        %v1090 = vadd.f32 0.0, %v1089
        %v1091 = vpop.f32.mrb[0].mxu0
        %v1092 = vadd.f32 0.0, %v1091
        %1093 = vmatprep.mubr.f32.mxu0 %v597
        %1094 = vmatmul.mubr.f32.gmra.mrb[0].mxu0 %v589
        %v1095 = vpop.f32.mrb[0].mxu0
        %v1096 = vadd.f32 0.0, %v1095
        %v1097 = vpop.f32.mrb[0].mxu0
        %v1098 = vadd.f32 0.0, %v1097
        %1099 = vmatprep.mubr.f32.mxu0 %v598
        %1100 = vmatmul.mubr.f32.gmra.mrb[0].mxu0 %v590
        %v1101 = vpop.f32.mrb[0].mxu0
        %v1102 = vadd.f32 0.0, %v1101
        %v1103 = vpop.f32.mrb[0].mxu0
        %v1104 = vadd.f32 0.0, %v1103
        %1105 = vmatprep.mubr.f32.mxu0 %v600
        %1106 = vmatmul.mubr.f32.gmra.mrb[0].mxu0 %v592
        %v1107 = vpop.f32.mrb[0].mxu0
        %v1108 = vadd.f32 0.0, %v1107
        %v1109 = vpop.f32.mrb[0].mxu0
        %v1110 = vadd.f32 0.0, %v1109
        %1111 = vmatprep.mubr.f32.mxu0 %v601
        %1112 = vmatmul.mubr.f32.gmra.mrb[0].mxu0 %v593
        %v1113 = vpop.f32.mrb[0].mxu0
        %v1114 = vadd.f32 0.0, %v1113
        %v1115 = vpop.f32.mrb[0].mxu0
        %v1116 = vadd.f32 0.0, %v1115
        %1117 = vmatprep.mubr.f32.mxu0 %v602
        %1118 = vmatmul.mubr.f32.gmra.mrb[0].mxu0 %v594
        %v1119 = vpop.f32.mrb[0].mxu0
        %v1120 = vadd.f32 0.0, %v1119
        %v1121 = vpop.f32.mrb[0].mxu0
        %v1122 = vadd.f32 0.0, %v1121
        %1123 = vmatprep.mubr.f32.mxu0 %v603
        %1124 = vmatmul.mubr.f32.gmra.mrb[0].mxu0 %v595
        %v1125 = vpop.f32.mrb[0].mxu0
        %v1126 = vadd.f32 0.0, %v1125
        %v1127 = vpop.f32.mrb[0].mxu0
        %v1128 = vadd.f32 0.0, %v1127
        %1129 = vmatprep.mubr.f32.mxu0 %v604
        %1130 = vmatmul.mubr.f32.gmra.mrb[0].mxu0 %v596
        %v1131 = vpop.f32.mrb[0].mxu0
        %v1132 = vadd.f32 0.0, %v1131
        %v1133 = vpop.f32.mrb[0].mxu0
        %v1134 = vadd.f32 0.0, %v1133
        %1135 = vmatprep.mubr.f32.mxu0 %v605
        %1136 = vmatmul.mubr.f32.gmra.mrb[0].mxu0 %v597
        %v1137 = vpop.f32.mrb[0].mxu0
        %v1138 = vadd.f32 0.0, %v1137
        %v1139 = vpop.f32.mrb[0].mxu0
        %v1140 = vadd.f32 0.0, %v1139
        %1141 = vmatprep.mubr.f32.mxu0 %v606
        %1142 = vmatmul.mubr.f32.gmra.mrb[0].mxu0 %v598
        %v1143 = vpop.f32.mrb[0].mxu0
        %v1144 = vadd.f32 0.0, %v1143
        %v1145 = vpop.f32.mrb[0].mxu0
        %v1146 = vadd.f32 0.0, %v1145
        %1147 = vmatprep.mubr.f32.mxu0 %v608
        %1148 = vmatmul.mubr.f32.gmra.mrb[0].mxu0 %v600
        %v1149 = vpop.f32.mrb[0].mxu0
        %v1150 = vadd.f32 0.0, %v1149
        %v1151 = vpop.f32.mrb[0].mxu0
        %v1152 = vadd.f32 0.0, %v1151
        %1153 = vmatprep.mubr.f32.mxu0 %v609
        %1154 = vmatmul.mubr.f32.gmra.mrb[0].mxu0 %v601
        %v1155 = vpop.f32.mrb[0].mxu0
        %v1156 = vadd.f32 0.0, %v1155
        %v1157 = vpop.f32.mrb[0].mxu0
        %v1158 = vadd.f32 0.0, %v1157
        %1159 = vmatprep.mubr.f32.mxu0 %v610
        %1160 = vmatmul.mubr.f32.gmra.mrb[0].mxu0 %v602
        %v1161 = vpop.f32.mrb[0].mxu0
        %v1162 = vadd.f32 0.0, %v1161
        %v1163 = vpop.f32.mrb[0].mxu0
        %v1164 = vadd.f32 0.0, %v1163
        %1165 = vmatprep.mubr.f32.mxu0 %v611
        %1166 = vmatmul.mubr.f32.gmra.mrb[0].mxu0 %v603
        %v1167 = vpop.f32.mrb[0].mxu0
        %v1168 = vadd.f32 0.0, %v1167
        %v1169 = vpop.f32.mrb[0].mxu0
        %v1170 = vadd.f32 0.0, %v1169
        %1171 = vmatprep.mubr.f32.mxu0 %v612
        %1172 = vmatmul.mubr.f32.gmra.mrb[0].mxu0 %v604
        %v1173 = vpop.f32.mrb[0].mxu0
        %v1174 = vadd.f32 0.0, %v1173
        %v1175 = vpop.f32.mrb[0].mxu0
        %v1176 = vadd.f32 0.0, %v1175
        %1177 = vmatprep.mubr.f32.mxu0 %v613
        %1178 = vmatmul.mubr.f32.gmra.mrb[0].mxu0 %v605
        %v1179 = vpop.f32.mrb[0].mxu0
        %v1180 = vadd.f32 0.0, %v1179
        %v1181 = vpop.f32.mrb[0].mxu0
        %v1182 = vadd.f32 0.0, %v1181
        %1183 = vmatprep.mubr.f32.mxu0 %v614
        %1184 = vmatmul.mubr.f32.gmra.mrb[0].mxu0 %v606
        %v1185 = vpop.f32.mrb[0].mxu0
        %v1186 = vadd.f32 0.0, %v1185
        %v1187 = vpop.f32.mrb[0].mxu0
        %v1188 = vadd.f32 0.0, %v1187
        %1189 = vmatprep.mubr.f32.mxu0 %v585
        %1190 = vmatmul.mubr.f32.gmra.mrb[0].mxu0 %v608
        %v1191 = vpop.f32.mrb[0].mxu0
        %v1192 = vadd.f32 0.0, %v1191
        %v1193 = vpop.f32.mrb[0].mxu0
        %v1194 = vadd.f32 0.0, %v1193
        %1195 = vmatprep.mubr.f32.mxu0 %v586
        %1196 = vmatmul.mubr.f32.gmra.mrb[0].mxu0 %v609
        %v1197 = vpop.f32.mrb[0].mxu0
        %v1198 = vadd.f32 0.0, %v1197
        %v1199 = vpop.f32.mrb[0].mxu0
        %v1200 = vadd.f32 0.0, %v1199
        %1201 = vmatprep.mubr.f32.mxu0 %v587
        %1202 = vmatmul.mubr.f32.gmra.mrb[0].mxu0 %v610
        %v1203 = vpop.f32.mrb[0].mxu0
        %v1204 = vadd.f32 0.0, %v1203
        %v1205 = vpop.f32.mrb[0].mxu0
        %v1206 = vadd.f32 0.0, %v1205
        %1207 = vmatprep.mubr.f32.mxu0 %v588
        %1208 = vmatmul.mubr.f32.gmra.mrb[0].mxu0 %v611
        %v1209 = vpop.f32.mrb[0].mxu0
        %v1210 = vadd.f32 0.0, %v1209
        %v1211 = vpop.f32.mrb[0].mxu0
        %v1212 = vadd.f32 0.0, %v1211
        %1213 = vmatprep.mubr.f32.mxu0 %v589
        %1214 = vmatmul.mubr.f32.gmra.mrb[0].mxu0 %v612
        %v1215 = vpop.f32.mrb[0].mxu0
        %v1216 = vadd.f32 0.0, %v1215
        %v1217 = vpop.f32.mrb[0].mxu0
        %v1218 = vadd.f32 0.0, %v1217
        %1219 = vmatprep.mubr.f32.mxu0 %v590
        %1220 = vmatmul.mubr.f32.gmra.mrb[0].mxu0 %v613
        %v1221 = vpop.f32.mrb[0].mxu0
        %v1222 = vadd.f32 0.0, %v1221
        %v1223 = vpop.f32.mrb[0].mxu0
        %v1224 = vadd.f32 0.0, %v1223
        %1225 = vmatprep.mubr.f32.mxu0 %v584
        %1226 = vmatmul.mubr.f32.gmra.mrb[0].mxu0 %v614
        %v1227 = vpop.f32.mrb[0].mxu0
        %v1228 = vadd.f32 0.0, %v1227
        %v1229 = vpop.f32.mrb[0].mxu0
        %v1230 = vadd.f32 0.0, %v1229
        %1231 = vdwg.mxu0
        %1232 = vmatprep.subr.mxu0 %v872
        %1233 = vmatpush1.msra.mxu0 %v871
        %1234 = vmatprep.subr.mxu0 %v880
        %1235 = vmatpush1.msra.mxu0 %v879
        %1236 = vmatprep.subr.mxu0 %v888
        %1237 = vmatpush1.msra.mxu0 %v887
        %1238 = vmatprep.subr.mxu0 %v896
        %1239 = vmatpush1.msra.mxu0 %v895
        %1240 = vmatprep.subr.mxu0 %v904
        %1241 = vmatpush1.msra.mxu0 %v903
        %1242 = vmatprep.subr.mxu0 %v912
        %1243 = vmatpush1.msra.mxu0 %v911
        %1244 = vmatprep.subr.mxu0 %v920
        %1245 = vmatpush1.msra.mxu0 %v919
        %1246 = vmatprep.subr.mxu0 %v928
        %1247 = vmatpush1.msra.mxu0 %v927
        %1248 = vmatprep.subr.mxu0 %v936
        %1249 = vmatpush1.msra.mxu0 %v935
        %1250 = vmatprep.subr.mxu0 %v944
        %1251 = vmatpush1.msra.mxu0 %v943
        %1252 = vmatprep.subr.mxu0 %v952
        %1253 = vmatpush1.msra.mxu0 %v951
        %1254 = vmatprep.subr.mxu0 %v960
        %1255 = vmatpush1.msra.mxu0 %v959
        %1256 = vmatprep.subr.mxu0 %v968
        %1257 = vmatpush1.msra.mxu0 %v967
        %1258 = vmatprep.subr.mxu0 %v976
        %1259 = vmatpush1.msra.mxu0 %v975
        %1260 = vmatprep.subr.mxu0 %v984
        %1261 = vmatpush1.msra.mxu0 %v983
        %1262 = vmatprep.subr.mxu0 %v992
        %1263 = vmatpush1.msra.mxu0 %v991
        %1264 = vmatprep.subr.mxu0 0.0
        %1265 = vmatpush1.msra.mxu0 0.0
        %1266 = vmatprep.subr.mxu0 0.0
        %1267 = vmatpush1.msra.mxu0 0.0
        %1268 = vmatprep.subr.mxu0 0.0
        %1269 = vmatpush1.msra.mxu0 0.0
        %1270 = vmatprep.subr.mxu0 0.0
        %1271 = vmatpush1.msra.mxu0 0.0
        %1272 = vmatprep.subr.mxu0 0.0
        %1273 = vmatpush1.msra.mxu0 0.0
        %1274 = vmatprep.subr.mxu0 0.0
        %1275 = vmatpush1.msra.mxu0 0.0
        %1276 = vmatprep.subr.mxu0 0.0
        %1277 = vmatpush1.msra.mxu0 0.0
        %1278 = vmatprep.subr.mxu0 0.0
        %1279 = vmatpush1.msra.mxu0 0.0
        %1280 = vmatprep.subr.mxu0 0.0
        %1281 = vmatpush1.msra.mxu0 0.0
        %1282 = vmatprep.subr.mxu0 0.0
        %1283 = vmatpush1.msra.mxu0 0.0
        %1284 = vmatprep.subr.mxu0 0.0
        %1285 = vmatpush1.msra.mxu0 0.0
        %1286 = vmatprep.subr.mxu0 0.0
        %1287 = vmatpush1.msra.mxu0 0.0
        %1288 = vmatprep.subr.mxu0 0.0
        %1289 = vmatpush1.msra.mxu0 0.0
        %1290 = vmatprep.subr.mxu0 0.0
        %1291 = vmatpush1.msra.mxu0 0.0
        %1292 = vmatprep.subr.mxu0 0.0
        %1293 = vmatpush1.msra.mxu0 0.0
        %1294 = vmatprep.subr.mxu0 0.0
        %1295 = vmatpush1.msra.mxu0 0.0
        %1296 = vmatprep.mubr.f32.mxu0 0.0
        %1297 = vmatmul.mubr.f32.gmra.mrb[0].mxu0 %v600
        %v1298 = vpop.f32.mrb[0].mxu0
        %v1299 = vadd.f32 %v1066, %v1298
        %v1300 = vpop.f32.mrb[0].mxu0
        %v1301 = vadd.f32 %v1068, %v1300
        %1302 = vmatprep.mubr.f32.mxu0 0.0
        %1303 = vmatmul.mubr.f32.gmra.mrb[0].mxu0 %v601
        %v1304 = vpop.f32.mrb[0].mxu0
        %v1305 = vadd.f32 %v1072, %v1304
        %v1306 = vpop.f32.mrb[0].mxu0
        %v1307 = vadd.f32 %v1074, %v1306
        %1308 = vmatprep.mubr.f32.mxu0 0.0
        %1309 = vmatmul.mubr.f32.gmra.mrb[0].mxu0 %v602
        %v1310 = vpop.f32.mrb[0].mxu0
        %v1311 = vadd.f32 %v1078, %v1310
        %v1312 = vpop.f32.mrb[0].mxu0
        %v1313 = vadd.f32 %v1080, %v1312
        %1314 = vmatprep.mubr.f32.mxu0 0.0
        %1315 = vmatmul.mubr.f32.gmra.mrb[0].mxu0 %v603
        %v1316 = vpop.f32.mrb[0].mxu0
        %v1317 = vadd.f32 %v1084, %v1316
        %v1318 = vpop.f32.mrb[0].mxu0
        %v1319 = vadd.f32 %v1086, %v1318
        %1320 = vmatprep.mubr.f32.mxu0 0.0
        %1321 = vmatmul.mubr.f32.gmra.mrb[0].mxu0 %v604
        %v1322 = vpop.f32.mrb[0].mxu0
        %v1323 = vadd.f32 %v1090, %v1322
        %v1324 = vpop.f32.mrb[0].mxu0
        %v1325 = vadd.f32 %v1092, %v1324
        %1326 = vmatprep.mubr.f32.mxu0 0.0
        %1327 = vmatmul.mubr.f32.gmra.mrb[0].mxu0 %v605
        %v1328 = vpop.f32.mrb[0].mxu0
        %v1329 = vadd.f32 %v1096, %v1328
        %v1330 = vpop.f32.mrb[0].mxu0
        %v1331 = vadd.f32 %v1098, %v1330
        %1332 = vmatprep.mubr.f32.mxu0 0.0
        %1333 = vmatmul.mubr.f32.gmra.mrb[0].mxu0 %v606
        %v1334 = vpop.f32.mrb[0].mxu0
        %v1335 = vadd.f32 %v1102, %v1334
        %v1336 = vpop.f32.mrb[0].mxu0
        %v1337 = vadd.f32 %v1104, %v1336
        %1338 = vmatprep.mubr.f32.mxu0 0.0
        %1339 = vmatmul.mubr.f32.gmra.mrb[0].mxu0 %v608
        %v1340 = vpop.f32.mrb[0].mxu0
        %v1341 = vadd.f32 %v1108, %v1340
        %v1342 = vpop.f32.mrb[0].mxu0
        %v1343 = vadd.f32 %v1110, %v1342
        %1344 = vmatprep.mubr.f32.mxu0 0.0
        %1345 = vmatmul.mubr.f32.gmra.mrb[0].mxu0 %v609
        %v1346 = vpop.f32.mrb[0].mxu0
        %v1347 = vadd.f32 %v1114, %v1346
        %v1348 = vpop.f32.mrb[0].mxu0
        %v1349 = vadd.f32 %v1116, %v1348
        %1350 = vmatprep.mubr.f32.mxu0 0.0
        %1351 = vmatmul.mubr.f32.gmra.mrb[0].mxu0 %v610
        %v1352 = vpop.f32.mrb[0].mxu0
        %v1353 = vadd.f32 %v1120, %v1352
        %v1354 = vpop.f32.mrb[0].mxu0
        %v1355 = vadd.f32 %v1122, %v1354
        %1356 = vmatprep.mubr.f32.mxu0 0.0
        %1357 = vmatmul.mubr.f32.gmra.mrb[0].mxu0 %v611
        %v1358 = vpop.f32.mrb[0].mxu0
        %v1359 = vadd.f32 %v1126, %v1358
        %v1360 = vpop.f32.mrb[0].mxu0
        %v1361 = vadd.f32 %v1128, %v1360
        %1362 = vmatprep.mubr.f32.mxu0 0.0
        %1363 = vmatmul.mubr.f32.gmra.mrb[0].mxu0 %v612
        %v1364 = vpop.f32.mrb[0].mxu0
        %v1365 = vadd.f32 %v1132, %v1364
        %v1366 = vpop.f32.mrb[0].mxu0
        %v1367 = vadd.f32 %v1134, %v1366
        %1368 = vmatprep.mubr.f32.mxu0 0.0
        %1369 = vmatmul.mubr.f32.gmra.mrb[0].mxu0 %v613
        %v1370 = vpop.f32.mrb[0].mxu0
        %v1371 = vadd.f32 %v1138, %v1370
        %v1372 = vpop.f32.mrb[0].mxu0
        %v1373 = vadd.f32 %v1140, %v1372
        %1374 = vmatprep.mubr.f32.mxu0 0.0
        %1375 = vmatmul.mubr.f32.gmra.mrb[0].mxu0 %v614
        %v1376 = vpop.f32.mrb[0].mxu0
        %v1377 = vadd.f32 %v1144, %v1376
        %v1378 = vpop.f32.mrb[0].mxu0
        %v1379 = vadd.f32 %v1146, %v1378
        %1380 = vmatprep.mubr.f32.mxu0 0.0
        %1381 = vmatmul.mubr.f32.gmra.mrb[0].mxu0 %v585
        %v1382 = vpop.f32.mrb[0].mxu0
        %v1383 = vadd.f32 %v1150, %v1382
        %v1384 = vpop.f32.mrb[0].mxu0
        %v1385 = vadd.f32 %v1152, %v1384
        %1386 = vmatprep.mubr.f32.mxu0 0.0
        %1387 = vmatmul.mubr.f32.gmra.mrb[0].mxu0 %v586
        %v1388 = vpop.f32.mrb[0].mxu0
        %v1389 = vadd.f32 %v1156, %v1388
        %v1390 = vpop.f32.mrb[0].mxu0
        %v1391 = vadd.f32 %v1158, %v1390
        %1392 = vmatprep.mubr.f32.mxu0 0.0
        %1393 = vmatmul.mubr.f32.gmra.mrb[0].mxu0 %v587
        %v1394 = vpop.f32.mrb[0].mxu0
        %v1395 = vadd.f32 %v1162, %v1394
        %v1396 = vpop.f32.mrb[0].mxu0
        %v1397 = vadd.f32 %v1164, %v1396
        %1398 = vmatprep.mubr.f32.mxu0 0.0
        %1399 = vmatmul.mubr.f32.gmra.mrb[0].mxu0 %v588
        %v1400 = vpop.f32.mrb[0].mxu0
        %v1401 = vadd.f32 %v1168, %v1400
        %v1402 = vpop.f32.mrb[0].mxu0
        %v1403 = vadd.f32 %v1170, %v1402
        %1404 = vmatprep.mubr.f32.mxu0 0.0
        %1405 = vmatmul.mubr.f32.gmra.mrb[0].mxu0 %v589
        %v1406 = vpop.f32.mrb[0].mxu0
        %v1407 = vadd.f32 %v1174, %v1406
        %v1408 = vpop.f32.mrb[0].mxu0
        %v1409 = vadd.f32 %v1176, %v1408
        %1410 = vmatprep.mubr.f32.mxu0 0.0
        %1411 = vmatmul.mubr.f32.gmra.mrb[0].mxu0 %v590
        %v1412 = vpop.f32.mrb[0].mxu0
        %v1413 = vadd.f32 %v1180, %v1412
        %v1414 = vpop.f32.mrb[0].mxu0
        %v1415 = vadd.f32 %v1182, %v1414
        %1416 = vmatprep.mubr.f32.mxu0 0.0
        %1417 = vmatmul.mubr.f32.gmra.mrb[0].mxu0 %v584
        %v1418 = vpop.f32.mrb[0].mxu0
        %v1419 = vadd.f32 %v1186, %v1418
        %v1420 = vpop.f32.mrb[0].mxu0
        %v1421 = vadd.f32 %v1188, %v1420
        %1422 = vmatprep.mubr.f32.mxu0 0.0
        %1423 = vmatmul.mubr.f32.gmra.mrb[0].mxu0 %v593
        %v1424 = vpop.f32.mrb[0].mxu0
        %v1425 = vadd.f32 %v1192, %v1424
        %v1426 = vpop.f32.mrb[0].mxu0
        %v1427 = vadd.f32 %v1194, %v1426
        %1428 = vmatprep.mubr.f32.mxu0 0.0
        %1429 = vmatmul.mubr.f32.gmra.mrb[0].mxu0 %v594
        %v1430 = vpop.f32.mrb[0].mxu0
        %v1431 = vadd.f32 %v1198, %v1430
        %v1432 = vpop.f32.mrb[0].mxu0
        %v1433 = vadd.f32 %v1200, %v1432
        %1434 = vmatprep.mubr.f32.mxu0 0.0
        %1435 = vmatmul.mubr.f32.gmra.mrb[0].mxu0 %v595
        %v1436 = vpop.f32.mrb[0].mxu0
        %v1437 = vadd.f32 %v1204, %v1436
        %v1438 = vpop.f32.mrb[0].mxu0
        %v1439 = vadd.f32 %v1206, %v1438
        %1440 = vmatprep.mubr.f32.mxu0 0.0
        %1441 = vmatmul.mubr.f32.gmra.mrb[0].mxu0 %v596
        %v1442 = vpop.f32.mrb[0].mxu0
        %v1443 = vadd.f32 %v1210, %v1442
        %v1444 = vpop.f32.mrb[0].mxu0
        %v1445 = vadd.f32 %v1212, %v1444
        %1446 = vmatprep.mubr.f32.mxu0 0.0
        %1447 = vmatmul.mubr.f32.gmra.mrb[0].mxu0 %v597
        %v1448 = vpop.f32.mrb[0].mxu0
        %v1449 = vadd.f32 %v1216, %v1448
        %v1450 = vpop.f32.mrb[0].mxu0
        %v1451 = vadd.f32 %v1218, %v1450
        %1452 = vmatprep.mubr.f32.mxu0 0.0
        %1453 = vmatmul.mubr.f32.gmra.mrb[0].mxu0 %v598
        %v1454 = vpop.f32.mrb[0].mxu0
        %v1455 = vadd.f32 %v1222, %v1454
        %v1456 = vpop.f32.mrb[0].mxu0
        %v1457 = vadd.f32 %v1224, %v1456
        %1458 = vmatprep.mubr.f32.mxu0 0.0
        %1459 = vmatmul.mubr.f32.gmra.mrb[0].mxu0 %v592
        %v1460 = vpop.f32.mrb[0].mxu0
        %v1461 = vadd.f32 %v1228, %v1460
        %v1462 = vpop.f32.mrb[0].mxu0
        %v1463 = vadd.f32 %v1230, %v1462
        %1464 = vdwg.mxu0
        %1465 = vmatprep.subr.mxu0 %v618
        %1466 = vmatpush1.msra.mxu0 %v617
        %1467 = vmatprep.subr.mxu0 %v626
        %1468 = vmatpush1.msra.mxu0 %v625
        %1469 = vmatprep.subr.mxu0 %v634
        %1470 = vmatpush1.msra.mxu0 %v633
        %1471 = vmatprep.subr.mxu0 %v642
        %1472 = vmatpush1.msra.mxu0 %v641
        %1473 = vmatprep.subr.mxu0 %v650
        %1474 = vmatpush1.msra.mxu0 %v649
        %1475 = vmatprep.subr.mxu0 %v658
        %1476 = vmatpush1.msra.mxu0 %v657
        %1477 = vmatprep.subr.mxu0 %v666
        %1478 = vmatpush1.msra.mxu0 %v665
        %1479 = vmatprep.subr.mxu0 %v674
        %1480 = vmatpush1.msra.mxu0 %v673
        %1481 = vmatprep.subr.mxu0 %v682
        %1482 = vmatpush1.msra.mxu0 %v681
        %1483 = vmatprep.subr.mxu0 %v690
        %1484 = vmatpush1.msra.mxu0 %v689
        %1485 = vmatprep.subr.mxu0 %v698
        %1486 = vmatpush1.msra.mxu0 %v697
        %1487 = vmatprep.subr.mxu0 %v706
        %1488 = vmatpush1.msra.mxu0 %v705
        %1489 = vmatprep.subr.mxu0 %v714
        %1490 = vmatpush1.msra.mxu0 %v713
        %1491 = vmatprep.subr.mxu0 %v722
        %1492 = vmatpush1.msra.mxu0 %v721
        %1493 = vmatprep.subr.mxu0 %v730
        %1494 = vmatpush1.msra.mxu0 %v729
        %1495 = vmatprep.subr.mxu0 %v738
        %1496 = vmatpush1.msra.mxu0 %v737
        %1497 = vmatprep.subr.mxu0 %v746
        %1498 = vmatpush1.msra.mxu0 %v745
        %1499 = vmatprep.subr.mxu0 %v754
        %1500 = vmatpush1.msra.mxu0 %v753
        %1501 = vmatprep.subr.mxu0 %v762
        %1502 = vmatpush1.msra.mxu0 %v761
        %1503 = vmatprep.subr.mxu0 %v770
        %1504 = vmatpush1.msra.mxu0 %v769
        %1505 = vmatprep.subr.mxu0 %v778
        %1506 = vmatpush1.msra.mxu0 %v777
        %1507 = vmatprep.subr.mxu0 %v786
        %1508 = vmatpush1.msra.mxu0 %v785
        %1509 = vmatprep.subr.mxu0 %v794
        %1510 = vmatpush1.msra.mxu0 %v793
        %1511 = vmatprep.subr.mxu0 %v802
        %1512 = vmatpush1.msra.mxu0 %v801
        %1513 = vmatprep.subr.mxu0 %v810
        %1514 = vmatpush1.msra.mxu0 %v809
        %1515 = vmatprep.subr.mxu0 %v818
        %1516 = vmatpush1.msra.mxu0 %v817
        %1517 = vmatprep.subr.mxu0 %v826
        %1518 = vmatpush1.msra.mxu0 %v825
        %1519 = vmatprep.subr.mxu0 %v834
        %1520 = vmatpush1.msra.mxu0 %v833
        %1521 = vmatprep.subr.mxu0 %v842
        %1522 = vmatpush1.msra.mxu0 %v841
        %1523 = vmatprep.subr.mxu0 %v850
        %1524 = vmatpush1.msra.mxu0 %v849
        %1525 = vmatprep.subr.mxu0 %v858
        %1526 = vmatpush1.msra.mxu0 %v857
        %1527 = vmatprep.subr.mxu0 %v866
        %1528 = vmatpush1.msra.mxu0 %v865
        %1529 = vmatprep.mubr.f32.mxu0 %v592
        %1530 = vmatmul.mubr.f32.gmra.mrb[0].mxu0 %v584
        %v1531 = vpop.f32.mrb[0].mxu0
        %v1532 = vadd.f32 0.0, %v1531
        %v1533 = vpop.f32.mrb[0].mxu0
        %v1534 = vadd.f32 0.0, %v1533
        %1535 = vmatprep.mubr.f32.mxu0 %v593
        %1536 = vmatmul.mubr.f32.gmra.mrb[0].mxu0 %v585
        %v1537 = vpop.f32.mrb[0].mxu0
        %v1538 = vadd.f32 0.0, %v1537
        %v1539 = vpop.f32.mrb[0].mxu0
        %v1540 = vadd.f32 0.0, %v1539
        %1541 = vmatprep.mubr.f32.mxu0 %v594
        %1542 = vmatmul.mubr.f32.gmra.mrb[0].mxu0 %v586
        %v1543 = vpop.f32.mrb[0].mxu0
        %v1544 = vadd.f32 0.0, %v1543
        %v1545 = vpop.f32.mrb[0].mxu0
        %v1546 = vadd.f32 0.0, %v1545
        %1547 = vmatprep.mubr.f32.mxu0 %v595
        %1548 = vmatmul.mubr.f32.gmra.mrb[0].mxu0 %v587
        %v1549 = vpop.f32.mrb[0].mxu0
        %v1550 = vadd.f32 0.0, %v1549
        %v1551 = vpop.f32.mrb[0].mxu0
        %v1552 = vadd.f32 0.0, %v1551
        %1553 = vmatprep.mubr.f32.mxu0 %v596
        %1554 = vmatmul.mubr.f32.gmra.mrb[0].mxu0 %v588
        %v1555 = vpop.f32.mrb[0].mxu0
        %v1556 = vadd.f32 0.0, %v1555
        %v1557 = vpop.f32.mrb[0].mxu0
        %v1558 = vadd.f32 0.0, %v1557
        %1559 = vmatprep.mubr.f32.mxu0 %v597
        %1560 = vmatmul.mubr.f32.gmra.mrb[0].mxu0 %v589
        %v1561 = vpop.f32.mrb[0].mxu0
        %v1562 = vadd.f32 0.0, %v1561
        %v1563 = vpop.f32.mrb[0].mxu0
        %v1564 = vadd.f32 0.0, %v1563
        %1565 = vmatprep.mubr.f32.mxu0 %v598
        %1566 = vmatmul.mubr.f32.gmra.mrb[0].mxu0 %v590
        %v1567 = vpop.f32.mrb[0].mxu0
        %v1568 = vadd.f32 0.0, %v1567
        %v1569 = vpop.f32.mrb[0].mxu0
        %v1570 = vadd.f32 0.0, %v1569
        %1571 = vmatprep.mubr.f32.mxu0 %v600
        %1572 = vmatmul.mubr.f32.gmra.mrb[0].mxu0 %v592
        %v1573 = vpop.f32.mrb[0].mxu0
        %v1574 = vadd.f32 0.0, %v1573
        %v1575 = vpop.f32.mrb[0].mxu0
        %v1576 = vadd.f32 0.0, %v1575
        %1577 = vmatprep.mubr.f32.mxu0 %v601
        %1578 = vmatmul.mubr.f32.gmra.mrb[0].mxu0 %v593
        %v1579 = vpop.f32.mrb[0].mxu0
        %v1580 = vadd.f32 0.0, %v1579
        %v1581 = vpop.f32.mrb[0].mxu0
        %v1582 = vadd.f32 0.0, %v1581
        %1583 = vmatprep.mubr.f32.mxu0 %v602
        %1584 = vmatmul.mubr.f32.gmra.mrb[0].mxu0 %v594
        %v1585 = vpop.f32.mrb[0].mxu0
        %v1586 = vadd.f32 0.0, %v1585
        %v1587 = vpop.f32.mrb[0].mxu0
        %v1588 = vadd.f32 0.0, %v1587
        %1589 = vmatprep.mubr.f32.mxu0 %v603
        %1590 = vmatmul.mubr.f32.gmra.mrb[0].mxu0 %v595
        %v1591 = vpop.f32.mrb[0].mxu0
        %v1592 = vadd.f32 0.0, %v1591
        %v1593 = vpop.f32.mrb[0].mxu0
        %v1594 = vadd.f32 0.0, %v1593
        %1595 = vmatprep.mubr.f32.mxu0 %v604
        %1596 = vmatmul.mubr.f32.gmra.mrb[0].mxu0 %v596
        %v1597 = vpop.f32.mrb[0].mxu0
        %v1598 = vadd.f32 0.0, %v1597
        %v1599 = vpop.f32.mrb[0].mxu0
        %v1600 = vadd.f32 0.0, %v1599
        %1601 = vmatprep.mubr.f32.mxu0 %v605
        %1602 = vmatmul.mubr.f32.gmra.mrb[0].mxu0 %v597
        %v1603 = vpop.f32.mrb[0].mxu0
        %v1604 = vadd.f32 0.0, %v1603
        %v1605 = vpop.f32.mrb[0].mxu0
        %v1606 = vadd.f32 0.0, %v1605
        %1607 = vmatprep.mubr.f32.mxu0 %v606
        %1608 = vmatmul.mubr.f32.gmra.mrb[0].mxu0 %v598
        %v1609 = vpop.f32.mrb[0].mxu0
        %v1610 = vadd.f32 0.0, %v1609
        %v1611 = vpop.f32.mrb[0].mxu0
        %v1612 = vadd.f32 0.0, %v1611
        %1613 = vmatprep.mubr.f32.mxu0 %v608
        %1614 = vmatmul.mubr.f32.gmra.mrb[0].mxu0 %v600
        %v1615 = vpop.f32.mrb[0].mxu0
        %v1616 = vadd.f32 0.0, %v1615
        %v1617 = vpop.f32.mrb[0].mxu0
        %v1618 = vadd.f32 0.0, %v1617
        %1619 = vmatprep.mubr.f32.mxu0 %v609
        %1620 = vmatmul.mubr.f32.gmra.mrb[0].mxu0 %v601
        %v1621 = vpop.f32.mrb[0].mxu0
        %v1622 = vadd.f32 0.0, %v1621
        %v1623 = vpop.f32.mrb[0].mxu0
        %v1624 = vadd.f32 0.0, %v1623
        %1625 = vmatprep.mubr.f32.mxu0 %v610
        %1626 = vmatmul.mubr.f32.gmra.mrb[0].mxu0 %v602
        %v1627 = vpop.f32.mrb[0].mxu0
        %v1628 = vadd.f32 0.0, %v1627
        %v1629 = vpop.f32.mrb[0].mxu0
        %v1630 = vadd.f32 0.0, %v1629
        %1631 = vmatprep.mubr.f32.mxu0 %v611
        %1632 = vmatmul.mubr.f32.gmra.mrb[0].mxu0 %v603
        %v1633 = vpop.f32.mrb[0].mxu0
        %v1634 = vadd.f32 0.0, %v1633
        %v1635 = vpop.f32.mrb[0].mxu0
        %v1636 = vadd.f32 0.0, %v1635
        %1637 = vmatprep.mubr.f32.mxu0 %v612
        %1638 = vmatmul.mubr.f32.gmra.mrb[0].mxu0 %v604
        %v1639 = vpop.f32.mrb[0].mxu0
        %v1640 = vadd.f32 0.0, %v1639
        %v1641 = vpop.f32.mrb[0].mxu0
        %v1642 = vadd.f32 0.0, %v1641
        %1643 = vmatprep.mubr.f32.mxu0 %v613
        %1644 = vmatmul.mubr.f32.gmra.mrb[0].mxu0 %v605
        %v1645 = vpop.f32.mrb[0].mxu0
        %v1646 = vadd.f32 0.0, %v1645
        %v1647 = vpop.f32.mrb[0].mxu0
        %v1648 = vadd.f32 0.0, %v1647
        %1649 = vmatprep.mubr.f32.mxu0 %v614
        %1650 = vmatmul.mubr.f32.gmra.mrb[0].mxu0 %v606
        %v1651 = vpop.f32.mrb[0].mxu0
        %v1652 = vadd.f32 0.0, %v1651
        %v1653 = vpop.f32.mrb[0].mxu0
        %v1654 = vadd.f32 0.0, %v1653
        %1655 = vmatprep.mubr.f32.mxu0 %v585
        %1656 = vmatmul.mubr.f32.gmra.mrb[0].mxu0 %v608
        %v1657 = vpop.f32.mrb[0].mxu0
        %v1658 = vadd.f32 0.0, %v1657
        %v1659 = vpop.f32.mrb[0].mxu0
        %v1660 = vadd.f32 0.0, %v1659
        %1661 = vmatprep.mubr.f32.mxu0 %v586
        %1662 = vmatmul.mubr.f32.gmra.mrb[0].mxu0 %v609
        %v1663 = vpop.f32.mrb[0].mxu0
        %v1664 = vadd.f32 0.0, %v1663
        %v1665 = vpop.f32.mrb[0].mxu0
        %v1666 = vadd.f32 0.0, %v1665
        %1667 = vmatprep.mubr.f32.mxu0 %v587
        %1668 = vmatmul.mubr.f32.gmra.mrb[0].mxu0 %v610
        %v1669 = vpop.f32.mrb[0].mxu0
        %v1670 = vadd.f32 0.0, %v1669
        %v1671 = vpop.f32.mrb[0].mxu0
        %v1672 = vadd.f32 0.0, %v1671
        %1673 = vmatprep.mubr.f32.mxu0 %v588
        %1674 = vmatmul.mubr.f32.gmra.mrb[0].mxu0 %v611
        %v1675 = vpop.f32.mrb[0].mxu0
        %v1676 = vadd.f32 0.0, %v1675
        %v1677 = vpop.f32.mrb[0].mxu0
        %v1678 = vadd.f32 0.0, %v1677
        %1679 = vmatprep.mubr.f32.mxu0 %v589
        %1680 = vmatmul.mubr.f32.gmra.mrb[0].mxu0 %v612
        %v1681 = vpop.f32.mrb[0].mxu0
        %v1682 = vadd.f32 0.0, %v1681
        %v1683 = vpop.f32.mrb[0].mxu0
        %v1684 = vadd.f32 0.0, %v1683
        %1685 = vmatprep.mubr.f32.mxu0 %v590
        %1686 = vmatmul.mubr.f32.gmra.mrb[0].mxu0 %v613
        %v1687 = vpop.f32.mrb[0].mxu0
        %v1688 = vadd.f32 0.0, %v1687
        %v1689 = vpop.f32.mrb[0].mxu0
        %v1690 = vadd.f32 0.0, %v1689
        %1691 = vmatprep.mubr.f32.mxu0 %v584
        %1692 = vmatmul.mubr.f32.gmra.mrb[0].mxu0 %v614
        %v1693 = vpop.f32.mrb[0].mxu0
        %v1694 = vadd.f32 0.0, %v1693
        %v1695 = vpop.f32.mrb[0].mxu0
        %v1696 = vadd.f32 0.0, %v1695
        %1697 = vdwg.mxu0
        %1698 = vmatprep.subr.mxu0 %v874
        %1699 = vmatpush1.msra.mxu0 %v873
        %1700 = vmatprep.subr.mxu0 %v882
        %1701 = vmatpush1.msra.mxu0 %v881
        %1702 = vmatprep.subr.mxu0 %v890
        %1703 = vmatpush1.msra.mxu0 %v889
        %1704 = vmatprep.subr.mxu0 %v898
        %1705 = vmatpush1.msra.mxu0 %v897
        %1706 = vmatprep.subr.mxu0 %v906
        %1707 = vmatpush1.msra.mxu0 %v905
        %1708 = vmatprep.subr.mxu0 %v914
        %1709 = vmatpush1.msra.mxu0 %v913
        %1710 = vmatprep.subr.mxu0 %v922
        %1711 = vmatpush1.msra.mxu0 %v921
        %1712 = vmatprep.subr.mxu0 %v930
        %1713 = vmatpush1.msra.mxu0 %v929
        %1714 = vmatprep.subr.mxu0 %v938
        %1715 = vmatpush1.msra.mxu0 %v937
        %1716 = vmatprep.subr.mxu0 %v946
        %1717 = vmatpush1.msra.mxu0 %v945
        %1718 = vmatprep.subr.mxu0 %v954
        %1719 = vmatpush1.msra.mxu0 %v953
        %1720 = vmatprep.subr.mxu0 %v962
        %1721 = vmatpush1.msra.mxu0 %v961
        %1722 = vmatprep.subr.mxu0 %v970
        %1723 = vmatpush1.msra.mxu0 %v969
        %1724 = vmatprep.subr.mxu0 %v978
        %1725 = vmatpush1.msra.mxu0 %v977
        %1726 = vmatprep.subr.mxu0 %v986
        %1727 = vmatpush1.msra.mxu0 %v985
        %1728 = vmatprep.subr.mxu0 %v994
        %1729 = vmatpush1.msra.mxu0 %v993
        %1730 = vmatprep.subr.mxu0 0.0
        %1731 = vmatpush1.msra.mxu0 0.0
        %1732 = vmatprep.subr.mxu0 0.0
        %1733 = vmatpush1.msra.mxu0 0.0
        %1734 = vmatprep.subr.mxu0 0.0
        %1735 = vmatpush1.msra.mxu0 0.0
        %1736 = vmatprep.subr.mxu0 0.0
        %1737 = vmatpush1.msra.mxu0 0.0
        %1738 = vmatprep.subr.mxu0 0.0
        %1739 = vmatpush1.msra.mxu0 0.0
        %1740 = vmatprep.subr.mxu0 0.0
        %1741 = vmatpush1.msra.mxu0 0.0
        %1742 = vmatprep.subr.mxu0 0.0
        %1743 = vmatpush1.msra.mxu0 0.0
        %1744 = vmatprep.subr.mxu0 0.0
        %1745 = vmatpush1.msra.mxu0 0.0
        %1746 = vmatprep.subr.mxu0 0.0
        %1747 = vmatpush1.msra.mxu0 0.0
        %1748 = vmatprep.subr.mxu0 0.0
        %1749 = vmatpush1.msra.mxu0 0.0
        %1750 = vmatprep.subr.mxu0 0.0
        %1751 = vmatpush1.msra.mxu0 0.0
        %1752 = vmatprep.subr.mxu0 0.0
        %1753 = vmatpush1.msra.mxu0 0.0
        %1754 = vmatprep.subr.mxu0 0.0
        %1755 = vmatpush1.msra.mxu0 0.0
        %1756 = vmatprep.subr.mxu0 0.0
        %1757 = vmatpush1.msra.mxu0 0.0
        %1758 = vmatprep.subr.mxu0 0.0
        %1759 = vmatpush1.msra.mxu0 0.0
        %1760 = vmatprep.subr.mxu0 0.0
        %1761 = vmatpush1.msra.mxu0 0.0
        %1762 = vmatprep.mubr.f32.mxu0 0.0
        %1763 = vmatmul.mubr.f32.gmra.mrb[0].mxu0 %v600
        %v1764 = vpop.f32.mrb[0].mxu0
        %v1765 = vadd.f32 %v1532, %v1764
        %v1766 = vpop.f32.mrb[0].mxu0
        %v1767 = vadd.f32 %v1534, %v1766
        %1768 = vmatprep.mubr.f32.mxu0 0.0
        %1769 = vmatmul.mubr.f32.gmra.mrb[0].mxu0 %v601
        %v1770 = vpop.f32.mrb[0].mxu0
        %v1771 = vadd.f32 %v1538, %v1770
        %v1772 = vpop.f32.mrb[0].mxu0
        %v1773 = vadd.f32 %v1540, %v1772
        %1774 = vmatprep.mubr.f32.mxu0 0.0
        %1775 = vmatmul.mubr.f32.gmra.mrb[0].mxu0 %v602
        %v1776 = vpop.f32.mrb[0].mxu0
        %v1777 = vadd.f32 %v1544, %v1776
        %v1778 = vpop.f32.mrb[0].mxu0
        %v1779 = vadd.f32 %v1546, %v1778
        %1780 = vmatprep.mubr.f32.mxu0 0.0
        %1781 = vmatmul.mubr.f32.gmra.mrb[0].mxu0 %v603
        %v1782 = vpop.f32.mrb[0].mxu0
        %v1783 = vadd.f32 %v1550, %v1782
        %v1784 = vpop.f32.mrb[0].mxu0
        %v1785 = vadd.f32 %v1552, %v1784
        %1786 = vmatprep.mubr.f32.mxu0 0.0
        %1787 = vmatmul.mubr.f32.gmra.mrb[0].mxu0 %v604
        %v1788 = vpop.f32.mrb[0].mxu0
        %v1789 = vadd.f32 %v1556, %v1788
        %v1790 = vpop.f32.mrb[0].mxu0
        %v1791 = vadd.f32 %v1558, %v1790
        %1792 = vmatprep.mubr.f32.mxu0 0.0
        %1793 = vmatmul.mubr.f32.gmra.mrb[0].mxu0 %v605
        %v1794 = vpop.f32.mrb[0].mxu0
        %v1795 = vadd.f32 %v1562, %v1794
        %v1796 = vpop.f32.mrb[0].mxu0
        %v1797 = vadd.f32 %v1564, %v1796
        %1798 = vmatprep.mubr.f32.mxu0 0.0
        %1799 = vmatmul.mubr.f32.gmra.mrb[0].mxu0 %v606
        %v1800 = vpop.f32.mrb[0].mxu0
        %v1801 = vadd.f32 %v1568, %v1800
        %v1802 = vpop.f32.mrb[0].mxu0
        %v1803 = vadd.f32 %v1570, %v1802
        %1804 = vmatprep.mubr.f32.mxu0 0.0
        %1805 = vmatmul.mubr.f32.gmra.mrb[0].mxu0 %v608
        %v1806 = vpop.f32.mrb[0].mxu0
        %v1807 = vadd.f32 %v1574, %v1806
        %v1808 = vpop.f32.mrb[0].mxu0
        %v1809 = vadd.f32 %v1576, %v1808
        %1810 = vmatprep.mubr.f32.mxu0 0.0
        %1811 = vmatmul.mubr.f32.gmra.mrb[0].mxu0 %v609
        %v1812 = vpop.f32.mrb[0].mxu0
        %v1813 = vadd.f32 %v1580, %v1812
        %v1814 = vpop.f32.mrb[0].mxu0
        %v1815 = vadd.f32 %v1582, %v1814
        %1816 = vmatprep.mubr.f32.mxu0 0.0
        %1817 = vmatmul.mubr.f32.gmra.mrb[0].mxu0 %v610
        %v1818 = vpop.f32.mrb[0].mxu0
        %v1819 = vadd.f32 %v1586, %v1818
        %v1820 = vpop.f32.mrb[0].mxu0
        %v1821 = vadd.f32 %v1588, %v1820
        %1822 = vmatprep.mubr.f32.mxu0 0.0
        %1823 = vmatmul.mubr.f32.gmra.mrb[0].mxu0 %v611
        %v1824 = vpop.f32.mrb[0].mxu0
        %v1825 = vadd.f32 %v1592, %v1824
        %v1826 = vpop.f32.mrb[0].mxu0
        %v1827 = vadd.f32 %v1594, %v1826
        %1828 = vmatprep.mubr.f32.mxu0 0.0
        %1829 = vmatmul.mubr.f32.gmra.mrb[0].mxu0 %v612
        %v1830 = vpop.f32.mrb[0].mxu0
        %v1831 = vadd.f32 %v1598, %v1830
        %v1832 = vpop.f32.mrb[0].mxu0
        %v1833 = vadd.f32 %v1600, %v1832
        %1834 = vmatprep.mubr.f32.mxu0 0.0
        %1835 = vmatmul.mubr.f32.gmra.mrb[0].mxu0 %v613
        %v1836 = vpop.f32.mrb[0].mxu0
        %v1837 = vadd.f32 %v1604, %v1836
        %v1838 = vpop.f32.mrb[0].mxu0
        %v1839 = vadd.f32 %v1606, %v1838
        %1840 = vmatprep.mubr.f32.mxu0 0.0
        %1841 = vmatmul.mubr.f32.gmra.mrb[0].mxu0 %v614
        %v1842 = vpop.f32.mrb[0].mxu0
        %v1843 = vadd.f32 %v1610, %v1842
        %v1844 = vpop.f32.mrb[0].mxu0
        %v1845 = vadd.f32 %v1612, %v1844
        %1846 = vmatprep.mubr.f32.mxu0 0.0
        %1847 = vmatmul.mubr.f32.gmra.mrb[0].mxu0 %v585
        %v1848 = vpop.f32.mrb[0].mxu0
        %v1849 = vadd.f32 %v1616, %v1848
        %v1850 = vpop.f32.mrb[0].mxu0
        %v1851 = vadd.f32 %v1618, %v1850
        %1852 = vmatprep.mubr.f32.mxu0 0.0
        %1853 = vmatmul.mubr.f32.gmra.mrb[0].mxu0 %v586
        %v1854 = vpop.f32.mrb[0].mxu0
        %v1855 = vadd.f32 %v1622, %v1854
        %v1856 = vpop.f32.mrb[0].mxu0
        %v1857 = vadd.f32 %v1624, %v1856
        %1858 = vmatprep.mubr.f32.mxu0 0.0
        %1859 = vmatmul.mubr.f32.gmra.mrb[0].mxu0 %v587
        %v1860 = vpop.f32.mrb[0].mxu0
        %v1861 = vadd.f32 %v1628, %v1860
        %v1862 = vpop.f32.mrb[0].mxu0
        %v1863 = vadd.f32 %v1630, %v1862
        %1864 = vmatprep.mubr.f32.mxu0 0.0
        %1865 = vmatmul.mubr.f32.gmra.mrb[0].mxu0 %v588
        %v1866 = vpop.f32.mrb[0].mxu0
        %v1867 = vadd.f32 %v1634, %v1866
        %v1868 = vpop.f32.mrb[0].mxu0
        %v1869 = vadd.f32 %v1636, %v1868
        %1870 = vmatprep.mubr.f32.mxu0 0.0
        %1871 = vmatmul.mubr.f32.gmra.mrb[0].mxu0 %v589
        %v1872 = vpop.f32.mrb[0].mxu0
        %v1873 = vadd.f32 %v1640, %v1872
        %v1874 = vpop.f32.mrb[0].mxu0
        %v1875 = vadd.f32 %v1642, %v1874
        %1876 = vmatprep.mubr.f32.mxu0 0.0
        %1877 = vmatmul.mubr.f32.gmra.mrb[0].mxu0 %v590
        %v1878 = vpop.f32.mrb[0].mxu0
        %v1879 = vadd.f32 %v1646, %v1878
        %v1880 = vpop.f32.mrb[0].mxu0
        %v1881 = vadd.f32 %v1648, %v1880
        %1882 = vmatprep.mubr.f32.mxu0 0.0
        %1883 = vmatmul.mubr.f32.gmra.mrb[0].mxu0 %v584
        %v1884 = vpop.f32.mrb[0].mxu0
        %v1885 = vadd.f32 %v1652, %v1884
        %v1886 = vpop.f32.mrb[0].mxu0
        %v1887 = vadd.f32 %v1654, %v1886
        %1888 = vmatprep.mubr.f32.mxu0 0.0
        %1889 = vmatmul.mubr.f32.gmra.mrb[0].mxu0 %v593
        %v1890 = vpop.f32.mrb[0].mxu0
        %v1891 = vadd.f32 %v1658, %v1890
        %v1892 = vpop.f32.mrb[0].mxu0
        %v1893 = vadd.f32 %v1660, %v1892
        %1894 = vmatprep.mubr.f32.mxu0 0.0
        %1895 = vmatmul.mubr.f32.gmra.mrb[0].mxu0 %v594
        %v1896 = vpop.f32.mrb[0].mxu0
        %v1897 = vadd.f32 %v1664, %v1896
        %v1898 = vpop.f32.mrb[0].mxu0
        %v1899 = vadd.f32 %v1666, %v1898
        %1900 = vmatprep.mubr.f32.mxu0 0.0
        %1901 = vmatmul.mubr.f32.gmra.mrb[0].mxu0 %v595
        %v1902 = vpop.f32.mrb[0].mxu0
        %v1903 = vadd.f32 %v1670, %v1902
        %v1904 = vpop.f32.mrb[0].mxu0
        %v1905 = vadd.f32 %v1672, %v1904
        %1906 = vmatprep.mubr.f32.mxu0 0.0
        %1907 = vmatmul.mubr.f32.gmra.mrb[0].mxu0 %v596
        %v1908 = vpop.f32.mrb[0].mxu0
        %v1909 = vadd.f32 %v1676, %v1908
        %v1910 = vpop.f32.mrb[0].mxu0
        %v1911 = vadd.f32 %v1678, %v1910
        %1912 = vmatprep.mubr.f32.mxu0 0.0
        %1913 = vmatmul.mubr.f32.gmra.mrb[0].mxu0 %v597
        %v1914 = vpop.f32.mrb[0].mxu0
        %v1915 = vadd.f32 %v1682, %v1914
        %v1916 = vpop.f32.mrb[0].mxu0
        %v1917 = vadd.f32 %v1684, %v1916
        %1918 = vmatprep.mubr.f32.mxu0 0.0
        %1919 = vmatmul.mubr.f32.gmra.mrb[0].mxu0 %v598
        %v1920 = vpop.f32.mrb[0].mxu0
        %v1921 = vadd.f32 %v1688, %v1920
        %v1922 = vpop.f32.mrb[0].mxu0
        %v1923 = vadd.f32 %v1690, %v1922
        %1924 = vmatprep.mubr.f32.mxu0 0.0
        %1925 = vmatmul.mubr.f32.gmra.mrb[0].mxu0 %v592
        %v1926 = vpop.f32.mrb[0].mxu0
        %v1927 = vadd.f32 %v1694, %v1926
        %v1928 = vpop.f32.mrb[0].mxu0
        %v1929 = vadd.f32 %v1696, %v1928
        %1930 = vdwg.mxu0
        %1931 = vmatprep.subr.mxu0 %v620
        %1932 = vmatpush1.msra.mxu0 %v619
        %1933 = vmatprep.subr.mxu0 %v628
        %1934 = vmatpush1.msra.mxu0 %v627
        %1935 = vmatprep.subr.mxu0 %v636
        %1936 = vmatpush1.msra.mxu0 %v635
        %1937 = vmatprep.subr.mxu0 %v644
        %1938 = vmatpush1.msra.mxu0 %v643
        %1939 = vmatprep.subr.mxu0 %v652
        %1940 = vmatpush1.msra.mxu0 %v651
        %1941 = vmatprep.subr.mxu0 %v660
        %1942 = vmatpush1.msra.mxu0 %v659
        %1943 = vmatprep.subr.mxu0 %v668
        %1944 = vmatpush1.msra.mxu0 %v667
        %1945 = vmatprep.subr.mxu0 %v676
        %1946 = vmatpush1.msra.mxu0 %v675
        %1947 = vmatprep.subr.mxu0 %v684
        %1948 = vmatpush1.msra.mxu0 %v683
        %1949 = vmatprep.subr.mxu0 %v692
        %1950 = vmatpush1.msra.mxu0 %v691
        %1951 = vmatprep.subr.mxu0 %v700
        %1952 = vmatpush1.msra.mxu0 %v699
        %1953 = vmatprep.subr.mxu0 %v708
        %1954 = vmatpush1.msra.mxu0 %v707
        %1955 = vmatprep.subr.mxu0 %v716
        %1956 = vmatpush1.msra.mxu0 %v715
        %1957 = vmatprep.subr.mxu0 %v724
        %1958 = vmatpush1.msra.mxu0 %v723
        %1959 = vmatprep.subr.mxu0 %v732
        %1960 = vmatpush1.msra.mxu0 %v731
        %1961 = vmatprep.subr.mxu0 %v740
        %1962 = vmatpush1.msra.mxu0 %v739
        %1963 = vmatprep.subr.mxu0 %v748
        %1964 = vmatpush1.msra.mxu0 %v747
        %1965 = vmatprep.subr.mxu0 %v756
        %1966 = vmatpush1.msra.mxu0 %v755
        %1967 = vmatprep.subr.mxu0 %v764
        %1968 = vmatpush1.msra.mxu0 %v763
        %1969 = vmatprep.subr.mxu0 %v772
        %1970 = vmatpush1.msra.mxu0 %v771
        %1971 = vmatprep.subr.mxu0 %v780
        %1972 = vmatpush1.msra.mxu0 %v779
        %1973 = vmatprep.subr.mxu0 %v788
        %1974 = vmatpush1.msra.mxu0 %v787
        %1975 = vmatprep.subr.mxu0 %v796
        %1976 = vmatpush1.msra.mxu0 %v795
        %1977 = vmatprep.subr.mxu0 %v804
        %1978 = vmatpush1.msra.mxu0 %v803
        %1979 = vmatprep.subr.mxu0 %v812
        %1980 = vmatpush1.msra.mxu0 %v811
        %1981 = vmatprep.subr.mxu0 %v820
        %1982 = vmatpush1.msra.mxu0 %v819
        %1983 = vmatprep.subr.mxu0 %v828
        %1984 = vmatpush1.msra.mxu0 %v827
        %1985 = vmatprep.subr.mxu0 %v836
        %1986 = vmatpush1.msra.mxu0 %v835
        %1987 = vmatprep.subr.mxu0 %v844
        %1988 = vmatpush1.msra.mxu0 %v843
        %1989 = vmatprep.subr.mxu0 %v852
        %1990 = vmatpush1.msra.mxu0 %v851
        %1991 = vmatprep.subr.mxu0 %v860
        %1992 = vmatpush1.msra.mxu0 %v859
        %1993 = vmatprep.subr.mxu0 %v868
        %1994 = vmatpush1.msra.mxu0 %v867
        %1995 = vmatprep.mubr.f32.mxu0 %v592
        %1996 = vmatmul.mubr.f32.gmra.mrb[0].mxu0 %v584
        %v1997 = vpop.f32.mrb[0].mxu0
        %v1998 = vadd.f32 0.0, %v1997
        %v1999 = vpop.f32.mrb[0].mxu0
        %v2000 = vadd.f32 0.0, %v1999
        %2001 = vmatprep.mubr.f32.mxu0 %v593
        %2002 = vmatmul.mubr.f32.gmra.mrb[0].mxu0 %v585
        %v2003 = vpop.f32.mrb[0].mxu0
        %v2004 = vadd.f32 0.0, %v2003
        %v2005 = vpop.f32.mrb[0].mxu0
        %v2006 = vadd.f32 0.0, %v2005
        %2007 = vmatprep.mubr.f32.mxu0 %v594
        %2008 = vmatmul.mubr.f32.gmra.mrb[0].mxu0 %v586
        %v2009 = vpop.f32.mrb[0].mxu0
        %v2010 = vadd.f32 0.0, %v2009
        %v2011 = vpop.f32.mrb[0].mxu0
        %v2012 = vadd.f32 0.0, %v2011
        %2013 = vmatprep.mubr.f32.mxu0 %v595
        %2014 = vmatmul.mubr.f32.gmra.mrb[0].mxu0 %v587
        %v2015 = vpop.f32.mrb[0].mxu0
        %v2016 = vadd.f32 0.0, %v2015
        %v2017 = vpop.f32.mrb[0].mxu0
        %v2018 = vadd.f32 0.0, %v2017
        %2019 = vmatprep.mubr.f32.mxu0 %v596
        %2020 = vmatmul.mubr.f32.gmra.mrb[0].mxu0 %v588
        %v2021 = vpop.f32.mrb[0].mxu0
        %v2022 = vadd.f32 0.0, %v2021
        %v2023 = vpop.f32.mrb[0].mxu0
        %v2024 = vadd.f32 0.0, %v2023
        %2025 = vmatprep.mubr.f32.mxu0 %v597
        %2026 = vmatmul.mubr.f32.gmra.mrb[0].mxu0 %v589
        %v2027 = vpop.f32.mrb[0].mxu0
        %v2028 = vadd.f32 0.0, %v2027
        %v2029 = vpop.f32.mrb[0].mxu0
        %v2030 = vadd.f32 0.0, %v2029
        %2031 = vmatprep.mubr.f32.mxu0 %v598
        %2032 = vmatmul.mubr.f32.gmra.mrb[0].mxu0 %v590
        %v2033 = vpop.f32.mrb[0].mxu0
        %v2034 = vadd.f32 0.0, %v2033
        %v2035 = vpop.f32.mrb[0].mxu0
        %v2036 = vadd.f32 0.0, %v2035
        %2037 = vmatprep.mubr.f32.mxu0 %v600
        %2038 = vmatmul.mubr.f32.gmra.mrb[0].mxu0 %v592
        %v2039 = vpop.f32.mrb[0].mxu0
        %v2040 = vadd.f32 0.0, %v2039
        %v2041 = vpop.f32.mrb[0].mxu0
        %v2042 = vadd.f32 0.0, %v2041
        %2043 = vmatprep.mubr.f32.mxu0 %v601
        %2044 = vmatmul.mubr.f32.gmra.mrb[0].mxu0 %v593
        %v2045 = vpop.f32.mrb[0].mxu0
        %v2046 = vadd.f32 0.0, %v2045
        %v2047 = vpop.f32.mrb[0].mxu0
        %v2048 = vadd.f32 0.0, %v2047
        %2049 = vmatprep.mubr.f32.mxu0 %v602
        %2050 = vmatmul.mubr.f32.gmra.mrb[0].mxu0 %v594
        %v2051 = vpop.f32.mrb[0].mxu0
        %v2052 = vadd.f32 0.0, %v2051
        %v2053 = vpop.f32.mrb[0].mxu0
        %v2054 = vadd.f32 0.0, %v2053
        %2055 = vmatprep.mubr.f32.mxu0 %v603
        %2056 = vmatmul.mubr.f32.gmra.mrb[0].mxu0 %v595
        %v2057 = vpop.f32.mrb[0].mxu0
        %v2058 = vadd.f32 0.0, %v2057
        %v2059 = vpop.f32.mrb[0].mxu0
        %v2060 = vadd.f32 0.0, %v2059
        %2061 = vmatprep.mubr.f32.mxu0 %v604
        %2062 = vmatmul.mubr.f32.gmra.mrb[0].mxu0 %v596
        %v2063 = vpop.f32.mrb[0].mxu0
        %v2064 = vadd.f32 0.0, %v2063
        %v2065 = vpop.f32.mrb[0].mxu0
        %v2066 = vadd.f32 0.0, %v2065
        %2067 = vmatprep.mubr.f32.mxu0 %v605
        %2068 = vmatmul.mubr.f32.gmra.mrb[0].mxu0 %v597
        %v2069 = vpop.f32.mrb[0].mxu0
        %v2070 = vadd.f32 0.0, %v2069
        %v2071 = vpop.f32.mrb[0].mxu0
        %v2072 = vadd.f32 0.0, %v2071
        %2073 = vmatprep.mubr.f32.mxu0 %v606
        %2074 = vmatmul.mubr.f32.gmra.mrb[0].mxu0 %v598
        %v2075 = vpop.f32.mrb[0].mxu0
        %v2076 = vadd.f32 0.0, %v2075
        %v2077 = vpop.f32.mrb[0].mxu0
        %v2078 = vadd.f32 0.0, %v2077
        %2079 = vmatprep.mubr.f32.mxu0 %v608
        %2080 = vmatmul.mubr.f32.gmra.mrb[0].mxu0 %v600
        %v2081 = vpop.f32.mrb[0].mxu0
        %v2082 = vadd.f32 0.0, %v2081
        %v2083 = vpop.f32.mrb[0].mxu0
        %v2084 = vadd.f32 0.0, %v2083
        %2085 = vmatprep.mubr.f32.mxu0 %v609
        %2086 = vmatmul.mubr.f32.gmra.mrb[0].mxu0 %v601
        %v2087 = vpop.f32.mrb[0].mxu0
        %v2088 = vadd.f32 0.0, %v2087
        %v2089 = vpop.f32.mrb[0].mxu0
        %v2090 = vadd.f32 0.0, %v2089
        %2091 = vmatprep.mubr.f32.mxu0 %v610
        %2092 = vmatmul.mubr.f32.gmra.mrb[0].mxu0 %v602
        %v2093 = vpop.f32.mrb[0].mxu0
        %v2094 = vadd.f32 0.0, %v2093
        %v2095 = vpop.f32.mrb[0].mxu0
        %v2096 = vadd.f32 0.0, %v2095
        %2097 = vmatprep.mubr.f32.mxu0 %v611
        %2098 = vmatmul.mubr.f32.gmra.mrb[0].mxu0 %v603
        %v2099 = vpop.f32.mrb[0].mxu0
        %v2100 = vadd.f32 0.0, %v2099
        %v2101 = vpop.f32.mrb[0].mxu0
        %v2102 = vadd.f32 0.0, %v2101
        %2103 = vmatprep.mubr.f32.mxu0 %v612
        %2104 = vmatmul.mubr.f32.gmra.mrb[0].mxu0 %v604
        %v2105 = vpop.f32.mrb[0].mxu0
        %v2106 = vadd.f32 0.0, %v2105
        %v2107 = vpop.f32.mrb[0].mxu0
        %v2108 = vadd.f32 0.0, %v2107
        %2109 = vmatprep.mubr.f32.mxu0 %v613
        %2110 = vmatmul.mubr.f32.gmra.mrb[0].mxu0 %v605
        %v2111 = vpop.f32.mrb[0].mxu0
        %v2112 = vadd.f32 0.0, %v2111
        %v2113 = vpop.f32.mrb[0].mxu0
        %v2114 = vadd.f32 0.0, %v2113
        %2115 = vmatprep.mubr.f32.mxu0 %v614
        %2116 = vmatmul.mubr.f32.gmra.mrb[0].mxu0 %v606
        %v2117 = vpop.f32.mrb[0].mxu0
        %v2118 = vadd.f32 0.0, %v2117
        %v2119 = vpop.f32.mrb[0].mxu0
        %v2120 = vadd.f32 0.0, %v2119
        %2121 = vmatprep.mubr.f32.mxu0 %v585
        %2122 = vmatmul.mubr.f32.gmra.mrb[0].mxu0 %v608
        %v2123 = vpop.f32.mrb[0].mxu0
        %v2124 = vadd.f32 0.0, %v2123
        %v2125 = vpop.f32.mrb[0].mxu0
        %v2126 = vadd.f32 0.0, %v2125
        %2127 = vmatprep.mubr.f32.mxu0 %v586
        %2128 = vmatmul.mubr.f32.gmra.mrb[0].mxu0 %v609
        %v2129 = vpop.f32.mrb[0].mxu0
        %v2130 = vadd.f32 0.0, %v2129
        %v2131 = vpop.f32.mrb[0].mxu0
        %v2132 = vadd.f32 0.0, %v2131
        %2133 = vmatprep.mubr.f32.mxu0 %v587
        %2134 = vmatmul.mubr.f32.gmra.mrb[0].mxu0 %v610
        %v2135 = vpop.f32.mrb[0].mxu0
        %v2136 = vadd.f32 0.0, %v2135
        %v2137 = vpop.f32.mrb[0].mxu0
        %v2138 = vadd.f32 0.0, %v2137
        %2139 = vmatprep.mubr.f32.mxu0 %v588
        %2140 = vmatmul.mubr.f32.gmra.mrb[0].mxu0 %v611
        %v2141 = vpop.f32.mrb[0].mxu0
        %v2142 = vadd.f32 0.0, %v2141
        %v2143 = vpop.f32.mrb[0].mxu0
        %v2144 = vadd.f32 0.0, %v2143
        %2145 = vmatprep.mubr.f32.mxu0 %v589
        %2146 = vmatmul.mubr.f32.gmra.mrb[0].mxu0 %v612
        %v2147 = vpop.f32.mrb[0].mxu0
        %v2148 = vadd.f32 0.0, %v2147
        %v2149 = vpop.f32.mrb[0].mxu0
        %v2150 = vadd.f32 0.0, %v2149
        %2151 = vmatprep.mubr.f32.mxu0 %v590
        %2152 = vmatmul.mubr.f32.gmra.mrb[0].mxu0 %v613
        %v2153 = vpop.f32.mrb[0].mxu0
        %v2154 = vadd.f32 0.0, %v2153
        %v2155 = vpop.f32.mrb[0].mxu0
        %v2156 = vadd.f32 0.0, %v2155
        %2157 = vmatprep.mubr.f32.mxu0 %v584
        %2158 = vmatmul.mubr.f32.gmra.mrb[0].mxu0 %v614
        %v2159 = vpop.f32.mrb[0].mxu0
        %v2160 = vadd.f32 0.0, %v2159
        %v2161 = vpop.f32.mrb[0].mxu0
        %v2162 = vadd.f32 0.0, %v2161
        %2163 = vdwg.mxu0
        %2164 = vmatprep.subr.mxu0 %v876
        %2165 = vmatpush1.msra.mxu0 %v875
        %2166 = vmatprep.subr.mxu0 %v884
        %2167 = vmatpush1.msra.mxu0 %v883
        %2168 = vmatprep.subr.mxu0 %v892
        %2169 = vmatpush1.msra.mxu0 %v891
        %2170 = vmatprep.subr.mxu0 %v900
        %2171 = vmatpush1.msra.mxu0 %v899
        %2172 = vmatprep.subr.mxu0 %v908
        %2173 = vmatpush1.msra.mxu0 %v907
        %2174 = vmatprep.subr.mxu0 %v916
        %2175 = vmatpush1.msra.mxu0 %v915
        %2176 = vmatprep.subr.mxu0 %v924
        %2177 = vmatpush1.msra.mxu0 %v923
        %2178 = vmatprep.subr.mxu0 %v932
        %2179 = vmatpush1.msra.mxu0 %v931
        %2180 = vmatprep.subr.mxu0 %v940
        %2181 = vmatpush1.msra.mxu0 %v939
        %2182 = vmatprep.subr.mxu0 %v948
        %2183 = vmatpush1.msra.mxu0 %v947
        %2184 = vmatprep.subr.mxu0 %v956
        %2185 = vmatpush1.msra.mxu0 %v955
        %2186 = vmatprep.subr.mxu0 %v964
        %2187 = vmatpush1.msra.mxu0 %v963
        %2188 = vmatprep.subr.mxu0 %v972
        %2189 = vmatpush1.msra.mxu0 %v971
        %2190 = vmatprep.subr.mxu0 %v980
        %2191 = vmatpush1.msra.mxu0 %v979
        %2192 = vmatprep.subr.mxu0 %v988
        %2193 = vmatpush1.msra.mxu0 %v987
        %2194 = vmatprep.subr.mxu0 %v996
        %2195 = vmatpush1.msra.mxu0 %v995
        %2196 = vmatprep.subr.mxu0 0.0
        %2197 = vmatpush1.msra.mxu0 0.0
        %2198 = vmatprep.subr.mxu0 0.0
        %2199 = vmatpush1.msra.mxu0 0.0
        %2200 = vmatprep.subr.mxu0 0.0
        %2201 = vmatpush1.msra.mxu0 0.0
        %2202 = vmatprep.subr.mxu0 0.0
        %2203 = vmatpush1.msra.mxu0 0.0
        %2204 = vmatprep.subr.mxu0 0.0
        %2205 = vmatpush1.msra.mxu0 0.0
        %2206 = vmatprep.subr.mxu0 0.0
        %2207 = vmatpush1.msra.mxu0 0.0
        %2208 = vmatprep.subr.mxu0 0.0
        %2209 = vmatpush1.msra.mxu0 0.0
        %2210 = vmatprep.subr.mxu0 0.0
        %2211 = vmatpush1.msra.mxu0 0.0
        %2212 = vmatprep.subr.mxu0 0.0
        %2213 = vmatpush1.msra.mxu0 0.0
        %2214 = vmatprep.subr.mxu0 0.0
        %2215 = vmatpush1.msra.mxu0 0.0
        %2216 = vmatprep.subr.mxu0 0.0
        %2217 = vmatpush1.msra.mxu0 0.0
        %2218 = vmatprep.subr.mxu0 0.0
        %2219 = vmatpush1.msra.mxu0 0.0
        %2220 = vmatprep.subr.mxu0 0.0
        %2221 = vmatpush1.msra.mxu0 0.0
        %2222 = vmatprep.subr.mxu0 0.0
        %2223 = vmatpush1.msra.mxu0 0.0
        %2224 = vmatprep.subr.mxu0 0.0
        %2225 = vmatpush1.msra.mxu0 0.0
        %2226 = vmatprep.subr.mxu0 0.0
        %2227 = vmatpush1.msra.mxu0 0.0
        %2228 = vmatprep.mubr.f32.mxu0 0.0
        %2229 = vmatmul.mubr.f32.gmra.mrb[0].mxu0 %v600
        %v2230 = vpop.f32.mrb[0].mxu0
        %v2231 = vadd.f32 %v1998, %v2230
        %v2232 = vpop.f32.mrb[0].mxu0
        %v2233 = vadd.f32 %v2000, %v2232
        %2234 = vmatprep.mubr.f32.mxu0 0.0
        %2235 = vmatmul.mubr.f32.gmra.mrb[0].mxu0 %v601
        %v2236 = vpop.f32.mrb[0].mxu0
        %v2237 = vadd.f32 %v2004, %v2236
        %v2238 = vpop.f32.mrb[0].mxu0
        %v2239 = vadd.f32 %v2006, %v2238
        %2240 = vmatprep.mubr.f32.mxu0 0.0
        %2241 = vmatmul.mubr.f32.gmra.mrb[0].mxu0 %v602
        %v2242 = vpop.f32.mrb[0].mxu0
        %v2243 = vadd.f32 %v2010, %v2242
        %v2244 = vpop.f32.mrb[0].mxu0
        %v2245 = vadd.f32 %v2012, %v2244
        %2246 = vmatprep.mubr.f32.mxu0 0.0
        %2247 = vmatmul.mubr.f32.gmra.mrb[0].mxu0 %v603
        %v2248 = vpop.f32.mrb[0].mxu0
        %v2249 = vadd.f32 %v2016, %v2248
        %v2250 = vpop.f32.mrb[0].mxu0
        %v2251 = vadd.f32 %v2018, %v2250
        %2252 = vmatprep.mubr.f32.mxu0 0.0
        %2253 = vmatmul.mubr.f32.gmra.mrb[0].mxu0 %v604
        %v2254 = vpop.f32.mrb[0].mxu0
        %v2255 = vadd.f32 %v2022, %v2254
        %v2256 = vpop.f32.mrb[0].mxu0
        %v2257 = vadd.f32 %v2024, %v2256
        %2258 = vmatprep.mubr.f32.mxu0 0.0
        %2259 = vmatmul.mubr.f32.gmra.mrb[0].mxu0 %v605
        %v2260 = vpop.f32.mrb[0].mxu0
        %v2261 = vadd.f32 %v2028, %v2260
        %v2262 = vpop.f32.mrb[0].mxu0
        %v2263 = vadd.f32 %v2030, %v2262
        %2264 = vmatprep.mubr.f32.mxu0 0.0
        %2265 = vmatmul.mubr.f32.gmra.mrb[0].mxu0 %v606
        %v2266 = vpop.f32.mrb[0].mxu0
        %v2267 = vadd.f32 %v2034, %v2266
        %v2268 = vpop.f32.mrb[0].mxu0
        %v2269 = vadd.f32 %v2036, %v2268
        %2270 = vmatprep.mubr.f32.mxu0 0.0
        %2271 = vmatmul.mubr.f32.gmra.mrb[0].mxu0 %v608
        %v2272 = vpop.f32.mrb[0].mxu0
        %v2273 = vadd.f32 %v2040, %v2272
        %v2274 = vpop.f32.mrb[0].mxu0
        %v2275 = vadd.f32 %v2042, %v2274
        %2276 = vmatprep.mubr.f32.mxu0 0.0
        %2277 = vmatmul.mubr.f32.gmra.mrb[0].mxu0 %v609
        %v2278 = vpop.f32.mrb[0].mxu0
        %v2279 = vadd.f32 %v2046, %v2278
        %v2280 = vpop.f32.mrb[0].mxu0
        %v2281 = vadd.f32 %v2048, %v2280
        %2282 = vmatprep.mubr.f32.mxu0 0.0
        %2283 = vmatmul.mubr.f32.gmra.mrb[0].mxu0 %v610
        %v2284 = vpop.f32.mrb[0].mxu0
        %v2285 = vadd.f32 %v2052, %v2284
        %v2286 = vpop.f32.mrb[0].mxu0
        %v2287 = vadd.f32 %v2054, %v2286
        %2288 = vmatprep.mubr.f32.mxu0 0.0
        %2289 = vmatmul.mubr.f32.gmra.mrb[0].mxu0 %v611
        %v2290 = vpop.f32.mrb[0].mxu0
        %v2291 = vadd.f32 %v2058, %v2290
        %v2292 = vpop.f32.mrb[0].mxu0
        %v2293 = vadd.f32 %v2060, %v2292
        %2294 = vmatprep.mubr.f32.mxu0 0.0
        %2295 = vmatmul.mubr.f32.gmra.mrb[0].mxu0 %v612
        %v2296 = vpop.f32.mrb[0].mxu0
        %v2297 = vadd.f32 %v2064, %v2296
        %v2298 = vpop.f32.mrb[0].mxu0
        %v2299 = vadd.f32 %v2066, %v2298
        %2300 = vmatprep.mubr.f32.mxu0 0.0
        %2301 = vmatmul.mubr.f32.gmra.mrb[0].mxu0 %v613
        %v2302 = vpop.f32.mrb[0].mxu0
        %v2303 = vadd.f32 %v2070, %v2302
        %v2304 = vpop.f32.mrb[0].mxu0
        %v2305 = vadd.f32 %v2072, %v2304
        %2306 = vmatprep.mubr.f32.mxu0 0.0
        %2307 = vmatmul.mubr.f32.gmra.mrb[0].mxu0 %v614
        %v2308 = vpop.f32.mrb[0].mxu0
        %v2309 = vadd.f32 %v2076, %v2308
        %v2310 = vpop.f32.mrb[0].mxu0
        %v2311 = vadd.f32 %v2078, %v2310
        %2312 = vmatprep.mubr.f32.mxu0 0.0
        %2313 = vmatmul.mubr.f32.gmra.mrb[0].mxu0 %v585
        %v2314 = vpop.f32.mrb[0].mxu0
        %v2315 = vadd.f32 %v2082, %v2314
        %v2316 = vpop.f32.mrb[0].mxu0
        %v2317 = vadd.f32 %v2084, %v2316
        %2318 = vmatprep.mubr.f32.mxu0 0.0
        %2319 = vmatmul.mubr.f32.gmra.mrb[0].mxu0 %v586
        %v2320 = vpop.f32.mrb[0].mxu0
        %v2321 = vadd.f32 %v2088, %v2320
        %v2322 = vpop.f32.mrb[0].mxu0
        %v2323 = vadd.f32 %v2090, %v2322
        %2324 = vmatprep.mubr.f32.mxu0 0.0
        %2325 = vmatmul.mubr.f32.gmra.mrb[0].mxu0 %v587
        %v2326 = vpop.f32.mrb[0].mxu0
        %v2327 = vadd.f32 %v2094, %v2326
        %v2328 = vpop.f32.mrb[0].mxu0
        %v2329 = vadd.f32 %v2096, %v2328
        %2330 = vmatprep.mubr.f32.mxu0 0.0
        %2331 = vmatmul.mubr.f32.gmra.mrb[0].mxu0 %v588
        %v2332 = vpop.f32.mrb[0].mxu0
        %v2333 = vadd.f32 %v2100, %v2332
        %v2334 = vpop.f32.mrb[0].mxu0
        %v2335 = vadd.f32 %v2102, %v2334
        %2336 = vmatprep.mubr.f32.mxu0 0.0
        %2337 = vmatmul.mubr.f32.gmra.mrb[0].mxu0 %v589
        %v2338 = vpop.f32.mrb[0].mxu0
        %v2339 = vadd.f32 %v2106, %v2338
        %v2340 = vpop.f32.mrb[0].mxu0
        %v2341 = vadd.f32 %v2108, %v2340
        %2342 = vmatprep.mubr.f32.mxu0 0.0
        %2343 = vmatmul.mubr.f32.gmra.mrb[0].mxu0 %v590
        %v2344 = vpop.f32.mrb[0].mxu0
        %v2345 = vadd.f32 %v2112, %v2344
        %v2346 = vpop.f32.mrb[0].mxu0
        %v2347 = vadd.f32 %v2114, %v2346
        %2348 = vmatprep.mubr.f32.mxu0 0.0
        %2349 = vmatmul.mubr.f32.gmra.mrb[0].mxu0 %v584
        %v2350 = vpop.f32.mrb[0].mxu0
        %v2351 = vadd.f32 %v2118, %v2350
        %v2352 = vpop.f32.mrb[0].mxu0
        %v2353 = vadd.f32 %v2120, %v2352
        %2354 = vmatprep.mubr.f32.mxu0 0.0
        %2355 = vmatmul.mubr.f32.gmra.mrb[0].mxu0 %v593
        %v2356 = vpop.f32.mrb[0].mxu0
        %v2357 = vadd.f32 %v2124, %v2356
        %v2358 = vpop.f32.mrb[0].mxu0
        %v2359 = vadd.f32 %v2126, %v2358
        %2360 = vmatprep.mubr.f32.mxu0 0.0
        %2361 = vmatmul.mubr.f32.gmra.mrb[0].mxu0 %v594
        %v2362 = vpop.f32.mrb[0].mxu0
        %v2363 = vadd.f32 %v2130, %v2362
        %v2364 = vpop.f32.mrb[0].mxu0
        %v2365 = vadd.f32 %v2132, %v2364
        %2366 = vmatprep.mubr.f32.mxu0 0.0
        %2367 = vmatmul.mubr.f32.gmra.mrb[0].mxu0 %v595
        %v2368 = vpop.f32.mrb[0].mxu0
        %v2369 = vadd.f32 %v2136, %v2368
        %v2370 = vpop.f32.mrb[0].mxu0
        %v2371 = vadd.f32 %v2138, %v2370
        %2372 = vmatprep.mubr.f32.mxu0 0.0
        %2373 = vmatmul.mubr.f32.gmra.mrb[0].mxu0 %v596
        %v2374 = vpop.f32.mrb[0].mxu0
        %v2375 = vadd.f32 %v2142, %v2374
        %v2376 = vpop.f32.mrb[0].mxu0
        %v2377 = vadd.f32 %v2144, %v2376
        %2378 = vmatprep.mubr.f32.mxu0 0.0
        %2379 = vmatmul.mubr.f32.gmra.mrb[0].mxu0 %v597
        %v2380 = vpop.f32.mrb[0].mxu0
        %v2381 = vadd.f32 %v2148, %v2380
        %v2382 = vpop.f32.mrb[0].mxu0
        %v2383 = vadd.f32 %v2150, %v2382
        %2384 = vmatprep.mubr.f32.mxu0 0.0
        %2385 = vmatmul.mubr.f32.gmra.mrb[0].mxu0 %v598
        %v2386 = vpop.f32.mrb[0].mxu0
        %v2387 = vadd.f32 %v2154, %v2386
        %v2388 = vpop.f32.mrb[0].mxu0
        %v2389 = vadd.f32 %v2156, %v2388
        %2390 = vmatprep.mubr.f32.mxu0 0.0
        %2391 = vmatmul.mubr.f32.gmra.mrb[0].mxu0 %v592
        %v2392 = vpop.f32.mrb[0].mxu0
        %v2393 = vadd.f32 %v2160, %v2392
        %v2394 = vpop.f32.mrb[0].mxu0
        %v2395 = vadd.f32 %v2162, %v2394
        %2396 = vdwg.mxu0
        %2397 = vmatprep.subr.mxu0 %v622
        %2398 = vmatpush1.msra.mxu0 %v621
        %2399 = vmatprep.subr.mxu0 %v630
        %2400 = vmatpush1.msra.mxu0 %v629
        %2401 = vmatprep.subr.mxu0 %v638
        %2402 = vmatpush1.msra.mxu0 %v637
        %2403 = vmatprep.subr.mxu0 %v646
        %2404 = vmatpush1.msra.mxu0 %v645
        %2405 = vmatprep.subr.mxu0 %v654
        %2406 = vmatpush1.msra.mxu0 %v653
        %2407 = vmatprep.subr.mxu0 %v662
        %2408 = vmatpush1.msra.mxu0 %v661
        %2409 = vmatprep.subr.mxu0 %v670
        %2410 = vmatpush1.msra.mxu0 %v669
        %2411 = vmatprep.subr.mxu0 %v678
        %2412 = vmatpush1.msra.mxu0 %v677
        %2413 = vmatprep.subr.mxu0 %v686
        %2414 = vmatpush1.msra.mxu0 %v685
        %2415 = vmatprep.subr.mxu0 %v694
        %2416 = vmatpush1.msra.mxu0 %v693
        %2417 = vmatprep.subr.mxu0 %v702
        %2418 = vmatpush1.msra.mxu0 %v701
        %2419 = vmatprep.subr.mxu0 %v710
        %2420 = vmatpush1.msra.mxu0 %v709
        %2421 = vmatprep.subr.mxu0 %v718
        %2422 = vmatpush1.msra.mxu0 %v717
        %2423 = vmatprep.subr.mxu0 %v726
        %2424 = vmatpush1.msra.mxu0 %v725
        %2425 = vmatprep.subr.mxu0 %v734
        %2426 = vmatpush1.msra.mxu0 %v733
        %2427 = vmatprep.subr.mxu0 %v742
        %2428 = vmatpush1.msra.mxu0 %v741
        %2429 = vmatprep.subr.mxu0 %v750
        %2430 = vmatpush1.msra.mxu0 %v749
        %2431 = vmatprep.subr.mxu0 %v758
        %2432 = vmatpush1.msra.mxu0 %v757
        %2433 = vmatprep.subr.mxu0 %v766
        %2434 = vmatpush1.msra.mxu0 %v765
        %2435 = vmatprep.subr.mxu0 %v774
        %2436 = vmatpush1.msra.mxu0 %v773
        %2437 = vmatprep.subr.mxu0 %v782
        %2438 = vmatpush1.msra.mxu0 %v781
        %2439 = vmatprep.subr.mxu0 %v790
        %2440 = vmatpush1.msra.mxu0 %v789
        %2441 = vmatprep.subr.mxu0 %v798
        %2442 = vmatpush1.msra.mxu0 %v797
        %2443 = vmatprep.subr.mxu0 %v806
        %2444 = vmatpush1.msra.mxu0 %v805
        %2445 = vmatprep.subr.mxu0 %v814
        %2446 = vmatpush1.msra.mxu0 %v813
        %2447 = vmatprep.subr.mxu0 %v822
        %2448 = vmatpush1.msra.mxu0 %v821
        %2449 = vmatprep.subr.mxu0 %v830
        %2450 = vmatpush1.msra.mxu0 %v829
        %2451 = vmatprep.subr.mxu0 %v838
        %2452 = vmatpush1.msra.mxu0 %v837
        %2453 = vmatprep.subr.mxu0 %v846
        %2454 = vmatpush1.msra.mxu0 %v845
        %2455 = vmatprep.subr.mxu0 %v854
        %2456 = vmatpush1.msra.mxu0 %v853
        %2457 = vmatprep.subr.mxu0 %v862
        %2458 = vmatpush1.msra.mxu0 %v861
        %2459 = vmatprep.subr.mxu0 %v870
        %2460 = vmatpush1.msra.mxu0 %v869
        %2461 = vmatprep.mubr.f32.mxu0 %v592
        %2462 = vmatmul.mubr.f32.gmra.mrb[0].mxu0 %v584
        %v2463 = vpop.f32.mrb[0].mxu0
        %v2464 = vadd.f32 0.0, %v2463
        %v2465 = vpop.f32.mrb[0].mxu0
        %v2466 = vadd.f32 0.0, %v2465
        %2467 = vmatprep.mubr.f32.mxu0 %v593
        %2468 = vmatmul.mubr.f32.gmra.mrb[0].mxu0 %v585
        %v2469 = vpop.f32.mrb[0].mxu0
        %v2470 = vadd.f32 0.0, %v2469
        %v2471 = vpop.f32.mrb[0].mxu0
        %v2472 = vadd.f32 0.0, %v2471
        %2473 = vmatprep.mubr.f32.mxu0 %v594
        %2474 = vmatmul.mubr.f32.gmra.mrb[0].mxu0 %v586
        %v2475 = vpop.f32.mrb[0].mxu0
        %v2476 = vadd.f32 0.0, %v2475
        %v2477 = vpop.f32.mrb[0].mxu0
        %v2478 = vadd.f32 0.0, %v2477
        %2479 = vmatprep.mubr.f32.mxu0 %v595
        %2480 = vmatmul.mubr.f32.gmra.mrb[0].mxu0 %v587
        %v2481 = vpop.f32.mrb[0].mxu0
        %v2482 = vadd.f32 0.0, %v2481
        %v2483 = vpop.f32.mrb[0].mxu0
        %v2484 = vadd.f32 0.0, %v2483
        %2485 = vmatprep.mubr.f32.mxu0 %v596
        %2486 = vmatmul.mubr.f32.gmra.mrb[0].mxu0 %v588
        %v2487 = vpop.f32.mrb[0].mxu0
        %v2488 = vadd.f32 0.0, %v2487
        %v2489 = vpop.f32.mrb[0].mxu0
        %v2490 = vadd.f32 0.0, %v2489
        %2491 = vmatprep.mubr.f32.mxu0 %v597
        %2492 = vmatmul.mubr.f32.gmra.mrb[0].mxu0 %v589
        %v2493 = vpop.f32.mrb[0].mxu0
        %v2494 = vadd.f32 0.0, %v2493
        %v2495 = vpop.f32.mrb[0].mxu0
        %v2496 = vadd.f32 0.0, %v2495
        %2497 = vmatprep.mubr.f32.mxu0 %v598
        %2498 = vmatmul.mubr.f32.gmra.mrb[0].mxu0 %v590
        %v2499 = vpop.f32.mrb[0].mxu0
        %v2500 = vadd.f32 0.0, %v2499
        %v2501 = vpop.f32.mrb[0].mxu0
        %v2502 = vadd.f32 0.0, %v2501
        %2503 = vmatprep.mubr.f32.mxu0 %v600
        %2504 = vmatmul.mubr.f32.gmra.mrb[0].mxu0 %v592
        %v2505 = vpop.f32.mrb[0].mxu0
        %v2506 = vadd.f32 0.0, %v2505
        %v2507 = vpop.f32.mrb[0].mxu0
        %v2508 = vadd.f32 0.0, %v2507
        %2509 = vmatprep.mubr.f32.mxu0 %v601
        %2510 = vmatmul.mubr.f32.gmra.mrb[0].mxu0 %v593
        %v2511 = vpop.f32.mrb[0].mxu0
        %v2512 = vadd.f32 0.0, %v2511
        %v2513 = vpop.f32.mrb[0].mxu0
        %v2514 = vadd.f32 0.0, %v2513
        %2515 = vmatprep.mubr.f32.mxu0 %v602
        %2516 = vmatmul.mubr.f32.gmra.mrb[0].mxu0 %v594
        %v2517 = vpop.f32.mrb[0].mxu0
        %v2518 = vadd.f32 0.0, %v2517
        %v2519 = vpop.f32.mrb[0].mxu0
        %v2520 = vadd.f32 0.0, %v2519
        %2521 = vmatprep.mubr.f32.mxu0 %v603
        %2522 = vmatmul.mubr.f32.gmra.mrb[0].mxu0 %v595
        %v2523 = vpop.f32.mrb[0].mxu0
        %v2524 = vadd.f32 0.0, %v2523
        %v2525 = vpop.f32.mrb[0].mxu0
        %v2526 = vadd.f32 0.0, %v2525
        %2527 = vmatprep.mubr.f32.mxu0 %v604
        %2528 = vmatmul.mubr.f32.gmra.mrb[0].mxu0 %v596
        %v2529 = vpop.f32.mrb[0].mxu0
        %v2530 = vadd.f32 0.0, %v2529
        %v2531 = vpop.f32.mrb[0].mxu0
        %v2532 = vadd.f32 0.0, %v2531
        %2533 = vmatprep.mubr.f32.mxu0 %v605
        %2534 = vmatmul.mubr.f32.gmra.mrb[0].mxu0 %v597
        %v2535 = vpop.f32.mrb[0].mxu0
        %v2536 = vadd.f32 0.0, %v2535
        %v2537 = vpop.f32.mrb[0].mxu0
        %v2538 = vadd.f32 0.0, %v2537
        %2539 = vmatprep.mubr.f32.mxu0 %v606
        %2540 = vmatmul.mubr.f32.gmra.mrb[0].mxu0 %v598
        %v2541 = vpop.f32.mrb[0].mxu0
        %v2542 = vadd.f32 0.0, %v2541
        %v2543 = vpop.f32.mrb[0].mxu0
        %v2544 = vadd.f32 0.0, %v2543
        %2545 = vmatprep.mubr.f32.mxu0 %v608
        %2546 = vmatmul.mubr.f32.gmra.mrb[0].mxu0 %v600
        %v2547 = vpop.f32.mrb[0].mxu0
        %v2548 = vadd.f32 0.0, %v2547
        %v2549 = vpop.f32.mrb[0].mxu0
        %v2550 = vadd.f32 0.0, %v2549
        %2551 = vmatprep.mubr.f32.mxu0 %v609
        %2552 = vmatmul.mubr.f32.gmra.mrb[0].mxu0 %v601
        %v2553 = vpop.f32.mrb[0].mxu0
        %v2554 = vadd.f32 0.0, %v2553
        %v2555 = vpop.f32.mrb[0].mxu0
        %v2556 = vadd.f32 0.0, %v2555
        %2557 = vmatprep.mubr.f32.mxu0 %v610
        %2558 = vmatmul.mubr.f32.gmra.mrb[0].mxu0 %v602
        %v2559 = vpop.f32.mrb[0].mxu0
        %v2560 = vadd.f32 0.0, %v2559
        %v2561 = vpop.f32.mrb[0].mxu0
        %v2562 = vadd.f32 0.0, %v2561
        %2563 = vmatprep.mubr.f32.mxu0 %v611
        %2564 = vmatmul.mubr.f32.gmra.mrb[0].mxu0 %v603
        %v2565 = vpop.f32.mrb[0].mxu0
        %v2566 = vadd.f32 0.0, %v2565
        %v2567 = vpop.f32.mrb[0].mxu0
        %v2568 = vadd.f32 0.0, %v2567
        %2569 = vmatprep.mubr.f32.mxu0 %v612
        %2570 = vmatmul.mubr.f32.gmra.mrb[0].mxu0 %v604
        %v2571 = vpop.f32.mrb[0].mxu0
        %v2572 = vadd.f32 0.0, %v2571
        %v2573 = vpop.f32.mrb[0].mxu0
        %v2574 = vadd.f32 0.0, %v2573
        %2575 = vmatprep.mubr.f32.mxu0 %v613
        %2576 = vmatmul.mubr.f32.gmra.mrb[0].mxu0 %v605
        %v2577 = vpop.f32.mrb[0].mxu0
        %v2578 = vadd.f32 0.0, %v2577
        %v2579 = vpop.f32.mrb[0].mxu0
        %v2580 = vadd.f32 0.0, %v2579
        %2581 = vmatprep.mubr.f32.mxu0 %v614
        %2582 = vmatmul.mubr.f32.gmra.mrb[0].mxu0 %v606
        %v2583 = vpop.f32.mrb[0].mxu0
        %v2584 = vadd.f32 0.0, %v2583
        %v2585 = vpop.f32.mrb[0].mxu0
        %v2586 = vadd.f32 0.0, %v2585
        %2587 = vmatprep.mubr.f32.mxu0 %v585
        %2588 = vmatmul.mubr.f32.gmra.mrb[0].mxu0 %v608
        %v2589 = vpop.f32.mrb[0].mxu0
        %v2590 = vadd.f32 0.0, %v2589
        %v2591 = vpop.f32.mrb[0].mxu0
        %v2592 = vadd.f32 0.0, %v2591
        %2593 = vmatprep.mubr.f32.mxu0 %v586
        %2594 = vmatmul.mubr.f32.gmra.mrb[0].mxu0 %v609
        %v2595 = vpop.f32.mrb[0].mxu0
        %v2596 = vadd.f32 0.0, %v2595
        %v2597 = vpop.f32.mrb[0].mxu0
        %v2598 = vadd.f32 0.0, %v2597
        %2599 = vmatprep.mubr.f32.mxu0 %v587
        %2600 = vmatmul.mubr.f32.gmra.mrb[0].mxu0 %v610
        %v2601 = vpop.f32.mrb[0].mxu0
        %v2602 = vadd.f32 0.0, %v2601
        %v2603 = vpop.f32.mrb[0].mxu0
        %v2604 = vadd.f32 0.0, %v2603
        %2605 = vmatprep.mubr.f32.mxu0 %v588
        %2606 = vmatmul.mubr.f32.gmra.mrb[0].mxu0 %v611
        %v2607 = vpop.f32.mrb[0].mxu0
        %v2608 = vadd.f32 0.0, %v2607
        %v2609 = vpop.f32.mrb[0].mxu0
        %v2610 = vadd.f32 0.0, %v2609
        %2611 = vmatprep.mubr.f32.mxu0 %v589
        %2612 = vmatmul.mubr.f32.gmra.mrb[0].mxu0 %v612
        %v2613 = vpop.f32.mrb[0].mxu0
        %v2614 = vadd.f32 0.0, %v2613
        %v2615 = vpop.f32.mrb[0].mxu0
        %v2616 = vadd.f32 0.0, %v2615
        %2617 = vmatprep.mubr.f32.mxu0 %v590
        %2618 = vmatmul.mubr.f32.gmra.mrb[0].mxu0 %v613
        %v2619 = vpop.f32.mrb[0].mxu0
        %v2620 = vadd.f32 0.0, %v2619
        %v2621 = vpop.f32.mrb[0].mxu0
        %v2622 = vadd.f32 0.0, %v2621
        %2623 = vmatprep.mubr.f32.mxu0 %v584
        %2624 = vmatmul.mubr.f32.gmra.mrb[0].mxu0 %v614
        %v2625 = vpop.f32.mrb[0].mxu0
        %v2626 = vadd.f32 0.0, %v2625
        %v2627 = vpop.f32.mrb[0].mxu0
        %v2628 = vadd.f32 0.0, %v2627
        %2629 = vdwg.mxu0
        %2630 = vmatprep.subr.mxu0 %v878
        %2631 = vmatpush1.msra.mxu0 %v877
        %2632 = vmatprep.subr.mxu0 %v886
        %2633 = vmatpush1.msra.mxu0 %v885
        %2634 = vmatprep.subr.mxu0 %v894
        %2635 = vmatpush1.msra.mxu0 %v893
        %2636 = vmatprep.subr.mxu0 %v902
        %2637 = vmatpush1.msra.mxu0 %v901
        %2638 = vmatprep.subr.mxu0 %v910
        %2639 = vmatpush1.msra.mxu0 %v909
        %2640 = vmatprep.subr.mxu0 %v918
        %2641 = vmatpush1.msra.mxu0 %v917
        %2642 = vmatprep.subr.mxu0 %v926
        %2643 = vmatpush1.msra.mxu0 %v925
        %2644 = vmatprep.subr.mxu0 %v934
        %2645 = vmatpush1.msra.mxu0 %v933
        %2646 = vmatprep.subr.mxu0 %v942
        %2647 = vmatpush1.msra.mxu0 %v941
        %2648 = vmatprep.subr.mxu0 %v950
        %2649 = vmatpush1.msra.mxu0 %v949
        %2650 = vmatprep.subr.mxu0 %v958
        %2651 = vmatpush1.msra.mxu0 %v957
        %2652 = vmatprep.subr.mxu0 %v966
        %2653 = vmatpush1.msra.mxu0 %v965
        %2654 = vmatprep.subr.mxu0 %v974
        %2655 = vmatpush1.msra.mxu0 %v973
        %2656 = vmatprep.subr.mxu0 %v982
        %2657 = vmatpush1.msra.mxu0 %v981
        %2658 = vmatprep.subr.mxu0 %v990
        %2659 = vmatpush1.msra.mxu0 %v989
        %2660 = vmatprep.subr.mxu0 %v998
        %2661 = vmatpush1.msra.mxu0 %v997
        %2662 = vmatprep.subr.mxu0 0.0
        %2663 = vmatpush1.msra.mxu0 0.0
        %2664 = vmatprep.subr.mxu0 0.0
        %2665 = vmatpush1.msra.mxu0 0.0
        %2666 = vmatprep.subr.mxu0 0.0
        %2667 = vmatpush1.msra.mxu0 0.0
        %2668 = vmatprep.subr.mxu0 0.0
        %2669 = vmatpush1.msra.mxu0 0.0
        %2670 = vmatprep.subr.mxu0 0.0
        %2671 = vmatpush1.msra.mxu0 0.0
        %2672 = vmatprep.subr.mxu0 0.0
        %2673 = vmatpush1.msra.mxu0 0.0
        %2674 = vmatprep.subr.mxu0 0.0
        %2675 = vmatpush1.msra.mxu0 0.0
        %2676 = vmatprep.subr.mxu0 0.0
        %2677 = vmatpush1.msra.mxu0 0.0
        %2678 = vmatprep.subr.mxu0 0.0
        %2679 = vmatpush1.msra.mxu0 0.0
        %2680 = vmatprep.subr.mxu0 0.0
        %2681 = vmatpush1.msra.mxu0 0.0
        %2682 = vmatprep.subr.mxu0 0.0
        %2683 = vmatpush1.msra.mxu0 0.0
        %2684 = vmatprep.subr.mxu0 0.0
        %2685 = vmatpush1.msra.mxu0 0.0
        %2686 = vmatprep.subr.mxu0 0.0
        %2687 = vmatpush1.msra.mxu0 0.0
        %2688 = vmatprep.subr.mxu0 0.0
        %2689 = vmatpush1.msra.mxu0 0.0
        %2690 = vmatprep.subr.mxu0 0.0
        %2691 = vmatpush1.msra.mxu0 0.0
        %2692 = vmatprep.subr.mxu0 0.0
        %2693 = vmatpush1.msra.mxu0 0.0
        %2694 = vmatprep.mubr.f32.mxu0 0.0
        %2695 = vmatmul.mubr.f32.gmra.mrb[0].mxu0 %v600
        %v2696 = vpop.f32.mrb[0].mxu0
        %v2697 = vadd.f32 %v2464, %v2696
        %v2698 = vpop.f32.mrb[0].mxu0
        %v2699 = vadd.f32 %v2466, %v2698
        %2700 = vmatprep.mubr.f32.mxu0 0.0
        %2701 = vmatmul.mubr.f32.gmra.mrb[0].mxu0 %v601
        %v2702 = vpop.f32.mrb[0].mxu0
        %v2703 = vadd.f32 %v2470, %v2702
        %v2704 = vpop.f32.mrb[0].mxu0
        %v2705 = vadd.f32 %v2472, %v2704
        %2706 = vmatprep.mubr.f32.mxu0 0.0
        %2707 = vmatmul.mubr.f32.gmra.mrb[0].mxu0 %v602
        %v2708 = vpop.f32.mrb[0].mxu0
        %v2709 = vadd.f32 %v2476, %v2708
        %v2710 = vpop.f32.mrb[0].mxu0
        %v2711 = vadd.f32 %v2478, %v2710
        %2712 = vmatprep.mubr.f32.mxu0 0.0
        %2713 = vmatmul.mubr.f32.gmra.mrb[0].mxu0 %v603
        %v2714 = vpop.f32.mrb[0].mxu0
        %v2715 = vadd.f32 %v2482, %v2714
        %v2716 = vpop.f32.mrb[0].mxu0
        %v2717 = vadd.f32 %v2484, %v2716
        %2718 = vmatprep.mubr.f32.mxu0 0.0
        %2719 = vmatmul.mubr.f32.gmra.mrb[0].mxu0 %v604
        %v2720 = vpop.f32.mrb[0].mxu0
        %v2721 = vadd.f32 %v2488, %v2720
        %v2722 = vpop.f32.mrb[0].mxu0
        %v2723 = vadd.f32 %v2490, %v2722
        %2724 = vmatprep.mubr.f32.mxu0 0.0
        %2725 = vmatmul.mubr.f32.gmra.mrb[0].mxu0 %v605
        %v2726 = vpop.f32.mrb[0].mxu0
        %v2727 = vadd.f32 %v2494, %v2726
        %v2728 = vpop.f32.mrb[0].mxu0
        %v2729 = vadd.f32 %v2496, %v2728
        %2730 = vmatprep.mubr.f32.mxu0 0.0
        %2731 = vmatmul.mubr.f32.gmra.mrb[0].mxu0 %v606
        %v2732 = vpop.f32.mrb[0].mxu0
        %v2733 = vadd.f32 %v2500, %v2732
        %v2734 = vpop.f32.mrb[0].mxu0
        %v2735 = vadd.f32 %v2502, %v2734
        %2736 = vmatprep.mubr.f32.mxu0 0.0
        %2737 = vmatmul.mubr.f32.gmra.mrb[0].mxu0 %v608
        %v2738 = vpop.f32.mrb[0].mxu0
        %v2739 = vadd.f32 %v2506, %v2738
        %v2740 = vpop.f32.mrb[0].mxu0
        %v2741 = vadd.f32 %v2508, %v2740
        %2742 = vmatprep.mubr.f32.mxu0 0.0
        %2743 = vmatmul.mubr.f32.gmra.mrb[0].mxu0 %v609
        %v2744 = vpop.f32.mrb[0].mxu0
        %v2745 = vadd.f32 %v2512, %v2744
        %v2746 = vpop.f32.mrb[0].mxu0
        %v2747 = vadd.f32 %v2514, %v2746
        %2748 = vmatprep.mubr.f32.mxu0 0.0
        %2749 = vmatmul.mubr.f32.gmra.mrb[0].mxu0 %v610
        %v2750 = vpop.f32.mrb[0].mxu0
        %v2751 = vadd.f32 %v2518, %v2750
        %v2752 = vpop.f32.mrb[0].mxu0
        %v2753 = vadd.f32 %v2520, %v2752
        %2754 = vmatprep.mubr.f32.mxu0 0.0
        %2755 = vmatmul.mubr.f32.gmra.mrb[0].mxu0 %v611
        %v2756 = vpop.f32.mrb[0].mxu0
        %v2757 = vadd.f32 %v2524, %v2756
        %v2758 = vpop.f32.mrb[0].mxu0
        %v2759 = vadd.f32 %v2526, %v2758
        %2760 = vmatprep.mubr.f32.mxu0 0.0
        %2761 = vmatmul.mubr.f32.gmra.mrb[0].mxu0 %v612
        %v2762 = vpop.f32.mrb[0].mxu0
        %v2763 = vadd.f32 %v2530, %v2762
        %v2764 = vpop.f32.mrb[0].mxu0
        %v2765 = vadd.f32 %v2532, %v2764
        %2766 = vmatprep.mubr.f32.mxu0 0.0
        %2767 = vmatmul.mubr.f32.gmra.mrb[0].mxu0 %v613
        %v2768 = vpop.f32.mrb[0].mxu0
        %v2769 = vadd.f32 %v2536, %v2768
        %v2770 = vpop.f32.mrb[0].mxu0
        %v2771 = vadd.f32 %v2538, %v2770
        %2772 = vmatprep.mubr.f32.mxu0 0.0
        %2773 = vmatmul.mubr.f32.gmra.mrb[0].mxu0 %v614
        %v2774 = vpop.f32.mrb[0].mxu0
        %v2775 = vadd.f32 %v2542, %v2774
        %v2776 = vpop.f32.mrb[0].mxu0
        %v2777 = vadd.f32 %v2544, %v2776
        %2778 = vmatprep.mubr.f32.mxu0 0.0
        %2779 = vmatmul.mubr.f32.gmra.mrb[0].mxu0 %v585
        %v2780 = vpop.f32.mrb[0].mxu0
        %v2781 = vadd.f32 %v2548, %v2780
        %v2782 = vpop.f32.mrb[0].mxu0
        %v2783 = vadd.f32 %v2550, %v2782
        %2784 = vmatprep.mubr.f32.mxu0 0.0
        %2785 = vmatmul.mubr.f32.gmra.mrb[0].mxu0 %v586
        %v2786 = vpop.f32.mrb[0].mxu0
        %v2787 = vadd.f32 %v2554, %v2786
        %v2788 = vpop.f32.mrb[0].mxu0
        %v2789 = vadd.f32 %v2556, %v2788
        %2790 = vmatprep.mubr.f32.mxu0 0.0
        %2791 = vmatmul.mubr.f32.gmra.mrb[0].mxu0 %v587
        %v2792 = vpop.f32.mrb[0].mxu0
        %v2793 = vadd.f32 %v2560, %v2792
        %v2794 = vpop.f32.mrb[0].mxu0
        %v2795 = vadd.f32 %v2562, %v2794
        %2796 = vmatprep.mubr.f32.mxu0 0.0
        %2797 = vmatmul.mubr.f32.gmra.mrb[0].mxu0 %v588
        %v2798 = vpop.f32.mrb[0].mxu0
        %v2799 = vadd.f32 %v2566, %v2798
        %v2800 = vpop.f32.mrb[0].mxu0
        %v2801 = vadd.f32 %v2568, %v2800
        %2802 = vmatprep.mubr.f32.mxu0 0.0
        %2803 = vmatmul.mubr.f32.gmra.mrb[0].mxu0 %v589
        %v2804 = vpop.f32.mrb[0].mxu0
        %v2805 = vadd.f32 %v2572, %v2804
        %v2806 = vpop.f32.mrb[0].mxu0
        %v2807 = vadd.f32 %v2574, %v2806
        %2808 = vmatprep.mubr.f32.mxu0 0.0
        %2809 = vmatmul.mubr.f32.gmra.mrb[0].mxu0 %v590
        %v2810 = vpop.f32.mrb[0].mxu0
        %v2811 = vadd.f32 %v2578, %v2810
        %v2812 = vpop.f32.mrb[0].mxu0
        %v2813 = vadd.f32 %v2580, %v2812
        %2814 = vmatprep.mubr.f32.mxu0 0.0
        %2815 = vmatmul.mubr.f32.gmra.mrb[0].mxu0 %v584
        %v2816 = vpop.f32.mrb[0].mxu0
        %v2817 = vadd.f32 %v2584, %v2816
        %v2818 = vpop.f32.mrb[0].mxu0
        %v2819 = vadd.f32 %v2586, %v2818
        %2820 = vmatprep.mubr.f32.mxu0 0.0
        %2821 = vmatmul.mubr.f32.gmra.mrb[0].mxu0 %v593
        %v2822 = vpop.f32.mrb[0].mxu0
        %v2823 = vadd.f32 %v2590, %v2822
        %v2824 = vpop.f32.mrb[0].mxu0
        %v2825 = vadd.f32 %v2592, %v2824
        %2826 = vmatprep.mubr.f32.mxu0 0.0
        %2827 = vmatmul.mubr.f32.gmra.mrb[0].mxu0 %v594
        %v2828 = vpop.f32.mrb[0].mxu0
        %v2829 = vadd.f32 %v2596, %v2828
        %v2830 = vpop.f32.mrb[0].mxu0
        %v2831 = vadd.f32 %v2598, %v2830
        %2832 = vmatprep.mubr.f32.mxu0 0.0
        %2833 = vmatmul.mubr.f32.gmra.mrb[0].mxu0 %v595
        %v2834 = vpop.f32.mrb[0].mxu0
        %v2835 = vadd.f32 %v2602, %v2834
        %v2836 = vpop.f32.mrb[0].mxu0
        %v2837 = vadd.f32 %v2604, %v2836
        %2838 = vmatprep.mubr.f32.mxu0 0.0
        %2839 = vmatmul.mubr.f32.gmra.mrb[0].mxu0 %v596
        %v2840 = vpop.f32.mrb[0].mxu0
        %v2841 = vadd.f32 %v2608, %v2840
        %v2842 = vpop.f32.mrb[0].mxu0
        %v2843 = vadd.f32 %v2610, %v2842
        %2844 = vmatprep.mubr.f32.mxu0 0.0
        %2845 = vmatmul.mubr.f32.gmra.mrb[0].mxu0 %v597
        %v2846 = vpop.f32.mrb[0].mxu0
        %v2847 = vadd.f32 %v2614, %v2846
        %v2848 = vpop.f32.mrb[0].mxu0
        %v2849 = vadd.f32 %v2616, %v2848
        %2850 = vmatprep.mubr.f32.mxu0 0.0
        %2851 = vmatmul.mubr.f32.gmra.mrb[0].mxu0 %v598
        %v2852 = vpop.f32.mrb[0].mxu0
        %v2853 = vadd.f32 %v2620, %v2852
        %v2854 = vpop.f32.mrb[0].mxu0
        %v2855 = vadd.f32 %v2622, %v2854
        %2856 = vmatprep.mubr.f32.mxu0 0.0
        %2857 = vmatmul.mubr.f32.gmra.mrb[0].mxu0 %v592
        %v2858 = vpop.f32.mrb[0].mxu0
        %v2859 = vadd.f32 %v2626, %v2858
        %v2860 = vpop.f32.mrb[0].mxu0
        %v2861 = vadd.f32 %v2628, %v2860
        %2862 = vdwg.mxu0
        %v2863 = vmax.f32 %v1299, %v1341
        %v2864 = vmax.f32 %v1301, %v1343
        %v2865 = vmax.f32 %v1765, %v1807
        %v2866 = vmax.f32 %v1767, %v1809
        %v2867 = vmax.f32 %v2231, %v2273
        %v2868 = vmax.f32 %v2233, %v2275
        %v2869 = vmax.f32 %v2697, %v2739
        %v2870 = vmax.f32 %v2699, %v2741
        %v2871 = vmax.f32 %v1305, %v1347
        %v2872 = vmax.f32 %v1307, %v1349
        %v2873 = vmax.f32 %v1771, %v1813
        %v2874 = vmax.f32 %v1773, %v1815
        %v2875 = vmax.f32 %v2237, %v2279
        %v2876 = vmax.f32 %v2239, %v2281
        %v2877 = vmax.f32 %v2703, %v2745
        %v2878 = vmax.f32 %v2705, %v2747
        %v2879 = vmax.f32 %v1311, %v1353
        %v2880 = vmax.f32 %v1313, %v1355
        %v2881 = vmax.f32 %v1777, %v1819
        %v2882 = vmax.f32 %v1779, %v1821
        %v2883 = vmax.f32 %v2243, %v2285
        %v2884 = vmax.f32 %v2245, %v2287
        %v2885 = vmax.f32 %v2709, %v2751
        %v2886 = vmax.f32 %v2711, %v2753
        %v2887 = vmax.f32 %v1317, %v1359
        %v2888 = vmax.f32 %v1319, %v1361
        %v2889 = vmax.f32 %v1783, %v1825
        %v2890 = vmax.f32 %v1785, %v1827
        %v2891 = vmax.f32 %v2249, %v2291
        %v2892 = vmax.f32 %v2251, %v2293
        %v2893 = vmax.f32 %v2715, %v2757
        %v2894 = vmax.f32 %v2717, %v2759
        %v2895 = vmax.f32 %v1323, %v1365
        %v2896 = vmax.f32 %v1325, %v1367
        %v2897 = vmax.f32 %v1789, %v1831
        %v2898 = vmax.f32 %v1791, %v1833
        %v2899 = vmax.f32 %v2255, %v2297
        %v2900 = vmax.f32 %v2257, %v2299
        %v2901 = vmax.f32 %v2721, %v2763
        %v2902 = vmax.f32 %v2723, %v2765
        %v2903 = vmax.f32 %v1329, %v1371
        %v2904 = vmax.f32 %v1331, %v1373
        %v2905 = vmax.f32 %v1795, %v1837
        %v2906 = vmax.f32 %v1797, %v1839
        %v2907 = vmax.f32 %v2261, %v2303
        %v2908 = vmax.f32 %v2263, %v2305
        %v2909 = vmax.f32 %v2727, %v2769
        %v2910 = vmax.f32 %v2729, %v2771
        %v2911 = vmax.f32 %v1335, %v1377
        %v2912 = vmax.f32 %v1337, %v1379
        %v2913 = vmax.f32 %v1801, %v1843
        %v2914 = vmax.f32 %v1803, %v1845
        %v2915 = vmax.f32 %v2267, %v2309
        %v2916 = vmax.f32 %v2269, %v2311
        %v2917 = vmax.f32 %v2733, %v2775
        %v2918 = vmax.f32 %v2735, %v2777
        %v2919 = vmax.f32 %v1383, %v1425
        %v2920 = vmax.f32 %v1385, %v1427
        %v2921 = vmax.f32 %v1849, %v1891
        %v2922 = vmax.f32 %v1851, %v1893
        %v2923 = vmax.f32 %v2315, %v2357
        %v2924 = vmax.f32 %v2317, %v2359
        %v2925 = vmax.f32 %v2781, %v2823
        %v2926 = vmax.f32 %v2783, %v2825
        %v2927 = vmax.f32 %v1389, %v1431
        %v2928 = vmax.f32 %v1391, %v1433
        %v2929 = vmax.f32 %v1855, %v1897
        %v2930 = vmax.f32 %v1857, %v1899
        %v2931 = vmax.f32 %v2321, %v2363
        %v2932 = vmax.f32 %v2323, %v2365
        %v2933 = vmax.f32 %v2787, %v2829
        %v2934 = vmax.f32 %v2789, %v2831
        %v2935 = vmax.f32 %v1395, %v1437
        %v2936 = vmax.f32 %v1397, %v1439
        %v2937 = vmax.f32 %v1861, %v1903
        %v2938 = vmax.f32 %v1863, %v1905
        %v2939 = vmax.f32 %v2327, %v2369
        %v2940 = vmax.f32 %v2329, %v2371
        %v2941 = vmax.f32 %v2793, %v2835
        %v2942 = vmax.f32 %v2795, %v2837
        %v2943 = vmax.f32 %v1401, %v1443
        %v2944 = vmax.f32 %v1403, %v1445
        %v2945 = vmax.f32 %v1867, %v1909
        %v2946 = vmax.f32 %v1869, %v1911
        %v2947 = vmax.f32 %v2333, %v2375
        %v2948 = vmax.f32 %v2335, %v2377
        %v2949 = vmax.f32 %v2799, %v2841
        %v2950 = vmax.f32 %v2801, %v2843
        %v2951 = vmax.f32 %v1407, %v1449
        %v2952 = vmax.f32 %v1409, %v1451
        %v2953 = vmax.f32 %v1873, %v1915
        %v2954 = vmax.f32 %v1875, %v1917
        %v2955 = vmax.f32 %v2339, %v2381
        %v2956 = vmax.f32 %v2341, %v2383
        %v2957 = vmax.f32 %v2805, %v2847
        %v2958 = vmax.f32 %v2807, %v2849
        %v2959 = vmax.f32 %v1413, %v1455
        %v2960 = vmax.f32 %v1415, %v1457
        %v2961 = vmax.f32 %v1879, %v1921
        %v2962 = vmax.f32 %v1881, %v1923
        %v2963 = vmax.f32 %v2345, %v2387
        %v2964 = vmax.f32 %v2347, %v2389
        %v2965 = vmax.f32 %v2811, %v2853
        %v2966 = vmax.f32 %v2813, %v2855
        %v2967 = vmax.f32 %v1419, %v1461
        %v2968 = vmax.f32 %v1421, %v1463
        %v2969 = vmax.f32 %v1885, %v1927
        %v2970 = vmax.f32 %v1887, %v1929
        %v2971 = vmax.f32 %v2351, %v2393
        %v2972 = vmax.f32 %v2353, %v2395
        %v2973 = vmax.f32 %v2817, %v2859
        %v2974 = vmax.f32 %v2819, %v2861
        %v2975 = vmax.f32 %v2863, %v2867
        %v2976 = vmax.f32 %v2864, %v2868
        %v2977 = vmax.f32 %v2865, %v2869
        %v2978 = vmax.f32 %v2866, %v2870
        %v2979 = vmax.f32 %v2871, %v2875
        %v2980 = vmax.f32 %v2872, %v2876
        %v2981 = vmax.f32 %v2873, %v2877
        %v2982 = vmax.f32 %v2874, %v2878
        %v2983 = vmax.f32 %v2879, %v2883
        %v2984 = vmax.f32 %v2880, %v2884
        %v2985 = vmax.f32 %v2881, %v2885
        %v2986 = vmax.f32 %v2882, %v2886
        %v2987 = vmax.f32 %v2887, %v2891
        %v2988 = vmax.f32 %v2888, %v2892
        %v2989 = vmax.f32 %v2889, %v2893
        %v2990 = vmax.f32 %v2890, %v2894
        %v2991 = vmax.f32 %v2895, %v2899
        %v2992 = vmax.f32 %v2896, %v2900
        %v2993 = vmax.f32 %v2897, %v2901
        %v2994 = vmax.f32 %v2898, %v2902
        %v2995 = vmax.f32 %v2903, %v2907
        %v2996 = vmax.f32 %v2904, %v2908
        %v2997 = vmax.f32 %v2905, %v2909
        %v2998 = vmax.f32 %v2906, %v2910
        %v2999 = vmax.f32 %v2911, %v2915
        %v3000 = vmax.f32 %v2912, %v2916
        %v3001 = vmax.f32 %v2913, %v2917
        %v3002 = vmax.f32 %v2914, %v2918
        %v3003 = vld [vmem:[#allocation5] sm:$0xf]
        %v3005 = vlaneseq
        %v3006 = vshrl.u32 %v3005, 7
        %v3007 = vsub.s32 0, %v3006
        %v3008 = vrot.slane %v3003, %v3007
        %v3009 = vlaneseq
        %v3010 = vshrl.u32 %v3009, 7
        %v3011 = vsub.s32 1, %v3010
        %v3012 = vrot.slane %v3003, %v3011
        %v3013 = vlaneseq
        %v3014 = vshrl.u32 %v3013, 7
        %v3015 = vsub.s32 2, %v3014
        %v3016 = vrot.slane %v3003, %v3015
        %v3017 = vlaneseq
        %v3018 = vshrl.u32 %v3017, 7
        %v3019 = vsub.s32 3, %v3018
        %v3020 = vrot.slane %v3003, %v3019
        %v3025 = vadd.f32 %v2975, %v3008
        %v3026 = vadd.f32 %v2976, %v3012
        %v3027 = vadd.f32 %v2977, %v3016
        %v3028 = vadd.f32 %v2978, %v3020
        %v3029 = vadd.f32 %v2979, %v3008
        %v3030 = vadd.f32 %v2980, %v3012
        %v3031 = vadd.f32 %v2981, %v3016
        %v3032 = vadd.f32 %v2982, %v3020
        %v3033 = vadd.f32 %v2983, %v3008
        %v3034 = vadd.f32 %v2984, %v3012
        %v3035 = vadd.f32 %v2985, %v3016
        %v3036 = vadd.f32 %v2986, %v3020
        %v3037 = vadd.f32 %v2987, %v3008
        %v3038 = vadd.f32 %v2988, %v3012
        %v3039 = vadd.f32 %v2989, %v3016
        %v3040 = vadd.f32 %v2990, %v3020
        %v3041 = vadd.f32 %v2991, %v3008
        %v3042 = vadd.f32 %v2992, %v3012
        %v3043 = vadd.f32 %v2993, %v3016
        %v3044 = vadd.f32 %v2994, %v3020
        %v3045 = vadd.f32 %v2995, %v3008
        %v3046 = vadd.f32 %v2996, %v3012
        %v3047 = vadd.f32 %v2997, %v3016
        %v3048 = vadd.f32 %v2998, %v3020
        %v3049 = vadd.f32 %v2999, %v3008
        %v3050 = vadd.f32 %v3000, %v3012
        %v3051 = vadd.f32 %v3001, %v3016
        %v3052 = vadd.f32 %v3002, %v3020
        %v3053 = vmax.f32 %v3025, 0.0
        %v3054 = vmax.f32 %v3026, 0.0
        %v3055 = vmax.f32 %v3027, 0.0
        %v3056 = vmax.f32 %v3028, 0.0
        %v3057 = vmax.f32 %v3029, 0.0
        %v3058 = vmax.f32 %v3030, 0.0
        %v3059 = vmax.f32 %v3031, 0.0
        %v3060 = vmax.f32 %v3032, 0.0
        %v3061 = vmax.f32 %v3033, 0.0
        %v3062 = vmax.f32 %v3034, 0.0
        %v3063 = vmax.f32 %v3035, 0.0
        %v3064 = vmax.f32 %v3036, 0.0
        %v3065 = vmax.f32 %v3037, 0.0
        %v3066 = vmax.f32 %v3038, 0.0
        %v3067 = vmax.f32 %v3039, 0.0
        %v3068 = vmax.f32 %v3040, 0.0
        %v3069 = vmax.f32 %v3041, 0.0
        %v3070 = vmax.f32 %v3042, 0.0
        %v3071 = vmax.f32 %v3043, 0.0
        %v3072 = vmax.f32 %v3044, 0.0
        %v3073 = vmax.f32 %v3045, 0.0
        %v3074 = vmax.f32 %v3046, 0.0
        %v3075 = vmax.f32 %v3047, 0.0
        %v3076 = vmax.f32 %v3048, 0.0
        %v3077 = vmax.f32 %v3049, 0.0
        %v3078 = vmax.f32 %v3050, 0.0
        %v3079 = vmax.f32 %v3051, 0.0
        %v3080 = vmax.f32 %v3052, 0.0
        %v3081 = vmax.f32 %v2919, %v2923
        %v3082 = vmax.f32 %v2920, %v2924
        %v3083 = vmax.f32 %v2921, %v2925
        %v3084 = vmax.f32 %v2922, %v2926
        %v3085 = vmax.f32 %v2927, %v2931
        %v3086 = vmax.f32 %v2928, %v2932
        %v3087 = vmax.f32 %v2929, %v2933
        %v3088 = vmax.f32 %v2930, %v2934
        %v3089 = vmax.f32 %v2935, %v2939
        %v3090 = vmax.f32 %v2936, %v2940
        %v3091 = vmax.f32 %v2937, %v2941
        %v3092 = vmax.f32 %v2938, %v2942
        %v3093 = vmax.f32 %v2943, %v2947
        %v3094 = vmax.f32 %v2944, %v2948
        %v3095 = vmax.f32 %v2945, %v2949
        %v3096 = vmax.f32 %v2946, %v2950
        %v3097 = vmax.f32 %v2951, %v2955
        %v3098 = vmax.f32 %v2952, %v2956
        %v3099 = vmax.f32 %v2953, %v2957
        %v3100 = vmax.f32 %v2954, %v2958
        %v3101 = vmax.f32 %v2959, %v2963
        %v3102 = vmax.f32 %v2960, %v2964
        %v3103 = vmax.f32 %v2961, %v2965
        %v3104 = vmax.f32 %v2962, %v2966
        %v3105 = vmax.f32 %v2967, %v2971
        %v3106 = vmax.f32 %v2968, %v2972
        %v3107 = vmax.f32 %v2969, %v2973
        %v3108 = vmax.f32 %v2970, %v2974
        %v3109 = vadd.f32 %v3081, %v3008
        %v3110 = vadd.f32 %v3082, %v3012
        %v3111 = vadd.f32 %v3083, %v3016
        %v3112 = vadd.f32 %v3084, %v3020
        %v3113 = vadd.f32 %v3085, %v3008
        %v3114 = vadd.f32 %v3086, %v3012
        %v3115 = vadd.f32 %v3087, %v3016
        %v3116 = vadd.f32 %v3088, %v3020
        %v3117 = vadd.f32 %v3089, %v3008
        %v3118 = vadd.f32 %v3090, %v3012
        %v3119 = vadd.f32 %v3091, %v3016
        %v3120 = vadd.f32 %v3092, %v3020
        %v3121 = vadd.f32 %v3093, %v3008
        %v3122 = vadd.f32 %v3094, %v3012
        %v3123 = vadd.f32 %v3095, %v3016
        %v3124 = vadd.f32 %v3096, %v3020
        %v3125 = vadd.f32 %v3097, %v3008
        %v3126 = vadd.f32 %v3098, %v3012
        %v3127 = vadd.f32 %v3099, %v3016
        %v3128 = vadd.f32 %v3100, %v3020
        %v3129 = vadd.f32 %v3101, %v3008
        %v3130 = vadd.f32 %v3102, %v3012
        %v3131 = vadd.f32 %v3103, %v3016
        %v3132 = vadd.f32 %v3104, %v3020
        %v3133 = vadd.f32 %v3105, %v3008
        %v3134 = vadd.f32 %v3106, %v3012
        %v3135 = vadd.f32 %v3107, %v3016
        %v3136 = vadd.f32 %v3108, %v3020
        %v3137 = vmax.f32 %v3109, 0.0
        %v3138 = vmax.f32 %v3110, 0.0
        %v3139 = vmax.f32 %v3111, 0.0
        %v3140 = vmax.f32 %v3112, 0.0
        %v3141 = vmax.f32 %v3113, 0.0
        %v3142 = vmax.f32 %v3114, 0.0
        %v3143 = vmax.f32 %v3115, 0.0
        %v3144 = vmax.f32 %v3116, 0.0
        %v3145 = vmax.f32 %v3117, 0.0
        %v3146 = vmax.f32 %v3118, 0.0
        %v3147 = vmax.f32 %v3119, 0.0
        %v3148 = vmax.f32 %v3120, 0.0
        %v3149 = vmax.f32 %v3121, 0.0
        %v3150 = vmax.f32 %v3122, 0.0
        %v3151 = vmax.f32 %v3123, 0.0
        %v3152 = vmax.f32 %v3124, 0.0
        %v3153 = vmax.f32 %v3125, 0.0
        %v3154 = vmax.f32 %v3126, 0.0
        %v3155 = vmax.f32 %v3127, 0.0
        %v3156 = vmax.f32 %v3128, 0.0
        %v3157 = vmax.f32 %v3129, 0.0
        %v3158 = vmax.f32 %v3130, 0.0
        %v3159 = vmax.f32 %v3131, 0.0
        %v3160 = vmax.f32 %v3132, 0.0
        %v3161 = vmax.f32 %v3133, 0.0
        %v3162 = vmax.f32 %v3134, 0.0
        %v3163 = vmax.f32 %v3135, 0.0
        %v3164 = vmax.f32 %v3136, 0.0
        %v3165 = vld [vmem:[#allocation7] sm:$0xff]
        %v3166 = vld [vmem:[#allocation7 + $0x8] sm:$0xff]
        %v3167 = vld [vmem:[#allocation7 + $0x10] sm:$0xff]
        %v3168 = vld [vmem:[#allocation7 + $0x18] sm:$0xff]
        %v3169 = vld [vmem:[#allocation7 + $0x20] sm:$0xff]
        %v3170 = vld [vmem:[#allocation7 + $0x28] sm:$0xff]
        %v3171 = vld [vmem:[#allocation7 + $0x30] sm:$0xff]
        %v3172 = vld [vmem:[#allocation7 + $0x38] sm:$0xff]
        %v3173 = vld [vmem:[#allocation7 + $0x40] sm:$0xff]
        %v3174 = vld [vmem:[#allocation7 + $0x48] sm:$0xff]
        %v3175 = vld [vmem:[#allocation7 + $0x50] sm:$0xff]
        %v3176 = vld [vmem:[#allocation7 + $0x58] sm:$0xff]
        %v3177 = vld [vmem:[#allocation7 + $0x60] sm:$0xff]
        %v3178 = vld [vmem:[#allocation7 + $0x68] sm:$0xff]
        %v3179 = vld [vmem:[#allocation7 + $0x70] sm:$0xff]
        %v3180 = vld [vmem:[#allocation7 + $0x78] sm:$0xff]
        %v3181 = vld [vmem:[#allocation7 + $0x80] sm:$0xff]
        %v3182 = vld [vmem:[#allocation7 + $0x88] sm:$0xff]
        %v3183 = vld [vmem:[#allocation7 + $0x90] sm:$0xff]
        %v3184 = vld [vmem:[#allocation7 + $0x98] sm:$0xff]
        %v3185 = vld [vmem:[#allocation7 + $0xa0] sm:$0xff]
        %v3186 = vld [vmem:[#allocation7 + $0xa8] sm:$0xff]
        %v3187 = vld [vmem:[#allocation7 + $0xb0] sm:$0xff]
        %v3188 = vld [vmem:[#allocation7 + $0xb8] sm:$0xff]
        %v3189 = vld [vmem:[#allocation7 + $0xc0] sm:$0xff]
        %v3190 = vld [vmem:[#allocation7 + $0xc8] sm:$0xff]
        %v3191 = vld [vmem:[#allocation7 + $0xd0] sm:$0xff]
        %v3192 = vld [vmem:[#allocation7 + $0xd8] sm:$0xff]
        %v3193 = vld [vmem:[#allocation7 + $0xe0] sm:$0xff]
        %v3194 = vld [vmem:[#allocation7 + $0xe8] sm:$0xff]
        %v3195 = vld [vmem:[#allocation7 + $0xf0] sm:$0xff]
        %v3196 = vld [vmem:[#allocation7 + $0xf8] sm:$0xff]
        %v3197 = vld [vmem:[#allocation7 + $0x100] sm:$0xff]
        %v3198 = vld [vmem:[#allocation7 + $0x108] sm:$0xff]
        %v3199 = vld [vmem:[#allocation7 + $0x110] sm:$0xff]
        %v3200 = vld [vmem:[#allocation7 + $0x118] sm:$0xff]
        %v3201 = vld [vmem:[#allocation7 + $0x120] sm:$0xff]
        %v3202 = vld [vmem:[#allocation7 + $0x128] sm:$0xff]
        %v3203 = vld [vmem:[#allocation7 + $0x130] sm:$0xff]
        %v3204 = vld [vmem:[#allocation7 + $0x138] sm:$0xff]
        %v3205 = vld [vmem:[#allocation7 + $0x140] sm:$0xff]
        %v3206 = vld [vmem:[#allocation7 + $0x148] sm:$0xff]
        %v3207 = vld [vmem:[#allocation7 + $0x150] sm:$0xff]
        %v3208 = vld [vmem:[#allocation7 + $0x158] sm:$0xff]
        %v3209 = vld [vmem:[#allocation7 + $0x160] sm:$0xff]
        %v3210 = vld [vmem:[#allocation7 + $0x168] sm:$0xff]
        %v3211 = vld [vmem:[#allocation7 + $0x170] sm:$0xff]
        %v3212 = vld [vmem:[#allocation7 + $0x178] sm:$0xff]
        %v3213 = vld [vmem:[#allocation7 + $0x180] sm:$0xff]
        %v3214 = vld [vmem:[#allocation7 + $0x188] sm:$0xff]
        %v3215 = vld [vmem:[#allocation7 + $0x190] sm:$0xff]
        %v3216 = vld [vmem:[#allocation7 + $0x198] sm:$0xff]
        %v3217 = vld [vmem:[#allocation7 + $0x1a0] sm:$0xff]
        %v3218 = vld [vmem:[#allocation7 + $0x1a8] sm:$0xff]
        %v3219 = vld [vmem:[#allocation7 + $0x1b0] sm:$0xff]
        %v3220 = vld [vmem:[#allocation7 + $0x1b8] sm:$0xff]
        %v3221 = vld [vmem:[#allocation7 + $0x1c0] sm:$0xff]
        %v3222 = vld [vmem:[#allocation7 + $0x1c8] sm:$0xff]
        %v3223 = vld [vmem:[#allocation7 + $0x1d0] sm:$0xff]
        %v3224 = vld [vmem:[#allocation7 + $0x1d8] sm:$0xff]
        %v3225 = vld [vmem:[#allocation7 + $0x1e0] sm:$0xff]
        %v3226 = vld [vmem:[#allocation7 + $0x1e8] sm:$0xff]
        %v3227 = vld [vmem:[#allocation7 + $0x1f0] sm:$0xff]
        %v3228 = vld [vmem:[#allocation7 + $0x1f8] sm:$0xff]
        %v3229 = vld [vmem:[#allocation7 + $0x200] sm:$0xff]
        %v3230 = vld [vmem:[#allocation7 + $0x208] sm:$0xff]
        %v3231 = vld [vmem:[#allocation7 + $0x210] sm:$0xff]
        %v3232 = vld [vmem:[#allocation7 + $0x218] sm:$0xff]
        %v3233 = vld [vmem:[#allocation7 + $0x220] sm:$0xff]
        %v3234 = vld [vmem:[#allocation7 + $0x228] sm:$0xff]
        %v3235 = vld [vmem:[#allocation7 + $0x230] sm:$0xff]
        %v3236 = vld [vmem:[#allocation7 + $0x238] sm:$0xff]
        %v3237 = vld [vmem:[#allocation7 + $0x240] sm:$0xff]
        %v3238 = vld [vmem:[#allocation7 + $0x248] sm:$0xff]
        %v3239 = vld [vmem:[#allocation7 + $0x250] sm:$0xff]
        %v3240 = vld [vmem:[#allocation7 + $0x258] sm:$0xff]
        %v3241 = vld [vmem:[#allocation7 + $0x260] sm:$0xff]
        %v3242 = vld [vmem:[#allocation7 + $0x268] sm:$0xff]
        %v3243 = vld [vmem:[#allocation7 + $0x270] sm:$0xff]
        %v3244 = vld [vmem:[#allocation7 + $0x278] sm:$0xff]
        %v3245 = vld [vmem:[#allocation7 + $0x280] sm:$0xff]
        %v3246 = vld [vmem:[#allocation7 + $0x288] sm:$0xff]
        %v3247 = vld [vmem:[#allocation7 + $0x290] sm:$0xff]
        %v3248 = vld [vmem:[#allocation7 + $0x298] sm:$0xff]
        %v3249 = vld [vmem:[#allocation7 + $0x2a0] sm:$0xff]
        %v3250 = vld [vmem:[#allocation7 + $0x2a8] sm:$0xff]
        %v3251 = vld [vmem:[#allocation7 + $0x2b0] sm:$0xff]
        %v3252 = vld [vmem:[#allocation7 + $0x2b8] sm:$0xff]
        %v3253 = vld [vmem:[#allocation7 + $0x2c0] sm:$0xff]
        %v3254 = vld [vmem:[#allocation7 + $0x2c8] sm:$0xff]
        %v3255 = vld [vmem:[#allocation7 + $0x2d0] sm:$0xff]
        %v3256 = vld [vmem:[#allocation7 + $0x2d8] sm:$0xff]
        %v3257 = vld [vmem:[#allocation7 + $0x2e0] sm:$0xff]
        %v3258 = vld [vmem:[#allocation7 + $0x2e8] sm:$0xff]
        %v3259 = vld [vmem:[#allocation7 + $0x2f0] sm:$0xff]
        %v3260 = vld [vmem:[#allocation7 + $0x2f8] sm:$0xff]
        %v3261 = vld [vmem:[#allocation7 + $0x300] sm:$0xff]
        %v3262 = vld [vmem:[#allocation7 + $0x308] sm:$0xff]
        %v3263 = vld [vmem:[#allocation7 + $0x310] sm:$0xff]
        %v3264 = vld [vmem:[#allocation7 + $0x318] sm:$0xff]
        %v3265 = vld [vmem:[#allocation7 + $0x320] sm:$0xff]
        %v3266 = vld [vmem:[#allocation7 + $0x328] sm:$0xff]
        %v3267 = vld [vmem:[#allocation7 + $0x330] sm:$0xff]
        %v3268 = vld [vmem:[#allocation7 + $0x338] sm:$0xff]
        %v3269 = vld [vmem:[#allocation7 + $0x340] sm:$0xff]
        %v3270 = vld [vmem:[#allocation7 + $0x348] sm:$0xff]
        %v3271 = vld [vmem:[#allocation7 + $0x350] sm:$0xff]
        %v3272 = vld [vmem:[#allocation7 + $0x358] sm:$0xff]
        %v3273 = vld [vmem:[#allocation7 + $0x360] sm:$0xff]
        %v3274 = vld [vmem:[#allocation7 + $0x368] sm:$0xff]
        %v3275 = vld [vmem:[#allocation7 + $0x370] sm:$0xff]
        %v3276 = vld [vmem:[#allocation7 + $0x378] sm:$0xff]
        %v3277 = vld [vmem:[#allocation7 + $0x380] sm:$0xff]
        %v3278 = vld [vmem:[#allocation7 + $0x388] sm:$0xff]
        %v3279 = vld [vmem:[#allocation7 + $0x390] sm:$0xff]
        %v3280 = vld [vmem:[#allocation7 + $0x398] sm:$0xff]
        %v3281 = vld [vmem:[#allocation7 + $0x3a0] sm:$0xff]
        %v3282 = vld [vmem:[#allocation7 + $0x3a8] sm:$0xff]
        %v3283 = vld [vmem:[#allocation7 + $0x3b0] sm:$0xff]
        %v3284 = vld [vmem:[#allocation7 + $0x3b8] sm:$0xff]
        %v3285 = vld [vmem:[#allocation7 + $0x3c0] sm:$0xff]
        %v3286 = vld [vmem:[#allocation7 + $0x3c8] sm:$0xff]
        %v3287 = vld [vmem:[#allocation7 + $0x3d0] sm:$0xff]
        %v3288 = vld [vmem:[#allocation7 + $0x3d8] sm:$0xff]
        %v3289 = vld [vmem:[#allocation7 + $0x3e0] sm:$0xff]
        %v3290 = vld [vmem:[#allocation7 + $0x3e8] sm:$0xff]
        %v3291 = vld [vmem:[#allocation7 + $0x3f0] sm:$0xff]
        %v3292 = vld [vmem:[#allocation7 + $0x3f8] sm:$0xff]
        %v3293 = vld [vmem:[#allocation7 + $0x400] sm:$0xff]
        %v3294 = vld [vmem:[#allocation7 + $0x408] sm:$0xff]
        %v3295 = vld [vmem:[#allocation7 + $0x410] sm:$0xff]
        %v3296 = vld [vmem:[#allocation7 + $0x418] sm:$0xff]
        %v3297 = vld [vmem:[#allocation7 + $0x420] sm:$0xff]
        %v3298 = vld [vmem:[#allocation7 + $0x428] sm:$0xff]
        %v3299 = vld [vmem:[#allocation7 + $0x430] sm:$0xff]
        %v3300 = vld [vmem:[#allocation7 + $0x438] sm:$0xff]
        %v3301 = vld [vmem:[#allocation7 + $0x440] sm:$0xff]
        %v3302 = vld [vmem:[#allocation7 + $0x448] sm:$0xff]
        %v3303 = vld [vmem:[#allocation7 + $0x450] sm:$0xff]
        %v3304 = vld [vmem:[#allocation7 + $0x458] sm:$0xff]
        %v3305 = vld [vmem:[#allocation7 + $0x460] sm:$0xff]
        %v3306 = vld [vmem:[#allocation7 + $0x468] sm:$0xff]
        %v3307 = vld [vmem:[#allocation7 + $0x470] sm:$0xff]
        %v3308 = vld [vmem:[#allocation7 + $0x478] sm:$0xff]
        %v3309 = vld [vmem:[#allocation7 + $0x480] sm:$0xff]
        %v3310 = vld [vmem:[#allocation7 + $0x488] sm:$0xff]
        %v3311 = vld [vmem:[#allocation7 + $0x490] sm:$0xff]
        %v3312 = vld [vmem:[#allocation7 + $0x498] sm:$0xff]
        %v3313 = vld [vmem:[#allocation7 + $0x4a0] sm:$0xff]
        %v3314 = vld [vmem:[#allocation7 + $0x4a8] sm:$0xff]
        %v3315 = vld [vmem:[#allocation7 + $0x4b0] sm:$0xff]
        %v3316 = vld [vmem:[#allocation7 + $0x4b8] sm:$0xff]
        %v3317 = vld [vmem:[#allocation7 + $0x4c0] sm:$0xff]
        %v3318 = vld [vmem:[#allocation7 + $0x4c8] sm:$0xff]
        %v3319 = vld [vmem:[#allocation7 + $0x4d0] sm:$0xff]
        %v3320 = vld [vmem:[#allocation7 + $0x4d8] sm:$0xff]
        %v3321 = vld [vmem:[#allocation7 + $0x4e0] sm:$0xff]
        %v3322 = vld [vmem:[#allocation7 + $0x4e8] sm:$0xff]
        %v3323 = vld [vmem:[#allocation7 + $0x4f0] sm:$0xff]
        %v3324 = vld [vmem:[#allocation7 + $0x4f8] sm:$0xff]
        %v3325 = vld [vmem:[#allocation7 + $0x500] sm:$0xff]
        %v3326 = vld [vmem:[#allocation7 + $0x508] sm:$0xff]
        %v3327 = vld [vmem:[#allocation7 + $0x510] sm:$0xff]
        %v3328 = vld [vmem:[#allocation7 + $0x518] sm:$0xff]
        %v3329 = vld [vmem:[#allocation7 + $0x520] sm:$0xff]
        %v3330 = vld [vmem:[#allocation7 + $0x528] sm:$0xff]
        %v3331 = vld [vmem:[#allocation7 + $0x530] sm:$0xff]
        %v3332 = vld [vmem:[#allocation7 + $0x538] sm:$0xff]
        %v3333 = vld [vmem:[#allocation7 + $0x540] sm:$0xff]
        %v3334 = vld [vmem:[#allocation7 + $0x548] sm:$0xff]
        %v3335 = vld [vmem:[#allocation7 + $0x550] sm:$0xff]
        %v3336 = vld [vmem:[#allocation7 + $0x558] sm:$0xff]
        %v3337 = vld [vmem:[#allocation7 + $0x560] sm:$0xff]
        %v3338 = vld [vmem:[#allocation7 + $0x568] sm:$0xff]
        %v3339 = vld [vmem:[#allocation7 + $0x570] sm:$0xff]
        %v3340 = vld [vmem:[#allocation7 + $0x578] sm:$0xff]
        %v3341 = vld [vmem:[#allocation7 + $0x580] sm:$0xff]
        %v3342 = vld [vmem:[#allocation7 + $0x588] sm:$0xff]
        %v3343 = vld [vmem:[#allocation7 + $0x590] sm:$0xff]
        %v3344 = vld [vmem:[#allocation7 + $0x598] sm:$0xff]
        %v3345 = vld [vmem:[#allocation7 + $0x5a0] sm:$0xff]
        %v3346 = vld [vmem:[#allocation7 + $0x5a8] sm:$0xff]
        %v3347 = vld [vmem:[#allocation7 + $0x5b0] sm:$0xff]
        %v3348 = vld [vmem:[#allocation7 + $0x5b8] sm:$0xff]
        %v3349 = vld [vmem:[#allocation7 + $0x5c0] sm:$0xff]
        %v3350 = vld [vmem:[#allocation7 + $0x5c8] sm:$0xff]
        %v3351 = vld [vmem:[#allocation7 + $0x5d0] sm:$0xff]
        %v3352 = vld [vmem:[#allocation7 + $0x5d8] sm:$0xff]
        %v3353 = vld [vmem:[#allocation7 + $0x5e0] sm:$0xff]
        %v3354 = vld [vmem:[#allocation7 + $0x5e8] sm:$0xff]
        %v3355 = vld [vmem:[#allocation7 + $0x5f0] sm:$0xff]
        %v3356 = vld [vmem:[#allocation7 + $0x5f8] sm:$0xff]
        %v3357 = vld [vmem:[#allocation7 + $0x600] sm:$0xff]
        %v3358 = vld [vmem:[#allocation7 + $0x608] sm:$0xff]
        %v3359 = vld [vmem:[#allocation7 + $0x610] sm:$0xff]
        %v3360 = vld [vmem:[#allocation7 + $0x618] sm:$0xff]
        %v3361 = vld [vmem:[#allocation7 + $0x620] sm:$0xff]
        %v3362 = vld [vmem:[#allocation7 + $0x628] sm:$0xff]
        %v3363 = vld [vmem:[#allocation7 + $0x630] sm:$0xff]
        %v3364 = vld [vmem:[#allocation7 + $0x638] sm:$0xff]
        %v3365 = vld [vmem:[#allocation7 + $0x640] sm:$0xff]
        %v3366 = vld [vmem:[#allocation7 + $0x648] sm:$0xff]
        %v3367 = vld [vmem:[#allocation7 + $0x650] sm:$0xff]
        %v3368 = vld [vmem:[#allocation7 + $0x658] sm:$0xff]
        %v3369 = vld [vmem:[#allocation7 + $0x660] sm:$0xff]
        %v3370 = vld [vmem:[#allocation7 + $0x668] sm:$0xff]
        %v3371 = vld [vmem:[#allocation7 + $0x670] sm:$0xff]
        %v3372 = vld [vmem:[#allocation7 + $0x678] sm:$0xff]
        %v3373 = vld [vmem:[#allocation7 + $0x680] sm:$0xff]
        %v3374 = vld [vmem:[#allocation7 + $0x688] sm:$0xff]
        %v3375 = vld [vmem:[#allocation7 + $0x690] sm:$0xff]
        %v3376 = vld [vmem:[#allocation7 + $0x698] sm:$0xff]
        %v3377 = vld [vmem:[#allocation7 + $0x6a0] sm:$0xff]
        %v3378 = vld [vmem:[#allocation7 + $0x6a8] sm:$0xff]
        %v3379 = vld [vmem:[#allocation7 + $0x6b0] sm:$0xff]
        %v3380 = vld [vmem:[#allocation7 + $0x6b8] sm:$0xff]
        %v3381 = vld [vmem:[#allocation7 + $0x6c0] sm:$0xff]
        %v3382 = vld [vmem:[#allocation7 + $0x6c8] sm:$0xff]
        %v3383 = vld [vmem:[#allocation7 + $0x6d0] sm:$0xff]
        %v3384 = vld [vmem:[#allocation7 + $0x6d8] sm:$0xff]
        %v3385 = vld [vmem:[#allocation7 + $0x6e0] sm:$0xff]
        %v3386 = vld [vmem:[#allocation7 + $0x6e8] sm:$0xff]
        %v3387 = vld [vmem:[#allocation7 + $0x6f0] sm:$0xff]
        %v3388 = vld [vmem:[#allocation7 + $0x6f8] sm:$0xff]
        %v3389 = vld [vmem:[#allocation7 + $0x700] sm:$0xff]
        %v3390 = vld [vmem:[#allocation7 + $0x708] sm:$0xff]
        %v3391 = vld [vmem:[#allocation7 + $0x710] sm:$0xff]
        %v3392 = vld [vmem:[#allocation7 + $0x718] sm:$0xff]
        %v3393 = vld [vmem:[#allocation7 + $0x720] sm:$0xff]
        %v3394 = vld [vmem:[#allocation7 + $0x728] sm:$0xff]
        %v3395 = vld [vmem:[#allocation7 + $0x730] sm:$0xff]
        %v3396 = vld [vmem:[#allocation7 + $0x738] sm:$0xff]
        %v3397 = vld [vmem:[#allocation7 + $0x740] sm:$0xff]
        %v3398 = vld [vmem:[#allocation7 + $0x748] sm:$0xff]
        %v3399 = vld [vmem:[#allocation7 + $0x750] sm:$0xff]
        %v3400 = vld [vmem:[#allocation7 + $0x758] sm:$0xff]
        %v3401 = vld [vmem:[#allocation7 + $0x760] sm:$0xff]
        %v3402 = vld [vmem:[#allocation7 + $0x768] sm:$0xff]
        %v3403 = vld [vmem:[#allocation7 + $0x770] sm:$0xff]
        %v3404 = vld [vmem:[#allocation7 + $0x778] sm:$0xff]
        %v3405 = vld [vmem:[#allocation7 + $0x780] sm:$0xff]
        %v3406 = vld [vmem:[#allocation7 + $0x788] sm:$0xff]
        %v3407 = vld [vmem:[#allocation7 + $0x790] sm:$0xff]
        %v3408 = vld [vmem:[#allocation7 + $0x798] sm:$0xff]
        %v3409 = vld [vmem:[#allocation7 + $0x7a0] sm:$0xff]
        %v3410 = vld [vmem:[#allocation7 + $0x7a8] sm:$0xff]
        %v3411 = vld [vmem:[#allocation7 + $0x7b0] sm:$0xff]
        %v3412 = vld [vmem:[#allocation7 + $0x7b8] sm:$0xff]
        %v3413 = vld [vmem:[#allocation7 + $0x7c0] sm:$0xff]
        %v3414 = vld [vmem:[#allocation7 + $0x7c8] sm:$0xff]
        %v3415 = vld [vmem:[#allocation7 + $0x7d0] sm:$0xff]
        %v3416 = vld [vmem:[#allocation7 + $0x7d8] sm:$0xff]
        %v3417 = vld [vmem:[#allocation7 + $0x7e0] sm:$0xff]
        %v3418 = vld [vmem:[#allocation7 + $0x7e8] sm:$0xff]
        %v3419 = vld [vmem:[#allocation7 + $0x7f0] sm:$0xff]
        %v3420 = vld [vmem:[#allocation7 + $0x7f8] sm:$0xff]
        %v3421 = vld [vmem:[#allocation7 + $0x800] sm:$0xff]
        %v3422 = vld [vmem:[#allocation7 + $0x808] sm:$0xff]
        %v3423 = vld [vmem:[#allocation7 + $0x810] sm:$0xff]
        %v3424 = vld [vmem:[#allocation7 + $0x818] sm:$0xff]
        %v3425 = vld [vmem:[#allocation7 + $0x820] sm:$0xff]
        %v3426 = vld [vmem:[#allocation7 + $0x828] sm:$0xff]
        %v3427 = vld [vmem:[#allocation7 + $0x830] sm:$0xff]
        %v3428 = vld [vmem:[#allocation7 + $0x838] sm:$0xff]
        %v3429 = vld [vmem:[#allocation7 + $0x840] sm:$0xff]
        %v3430 = vld [vmem:[#allocation7 + $0x848] sm:$0xff]
        %v3431 = vld [vmem:[#allocation7 + $0x850] sm:$0xff]
        %v3432 = vld [vmem:[#allocation7 + $0x858] sm:$0xff]
        %v3433 = vld [vmem:[#allocation7 + $0x860] sm:$0xff]
        %v3434 = vld [vmem:[#allocation7 + $0x868] sm:$0xff]
        %v3435 = vld [vmem:[#allocation7 + $0x870] sm:$0xff]
        %v3436 = vld [vmem:[#allocation7 + $0x878] sm:$0xff]
        %v3437 = vld [vmem:[#allocation7 + $0x880] sm:$0xff]
        %v3438 = vld [vmem:[#allocation7 + $0x888] sm:$0xff]
        %v3439 = vld [vmem:[#allocation7 + $0x890] sm:$0xff]
        %v3440 = vld [vmem:[#allocation7 + $0x898] sm:$0xff]
        %v3441 = vld [vmem:[#allocation7 + $0x8a0] sm:$0xff]
        %v3442 = vld [vmem:[#allocation7 + $0x8a8] sm:$0xff]
        %v3443 = vld [vmem:[#allocation7 + $0x8b0] sm:$0xff]
        %v3444 = vld [vmem:[#allocation7 + $0x8b8] sm:$0xff]
        %v3445 = vld [vmem:[#allocation7 + $0x8c0] sm:$0xff]
        %v3446 = vld [vmem:[#allocation7 + $0x8c8] sm:$0xff]
        %v3447 = vld [vmem:[#allocation7 + $0x8d0] sm:$0xff]
        %v3448 = vld [vmem:[#allocation7 + $0x8d8] sm:$0xff]
        %v3449 = vld [vmem:[#allocation7 + $0x8e0] sm:$0xff]
        %v3450 = vld [vmem:[#allocation7 + $0x8e8] sm:$0xff]
        %v3451 = vld [vmem:[#allocation7 + $0x8f0] sm:$0xff]
        %v3452 = vld [vmem:[#allocation7 + $0x8f8] sm:$0xff]
        %v3453 = vld [vmem:[#allocation7 + $0x900] sm:$0xff]
        %v3454 = vld [vmem:[#allocation7 + $0x908] sm:$0xff]
        %v3455 = vld [vmem:[#allocation7 + $0x910] sm:$0xff]
        %v3456 = vld [vmem:[#allocation7 + $0x918] sm:$0xff]
        %v3457 = vld [vmem:[#allocation7 + $0x920] sm:$0xff]
        %v3458 = vld [vmem:[#allocation7 + $0x928] sm:$0xff]
        %v3459 = vld [vmem:[#allocation7 + $0x930] sm:$0xff]
        %v3460 = vld [vmem:[#allocation7 + $0x938] sm:$0xff]
        %v3461 = vld [vmem:[#allocation7 + $0x940] sm:$0xff]
        %v3462 = vld [vmem:[#allocation7 + $0x948] sm:$0xff]
        %v3463 = vld [vmem:[#allocation7 + $0x950] sm:$0xff]
        %v3464 = vld [vmem:[#allocation7 + $0x958] sm:$0xff]
        %v3465 = vld [vmem:[#allocation7 + $0x960] sm:$0xff]
        %v3466 = vld [vmem:[#allocation7 + $0x968] sm:$0xff]
        %v3467 = vld [vmem:[#allocation7 + $0x970] sm:$0xff]
        %v3468 = vld [vmem:[#allocation7 + $0x978] sm:$0xff]
        %v3469 = vld [vmem:[#allocation7 + $0x980] sm:$0xff]
        %v3470 = vld [vmem:[#allocation7 + $0x988] sm:$0xff]
        %v3471 = vld [vmem:[#allocation7 + $0x990] sm:$0xff]
        %v3472 = vld [vmem:[#allocation7 + $0x998] sm:$0xff]
        %v3473 = vld [vmem:[#allocation7 + $0x9a0] sm:$0xff]
        %v3474 = vld [vmem:[#allocation7 + $0x9a8] sm:$0xff]
        %v3475 = vld [vmem:[#allocation7 + $0x9b0] sm:$0xff]
        %v3476 = vld [vmem:[#allocation7 + $0x9b8] sm:$0xff]
        %v3477 = vld [vmem:[#allocation7 + $0x9c0] sm:$0xff]
        %v3478 = vld [vmem:[#allocation7 + $0x9c8] sm:$0xff]
        %v3479 = vld [vmem:[#allocation7 + $0x9d0] sm:$0xff]
        %v3480 = vld [vmem:[#allocation7 + $0x9d8] sm:$0xff]
        %v3481 = vld [vmem:[#allocation7 + $0x9e0] sm:$0xff]
        %v3482 = vld [vmem:[#allocation7 + $0x9e8] sm:$0xff]
        %v3483 = vld [vmem:[#allocation7 + $0x9f0] sm:$0xff]
        %v3484 = vld [vmem:[#allocation7 + $0x9f8] sm:$0xff]
        %v3485 = vld [vmem:[#allocation7 + $0xa00] sm:$0xff]
        %v3486 = vld [vmem:[#allocation7 + $0xa08] sm:$0xff]
        %v3487 = vld [vmem:[#allocation7 + $0xa10] sm:$0xff]
        %v3488 = vld [vmem:[#allocation7 + $0xa18] sm:$0xff]
        %v3489 = vld [vmem:[#allocation7 + $0xa20] sm:$0xff]
        %v3490 = vld [vmem:[#allocation7 + $0xa28] sm:$0xff]
        %v3491 = vld [vmem:[#allocation7 + $0xa30] sm:$0xff]
        %v3492 = vld [vmem:[#allocation7 + $0xa38] sm:$0xff]
        %v3493 = vld [vmem:[#allocation7 + $0xa40] sm:$0xff]
        %v3494 = vld [vmem:[#allocation7 + $0xa48] sm:$0xff]
        %v3495 = vld [vmem:[#allocation7 + $0xa50] sm:$0xff]
        %v3496 = vld [vmem:[#allocation7 + $0xa58] sm:$0xff]
        %v3497 = vld [vmem:[#allocation7 + $0xa60] sm:$0xff]
        %v3498 = vld [vmem:[#allocation7 + $0xa68] sm:$0xff]
        %v3499 = vld [vmem:[#allocation7 + $0xa70] sm:$0xff]
        %v3500 = vld [vmem:[#allocation7 + $0xa78] sm:$0xff]
        %v3501 = vld [vmem:[#allocation7 + $0xa80] sm:$0xff]
        %v3502 = vld [vmem:[#allocation7 + $0xa88] sm:$0xff]
        %v3503 = vld [vmem:[#allocation7 + $0xa90] sm:$0xff]
        %v3504 = vld [vmem:[#allocation7 + $0xa98] sm:$0xff]
        %v3505 = vld [vmem:[#allocation7 + $0xaa0] sm:$0xff]
        %v3506 = vld [vmem:[#allocation7 + $0xaa8] sm:$0xff]
        %v3507 = vld [vmem:[#allocation7 + $0xab0] sm:$0xff]
        %v3508 = vld [vmem:[#allocation7 + $0xab8] sm:$0xff]
        %v3509 = vld [vmem:[#allocation7 + $0xac0] sm:$0xff]
        %v3510 = vld [vmem:[#allocation7 + $0xac8] sm:$0xff]
        %v3511 = vld [vmem:[#allocation7 + $0xad0] sm:$0xff]
        %v3512 = vld [vmem:[#allocation7 + $0xad8] sm:$0xff]
        %v3513 = vld [vmem:[#allocation7 + $0xae0] sm:$0xff]
        %v3514 = vld [vmem:[#allocation7 + $0xae8] sm:$0xff]
        %v3515 = vld [vmem:[#allocation7 + $0xaf0] sm:$0xff]
        %v3516 = vld [vmem:[#allocation7 + $0xaf8] sm:$0xff]
        %v3517 = vld [vmem:[#allocation7 + $0xb00] sm:$0xff]
        %v3518 = vld [vmem:[#allocation7 + $0xb08] sm:$0xff]
        %v3519 = vld [vmem:[#allocation7 + $0xb10] sm:$0xff]
        %v3520 = vld [vmem:[#allocation7 + $0xb18] sm:$0xff]
        %v3521 = vld [vmem:[#allocation7 + $0xb20] sm:$0xff]
        %v3522 = vld [vmem:[#allocation7 + $0xb28] sm:$0xff]
        %v3523 = vld [vmem:[#allocation7 + $0xb30] sm:$0xff]
        %v3524 = vld [vmem:[#allocation7 + $0xb38] sm:$0xff]
        %v3525 = vld [vmem:[#allocation7 + $0xb40] sm:$0xff]
        %v3526 = vld [vmem:[#allocation7 + $0xb48] sm:$0xff]
        %v3527 = vld [vmem:[#allocation7 + $0xb50] sm:$0xff]
        %v3528 = vld [vmem:[#allocation7 + $0xb58] sm:$0xff]
        %v3529 = vld [vmem:[#allocation7 + $0xb60] sm:$0xff]
        %v3530 = vld [vmem:[#allocation7 + $0xb68] sm:$0xff]
        %v3531 = vld [vmem:[#allocation7 + $0xb70] sm:$0xff]
        %v3532 = vld [vmem:[#allocation7 + $0xb78] sm:$0xff]
        %v3533 = vld [vmem:[#allocation7 + $0xb80] sm:$0xff]
        %v3534 = vld [vmem:[#allocation7 + $0xb88] sm:$0xff]
        %v3535 = vld [vmem:[#allocation7 + $0xb90] sm:$0xff]
        %v3536 = vld [vmem:[#allocation7 + $0xb98] sm:$0xff]
        %v3537 = vld [vmem:[#allocation7 + $0xba0] sm:$0xff]
        %v3538 = vld [vmem:[#allocation7 + $0xba8] sm:$0xff]
        %v3539 = vld [vmem:[#allocation7 + $0xbb0] sm:$0xff]
        %v3540 = vld [vmem:[#allocation7 + $0xbb8] sm:$0xff]
        %v3541 = vld [vmem:[#allocation7 + $0xbc0] sm:$0xff]
        %v3542 = vld [vmem:[#allocation7 + $0xbc8] sm:$0xff]
        %v3543 = vld [vmem:[#allocation7 + $0xbd0] sm:$0xff]
        %v3544 = vld [vmem:[#allocation7 + $0xbd8] sm:$0xff]
        %v3545 = vld [vmem:[#allocation7 + $0xbe0] sm:$0xff]
        %v3546 = vld [vmem:[#allocation7 + $0xbe8] sm:$0xff]
        %v3547 = vld [vmem:[#allocation7 + $0xbf0] sm:$0xff]
        %v3548 = vld [vmem:[#allocation7 + $0xbf8] sm:$0xff]
        %v3549 = vld [vmem:[#allocation7 + $0xc00] sm:$0xff]
        %v3550 = vld [vmem:[#allocation7 + $0xc08] sm:$0xff]
        %v3551 = vld [vmem:[#allocation7 + $0xc10] sm:$0xff]
        %v3552 = vld [vmem:[#allocation7 + $0xc18] sm:$0xff]
        %v3553 = vld [vmem:[#allocation7 + $0xc20] sm:$0xff]
        %v3554 = vld [vmem:[#allocation7 + $0xc28] sm:$0xff]
        %v3555 = vld [vmem:[#allocation7 + $0xc30] sm:$0xff]
        %v3556 = vld [vmem:[#allocation7 + $0xc38] sm:$0xff]
        %v3557 = vld [vmem:[#allocation7 + $0xc40] sm:$0xff]
        %v3558 = vld [vmem:[#allocation7 + $0xc48] sm:$0xff]
        %v3559 = vld [vmem:[#allocation7 + $0xc50] sm:$0xff]
        %v3560 = vld [vmem:[#allocation7 + $0xc58] sm:$0xff]
        %v3561 = vld [vmem:[#allocation7 + $0xc60] sm:$0xff]
        %v3562 = vld [vmem:[#allocation7 + $0xc68] sm:$0xff]
        %v3563 = vld [vmem:[#allocation7 + $0xc70] sm:$0xff]
        %v3564 = vld [vmem:[#allocation7 + $0xc78] sm:$0xff]
        %v3565 = vld [vmem:[#allocation7 + $0xc80] sm:$0xff]
        %v3566 = vld [vmem:[#allocation7 + $0xc88] sm:$0xff]
        %v3567 = vld [vmem:[#allocation7 + $0xc90] sm:$0xff]
        %v3568 = vld [vmem:[#allocation7 + $0xc98] sm:$0xff]
        %v3569 = vld [vmem:[#allocation7 + $0xca0] sm:$0xff]
        %v3570 = vld [vmem:[#allocation7 + $0xca8] sm:$0xff]
        %v3571 = vld [vmem:[#allocation7 + $0xcb0] sm:$0xff]
        %v3572 = vld [vmem:[#allocation7 + $0xcb8] sm:$0xff]
        %v3573 = vld [vmem:[#allocation7 + $0xcc0] sm:$0xff]
        %v3574 = vld [vmem:[#allocation7 + $0xcc8] sm:$0xff]
        %v3575 = vld [vmem:[#allocation7 + $0xcd0] sm:$0xff]
        %v3576 = vld [vmem:[#allocation7 + $0xcd8] sm:$0xff]
        %v3577 = vld [vmem:[#allocation7 + $0xce0] sm:$0xff]
        %v3578 = vld [vmem:[#allocation7 + $0xce8] sm:$0xff]
        %v3579 = vld [vmem:[#allocation7 + $0xcf0] sm:$0xff]
        %v3580 = vld [vmem:[#allocation7 + $0xcf8] sm:$0xff]
        %v3581 = vld [vmem:[#allocation7 + $0xd00] sm:$0xff]
        %v3582 = vld [vmem:[#allocation7 + $0xd08] sm:$0xff]
        %v3583 = vld [vmem:[#allocation7 + $0xd10] sm:$0xff]
        %v3584 = vld [vmem:[#allocation7 + $0xd18] sm:$0xff]
        %v3585 = vld [vmem:[#allocation7 + $0xd20] sm:$0xff]
        %v3586 = vld [vmem:[#allocation7 + $0xd28] sm:$0xff]
        %v3587 = vld [vmem:[#allocation7 + $0xd30] sm:$0xff]
        %v3588 = vld [vmem:[#allocation7 + $0xd38] sm:$0xff]
        %v3589 = vld [vmem:[#allocation7 + $0xd40] sm:$0xff]
        %v3590 = vld [vmem:[#allocation7 + $0xd48] sm:$0xff]
        %v3591 = vld [vmem:[#allocation7 + $0xd50] sm:$0xff]
        %v3592 = vld [vmem:[#allocation7 + $0xd58] sm:$0xff]
        %v3593 = vld [vmem:[#allocation7 + $0xd60] sm:$0xff]
        %v3594 = vld [vmem:[#allocation7 + $0xd68] sm:$0xff]
        %v3595 = vld [vmem:[#allocation7 + $0xd70] sm:$0xff]
        %v3596 = vld [vmem:[#allocation7 + $0xd78] sm:$0xff]
        %v3597 = vld [vmem:[#allocation7 + $0xd80] sm:$0xff]
        %v3598 = vld [vmem:[#allocation7 + $0xd88] sm:$0xff]
        %v3599 = vld [vmem:[#allocation7 + $0xd90] sm:$0xff]
        %v3600 = vld [vmem:[#allocation7 + $0xd98] sm:$0xff]
        %v3601 = vld [vmem:[#allocation7 + $0xda0] sm:$0xff]
        %v3602 = vld [vmem:[#allocation7 + $0xda8] sm:$0xff]
        %v3603 = vld [vmem:[#allocation7 + $0xdb0] sm:$0xff]
        %v3604 = vld [vmem:[#allocation7 + $0xdb8] sm:$0xff]
        %v3605 = vld [vmem:[#allocation7 + $0xdc0] sm:$0xff]
        %v3606 = vld [vmem:[#allocation7 + $0xdc8] sm:$0xff]
        %v3607 = vld [vmem:[#allocation7 + $0xdd0] sm:$0xff]
        %v3608 = vld [vmem:[#allocation7 + $0xdd8] sm:$0xff]
        %v3609 = vld [vmem:[#allocation7 + $0xde0] sm:$0xff]
        %v3610 = vld [vmem:[#allocation7 + $0xde8] sm:$0xff]
        %v3611 = vld [vmem:[#allocation7 + $0xdf0] sm:$0xff]
        %v3612 = vld [vmem:[#allocation7 + $0xdf8] sm:$0xff]
        %v3613 = vld [vmem:[#allocation7 + $0xe00] sm:$0xff]
        %v3614 = vld [vmem:[#allocation7 + $0xe08] sm:$0xff]
        %v3615 = vld [vmem:[#allocation7 + $0xe10] sm:$0xff]
        %v3616 = vld [vmem:[#allocation7 + $0xe18] sm:$0xff]
        %v3617 = vld [vmem:[#allocation7 + $0xe20] sm:$0xff]
        %v3618 = vld [vmem:[#allocation7 + $0xe28] sm:$0xff]
        %v3619 = vld [vmem:[#allocation7 + $0xe30] sm:$0xff]
        %v3620 = vld [vmem:[#allocation7 + $0xe38] sm:$0xff]
        %v3621 = vld [vmem:[#allocation7 + $0xe40] sm:$0xff]
        %v3622 = vld [vmem:[#allocation7 + $0xe48] sm:$0xff]
        %v3623 = vld [vmem:[#allocation7 + $0xe50] sm:$0xff]
        %v3624 = vld [vmem:[#allocation7 + $0xe58] sm:$0xff]
        %v3625 = vld [vmem:[#allocation7 + $0xe60] sm:$0xff]
        %v3626 = vld [vmem:[#allocation7 + $0xe68] sm:$0xff]
        %v3627 = vld [vmem:[#allocation7 + $0xe70] sm:$0xff]
        %v3628 = vld [vmem:[#allocation7 + $0xe78] sm:$0xff]
        %v3629 = vld [vmem:[#allocation7 + $0xe80] sm:$0xff]
        %v3630 = vld [vmem:[#allocation7 + $0xe88] sm:$0xff]
        %v3631 = vld [vmem:[#allocation7 + $0xe90] sm:$0xff]
        %v3632 = vld [vmem:[#allocation7 + $0xe98] sm:$0xff]
        %v3633 = vld [vmem:[#allocation7 + $0xea0] sm:$0xff]
        %v3634 = vld [vmem:[#allocation7 + $0xea8] sm:$0xff]
        %v3635 = vld [vmem:[#allocation7 + $0xeb0] sm:$0xff]
        %v3636 = vld [vmem:[#allocation7 + $0xeb8] sm:$0xff]
        %v3637 = vld [vmem:[#allocation7 + $0xec0] sm:$0xff]
        %v3638 = vld [vmem:[#allocation7 + $0xec8] sm:$0xff]
        %v3639 = vld [vmem:[#allocation7 + $0xed0] sm:$0xff]
        %v3640 = vld [vmem:[#allocation7 + $0xed8] sm:$0xff]
        %v3641 = vld [vmem:[#allocation7 + $0xee0] sm:$0xff]
        %v3642 = vld [vmem:[#allocation7 + $0xee8] sm:$0xff]
        %v3643 = vld [vmem:[#allocation7 + $0xef0] sm:$0xff]
        %v3644 = vld [vmem:[#allocation7 + $0xef8] sm:$0xff]
        %v3645 = vld [vmem:[#allocation7 + $0xf00] sm:$0xff]
        %v3646 = vld [vmem:[#allocation7 + $0xf08] sm:$0xff]
        %v3647 = vld [vmem:[#allocation7 + $0xf10] sm:$0xff]
        %v3648 = vld [vmem:[#allocation7 + $0xf18] sm:$0xff]
        %v3649 = vld [vmem:[#allocation7 + $0xf20] sm:$0xff]
        %v3650 = vld [vmem:[#allocation7 + $0xf28] sm:$0xff]
        %v3651 = vld [vmem:[#allocation7 + $0xf30] sm:$0xff]
        %v3652 = vld [vmem:[#allocation7 + $0xf38] sm:$0xff]
        %v3653 = vld [vmem:[#allocation7 + $0xf40] sm:$0xff]
        %v3654 = vld [vmem:[#allocation7 + $0xf48] sm:$0xff]
        %v3655 = vld [vmem:[#allocation7 + $0xf50] sm:$0xff]
        %v3656 = vld [vmem:[#allocation7 + $0xf58] sm:$0xff]
        %v3657 = vld [vmem:[#allocation7 + $0xf60] sm:$0xff]
        %v3658 = vld [vmem:[#allocation7 + $0xf68] sm:$0xff]
        %v3659 = vld [vmem:[#allocation7 + $0xf70] sm:$0xff]
        %v3660 = vld [vmem:[#allocation7 + $0xf78] sm:$0xff]
        %v3661 = vld [vmem:[#allocation7 + $0xf80] sm:$0xff]
        %v3662 = vld [vmem:[#allocation7 + $0xf88] sm:$0xff]
        %v3663 = vld [vmem:[#allocation7 + $0xf90] sm:$0xff]
        %v3664 = vld [vmem:[#allocation7 + $0xf98] sm:$0xff]
        %v3665 = vld [vmem:[#allocation7 + $0xfa0] sm:$0xff]
        %v3666 = vld [vmem:[#allocation7 + $0xfa8] sm:$0xff]
        %v3667 = vld [vmem:[#allocation7 + $0xfb0] sm:$0xff]
        %v3668 = vld [vmem:[#allocation7 + $0xfb8] sm:$0xff]
        %v3669 = vld [vmem:[#allocation7 + $0xfc0] sm:$0xff]
        %v3670 = vld [vmem:[#allocation7 + $0xfc8] sm:$0xff]
        %v3671 = vld [vmem:[#allocation7 + $0xfd0] sm:$0xff]
        %v3672 = vld [vmem:[#allocation7 + $0xfd8] sm:$0xff]
        %v3673 = vld [vmem:[#allocation7 + $0xfe0] sm:$0xff]
        %v3674 = vld [vmem:[#allocation7 + $0xfe8] sm:$0xff]
        %v3675 = vld [vmem:[#allocation7 + $0xff0] sm:$0xff]
        %v3676 = vld [vmem:[#allocation7 + $0xff8] sm:$0xff]
        %v3677 = vld [vmem:[#allocation7 + $0x1000] sm:$0xff]
        %v3678 = vld [vmem:[#allocation7 + $0x1008] sm:$0xff]
        %v3679 = vld [vmem:[#allocation7 + $0x1010] sm:$0xff]
        %v3680 = vld [vmem:[#allocation7 + $0x1018] sm:$0xff]
        %v3681 = vld [vmem:[#allocation7 + $0x1020] sm:$0xff]
        %v3682 = vld [vmem:[#allocation7 + $0x1028] sm:$0xff]
        %v3683 = vld [vmem:[#allocation7 + $0x1030] sm:$0xff]
        %v3684 = vld [vmem:[#allocation7 + $0x1038] sm:$0xff]
        %v3685 = vld [vmem:[#allocation7 + $0x1040] sm:$0xff]
        %v3686 = vld [vmem:[#allocation7 + $0x1048] sm:$0xff]
        %v3687 = vld [vmem:[#allocation7 + $0x1050] sm:$0xff]
        %v3688 = vld [vmem:[#allocation7 + $0x1058] sm:$0xff]
        %v3689 = vld [vmem:[#allocation7 + $0x1060] sm:$0xff]
        %v3690 = vld [vmem:[#allocation7 + $0x1068] sm:$0xff]
        %v3691 = vld [vmem:[#allocation7 + $0x1070] sm:$0xff]
        %v3692 = vld [vmem:[#allocation7 + $0x1078] sm:$0xff]
        %v3693 = vld [vmem:[#allocation7 + $0x1080] sm:$0xff]
        %v3694 = vld [vmem:[#allocation7 + $0x1088] sm:$0xff]
        %v3695 = vld [vmem:[#allocation7 + $0x1090] sm:$0xff]
        %v3696 = vld [vmem:[#allocation7 + $0x1098] sm:$0xff]
        %v3697 = vld [vmem:[#allocation7 + $0x10a0] sm:$0xff]
        %v3698 = vld [vmem:[#allocation7 + $0x10a8] sm:$0xff]
        %v3699 = vld [vmem:[#allocation7 + $0x10b0] sm:$0xff]
        %v3700 = vld [vmem:[#allocation7 + $0x10b8] sm:$0xff]
        %v3701 = vld [vmem:[#allocation7 + $0x10c0] sm:$0xff]
        %v3702 = vld [vmem:[#allocation7 + $0x10c8] sm:$0xff]
        %v3703 = vld [vmem:[#allocation7 + $0x10d0] sm:$0xff]
        %v3704 = vld [vmem:[#allocation7 + $0x10d8] sm:$0xff]
        %v3705 = vld [vmem:[#allocation7 + $0x10e0] sm:$0xff]
        %v3706 = vld [vmem:[#allocation7 + $0x10e8] sm:$0xff]
        %v3707 = vld [vmem:[#allocation7 + $0x10f0] sm:$0xff]
        %v3708 = vld [vmem:[#allocation7 + $0x10f8] sm:$0xff]
        %v3709 = vld [vmem:[#allocation7 + $0x1100] sm:$0xff]
        %v3710 = vld [vmem:[#allocation7 + $0x1108] sm:$0xff]
        %v3711 = vld [vmem:[#allocation7 + $0x1110] sm:$0xff]
        %v3712 = vld [vmem:[#allocation7 + $0x1118] sm:$0xff]
        %v3713 = vld [vmem:[#allocation7 + $0x1120] sm:$0xff]
        %v3714 = vld [vmem:[#allocation7 + $0x1128] sm:$0xff]
        %v3715 = vld [vmem:[#allocation7 + $0x1130] sm:$0xff]
        %v3716 = vld [vmem:[#allocation7 + $0x1138] sm:$0xff]
        %v3717 = vld [vmem:[#allocation7 + $0x1140] sm:$0xff]
        %v3718 = vld [vmem:[#allocation7 + $0x1148] sm:$0xff]
        %v3719 = vld [vmem:[#allocation7 + $0x1150] sm:$0xff]
        %v3720 = vld [vmem:[#allocation7 + $0x1158] sm:$0xff]
        %v3721 = vld [vmem:[#allocation7 + $0x1160] sm:$0xff]
        %v3722 = vld [vmem:[#allocation7 + $0x1168] sm:$0xff]
        %v3723 = vld [vmem:[#allocation7 + $0x1170] sm:$0xff]
        %v3724 = vld [vmem:[#allocation7 + $0x1178] sm:$0xff]
        %v3725 = vld [vmem:[#allocation7 + $0x1180] sm:$0xff]
        %v3726 = vld [vmem:[#allocation7 + $0x1188] sm:$0xff]
        %v3727 = vld [vmem:[#allocation7 + $0x1190] sm:$0xff]
        %v3728 = vld [vmem:[#allocation7 + $0x1198] sm:$0xff]
        %v3729 = vld [vmem:[#allocation7 + $0x11a0] sm:$0xff]
        %v3730 = vld [vmem:[#allocation7 + $0x11a8] sm:$0xff]
        %v3731 = vld [vmem:[#allocation7 + $0x11b0] sm:$0xff]
        %v3732 = vld [vmem:[#allocation7 + $0x11b8] sm:$0xff]
        %v3733 = vld [vmem:[#allocation7 + $0x11c0] sm:$0xff]
        %v3734 = vld [vmem:[#allocation7 + $0x11c8] sm:$0xff]
        %v3735 = vld [vmem:[#allocation7 + $0x11d0] sm:$0xff]
        %v3736 = vld [vmem:[#allocation7 + $0x11d8] sm:$0xff]
        %v3737 = vld [vmem:[#allocation7 + $0x11e0] sm:$0xff]
        %v3738 = vld [vmem:[#allocation7 + $0x11e8] sm:$0xff]
        %v3739 = vld [vmem:[#allocation7 + $0x11f0] sm:$0xff]
        %v3740 = vld [vmem:[#allocation7 + $0x11f8] sm:$0xff]
        %v3741 = vld [vmem:[#allocation7 + $0x1200] sm:$0xff]
        %v3742 = vld [vmem:[#allocation7 + $0x1208] sm:$0xff]
        %v3743 = vld [vmem:[#allocation7 + $0x1210] sm:$0xff]
        %v3744 = vld [vmem:[#allocation7 + $0x1218] sm:$0xff]
        %v3745 = vld [vmem:[#allocation7 + $0x1220] sm:$0xff]
        %v3746 = vld [vmem:[#allocation7 + $0x1228] sm:$0xff]
        %v3747 = vld [vmem:[#allocation7 + $0x1230] sm:$0xff]
        %v3748 = vld [vmem:[#allocation7 + $0x1238] sm:$0xff]
        %v3749 = vld [vmem:[#allocation7 + $0x1240] sm:$0xff]
        %v3750 = vld [vmem:[#allocation7 + $0x1248] sm:$0xff]
        %v3751 = vld [vmem:[#allocation7 + $0x1250] sm:$0xff]
        %v3752 = vld [vmem:[#allocation7 + $0x1258] sm:$0xff]
        %v3753 = vld [vmem:[#allocation7 + $0x1260] sm:$0xff]
        %v3754 = vld [vmem:[#allocation7 + $0x1268] sm:$0xff]
        %v3755 = vld [vmem:[#allocation7 + $0x1270] sm:$0xff]
        %v3756 = vld [vmem:[#allocation7 + $0x1278] sm:$0xff]
        %v3757 = vld [vmem:[#allocation7 + $0x1280] sm:$0xff]
        %v3758 = vld [vmem:[#allocation7 + $0x1288] sm:$0xff]
        %v3759 = vld [vmem:[#allocation7 + $0x1290] sm:$0xff]
        %v3760 = vld [vmem:[#allocation7 + $0x1298] sm:$0xff]
        %v3761 = vld [vmem:[#allocation7 + $0x12a0] sm:$0xff]
        %v3762 = vld [vmem:[#allocation7 + $0x12a8] sm:$0xff]
        %v3763 = vld [vmem:[#allocation7 + $0x12b0] sm:$0xff]
        %v3764 = vld [vmem:[#allocation7 + $0x12b8] sm:$0xff]
        %v3765 = vld [vmem:[#allocation7 + $0x12c0] sm:$0xff]
        %v3766 = vld [vmem:[#allocation7 + $0x12c8] sm:$0xff]
        %v3767 = vld [vmem:[#allocation7 + $0x12d0] sm:$0xff]
        %v3768 = vld [vmem:[#allocation7 + $0x12d8] sm:$0xff]
        %v3769 = vld [vmem:[#allocation7 + $0x12e0] sm:$0xff]
        %v3770 = vld [vmem:[#allocation7 + $0x12e8] sm:$0xff]
        %v3771 = vld [vmem:[#allocation7 + $0x12f0] sm:$0xff]
        %v3772 = vld [vmem:[#allocation7 + $0x12f8] sm:$0xff]
        %v3773 = vld [vmem:[#allocation7 + $0x1300] sm:$0xff]
        %v3774 = vld [vmem:[#allocation7 + $0x1308] sm:$0xff]
        %v3775 = vld [vmem:[#allocation7 + $0x1310] sm:$0xff]
        %v3776 = vld [vmem:[#allocation7 + $0x1318] sm:$0xff]
        %v3777 = vld [vmem:[#allocation7 + $0x1320] sm:$0xff]
        %v3778 = vld [vmem:[#allocation7 + $0x1328] sm:$0xff]
        %v3779 = vld [vmem:[#allocation7 + $0x1330] sm:$0xff]
        %v3780 = vld [vmem:[#allocation7 + $0x1338] sm:$0xff]
        %v3781 = vld [vmem:[#allocation7 + $0x1340] sm:$0xff]
        %v3782 = vld [vmem:[#allocation7 + $0x1348] sm:$0xff]
        %v3783 = vld [vmem:[#allocation7 + $0x1350] sm:$0xff]
        %v3784 = vld [vmem:[#allocation7 + $0x1358] sm:$0xff]
        %v3785 = vld [vmem:[#allocation7 + $0x1360] sm:$0xff]
        %v3786 = vld [vmem:[#allocation7 + $0x1368] sm:$0xff]
        %v3787 = vld [vmem:[#allocation7 + $0x1370] sm:$0xff]
        %v3788 = vld [vmem:[#allocation7 + $0x1378] sm:$0xff]
        %v3789 = vld [vmem:[#allocation7 + $0x1380] sm:$0xff]
        %v3790 = vld [vmem:[#allocation7 + $0x1388] sm:$0xff]
        %v3791 = vld [vmem:[#allocation7 + $0x1390] sm:$0xff]
        %v3792 = vld [vmem:[#allocation7 + $0x1398] sm:$0xff]
        %v3793 = vld [vmem:[#allocation7 + $0x13a0] sm:$0xff]
        %v3794 = vld [vmem:[#allocation7 + $0x13a8] sm:$0xff]
        %v3795 = vld [vmem:[#allocation7 + $0x13b0] sm:$0xff]
        %v3796 = vld [vmem:[#allocation7 + $0x13b8] sm:$0xff]
        %v3797 = vld [vmem:[#allocation7 + $0x13c0] sm:$0xff]
        %v3798 = vld [vmem:[#allocation7 + $0x13c8] sm:$0xff]
        %v3799 = vld [vmem:[#allocation7 + $0x13d0] sm:$0xff]
        %v3800 = vld [vmem:[#allocation7 + $0x13d8] sm:$0xff]
        %v3801 = vld [vmem:[#allocation7 + $0x13e0] sm:$0xff]
        %v3802 = vld [vmem:[#allocation7 + $0x13e8] sm:$0xff]
        %v3803 = vld [vmem:[#allocation7 + $0x13f0] sm:$0xff]
        %v3804 = vld [vmem:[#allocation7 + $0x13f8] sm:$0xff]
        %v3805 = vld [vmem:[#allocation7 + $0x1400] sm:$0xff]
        %v3806 = vld [vmem:[#allocation7 + $0x1408] sm:$0xff]
        %v3807 = vld [vmem:[#allocation7 + $0x1410] sm:$0xff]
        %v3808 = vld [vmem:[#allocation7 + $0x1418] sm:$0xff]
        %v3809 = vld [vmem:[#allocation7 + $0x1420] sm:$0xff]
        %v3810 = vld [vmem:[#allocation7 + $0x1428] sm:$0xff]
        %v3811 = vld [vmem:[#allocation7 + $0x1430] sm:$0xff]
        %v3812 = vld [vmem:[#allocation7 + $0x1438] sm:$0xff]
        %v3813 = vld [vmem:[#allocation7 + $0x1440] sm:$0xff]
        %v3814 = vld [vmem:[#allocation7 + $0x1448] sm:$0xff]
        %v3815 = vld [vmem:[#allocation7 + $0x1450] sm:$0xff]
        %v3816 = vld [vmem:[#allocation7 + $0x1458] sm:$0xff]
        %v3817 = vld [vmem:[#allocation7 + $0x1460] sm:$0xff]
        %v3818 = vld [vmem:[#allocation7 + $0x1468] sm:$0xff]
        %v3819 = vld [vmem:[#allocation7 + $0x1470] sm:$0xff]
        %v3820 = vld [vmem:[#allocation7 + $0x1478] sm:$0xff]
        %v3821 = vld [vmem:[#allocation7 + $0x1480] sm:$0xff]
        %v3822 = vld [vmem:[#allocation7 + $0x1488] sm:$0xff]
        %v3823 = vld [vmem:[#allocation7 + $0x1490] sm:$0xff]
        %v3824 = vld [vmem:[#allocation7 + $0x1498] sm:$0xff]
        %v3825 = vld [vmem:[#allocation7 + $0x14a0] sm:$0xff]
        %v3826 = vld [vmem:[#allocation7 + $0x14a8] sm:$0xff]
        %v3827 = vld [vmem:[#allocation7 + $0x14b0] sm:$0xff]
        %v3828 = vld [vmem:[#allocation7 + $0x14b8] sm:$0xff]
        %v3829 = vld [vmem:[#allocation7 + $0x14c0] sm:$0xff]
        %v3830 = vld [vmem:[#allocation7 + $0x14c8] sm:$0xff]
        %v3831 = vld [vmem:[#allocation7 + $0x14d0] sm:$0xff]
        %v3832 = vld [vmem:[#allocation7 + $0x14d8] sm:$0xff]
        %v3833 = vld [vmem:[#allocation7 + $0x14e0] sm:$0xff]
        %v3834 = vld [vmem:[#allocation7 + $0x14e8] sm:$0xff]
        %v3835 = vld [vmem:[#allocation7 + $0x14f0] sm:$0xff]
        %v3836 = vld [vmem:[#allocation7 + $0x14f8] sm:$0xff]
        %v3837 = vld [vmem:[#allocation7 + $0x1500] sm:$0xff]
        %v3838 = vld [vmem:[#allocation7 + $0x1508] sm:$0xff]
        %v3839 = vld [vmem:[#allocation7 + $0x1510] sm:$0xff]
        %v3840 = vld [vmem:[#allocation7 + $0x1518] sm:$0xff]
        %v3841 = vld [vmem:[#allocation7 + $0x1520] sm:$0xff]
        %v3842 = vld [vmem:[#allocation7 + $0x1528] sm:$0xff]
        %v3843 = vld [vmem:[#allocation7 + $0x1530] sm:$0xff]
        %v3844 = vld [vmem:[#allocation7 + $0x1538] sm:$0xff]
        %v3845 = vld [vmem:[#allocation7 + $0x1540] sm:$0xff]
        %v3846 = vld [vmem:[#allocation7 + $0x1548] sm:$0xff]
        %v3847 = vld [vmem:[#allocation7 + $0x1550] sm:$0xff]
        %v3848 = vld [vmem:[#allocation7 + $0x1558] sm:$0xff]
        %v3849 = vld [vmem:[#allocation7 + $0x1560] sm:$0xff]
        %v3850 = vld [vmem:[#allocation7 + $0x1568] sm:$0xff]
        %v3851 = vld [vmem:[#allocation7 + $0x1570] sm:$0xff]
        %v3852 = vld [vmem:[#allocation7 + $0x1578] sm:$0xff]
        %v3853 = vld [vmem:[#allocation7 + $0x1580] sm:$0xff]
        %v3854 = vld [vmem:[#allocation7 + $0x1588] sm:$0xff]
        %v3855 = vld [vmem:[#allocation7 + $0x1590] sm:$0xff]
        %v3856 = vld [vmem:[#allocation7 + $0x1598] sm:$0xff]
        %v3857 = vld [vmem:[#allocation7 + $0x15a0] sm:$0xff]
        %v3858 = vld [vmem:[#allocation7 + $0x15a8] sm:$0xff]
        %v3859 = vld [vmem:[#allocation7 + $0x15b0] sm:$0xff]
        %v3860 = vld [vmem:[#allocation7 + $0x15b8] sm:$0xff]
        %v3861 = vld [vmem:[#allocation7 + $0x15c0] sm:$0xff]
        %v3862 = vld [vmem:[#allocation7 + $0x15c8] sm:$0xff]
        %v3863 = vld [vmem:[#allocation7 + $0x15d0] sm:$0xff]
        %v3864 = vld [vmem:[#allocation7 + $0x15d8] sm:$0xff]
        %v3865 = vld [vmem:[#allocation7 + $0x15e0] sm:$0xff]
        %v3866 = vld [vmem:[#allocation7 + $0x15e8] sm:$0xff]
        %v3867 = vld [vmem:[#allocation7 + $0x15f0] sm:$0xff]
        %v3868 = vld [vmem:[#allocation7 + $0x15f8] sm:$0xff]
        %v3869 = vld [vmem:[#allocation7 + $0x1600] sm:$0xff]
        %v3870 = vld [vmem:[#allocation7 + $0x1608] sm:$0xff]
        %v3871 = vld [vmem:[#allocation7 + $0x1610] sm:$0xff]
        %v3872 = vld [vmem:[#allocation7 + $0x1618] sm:$0xff]
        %v3873 = vld [vmem:[#allocation7 + $0x1620] sm:$0xff]
        %v3874 = vld [vmem:[#allocation7 + $0x1628] sm:$0xff]
        %v3875 = vld [vmem:[#allocation7 + $0x1630] sm:$0xff]
        %v3876 = vld [vmem:[#allocation7 + $0x1638] sm:$0xff]
        %v3877 = vld [vmem:[#allocation7 + $0x1640] sm:$0xff]
        %v3878 = vld [vmem:[#allocation7 + $0x1648] sm:$0xff]
        %v3879 = vld [vmem:[#allocation7 + $0x1650] sm:$0xff]
        %v3880 = vld [vmem:[#allocation7 + $0x1658] sm:$0xff]
        %v3881 = vld [vmem:[#allocation7 + $0x1660] sm:$0xff]
        %v3882 = vld [vmem:[#allocation7 + $0x1668] sm:$0xff]
        %v3883 = vld [vmem:[#allocation7 + $0x1670] sm:$0xff]
        %v3884 = vld [vmem:[#allocation7 + $0x1678] sm:$0xff]
        %v3885 = vld [vmem:[#allocation7 + $0x1680] sm:$0xff]
        %v3886 = vld [vmem:[#allocation7 + $0x1688] sm:$0xff]
        %v3887 = vld [vmem:[#allocation7 + $0x1690] sm:$0xff]
        %v3888 = vld [vmem:[#allocation7 + $0x1698] sm:$0xff]
        %v3889 = vld [vmem:[#allocation7 + $0x16a0] sm:$0xff]
        %v3890 = vld [vmem:[#allocation7 + $0x16a8] sm:$0xff]
        %v3891 = vld [vmem:[#allocation7 + $0x16b0] sm:$0xff]
        %v3892 = vld [vmem:[#allocation7 + $0x16b8] sm:$0xff]
        %v3893 = vld [vmem:[#allocation7 + $0x16c0] sm:$0xff]
        %v3894 = vld [vmem:[#allocation7 + $0x16c8] sm:$0xff]
        %v3895 = vld [vmem:[#allocation7 + $0x16d0] sm:$0xff]
        %v3896 = vld [vmem:[#allocation7 + $0x16d8] sm:$0xff]
        %v3897 = vld [vmem:[#allocation7 + $0x16e0] sm:$0xff]
        %v3898 = vld [vmem:[#allocation7 + $0x16e8] sm:$0xff]
        %v3899 = vld [vmem:[#allocation7 + $0x16f0] sm:$0xff]
        %v3900 = vld [vmem:[#allocation7 + $0x16f8] sm:$0xff]
        %v3901 = vld [vmem:[#allocation7 + $0x1700] sm:$0xff]
        %v3902 = vld [vmem:[#allocation7 + $0x1708] sm:$0xff]
        %v3903 = vld [vmem:[#allocation7 + $0x1710] sm:$0xff]
        %v3904 = vld [vmem:[#allocation7 + $0x1718] sm:$0xff]
        %v3905 = vld [vmem:[#allocation7 + $0x1720] sm:$0xff]
        %v3906 = vld [vmem:[#allocation7 + $0x1728] sm:$0xff]
        %v3907 = vld [vmem:[#allocation7 + $0x1730] sm:$0xff]
        %v3908 = vld [vmem:[#allocation7 + $0x1738] sm:$0xff]
        %v3909 = vld [vmem:[#allocation7 + $0x1740] sm:$0xff]
        %v3910 = vld [vmem:[#allocation7 + $0x1748] sm:$0xff]
        %v3911 = vld [vmem:[#allocation7 + $0x1750] sm:$0xff]
        %v3912 = vld [vmem:[#allocation7 + $0x1758] sm:$0xff]
        %v3913 = vld [vmem:[#allocation7 + $0x1760] sm:$0xff]
        %v3914 = vld [vmem:[#allocation7 + $0x1768] sm:$0xff]
        %v3915 = vld [vmem:[#allocation7 + $0x1770] sm:$0xff]
        %v3916 = vld [vmem:[#allocation7 + $0x1778] sm:$0xff]
        %v3917 = vld [vmem:[#allocation7 + $0x1780] sm:$0xff]
        %v3918 = vld [vmem:[#allocation7 + $0x1788] sm:$0xff]
        %v3919 = vld [vmem:[#allocation7 + $0x1790] sm:$0xff]
        %v3920 = vld [vmem:[#allocation7 + $0x1798] sm:$0xff]
        %v3921 = vld [vmem:[#allocation7 + $0x17a0] sm:$0xff]
        %v3922 = vld [vmem:[#allocation7 + $0x17a8] sm:$0xff]
        %v3923 = vld [vmem:[#allocation7 + $0x17b0] sm:$0xff]
        %v3924 = vld [vmem:[#allocation7 + $0x17b8] sm:$0xff]
        %v3925 = vld [vmem:[#allocation7 + $0x17c0] sm:$0xff]
        %v3926 = vld [vmem:[#allocation7 + $0x17c8] sm:$0xff]
        %v3927 = vld [vmem:[#allocation7 + $0x17d0] sm:$0xff]
        %v3928 = vld [vmem:[#allocation7 + $0x17d8] sm:$0xff]
        %v3929 = vld [vmem:[#allocation7 + $0x17e0] sm:$0xff]
        %v3930 = vld [vmem:[#allocation7 + $0x17e8] sm:$0xff]
        %v3931 = vld [vmem:[#allocation7 + $0x17f0] sm:$0xff]
        %v3932 = vld [vmem:[#allocation7 + $0x17f8] sm:$0xff]
        %3933 = vmatprep.subr.mxu0 %v3166
        %3934 = vmatpush1.msra.mxu0 %v3165
        %3935 = vmatprep.subr.mxu0 %v3170
        %3936 = vmatpush1.msra.mxu0 %v3169
        %3937 = vmatprep.subr.mxu0 %v3174
        %3938 = vmatpush1.msra.mxu0 %v3173
        %3939 = vmatprep.subr.mxu0 %v3178
        %3940 = vmatpush1.msra.mxu0 %v3177
        %3941 = vmatprep.subr.mxu0 %v3182
        %3942 = vmatpush1.msra.mxu0 %v3181
        %3943 = vmatprep.subr.mxu0 %v3186
        %3944 = vmatpush1.msra.mxu0 %v3185
        %3945 = vmatprep.subr.mxu0 %v3190
        %3946 = vmatpush1.msra.mxu0 %v3189
        %3947 = vmatprep.subr.mxu0 %v3194
        %3948 = vmatpush1.msra.mxu0 %v3193
        %3949 = vmatprep.subr.mxu0 %v3198
        %3950 = vmatpush1.msra.mxu0 %v3197
        %3951 = vmatprep.subr.mxu0 %v3202
        %3952 = vmatpush1.msra.mxu0 %v3201
        %3953 = vmatprep.subr.mxu0 %v3206
        %3954 = vmatpush1.msra.mxu0 %v3205
        %3955 = vmatprep.subr.mxu0 %v3210
        %3956 = vmatpush1.msra.mxu0 %v3209
        %3957 = vmatprep.subr.mxu0 %v3214
        %3958 = vmatpush1.msra.mxu0 %v3213
        %3959 = vmatprep.subr.mxu0 %v3218
        %3960 = vmatpush1.msra.mxu0 %v3217
        %3961 = vmatprep.subr.mxu0 %v3222
        %3962 = vmatpush1.msra.mxu0 %v3221
        %3963 = vmatprep.subr.mxu0 %v3226
        %3964 = vmatpush1.msra.mxu0 %v3225
        %3965 = vmatprep.subr.mxu0 %v3230
        %3966 = vmatpush1.msra.mxu0 %v3229
        %3967 = vmatprep.subr.mxu0 %v3234
        %3968 = vmatpush1.msra.mxu0 %v3233
        %3969 = vmatprep.subr.mxu0 %v3238
        %3970 = vmatpush1.msra.mxu0 %v3237
        %3971 = vmatprep.subr.mxu0 %v3242
        %3972 = vmatpush1.msra.mxu0 %v3241
        %3973 = vmatprep.subr.mxu0 %v3246
        %3974 = vmatpush1.msra.mxu0 %v3245
        %3975 = vmatprep.subr.mxu0 %v3250
        %3976 = vmatpush1.msra.mxu0 %v3249
        %3977 = vmatprep.subr.mxu0 %v3254
        %3978 = vmatpush1.msra.mxu0 %v3253
        %3979 = vmatprep.subr.mxu0 %v3258
        %3980 = vmatpush1.msra.mxu0 %v3257
        %3981 = vmatprep.subr.mxu0 %v3262
        %3982 = vmatpush1.msra.mxu0 %v3261
        %3983 = vmatprep.subr.mxu0 %v3266
        %3984 = vmatpush1.msra.mxu0 %v3265
        %3985 = vmatprep.subr.mxu0 %v3270
        %3986 = vmatpush1.msra.mxu0 %v3269
        %3987 = vmatprep.subr.mxu0 %v3274
        %3988 = vmatpush1.msra.mxu0 %v3273
        %3989 = vmatprep.subr.mxu0 %v3278
        %3990 = vmatpush1.msra.mxu0 %v3277
        %3991 = vmatprep.subr.mxu0 %v3282
        %3992 = vmatpush1.msra.mxu0 %v3281
        %3993 = vmatprep.subr.mxu0 %v3286
        %3994 = vmatpush1.msra.mxu0 %v3285
        %3995 = vmatprep.subr.mxu0 %v3290
        %3996 = vmatpush1.msra.mxu0 %v3289
        %3997 = vmatprep.mubr.f32.mxu0 %v3054
        %3998 = vmatmul.mubr.f32.gmra.mrb[0].mxu0 %v3053
        %v3999 = vpop.f32.mrb[0].mxu0
        %v4000 = vadd.f32 0.0, %v3999
        %v4001 = vpop.f32.mrb[0].mxu0
        %v4002 = vadd.f32 0.0, %v4001
        %4003 = vmatprep.mubr.f32.mxu0 %v3058
        %4004 = vmatmul.mubr.f32.gmra.mrb[0].mxu0 %v3057
        %v4005 = vpop.f32.mrb[0].mxu0
        %v4006 = vadd.f32 0.0, %v4005
        %v4007 = vpop.f32.mrb[0].mxu0
        %v4008 = vadd.f32 0.0, %v4007
        %4009 = vmatprep.mubr.f32.mxu0 %v3062
        %4010 = vmatmul.mubr.f32.gmra.mrb[0].mxu0 %v3061
        %v4011 = vpop.f32.mrb[0].mxu0
        %v4012 = vadd.f32 0.0, %v4011
        %v4013 = vpop.f32.mrb[0].mxu0
        %v4014 = vadd.f32 0.0, %v4013
        %4015 = vmatprep.mubr.f32.mxu0 %v3066
        %4016 = vmatmul.mubr.f32.gmra.mrb[0].mxu0 %v3065
        %v4017 = vpop.f32.mrb[0].mxu0
        %v4018 = vadd.f32 0.0, %v4017
        %v4019 = vpop.f32.mrb[0].mxu0
        %v4020 = vadd.f32 0.0, %v4019
        %4021 = vmatprep.mubr.f32.mxu0 %v3070
        %4022 = vmatmul.mubr.f32.gmra.mrb[0].mxu0 %v3069
        %v4023 = vpop.f32.mrb[0].mxu0
        %v4024 = vadd.f32 0.0, %v4023
        %v4025 = vpop.f32.mrb[0].mxu0
        %v4026 = vadd.f32 0.0, %v4025
        %4027 = vmatprep.mubr.f32.mxu0 %v3074
        %4028 = vmatmul.mubr.f32.gmra.mrb[0].mxu0 %v3073
        %v4029 = vpop.f32.mrb[0].mxu0
        %v4030 = vpop.f32.mrb[0].mxu0
        %4031 = vmatprep.mubr.f32.mxu0 %v3078
        %4032 = vmatmul.mubr.f32.gmra.mrb[0].mxu0 %v3077
        %v4033 = vpop.f32.mrb[0].mxu0
        %v4034 = vpop.f32.mrb[0].mxu0
        %4035 = vmatprep.mubr.f32.mxu0 %v3138
        %4036 = vmatmul.mubr.f32.gmra.mrb[0].mxu0 %v3137
        %v4037 = vpop.f32.mrb[0].mxu0
        %v4038 = vadd.f32 0.0, %v4037
        %v4039 = vpop.f32.mrb[0].mxu0
        %v4040 = vadd.f32 0.0, %v4039
        %4041 = vmatprep.mubr.f32.mxu0 %v3142
        %4042 = vmatmul.mubr.f32.gmra.mrb[0].mxu0 %v3141
        %v4043 = vpop.f32.mrb[0].mxu0
        %v4044 = vadd.f32 0.0, %v4043
        %v4045 = vpop.f32.mrb[0].mxu0
        %v4046 = vadd.f32 0.0, %v4045
        %4047 = vmatprep.mubr.f32.mxu0 %v3146
        %4048 = vmatmul.mubr.f32.gmra.mrb[0].mxu0 %v3145
        %v4049 = vpop.f32.mrb[0].mxu0
        %v4050 = vadd.f32 0.0, %v4049
        %v4051 = vpop.f32.mrb[0].mxu0
        %v4052 = vadd.f32 0.0, %v4051
        %4053 = vmatprep.mubr.f32.mxu0 %v3150
        %4054 = vmatmul.mubr.f32.gmra.mrb[0].mxu0 %v3149
        %v4055 = vpop.f32.mrb[0].mxu0
        %v4056 = vadd.f32 0.0, %v4055
        %v4057 = vpop.f32.mrb[0].mxu0
        %v4058 = vadd.f32 0.0, %v4057
        %4059 = vmatprep.mubr.f32.mxu0 %v3154
        %4060 = vmatmul.mubr.f32.gmra.mrb[0].mxu0 %v3153
        %v4061 = vpop.f32.mrb[0].mxu0
        %v4062 = vadd.f32 0.0, %v4061
        %v4063 = vpop.f32.mrb[0].mxu0
        %v4064 = vadd.f32 0.0, %v4063
        %4065 = vmatprep.mubr.f32.mxu0 %v3158
        %4066 = vmatmul.mubr.f32.gmra.mrb[0].mxu0 %v3157
        %v4067 = vpop.f32.mrb[0].mxu0
        %v4068 = vpop.f32.mrb[0].mxu0
        %4069 = vmatprep.mubr.f32.mxu0 %v3162
        %4070 = vmatmul.mubr.f32.gmra.mrb[0].mxu0 %v3161
        %v4071 = vpop.f32.mrb[0].mxu0
        %v4072 = vpop.f32.mrb[0].mxu0
        %4073 = vdwg.mxu0
        %4074 = vmatprep.subr.mxu0 %v3294
        %4075 = vmatpush1.msra.mxu0 %v3293
        %4076 = vmatprep.subr.mxu0 %v3298
        %4077 = vmatpush1.msra.mxu0 %v3297
        %4078 = vmatprep.subr.mxu0 %v3302
        %4079 = vmatpush1.msra.mxu0 %v3301
        %4080 = vmatprep.subr.mxu0 %v3306
        %4081 = vmatpush1.msra.mxu0 %v3305
        %4082 = vmatprep.subr.mxu0 %v3310
        %4083 = vmatpush1.msra.mxu0 %v3309
        %4084 = vmatprep.subr.mxu0 %v3314
        %4085 = vmatpush1.msra.mxu0 %v3313
        %4086 = vmatprep.subr.mxu0 %v3318
        %4087 = vmatpush1.msra.mxu0 %v3317
        %4088 = vmatprep.subr.mxu0 %v3322
        %4089 = vmatpush1.msra.mxu0 %v3321
        %4090 = vmatprep.subr.mxu0 %v3326
        %4091 = vmatpush1.msra.mxu0 %v3325
        %4092 = vmatprep.subr.mxu0 %v3330
        %4093 = vmatpush1.msra.mxu0 %v3329
        %4094 = vmatprep.subr.mxu0 %v3334
        %4095 = vmatpush1.msra.mxu0 %v3333
        %4096 = vmatprep.subr.mxu0 %v3338
        %4097 = vmatpush1.msra.mxu0 %v3337
        %4098 = vmatprep.subr.mxu0 %v3342
        %4099 = vmatpush1.msra.mxu0 %v3341
        %4100 = vmatprep.subr.mxu0 %v3346
        %4101 = vmatpush1.msra.mxu0 %v3345
        %4102 = vmatprep.subr.mxu0 %v3350
        %4103 = vmatpush1.msra.mxu0 %v3349
        %4104 = vmatprep.subr.mxu0 %v3354
        %4105 = vmatpush1.msra.mxu0 %v3353
        %4106 = vmatprep.subr.mxu0 %v3358
        %4107 = vmatpush1.msra.mxu0 %v3357
        %4108 = vmatprep.subr.mxu0 %v3362
        %4109 = vmatpush1.msra.mxu0 %v3361
        %4110 = vmatprep.subr.mxu0 %v3366
        %4111 = vmatpush1.msra.mxu0 %v3365
        %4112 = vmatprep.subr.mxu0 %v3370
        %4113 = vmatpush1.msra.mxu0 %v3369
        %4114 = vmatprep.subr.mxu0 %v3374
        %4115 = vmatpush1.msra.mxu0 %v3373
        %4116 = vmatprep.subr.mxu0 %v3378
        %4117 = vmatpush1.msra.mxu0 %v3377
        %4118 = vmatprep.subr.mxu0 %v3382
        %4119 = vmatpush1.msra.mxu0 %v3381
        %4120 = vmatprep.subr.mxu0 %v3386
        %4121 = vmatpush1.msra.mxu0 %v3385
        %4122 = vmatprep.subr.mxu0 %v3390
        %4123 = vmatpush1.msra.mxu0 %v3389
        %4124 = vmatprep.subr.mxu0 %v3394
        %4125 = vmatpush1.msra.mxu0 %v3393
        %4126 = vmatprep.subr.mxu0 %v3398
        %4127 = vmatpush1.msra.mxu0 %v3397
        %4128 = vmatprep.subr.mxu0 %v3402
        %4129 = vmatpush1.msra.mxu0 %v3401
        %4130 = vmatprep.subr.mxu0 %v3406
        %4131 = vmatpush1.msra.mxu0 %v3405
        %4132 = vmatprep.subr.mxu0 %v3410
        %4133 = vmatpush1.msra.mxu0 %v3409
        %4134 = vmatprep.subr.mxu0 %v3414
        %4135 = vmatpush1.msra.mxu0 %v3413
        %4136 = vmatprep.subr.mxu0 %v3418
        %4137 = vmatpush1.msra.mxu0 %v3417
        %4138 = vmatprep.mubr.f32.mxu0 %v3056
        %4139 = vmatmul.mubr.f32.gmra.mrb[0].mxu0 %v3055
        %v4140 = vpop.f32.mrb[0].mxu0
        %v4141 = vadd.f32 %v4000, %v4140
        %v4142 = vpop.f32.mrb[0].mxu0
        %v4143 = vadd.f32 %v4002, %v4142
        %4144 = vmatprep.mubr.f32.mxu0 %v3060
        %4145 = vmatmul.mubr.f32.gmra.mrb[0].mxu0 %v3059
        %v4146 = vpop.f32.mrb[0].mxu0
        %v4147 = vadd.f32 %v4006, %v4146
        %v4148 = vpop.f32.mrb[0].mxu0
        %v4149 = vadd.f32 %v4008, %v4148
        %4150 = vmatprep.mubr.f32.mxu0 %v3064
        %4151 = vmatmul.mubr.f32.gmra.mrb[0].mxu0 %v3063
        %v4152 = vpop.f32.mrb[0].mxu0
        %v4153 = vadd.f32 %v4012, %v4152
        %v4154 = vpop.f32.mrb[0].mxu0
        %v4155 = vadd.f32 %v4014, %v4154
        %4156 = vmatprep.mubr.f32.mxu0 %v3068
        %4157 = vmatmul.mubr.f32.gmra.mrb[0].mxu0 %v3067
        %v4158 = vpop.f32.mrb[0].mxu0
        %v4159 = vadd.f32 %v4018, %v4158
        %v4160 = vpop.f32.mrb[0].mxu0
        %v4161 = vadd.f32 %v4020, %v4160
        %4162 = vmatprep.mubr.f32.mxu0 %v3072
        %4163 = vmatmul.mubr.f32.gmra.mrb[0].mxu0 %v3071
        %v4164 = vpop.f32.mrb[0].mxu0
        %v4165 = vadd.f32 %v4024, %v4164
        %v4166 = vpop.f32.mrb[0].mxu0
        %v4167 = vadd.f32 %v4026, %v4166
        %4168 = vmatprep.mubr.f32.mxu0 %v3076
        %4169 = vmatmul.mubr.f32.gmra.mrb[0].mxu0 %v3075
        %v4170 = vpop.f32.mrb[0].mxu0
        %v4171 = vpop.f32.mrb[0].mxu0
        %4172 = vmatprep.mubr.f32.mxu0 %v3080
        %4173 = vmatmul.mubr.f32.gmra.mrb[0].mxu0 %v3079
        %v4174 = vpop.f32.mrb[0].mxu0
        %v4175 = vpop.f32.mrb[0].mxu0
        %4176 = vmatprep.mubr.f32.mxu0 %v3140
        %4177 = vmatmul.mubr.f32.gmra.mrb[0].mxu0 %v3139
        %v4178 = vpop.f32.mrb[0].mxu0
        %v4179 = vadd.f32 %v4038, %v4178
        %v4180 = vpop.f32.mrb[0].mxu0
        %v4181 = vadd.f32 %v4040, %v4180
        %4182 = vmatprep.mubr.f32.mxu0 %v3144
        %4183 = vmatmul.mubr.f32.gmra.mrb[0].mxu0 %v3143
        %v4184 = vpop.f32.mrb[0].mxu0
        %v4185 = vadd.f32 %v4044, %v4184
        %v4186 = vpop.f32.mrb[0].mxu0
        %v4187 = vadd.f32 %v4046, %v4186
        %4188 = vmatprep.mubr.f32.mxu0 %v3148
        %4189 = vmatmul.mubr.f32.gmra.mrb[0].mxu0 %v3147
        %v4190 = vpop.f32.mrb[0].mxu0
        %v4191 = vadd.f32 %v4050, %v4190
        %v4192 = vpop.f32.mrb[0].mxu0
        %v4193 = vadd.f32 %v4052, %v4192
        %4194 = vmatprep.mubr.f32.mxu0 %v3152
        %4195 = vmatmul.mubr.f32.gmra.mrb[0].mxu0 %v3151
        %v4196 = vpop.f32.mrb[0].mxu0
        %v4197 = vadd.f32 %v4056, %v4196
        %v4198 = vpop.f32.mrb[0].mxu0
        %v4199 = vadd.f32 %v4058, %v4198
        %4200 = vmatprep.mubr.f32.mxu0 %v3156
        %4201 = vmatmul.mubr.f32.gmra.mrb[0].mxu0 %v3155
        %v4202 = vpop.f32.mrb[0].mxu0
        %v4203 = vadd.f32 %v4062, %v4202
        %v4204 = vpop.f32.mrb[0].mxu0
        %v4205 = vadd.f32 %v4064, %v4204
        %4206 = vmatprep.mubr.f32.mxu0 %v3160
        %4207 = vmatmul.mubr.f32.gmra.mrb[0].mxu0 %v3159
        %v4208 = vpop.f32.mrb[0].mxu0
        %v4209 = vpop.f32.mrb[0].mxu0
        %4210 = vmatprep.mubr.f32.mxu0 %v3164
        %4211 = vmatmul.mubr.f32.gmra.mrb[0].mxu0 %v3163
        %v4212 = vpop.f32.mrb[0].mxu0
        %v4213 = vpop.f32.mrb[0].mxu0
        %4214 = vdwg.mxu0
        %4215 = vmatprep.subr.mxu0 %v3422
        %4216 = vmatpush1.msra.mxu0 %v3421
        %4217 = vmatprep.subr.mxu0 %v3426
        %4218 = vmatpush1.msra.mxu0 %v3425
        %4219 = vmatprep.subr.mxu0 %v3430
        %4220 = vmatpush1.msra.mxu0 %v3429
        %4221 = vmatprep.subr.mxu0 %v3434
        %4222 = vmatpush1.msra.mxu0 %v3433
        %4223 = vmatprep.subr.mxu0 %v3438
        %4224 = vmatpush1.msra.mxu0 %v3437
        %4225 = vmatprep.subr.mxu0 %v3442
        %4226 = vmatpush1.msra.mxu0 %v3441
        %4227 = vmatprep.subr.mxu0 %v3446
        %4228 = vmatpush1.msra.mxu0 %v3445
        %4229 = vmatprep.subr.mxu0 %v3450
        %4230 = vmatpush1.msra.mxu0 %v3449
        %4231 = vmatprep.subr.mxu0 %v3454
        %4232 = vmatpush1.msra.mxu0 %v3453
        %4233 = vmatprep.subr.mxu0 %v3458
        %4234 = vmatpush1.msra.mxu0 %v3457
        %4235 = vmatprep.subr.mxu0 %v3462
        %4236 = vmatpush1.msra.mxu0 %v3461
        %4237 = vmatprep.subr.mxu0 %v3466
        %4238 = vmatpush1.msra.mxu0 %v3465
        %4239 = vmatprep.subr.mxu0 %v3470
        %4240 = vmatpush1.msra.mxu0 %v3469
        %4241 = vmatprep.subr.mxu0 %v3474
        %4242 = vmatpush1.msra.mxu0 %v3473
        %4243 = vmatprep.subr.mxu0 %v3478
        %4244 = vmatpush1.msra.mxu0 %v3477
        %4245 = vmatprep.subr.mxu0 %v3482
        %4246 = vmatpush1.msra.mxu0 %v3481
        %4247 = vmatprep.subr.mxu0 %v3486
        %4248 = vmatpush1.msra.mxu0 %v3485
        %4249 = vmatprep.subr.mxu0 %v3490
        %4250 = vmatpush1.msra.mxu0 %v3489
        %4251 = vmatprep.subr.mxu0 %v3494
        %4252 = vmatpush1.msra.mxu0 %v3493
        %4253 = vmatprep.subr.mxu0 %v3498
        %4254 = vmatpush1.msra.mxu0 %v3497
        %4255 = vmatprep.subr.mxu0 %v3502
        %4256 = vmatpush1.msra.mxu0 %v3501
        %4257 = vmatprep.subr.mxu0 %v3506
        %4258 = vmatpush1.msra.mxu0 %v3505
        %4259 = vmatprep.subr.mxu0 %v3510
        %4260 = vmatpush1.msra.mxu0 %v3509
        %4261 = vmatprep.subr.mxu0 %v3514
        %4262 = vmatpush1.msra.mxu0 %v3513
        %4263 = vmatprep.subr.mxu0 %v3518
        %4264 = vmatpush1.msra.mxu0 %v3517
        %4265 = vmatprep.subr.mxu0 %v3522
        %4266 = vmatpush1.msra.mxu0 %v3521
        %4267 = vmatprep.subr.mxu0 %v3526
        %4268 = vmatpush1.msra.mxu0 %v3525
        %4269 = vmatprep.subr.mxu0 %v3530
        %4270 = vmatpush1.msra.mxu0 %v3529
        %4271 = vmatprep.subr.mxu0 %v3534
        %4272 = vmatpush1.msra.mxu0 %v3533
        %4273 = vmatprep.subr.mxu0 %v3538
        %4274 = vmatpush1.msra.mxu0 %v3537
        %4275 = vmatprep.subr.mxu0 %v3542
        %4276 = vmatpush1.msra.mxu0 %v3541
        %4277 = vmatprep.subr.mxu0 %v3546
        %4278 = vmatpush1.msra.mxu0 %v3545
        %4279 = vmatprep.mubr.f32.mxu0 %v3138
        %4280 = vmatmul.mubr.f32.gmra.mrb[0].mxu0 %v3137
        %v4281 = vpop.f32.mrb[0].mxu0
        %v4282 = vadd.f32 %v4141, %v4281
        %v4283 = vpop.f32.mrb[0].mxu0
        %v4284 = vadd.f32 %v4143, %v4283
        %4285 = vmatprep.mubr.f32.mxu0 %v3142
        %4286 = vmatmul.mubr.f32.gmra.mrb[0].mxu0 %v3141
        %v4287 = vpop.f32.mrb[0].mxu0
        %v4288 = vadd.f32 %v4147, %v4287
        %v4289 = vpop.f32.mrb[0].mxu0
        %v4290 = vadd.f32 %v4149, %v4289
        %4291 = vmatprep.mubr.f32.mxu0 %v3146
        %4292 = vmatmul.mubr.f32.gmra.mrb[0].mxu0 %v3145
        %v4293 = vpop.f32.mrb[0].mxu0
        %v4294 = vadd.f32 %v4153, %v4293
        %v4295 = vpop.f32.mrb[0].mxu0
        %v4296 = vadd.f32 %v4155, %v4295
        %4297 = vmatprep.mubr.f32.mxu0 %v3150
        %4298 = vmatmul.mubr.f32.gmra.mrb[0].mxu0 %v3149
        %v4299 = vpop.f32.mrb[0].mxu0
        %v4300 = vadd.f32 %v4159, %v4299
        %v4301 = vpop.f32.mrb[0].mxu0
        %v4302 = vadd.f32 %v4161, %v4301
        %4303 = vmatprep.mubr.f32.mxu0 %v3154
        %4304 = vmatmul.mubr.f32.gmra.mrb[0].mxu0 %v3153
        %v4305 = vpop.f32.mrb[0].mxu0
        %v4306 = vadd.f32 %v4165, %v4305
        %v4307 = vpop.f32.mrb[0].mxu0
        %v4308 = vadd.f32 %v4167, %v4307
        %4309 = vmatprep.mubr.f32.mxu0 %v3158
        %4310 = vmatmul.mubr.f32.gmra.mrb[0].mxu0 %v3157
        %v4311 = vpop.f32.mrb[0].mxu0
        %v4312 = vpop.f32.mrb[0].mxu0
        %4313 = vmatprep.mubr.f32.mxu0 %v3162
        %4314 = vmatmul.mubr.f32.gmra.mrb[0].mxu0 %v3161
        %v4315 = vpop.f32.mrb[0].mxu0
        %v4316 = vpop.f32.mrb[0].mxu0
        %4317 = vmatprep.mubr.f32.mxu0 %v3058
        %4318 = vmatmul.mubr.f32.gmra.mrb[0].mxu0 %v3057
        %v4319 = vpop.f32.mrb[0].mxu0
        %v4320 = vadd.f32 %v4179, %v4319
        %v4321 = vpop.f32.mrb[0].mxu0
        %v4322 = vadd.f32 %v4181, %v4321
        %4323 = vmatprep.mubr.f32.mxu0 %v3062
        %4324 = vmatmul.mubr.f32.gmra.mrb[0].mxu0 %v3061
        %v4325 = vpop.f32.mrb[0].mxu0
        %v4326 = vadd.f32 %v4185, %v4325
        %v4327 = vpop.f32.mrb[0].mxu0
        %v4328 = vadd.f32 %v4187, %v4327
        %4329 = vmatprep.mubr.f32.mxu0 %v3066
        %4330 = vmatmul.mubr.f32.gmra.mrb[0].mxu0 %v3065
        %v4331 = vpop.f32.mrb[0].mxu0
        %v4332 = vadd.f32 %v4191, %v4331
        %v4333 = vpop.f32.mrb[0].mxu0
        %v4334 = vadd.f32 %v4193, %v4333
        %4335 = vmatprep.mubr.f32.mxu0 %v3070
        %4336 = vmatmul.mubr.f32.gmra.mrb[0].mxu0 %v3069
        %v4337 = vpop.f32.mrb[0].mxu0
        %v4338 = vadd.f32 %v4197, %v4337
        %v4339 = vpop.f32.mrb[0].mxu0
        %v4340 = vadd.f32 %v4199, %v4339
        %4341 = vmatprep.mubr.f32.mxu0 %v3074
        %4342 = vmatmul.mubr.f32.gmra.mrb[0].mxu0 %v3073
        %v4343 = vpop.f32.mrb[0].mxu0
        %v4344 = vadd.f32 %v4203, %v4343
        %v4345 = vpop.f32.mrb[0].mxu0
        %v4346 = vadd.f32 %v4205, %v4345
        %4347 = vmatprep.mubr.f32.mxu0 %v3078
        %4348 = vmatmul.mubr.f32.gmra.mrb[0].mxu0 %v3077
        %v4349 = vpop.f32.mrb[0].mxu0
        %v4350 = vpop.f32.mrb[0].mxu0
        %4351 = vmatprep.mubr.f32.mxu0 %v3054
        %4352 = vmatmul.mubr.f32.gmra.mrb[0].mxu0 %v3053
        %v4353 = vpop.f32.mrb[0].mxu0
        %v4354 = vpop.f32.mrb[0].mxu0
        %4355 = vdwg.mxu0
        %4356 = vmatprep.subr.mxu0 %v3550
        %4357 = vmatpush1.msra.mxu0 %v3549
        %4358 = vmatprep.subr.mxu0 %v3554
        %4359 = vmatpush1.msra.mxu0 %v3553
        %4360 = vmatprep.subr.mxu0 %v3558
        %4361 = vmatpush1.msra.mxu0 %v3557
        %4362 = vmatprep.subr.mxu0 %v3562
        %4363 = vmatpush1.msra.mxu0 %v3561
        %4364 = vmatprep.subr.mxu0 %v3566
        %4365 = vmatpush1.msra.mxu0 %v3565
        %4366 = vmatprep.subr.mxu0 %v3570
        %4367 = vmatpush1.msra.mxu0 %v3569
        %4368 = vmatprep.subr.mxu0 %v3574
        %4369 = vmatpush1.msra.mxu0 %v3573
        %4370 = vmatprep.subr.mxu0 %v3578
        %4371 = vmatpush1.msra.mxu0 %v3577
        %4372 = vmatprep.subr.mxu0 %v3582
        %4373 = vmatpush1.msra.mxu0 %v3581
        %4374 = vmatprep.subr.mxu0 %v3586
        %4375 = vmatpush1.msra.mxu0 %v3585
        %4376 = vmatprep.subr.mxu0 %v3590
        %4377 = vmatpush1.msra.mxu0 %v3589
        %4378 = vmatprep.subr.mxu0 %v3594
        %4379 = vmatpush1.msra.mxu0 %v3593
        %4380 = vmatprep.subr.mxu0 %v3598
        %4381 = vmatpush1.msra.mxu0 %v3597
        %4382 = vmatprep.subr.mxu0 %v3602
        %4383 = vmatpush1.msra.mxu0 %v3601
        %4384 = vmatprep.subr.mxu0 %v3606
        %4385 = vmatpush1.msra.mxu0 %v3605
        %4386 = vmatprep.subr.mxu0 %v3610
        %4387 = vmatpush1.msra.mxu0 %v3609
        %4388 = vmatprep.subr.mxu0 %v3614
        %4389 = vmatpush1.msra.mxu0 %v3613
        %4390 = vmatprep.subr.mxu0 %v3618
        %4391 = vmatpush1.msra.mxu0 %v3617
        %4392 = vmatprep.subr.mxu0 %v3622
        %4393 = vmatpush1.msra.mxu0 %v3621
        %4394 = vmatprep.subr.mxu0 %v3626
        %4395 = vmatpush1.msra.mxu0 %v3625
        %4396 = vmatprep.subr.mxu0 %v3630
        %4397 = vmatpush1.msra.mxu0 %v3629
        %4398 = vmatprep.subr.mxu0 %v3634
        %4399 = vmatpush1.msra.mxu0 %v3633
        %4400 = vmatprep.subr.mxu0 %v3638
        %4401 = vmatpush1.msra.mxu0 %v3637
        %4402 = vmatprep.subr.mxu0 %v3642
        %4403 = vmatpush1.msra.mxu0 %v3641
        %4404 = vmatprep.subr.mxu0 %v3646
        %4405 = vmatpush1.msra.mxu0 %v3645
        %4406 = vmatprep.subr.mxu0 %v3650
        %4407 = vmatpush1.msra.mxu0 %v3649
        %4408 = vmatprep.subr.mxu0 %v3654
        %4409 = vmatpush1.msra.mxu0 %v3653
        %4410 = vmatprep.subr.mxu0 %v3658
        %4411 = vmatpush1.msra.mxu0 %v3657
        %4412 = vmatprep.subr.mxu0 %v3662
        %4413 = vmatpush1.msra.mxu0 %v3661
        %4414 = vmatprep.subr.mxu0 %v3666
        %4415 = vmatpush1.msra.mxu0 %v3665
        %4416 = vmatprep.subr.mxu0 %v3670
        %4417 = vmatpush1.msra.mxu0 %v3669
        %4418 = vmatprep.subr.mxu0 %v3674
        %4419 = vmatpush1.msra.mxu0 %v3673
        %4420 = vmatprep.mubr.f32.mxu0 %v3140
        %4421 = vmatmul.mubr.f32.gmra.mrb[0].mxu0 %v3139
        %v4422 = vpop.f32.mrb[0].mxu0
        %v4423 = vadd.f32 %v4282, %v4422
        %v4424 = vpop.f32.mrb[0].mxu0
        %v4425 = vadd.f32 %v4284, %v4424
        %4426 = vmatprep.mubr.f32.mxu0 %v3144
        %4427 = vmatmul.mubr.f32.gmra.mrb[0].mxu0 %v3143
        %v4428 = vpop.f32.mrb[0].mxu0
        %v4429 = vadd.f32 %v4288, %v4428
        %v4430 = vpop.f32.mrb[0].mxu0
        %v4431 = vadd.f32 %v4290, %v4430
        %4432 = vmatprep.mubr.f32.mxu0 %v3148
        %4433 = vmatmul.mubr.f32.gmra.mrb[0].mxu0 %v3147
        %v4434 = vpop.f32.mrb[0].mxu0
        %v4435 = vadd.f32 %v4294, %v4434
        %v4436 = vpop.f32.mrb[0].mxu0
        %v4437 = vadd.f32 %v4296, %v4436
        %4438 = vmatprep.mubr.f32.mxu0 %v3152
        %4439 = vmatmul.mubr.f32.gmra.mrb[0].mxu0 %v3151
        %v4440 = vpop.f32.mrb[0].mxu0
        %v4441 = vadd.f32 %v4300, %v4440
        %v4442 = vpop.f32.mrb[0].mxu0
        %v4443 = vadd.f32 %v4302, %v4442
        %4444 = vmatprep.mubr.f32.mxu0 %v3156
        %4445 = vmatmul.mubr.f32.gmra.mrb[0].mxu0 %v3155
        %v4446 = vpop.f32.mrb[0].mxu0
        %v4447 = vadd.f32 %v4306, %v4446
        %v4448 = vpop.f32.mrb[0].mxu0
        %v4449 = vadd.f32 %v4308, %v4448
        %4450 = vmatprep.mubr.f32.mxu0 %v3160
        %4451 = vmatmul.mubr.f32.gmra.mrb[0].mxu0 %v3159
        %v4452 = vpop.f32.mrb[0].mxu0
        %v4453 = vpop.f32.mrb[0].mxu0
        %4454 = vmatprep.mubr.f32.mxu0 %v3164
        %4455 = vmatmul.mubr.f32.gmra.mrb[0].mxu0 %v3163
        %v4456 = vpop.f32.mrb[0].mxu0
        %v4457 = vpop.f32.mrb[0].mxu0
        %4458 = vmatprep.mubr.f32.mxu0 %v3060
        %4459 = vmatmul.mubr.f32.gmra.mrb[0].mxu0 %v3059
        %v4460 = vpop.f32.mrb[0].mxu0
        %v4461 = vadd.f32 %v4320, %v4460
        %v4462 = vpop.f32.mrb[0].mxu0
        %v4463 = vadd.f32 %v4322, %v4462
        %4464 = vmatprep.mubr.f32.mxu0 %v3064
        %4465 = vmatmul.mubr.f32.gmra.mrb[0].mxu0 %v3063
        %v4466 = vpop.f32.mrb[0].mxu0
        %v4467 = vadd.f32 %v4326, %v4466
        %v4468 = vpop.f32.mrb[0].mxu0
        %v4469 = vadd.f32 %v4328, %v4468
        %4470 = vmatprep.mubr.f32.mxu0 %v3068
        %4471 = vmatmul.mubr.f32.gmra.mrb[0].mxu0 %v3067
        %v4472 = vpop.f32.mrb[0].mxu0
        %v4473 = vadd.f32 %v4332, %v4472
        %v4474 = vpop.f32.mrb[0].mxu0
        %v4475 = vadd.f32 %v4334, %v4474
        %4476 = vmatprep.mubr.f32.mxu0 %v3072
        %4477 = vmatmul.mubr.f32.gmra.mrb[0].mxu0 %v3071
        %v4478 = vpop.f32.mrb[0].mxu0
        %v4479 = vadd.f32 %v4338, %v4478
        %v4480 = vpop.f32.mrb[0].mxu0
        %v4481 = vadd.f32 %v4340, %v4480
        %4482 = vmatprep.mubr.f32.mxu0 %v3076
        %4483 = vmatmul.mubr.f32.gmra.mrb[0].mxu0 %v3075
        %v4484 = vpop.f32.mrb[0].mxu0
        %v4485 = vadd.f32 %v4344, %v4484
        %v4486 = vpop.f32.mrb[0].mxu0
        %v4487 = vadd.f32 %v4346, %v4486
        %4488 = vmatprep.mubr.f32.mxu0 %v3080
        %4489 = vmatmul.mubr.f32.gmra.mrb[0].mxu0 %v3079
        %v4490 = vpop.f32.mrb[0].mxu0
        %v4491 = vpop.f32.mrb[0].mxu0
        %4492 = vmatprep.mubr.f32.mxu0 %v3056
        %4493 = vmatmul.mubr.f32.gmra.mrb[0].mxu0 %v3055
        %v4494 = vpop.f32.mrb[0].mxu0
        %v4495 = vpop.f32.mrb[0].mxu0
        %4496 = vdwg.mxu0
        %4497 = vmatprep.subr.mxu0 %v3678
        %4498 = vmatpush1.msra.mxu0 %v3677
        %4499 = vmatprep.subr.mxu0 %v3682
        %4500 = vmatpush1.msra.mxu0 %v3681
        %4501 = vmatprep.subr.mxu0 %v3686
        %4502 = vmatpush1.msra.mxu0 %v3685
        %4503 = vmatprep.subr.mxu0 %v3690
        %4504 = vmatpush1.msra.mxu0 %v3689
        %4505 = vmatprep.subr.mxu0 %v3694
        %4506 = vmatpush1.msra.mxu0 %v3693
        %4507 = vmatprep.subr.mxu0 %v3698
        %4508 = vmatpush1.msra.mxu0 %v3697
        %4509 = vmatprep.subr.mxu0 %v3702
        %4510 = vmatpush1.msra.mxu0 %v3701
        %4511 = vmatprep.subr.mxu0 %v3706
        %4512 = vmatpush1.msra.mxu0 %v3705
        %4513 = vmatprep.subr.mxu0 %v3710
        %4514 = vmatpush1.msra.mxu0 %v3709
        %4515 = vmatprep.subr.mxu0 %v3714
        %4516 = vmatpush1.msra.mxu0 %v3713
        %4517 = vmatprep.subr.mxu0 %v3718
        %4518 = vmatpush1.msra.mxu0 %v3717
        %4519 = vmatprep.subr.mxu0 %v3722
        %4520 = vmatpush1.msra.mxu0 %v3721
        %4521 = vmatprep.subr.mxu0 %v3726
        %4522 = vmatpush1.msra.mxu0 %v3725
        %4523 = vmatprep.subr.mxu0 %v3730
        %4524 = vmatpush1.msra.mxu0 %v3729
        %4525 = vmatprep.subr.mxu0 %v3734
        %4526 = vmatpush1.msra.mxu0 %v3733
        %4527 = vmatprep.subr.mxu0 %v3738
        %4528 = vmatpush1.msra.mxu0 %v3737
        %4529 = vmatprep.subr.mxu0 %v3742
        %4530 = vmatpush1.msra.mxu0 %v3741
        %4531 = vmatprep.subr.mxu0 %v3746
        %4532 = vmatpush1.msra.mxu0 %v3745
        %4533 = vmatprep.subr.mxu0 %v3750
        %4534 = vmatpush1.msra.mxu0 %v3749
        %4535 = vmatprep.subr.mxu0 %v3754
        %4536 = vmatpush1.msra.mxu0 %v3753
        %4537 = vmatprep.subr.mxu0 %v3758
        %4538 = vmatpush1.msra.mxu0 %v3757
        %4539 = vmatprep.subr.mxu0 %v3762
        %4540 = vmatpush1.msra.mxu0 %v3761
        %4541 = vmatprep.subr.mxu0 %v3766
        %4542 = vmatpush1.msra.mxu0 %v3765
        %4543 = vmatprep.subr.mxu0 %v3770
        %4544 = vmatpush1.msra.mxu0 %v3769
        %4545 = vmatprep.subr.mxu0 %v3774
        %4546 = vmatpush1.msra.mxu0 %v3773
        %4547 = vmatprep.subr.mxu0 %v3778
        %4548 = vmatpush1.msra.mxu0 %v3777
        %4549 = vmatprep.subr.mxu0 %v3782
        %4550 = vmatpush1.msra.mxu0 %v3781
        %4551 = vmatprep.subr.mxu0 %v3786
        %4552 = vmatpush1.msra.mxu0 %v3785
        %4553 = vmatprep.subr.mxu0 %v3790
        %4554 = vmatpush1.msra.mxu0 %v3789
        %4555 = vmatprep.subr.mxu0 %v3794
        %4556 = vmatpush1.msra.mxu0 %v3793
        %4557 = vmatprep.subr.mxu0 %v3798
        %4558 = vmatpush1.msra.mxu0 %v3797
        %4559 = vmatprep.subr.mxu0 %v3802
        %4560 = vmatpush1.msra.mxu0 %v3801
        %4561 = vmatprep.mubr.f32.mxu0 %v3058
        %4562 = vmatmul.mubr.f32.gmra.mrb[0].mxu0 %v3057
        %v4563 = vpop.f32.mrb[0].mxu0
        %v4564 = vadd.f32 %v4423, %v4563
        %v4565 = vpop.f32.mrb[0].mxu0
        %v4566 = vadd.f32 %v4425, %v4565
        %4567 = vmatprep.mubr.f32.mxu0 %v3062
        %4568 = vmatmul.mubr.f32.gmra.mrb[0].mxu0 %v3061
        %v4569 = vpop.f32.mrb[0].mxu0
        %v4570 = vadd.f32 %v4429, %v4569
        %v4571 = vpop.f32.mrb[0].mxu0
        %v4572 = vadd.f32 %v4431, %v4571
        %4573 = vmatprep.mubr.f32.mxu0 %v3066
        %4574 = vmatmul.mubr.f32.gmra.mrb[0].mxu0 %v3065
        %v4575 = vpop.f32.mrb[0].mxu0
        %v4576 = vadd.f32 %v4435, %v4575
        %v4577 = vpop.f32.mrb[0].mxu0
        %v4578 = vadd.f32 %v4437, %v4577
        %4579 = vmatprep.mubr.f32.mxu0 %v3070
        %4580 = vmatmul.mubr.f32.gmra.mrb[0].mxu0 %v3069
        %v4581 = vpop.f32.mrb[0].mxu0
        %v4582 = vadd.f32 %v4441, %v4581
        %v4583 = vpop.f32.mrb[0].mxu0
        %v4584 = vadd.f32 %v4443, %v4583
        %4585 = vmatprep.mubr.f32.mxu0 %v3074
        %4586 = vmatmul.mubr.f32.gmra.mrb[0].mxu0 %v3073
        %v4587 = vpop.f32.mrb[0].mxu0
        %v4588 = vadd.f32 %v4447, %v4587
        %v4589 = vpop.f32.mrb[0].mxu0
        %v4590 = vadd.f32 %v4449, %v4589
        %4591 = vmatprep.mubr.f32.mxu0 %v3078
        %4592 = vmatmul.mubr.f32.gmra.mrb[0].mxu0 %v3077
        %v4593 = vpop.f32.mrb[0].mxu0
        %v4594 = vpop.f32.mrb[0].mxu0
        %4595 = vmatprep.mubr.f32.mxu0 %v3054
        %4596 = vmatmul.mubr.f32.gmra.mrb[0].mxu0 %v3053
        %v4597 = vpop.f32.mrb[0].mxu0
        %v4598 = vpop.f32.mrb[0].mxu0
        %4599 = vmatprep.mubr.f32.mxu0 %v3142
        %4600 = vmatmul.mubr.f32.gmra.mrb[0].mxu0 %v3141
        %v4601 = vpop.f32.mrb[0].mxu0
        %v4602 = vadd.f32 %v4461, %v4601
        %v4603 = vpop.f32.mrb[0].mxu0
        %v4604 = vadd.f32 %v4463, %v4603
        %4605 = vmatprep.mubr.f32.mxu0 %v3146
        %4606 = vmatmul.mubr.f32.gmra.mrb[0].mxu0 %v3145
        %v4607 = vpop.f32.mrb[0].mxu0
        %v4608 = vadd.f32 %v4467, %v4607
        %v4609 = vpop.f32.mrb[0].mxu0
        %v4610 = vadd.f32 %v4469, %v4609
        %4611 = vmatprep.mubr.f32.mxu0 %v3150
        %4612 = vmatmul.mubr.f32.gmra.mrb[0].mxu0 %v3149
        %v4613 = vpop.f32.mrb[0].mxu0
        %v4614 = vadd.f32 %v4473, %v4613
        %v4615 = vpop.f32.mrb[0].mxu0
        %v4616 = vadd.f32 %v4475, %v4615
        %4617 = vmatprep.mubr.f32.mxu0 %v3154
        %4618 = vmatmul.mubr.f32.gmra.mrb[0].mxu0 %v3153
        %v4619 = vpop.f32.mrb[0].mxu0
        %v4620 = vadd.f32 %v4479, %v4619
        %v4621 = vpop.f32.mrb[0].mxu0
        %v4622 = vadd.f32 %v4481, %v4621
        %4623 = vmatprep.mubr.f32.mxu0 %v3158
        %4624 = vmatmul.mubr.f32.gmra.mrb[0].mxu0 %v3157
        %v4625 = vpop.f32.mrb[0].mxu0
        %v4626 = vadd.f32 %v4485, %v4625
        %v4627 = vpop.f32.mrb[0].mxu0
        %v4628 = vadd.f32 %v4487, %v4627
        %4629 = vmatprep.mubr.f32.mxu0 %v3162
        %4630 = vmatmul.mubr.f32.gmra.mrb[0].mxu0 %v3161
        %v4631 = vpop.f32.mrb[0].mxu0
        %v4632 = vpop.f32.mrb[0].mxu0
        %4633 = vmatprep.mubr.f32.mxu0 %v3138
        %4634 = vmatmul.mubr.f32.gmra.mrb[0].mxu0 %v3137
        %v4635 = vpop.f32.mrb[0].mxu0
        %v4636 = vpop.f32.mrb[0].mxu0
        %4637 = vdwg.mxu0
        %4638 = vmatprep.subr.mxu0 %v3806
        %4639 = vmatpush1.msra.mxu0 %v3805
        %4640 = vmatprep.subr.mxu0 %v3810
        %4641 = vmatpush1.msra.mxu0 %v3809
        %4642 = vmatprep.subr.mxu0 %v3814
        %4643 = vmatpush1.msra.mxu0 %v3813
        %4644 = vmatprep.subr.mxu0 %v3818
        %4645 = vmatpush1.msra.mxu0 %v3817
        %4646 = vmatprep.subr.mxu0 %v3822
        %4647 = vmatpush1.msra.mxu0 %v3821
        %4648 = vmatprep.subr.mxu0 %v3826
        %4649 = vmatpush1.msra.mxu0 %v3825
        %4650 = vmatprep.subr.mxu0 %v3830
        %4651 = vmatpush1.msra.mxu0 %v3829
        %4652 = vmatprep.subr.mxu0 %v3834
        %4653 = vmatpush1.msra.mxu0 %v3833
        %4654 = vmatprep.subr.mxu0 %v3838
        %4655 = vmatpush1.msra.mxu0 %v3837
        %4656 = vmatprep.subr.mxu0 %v3842
        %4657 = vmatpush1.msra.mxu0 %v3841
        %4658 = vmatprep.subr.mxu0 %v3846
        %4659 = vmatpush1.msra.mxu0 %v3845
        %4660 = vmatprep.subr.mxu0 %v3850
        %4661 = vmatpush1.msra.mxu0 %v3849
        %4662 = vmatprep.subr.mxu0 %v3854
        %4663 = vmatpush1.msra.mxu0 %v3853
        %4664 = vmatprep.subr.mxu0 %v3858
        %4665 = vmatpush1.msra.mxu0 %v3857
        %4666 = vmatprep.subr.mxu0 %v3862
        %4667 = vmatpush1.msra.mxu0 %v3861
        %4668 = vmatprep.subr.mxu0 %v3866
        %4669 = vmatpush1.msra.mxu0 %v3865
        %4670 = vmatprep.subr.mxu0 %v3870
        %4671 = vmatpush1.msra.mxu0 %v3869
        %4672 = vmatprep.subr.mxu0 %v3874
        %4673 = vmatpush1.msra.mxu0 %v3873
        %4674 = vmatprep.subr.mxu0 %v3878
        %4675 = vmatpush1.msra.mxu0 %v3877
        %4676 = vmatprep.subr.mxu0 %v3882
        %4677 = vmatpush1.msra.mxu0 %v3881
        %4678 = vmatprep.subr.mxu0 %v3886
        %4679 = vmatpush1.msra.mxu0 %v3885
        %4680 = vmatprep.subr.mxu0 %v3890
        %4681 = vmatpush1.msra.mxu0 %v3889
        %4682 = vmatprep.subr.mxu0 %v3894
        %4683 = vmatpush1.msra.mxu0 %v3893
        %4684 = vmatprep.subr.mxu0 %v3898
        %4685 = vmatpush1.msra.mxu0 %v3897
        %4686 = vmatprep.subr.mxu0 %v3902
        %4687 = vmatpush1.msra.mxu0 %v3901
        %4688 = vmatprep.subr.mxu0 %v3906
        %4689 = vmatpush1.msra.mxu0 %v3905
        %4690 = vmatprep.subr.mxu0 %v3910
        %4691 = vmatpush1.msra.mxu0 %v3909
        %4692 = vmatprep.subr.mxu0 %v3914
        %4693 = vmatpush1.msra.mxu0 %v3913
        %4694 = vmatprep.subr.mxu0 %v3918
        %4695 = vmatpush1.msra.mxu0 %v3917
        %4696 = vmatprep.subr.mxu0 %v3922
        %4697 = vmatpush1.msra.mxu0 %v3921
        %4698 = vmatprep.subr.mxu0 %v3926
        %4699 = vmatpush1.msra.mxu0 %v3925
        %4700 = vmatprep.subr.mxu0 %v3930
        %4701 = vmatpush1.msra.mxu0 %v3929
        %4702 = vmatprep.mubr.f32.mxu0 %v3060
        %4703 = vmatmul.mubr.f32.gmra.mrb[0].mxu0 %v3059
        %v4704 = vpop.f32.mrb[0].mxu0
        %v4705 = vadd.f32 %v4564, %v4704
        %v4706 = vpop.f32.mrb[0].mxu0
        %v4707 = vadd.f32 %v4566, %v4706
        %4708 = vmatprep.mubr.f32.mxu0 %v3064
        %4709 = vmatmul.mubr.f32.gmra.mrb[0].mxu0 %v3063
        %v4710 = vpop.f32.mrb[0].mxu0
        %v4711 = vadd.f32 %v4570, %v4710
        %v4712 = vpop.f32.mrb[0].mxu0
        %v4713 = vadd.f32 %v4572, %v4712
        %4714 = vmatprep.mubr.f32.mxu0 %v3068
        %4715 = vmatmul.mubr.f32.gmra.mrb[0].mxu0 %v3067
        %v4716 = vpop.f32.mrb[0].mxu0
        %v4717 = vadd.f32 %v4576, %v4716
        %v4718 = vpop.f32.mrb[0].mxu0
        %v4719 = vadd.f32 %v4578, %v4718
        %4720 = vmatprep.mubr.f32.mxu0 %v3072
        %4721 = vmatmul.mubr.f32.gmra.mrb[0].mxu0 %v3071
        %v4722 = vpop.f32.mrb[0].mxu0
        %v4723 = vadd.f32 %v4582, %v4722
        %v4724 = vpop.f32.mrb[0].mxu0
        %v4725 = vadd.f32 %v4584, %v4724
        %4726 = vmatprep.mubr.f32.mxu0 %v3076
        %4727 = vmatmul.mubr.f32.gmra.mrb[0].mxu0 %v3075
        %v4728 = vpop.f32.mrb[0].mxu0
        %v4729 = vadd.f32 %v4588, %v4728
        %v4730 = vpop.f32.mrb[0].mxu0
        %v4731 = vadd.f32 %v4590, %v4730
        %4732 = vmatprep.mubr.f32.mxu0 %v3080
        %4733 = vmatmul.mubr.f32.gmra.mrb[0].mxu0 %v3079
        %v4734 = vpop.f32.mrb[0].mxu0
        %v4735 = vpop.f32.mrb[0].mxu0
        %4736 = vmatprep.mubr.f32.mxu0 %v3056
        %4737 = vmatmul.mubr.f32.gmra.mrb[0].mxu0 %v3055
        %v4738 = vpop.f32.mrb[0].mxu0
        %v4739 = vpop.f32.mrb[0].mxu0
        %4740 = vmatprep.mubr.f32.mxu0 %v3144
        %4741 = vmatmul.mubr.f32.gmra.mrb[0].mxu0 %v3143
        %v4742 = vpop.f32.mrb[0].mxu0
        %v4743 = vadd.f32 %v4602, %v4742
        %v4744 = vpop.f32.mrb[0].mxu0
        %v4745 = vadd.f32 %v4604, %v4744
        %4746 = vmatprep.mubr.f32.mxu0 %v3148
        %4747 = vmatmul.mubr.f32.gmra.mrb[0].mxu0 %v3147
        %v4748 = vpop.f32.mrb[0].mxu0
        %v4749 = vadd.f32 %v4608, %v4748
        %v4750 = vpop.f32.mrb[0].mxu0
        %v4751 = vadd.f32 %v4610, %v4750
        %4752 = vmatprep.mubr.f32.mxu0 %v3152
        %4753 = vmatmul.mubr.f32.gmra.mrb[0].mxu0 %v3151
        %v4754 = vpop.f32.mrb[0].mxu0
        %v4755 = vadd.f32 %v4614, %v4754
        %v4756 = vpop.f32.mrb[0].mxu0
        %v4757 = vadd.f32 %v4616, %v4756
        %4758 = vmatprep.mubr.f32.mxu0 %v3156
        %4759 = vmatmul.mubr.f32.gmra.mrb[0].mxu0 %v3155
        %v4760 = vpop.f32.mrb[0].mxu0
        %v4761 = vadd.f32 %v4620, %v4760
        %v4762 = vpop.f32.mrb[0].mxu0
        %v4763 = vadd.f32 %v4622, %v4762
        %4764 = vmatprep.mubr.f32.mxu0 %v3160
        %4765 = vmatmul.mubr.f32.gmra.mrb[0].mxu0 %v3159
        %v4766 = vpop.f32.mrb[0].mxu0
        %v4767 = vadd.f32 %v4626, %v4766
        %v4768 = vpop.f32.mrb[0].mxu0
        %v4769 = vadd.f32 %v4628, %v4768
        %4770 = vmatprep.mubr.f32.mxu0 %v3164
        %4771 = vmatmul.mubr.f32.gmra.mrb[0].mxu0 %v3163
        %v4772 = vpop.f32.mrb[0].mxu0
        %v4773 = vpop.f32.mrb[0].mxu0
        %4774 = vmatprep.mubr.f32.mxu0 %v3140
        %4775 = vmatmul.mubr.f32.gmra.mrb[0].mxu0 %v3139
        %v4776 = vpop.f32.mrb[0].mxu0
        %v4777 = vpop.f32.mrb[0].mxu0
        %4778 = vdwg.mxu0
        %4779 = vmatprep.subr.mxu0 %v3168
        %4780 = vmatpush1.msra.mxu0 %v3167
        %4781 = vmatprep.subr.mxu0 %v3172
        %4782 = vmatpush1.msra.mxu0 %v3171
        %4783 = vmatprep.subr.mxu0 %v3176
        %4784 = vmatpush1.msra.mxu0 %v3175
        %4785 = vmatprep.subr.mxu0 %v3180
        %4786 = vmatpush1.msra.mxu0 %v3179
        %4787 = vmatprep.subr.mxu0 %v3184
        %4788 = vmatpush1.msra.mxu0 %v3183
        %4789 = vmatprep.subr.mxu0 %v3188
        %4790 = vmatpush1.msra.mxu0 %v3187
        %4791 = vmatprep.subr.mxu0 %v3192
        %4792 = vmatpush1.msra.mxu0 %v3191
        %4793 = vmatprep.subr.mxu0 %v3196
        %4794 = vmatpush1.msra.mxu0 %v3195
        %4795 = vmatprep.subr.mxu0 %v3200
        %4796 = vmatpush1.msra.mxu0 %v3199
        %4797 = vmatprep.subr.mxu0 %v3204
        %4798 = vmatpush1.msra.mxu0 %v3203
        %4799 = vmatprep.subr.mxu0 %v3208
        %4800 = vmatpush1.msra.mxu0 %v3207
        %4801 = vmatprep.subr.mxu0 %v3212
        %4802 = vmatpush1.msra.mxu0 %v3211
        %4803 = vmatprep.subr.mxu0 %v3216
        %4804 = vmatpush1.msra.mxu0 %v3215
        %4805 = vmatprep.subr.mxu0 %v3220
        %4806 = vmatpush1.msra.mxu0 %v3219
        %4807 = vmatprep.subr.mxu0 %v3224
        %4808 = vmatpush1.msra.mxu0 %v3223
        %4809 = vmatprep.subr.mxu0 %v3228
        %4810 = vmatpush1.msra.mxu0 %v3227
        %4811 = vmatprep.subr.mxu0 %v3232
        %4812 = vmatpush1.msra.mxu0 %v3231
        %4813 = vmatprep.subr.mxu0 %v3236
        %4814 = vmatpush1.msra.mxu0 %v3235
        %4815 = vmatprep.subr.mxu0 %v3240
        %4816 = vmatpush1.msra.mxu0 %v3239
        %4817 = vmatprep.subr.mxu0 %v3244
        %4818 = vmatpush1.msra.mxu0 %v3243
        %4819 = vmatprep.subr.mxu0 %v3248
        %4820 = vmatpush1.msra.mxu0 %v3247
        %4821 = vmatprep.subr.mxu0 %v3252
        %4822 = vmatpush1.msra.mxu0 %v3251
        %4823 = vmatprep.subr.mxu0 %v3256
        %4824 = vmatpush1.msra.mxu0 %v3255
        %4825 = vmatprep.subr.mxu0 %v3260
        %4826 = vmatpush1.msra.mxu0 %v3259
        %4827 = vmatprep.subr.mxu0 %v3264
        %4828 = vmatpush1.msra.mxu0 %v3263
        %4829 = vmatprep.subr.mxu0 %v3268
        %4830 = vmatpush1.msra.mxu0 %v3267
        %4831 = vmatprep.subr.mxu0 %v3272
        %4832 = vmatpush1.msra.mxu0 %v3271
        %4833 = vmatprep.subr.mxu0 %v3276
        %4834 = vmatpush1.msra.mxu0 %v3275
        %4835 = vmatprep.subr.mxu0 %v3280
        %4836 = vmatpush1.msra.mxu0 %v3279
        %4837 = vmatprep.subr.mxu0 %v3284
        %4838 = vmatpush1.msra.mxu0 %v3283
        %4839 = vmatprep.subr.mxu0 %v3288
        %4840 = vmatpush1.msra.mxu0 %v3287
        %4841 = vmatprep.subr.mxu0 %v3292
        %4842 = vmatpush1.msra.mxu0 %v3291
        %4843 = vmatprep.mubr.f32.mxu0 %v3054
        %4844 = vmatmul.mubr.f32.gmra.mrb[0].mxu0 %v3053
        %v4845 = vpop.f32.mrb[0].mxu0
        %v4846 = vadd.f32 0.0, %v4845
        %v4847 = vpop.f32.mrb[0].mxu0
        %v4848 = vadd.f32 0.0, %v4847
        %4849 = vmatprep.mubr.f32.mxu0 %v3058
        %4850 = vmatmul.mubr.f32.gmra.mrb[0].mxu0 %v3057
        %v4851 = vpop.f32.mrb[0].mxu0
        %v4852 = vadd.f32 0.0, %v4851
        %v4853 = vpop.f32.mrb[0].mxu0
        %v4854 = vadd.f32 0.0, %v4853
        %4855 = vmatprep.mubr.f32.mxu0 %v3062
        %4856 = vmatmul.mubr.f32.gmra.mrb[0].mxu0 %v3061
        %v4857 = vpop.f32.mrb[0].mxu0
        %v4858 = vadd.f32 0.0, %v4857
        %v4859 = vpop.f32.mrb[0].mxu0
        %v4860 = vadd.f32 0.0, %v4859
        %4861 = vmatprep.mubr.f32.mxu0 %v3066
        %4862 = vmatmul.mubr.f32.gmra.mrb[0].mxu0 %v3065
        %v4863 = vpop.f32.mrb[0].mxu0
        %v4864 = vadd.f32 0.0, %v4863
        %v4865 = vpop.f32.mrb[0].mxu0
        %v4866 = vadd.f32 0.0, %v4865
        %4867 = vmatprep.mubr.f32.mxu0 %v3070
        %4868 = vmatmul.mubr.f32.gmra.mrb[0].mxu0 %v3069
        %v4869 = vpop.f32.mrb[0].mxu0
        %v4870 = vadd.f32 0.0, %v4869
        %v4871 = vpop.f32.mrb[0].mxu0
        %v4872 = vadd.f32 0.0, %v4871
        %4873 = vmatprep.mubr.f32.mxu0 %v3074
        %4874 = vmatmul.mubr.f32.gmra.mrb[0].mxu0 %v3073
        %v4875 = vpop.f32.mrb[0].mxu0
        %v4876 = vpop.f32.mrb[0].mxu0
        %4877 = vmatprep.mubr.f32.mxu0 %v3078
        %4878 = vmatmul.mubr.f32.gmra.mrb[0].mxu0 %v3077
        %v4879 = vpop.f32.mrb[0].mxu0
        %v4880 = vpop.f32.mrb[0].mxu0
        %4881 = vmatprep.mubr.f32.mxu0 %v3138
        %4882 = vmatmul.mubr.f32.gmra.mrb[0].mxu0 %v3137
        %v4883 = vpop.f32.mrb[0].mxu0
        %v4884 = vadd.f32 0.0, %v4883
        %v4885 = vpop.f32.mrb[0].mxu0
        %v4886 = vadd.f32 0.0, %v4885
        %4887 = vmatprep.mubr.f32.mxu0 %v3142
        %4888 = vmatmul.mubr.f32.gmra.mrb[0].mxu0 %v3141
        %v4889 = vpop.f32.mrb[0].mxu0
        %v4890 = vadd.f32 0.0, %v4889
        %v4891 = vpop.f32.mrb[0].mxu0
        %v4892 = vadd.f32 0.0, %v4891
        %4893 = vmatprep.mubr.f32.mxu0 %v3146
        %4894 = vmatmul.mubr.f32.gmra.mrb[0].mxu0 %v3145
        %v4895 = vpop.f32.mrb[0].mxu0
        %v4896 = vadd.f32 0.0, %v4895
        %v4897 = vpop.f32.mrb[0].mxu0
        %v4898 = vadd.f32 0.0, %v4897
        %4899 = vmatprep.mubr.f32.mxu0 %v3150
        %4900 = vmatmul.mubr.f32.gmra.mrb[0].mxu0 %v3149
        %v4901 = vpop.f32.mrb[0].mxu0
        %v4902 = vadd.f32 0.0, %v4901
        %v4903 = vpop.f32.mrb[0].mxu0
        %v4904 = vadd.f32 0.0, %v4903
        %4905 = vmatprep.mubr.f32.mxu0 %v3154
        %4906 = vmatmul.mubr.f32.gmra.mrb[0].mxu0 %v3153
        %v4907 = vpop.f32.mrb[0].mxu0
        %v4908 = vadd.f32 0.0, %v4907
        %v4909 = vpop.f32.mrb[0].mxu0
        %v4910 = vadd.f32 0.0, %v4909
        %4911 = vmatprep.mubr.f32.mxu0 %v3158
        %4912 = vmatmul.mubr.f32.gmra.mrb[0].mxu0 %v3157
        %v4913 = vpop.f32.mrb[0].mxu0
        %v4914 = vpop.f32.mrb[0].mxu0
        %4915 = vmatprep.mubr.f32.mxu0 %v3162
        %4916 = vmatmul.mubr.f32.gmra.mrb[0].mxu0 %v3161
        %v4917 = vpop.f32.mrb[0].mxu0
        %v4918 = vpop.f32.mrb[0].mxu0
        %4919 = vdwg.mxu0
        %4920 = vmatprep.subr.mxu0 %v3296
        %4921 = vmatpush1.msra.mxu0 %v3295
        %4922 = vmatprep.subr.mxu0 %v3300
        %4923 = vmatpush1.msra.mxu0 %v3299
        %4924 = vmatprep.subr.mxu0 %v3304
        %4925 = vmatpush1.msra.mxu0 %v3303
        %4926 = vmatprep.subr.mxu0 %v3308
        %4927 = vmatpush1.msra.mxu0 %v3307
        %4928 = vmatprep.subr.mxu0 %v3312
        %4929 = vmatpush1.msra.mxu0 %v3311
        %4930 = vmatprep.subr.mxu0 %v3316
        %4931 = vmatpush1.msra.mxu0 %v3315
        %4932 = vmatprep.subr.mxu0 %v3320
        %4933 = vmatpush1.msra.mxu0 %v3319
        %4934 = vmatprep.subr.mxu0 %v3324
        %4935 = vmatpush1.msra.mxu0 %v3323
        %4936 = vmatprep.subr.mxu0 %v3328
        %4937 = vmatpush1.msra.mxu0 %v3327
        %4938 = vmatprep.subr.mxu0 %v3332
        %4939 = vmatpush1.msra.mxu0 %v3331
        %4940 = vmatprep.subr.mxu0 %v3336
        %4941 = vmatpush1.msra.mxu0 %v3335
        %4942 = vmatprep.subr.mxu0 %v3340
        %4943 = vmatpush1.msra.mxu0 %v3339
        %4944 = vmatprep.subr.mxu0 %v3344
        %4945 = vmatpush1.msra.mxu0 %v3343
        %4946 = vmatprep.subr.mxu0 %v3348
        %4947 = vmatpush1.msra.mxu0 %v3347
        %4948 = vmatprep.subr.mxu0 %v3352
        %4949 = vmatpush1.msra.mxu0 %v3351
        %4950 = vmatprep.subr.mxu0 %v3356
        %4951 = vmatpush1.msra.mxu0 %v3355
        %4952 = vmatprep.subr.mxu0 %v3360
        %4953 = vmatpush1.msra.mxu0 %v3359
        %4954 = vmatprep.subr.mxu0 %v3364
        %4955 = vmatpush1.msra.mxu0 %v3363
        %4956 = vmatprep.subr.mxu0 %v3368
        %4957 = vmatpush1.msra.mxu0 %v3367
        %4958 = vmatprep.subr.mxu0 %v3372
        %4959 = vmatpush1.msra.mxu0 %v3371
        %4960 = vmatprep.subr.mxu0 %v3376
        %4961 = vmatpush1.msra.mxu0 %v3375
        %4962 = vmatprep.subr.mxu0 %v3380
        %4963 = vmatpush1.msra.mxu0 %v3379
        %4964 = vmatprep.subr.mxu0 %v3384
        %4965 = vmatpush1.msra.mxu0 %v3383
        %4966 = vmatprep.subr.mxu0 %v3388
        %4967 = vmatpush1.msra.mxu0 %v3387
        %4968 = vmatprep.subr.mxu0 %v3392
        %4969 = vmatpush1.msra.mxu0 %v3391
        %4970 = vmatprep.subr.mxu0 %v3396
        %4971 = vmatpush1.msra.mxu0 %v3395
        %4972 = vmatprep.subr.mxu0 %v3400
        %4973 = vmatpush1.msra.mxu0 %v3399
        %4974 = vmatprep.subr.mxu0 %v3404
        %4975 = vmatpush1.msra.mxu0 %v3403
        %4976 = vmatprep.subr.mxu0 %v3408
        %4977 = vmatpush1.msra.mxu0 %v3407
        %4978 = vmatprep.subr.mxu0 %v3412
        %4979 = vmatpush1.msra.mxu0 %v3411
        %4980 = vmatprep.subr.mxu0 %v3416
        %4981 = vmatpush1.msra.mxu0 %v3415
        %4982 = vmatprep.subr.mxu0 %v3420
        %4983 = vmatpush1.msra.mxu0 %v3419
        %4984 = vmatprep.mubr.f32.mxu0 %v3056
        %4985 = vmatmul.mubr.f32.gmra.mrb[0].mxu0 %v3055
        %v4986 = vpop.f32.mrb[0].mxu0
        %v4987 = vadd.f32 %v4846, %v4986
        %v4988 = vpop.f32.mrb[0].mxu0
        %v4989 = vadd.f32 %v4848, %v4988
        %4990 = vmatprep.mubr.f32.mxu0 %v3060
        %4991 = vmatmul.mubr.f32.gmra.mrb[0].mxu0 %v3059
        %v4992 = vpop.f32.mrb[0].mxu0
        %v4993 = vadd.f32 %v4852, %v4992
        %v4994 = vpop.f32.mrb[0].mxu0
        %v4995 = vadd.f32 %v4854, %v4994
        %4996 = vmatprep.mubr.f32.mxu0 %v3064
        %4997 = vmatmul.mubr.f32.gmra.mrb[0].mxu0 %v3063
        %v4998 = vpop.f32.mrb[0].mxu0
        %v4999 = vadd.f32 %v4858, %v4998
        %v5000 = vpop.f32.mrb[0].mxu0
        %v5001 = vadd.f32 %v4860, %v5000
        %5002 = vmatprep.mubr.f32.mxu0 %v3068
        %5003 = vmatmul.mubr.f32.gmra.mrb[0].mxu0 %v3067
        %v5004 = vpop.f32.mrb[0].mxu0
        %v5005 = vadd.f32 %v4864, %v5004
        %v5006 = vpop.f32.mrb[0].mxu0
        %v5007 = vadd.f32 %v4866, %v5006
        %5008 = vmatprep.mubr.f32.mxu0 %v3072
        %5009 = vmatmul.mubr.f32.gmra.mrb[0].mxu0 %v3071
        %v5010 = vpop.f32.mrb[0].mxu0
        %v5011 = vadd.f32 %v4870, %v5010
        %v5012 = vpop.f32.mrb[0].mxu0
        %v5013 = vadd.f32 %v4872, %v5012
        %5014 = vmatprep.mubr.f32.mxu0 %v3076
        %5015 = vmatmul.mubr.f32.gmra.mrb[0].mxu0 %v3075
        %v5016 = vpop.f32.mrb[0].mxu0
        %v5017 = vpop.f32.mrb[0].mxu0
        %5018 = vmatprep.mubr.f32.mxu0 %v3080
        %5019 = vmatmul.mubr.f32.gmra.mrb[0].mxu0 %v3079
        %v5020 = vpop.f32.mrb[0].mxu0
        %v5021 = vpop.f32.mrb[0].mxu0
        %5022 = vmatprep.mubr.f32.mxu0 %v3140
        %5023 = vmatmul.mubr.f32.gmra.mrb[0].mxu0 %v3139
        %v5024 = vpop.f32.mrb[0].mxu0
        %v5025 = vadd.f32 %v4884, %v5024
        %v5026 = vpop.f32.mrb[0].mxu0
        %v5027 = vadd.f32 %v4886, %v5026
        %5028 = vmatprep.mubr.f32.mxu0 %v3144
        %5029 = vmatmul.mubr.f32.gmra.mrb[0].mxu0 %v3143
        %v5030 = vpop.f32.mrb[0].mxu0
        %v5031 = vadd.f32 %v4890, %v5030
        %v5032 = vpop.f32.mrb[0].mxu0
        %v5033 = vadd.f32 %v4892, %v5032
        %5034 = vmatprep.mubr.f32.mxu0 %v3148
        %5035 = vmatmul.mubr.f32.gmra.mrb[0].mxu0 %v3147
        %v5036 = vpop.f32.mrb[0].mxu0
        %v5037 = vadd.f32 %v4896, %v5036
        %v5038 = vpop.f32.mrb[0].mxu0
        %v5039 = vadd.f32 %v4898, %v5038
        %5040 = vmatprep.mubr.f32.mxu0 %v3152
        %5041 = vmatmul.mubr.f32.gmra.mrb[0].mxu0 %v3151
        %v5042 = vpop.f32.mrb[0].mxu0
        %v5043 = vadd.f32 %v4902, %v5042
        %v5044 = vpop.f32.mrb[0].mxu0
        %v5045 = vadd.f32 %v4904, %v5044
        %5046 = vmatprep.mubr.f32.mxu0 %v3156
        %5047 = vmatmul.mubr.f32.gmra.mrb[0].mxu0 %v3155
        %v5048 = vpop.f32.mrb[0].mxu0
        %v5049 = vadd.f32 %v4908, %v5048
        %v5050 = vpop.f32.mrb[0].mxu0
        %v5051 = vadd.f32 %v4910, %v5050
        %5052 = vmatprep.mubr.f32.mxu0 %v3160
        %5053 = vmatmul.mubr.f32.gmra.mrb[0].mxu0 %v3159
        %v5054 = vpop.f32.mrb[0].mxu0
        %v5055 = vpop.f32.mrb[0].mxu0
        %5056 = vmatprep.mubr.f32.mxu0 %v3164
        %5057 = vmatmul.mubr.f32.gmra.mrb[0].mxu0 %v3163
        %v5058 = vpop.f32.mrb[0].mxu0
        %v5059 = vpop.f32.mrb[0].mxu0
        %5060 = vdwg.mxu0
        %5061 = vmatprep.subr.mxu0 %v3424
        %5062 = vmatpush1.msra.mxu0 %v3423
        %5063 = vmatprep.subr.mxu0 %v3428
        %5064 = vmatpush1.msra.mxu0 %v3427
        %5065 = vmatprep.subr.mxu0 %v3432
        %5066 = vmatpush1.msra.mxu0 %v3431
        %5067 = vmatprep.subr.mxu0 %v3436
        %5068 = vmatpush1.msra.mxu0 %v3435
        %5069 = vmatprep.subr.mxu0 %v3440
        %5070 = vmatpush1.msra.mxu0 %v3439
        %5071 = vmatprep.subr.mxu0 %v3444
        %5072 = vmatpush1.msra.mxu0 %v3443
        %5073 = vmatprep.subr.mxu0 %v3448
        %5074 = vmatpush1.msra.mxu0 %v3447
        %5075 = vmatprep.subr.mxu0 %v3452
        %5076 = vmatpush1.msra.mxu0 %v3451
        %5077 = vmatprep.subr.mxu0 %v3456
        %5078 = vmatpush1.msra.mxu0 %v3455
        %5079 = vmatprep.subr.mxu0 %v3460
        %5080 = vmatpush1.msra.mxu0 %v3459
        %5081 = vmatprep.subr.mxu0 %v3464
        %5082 = vmatpush1.msra.mxu0 %v3463
        %5083 = vmatprep.subr.mxu0 %v3468
        %5084 = vmatpush1.msra.mxu0 %v3467
        %5085 = vmatprep.subr.mxu0 %v3472
        %5086 = vmatpush1.msra.mxu0 %v3471
        %5087 = vmatprep.subr.mxu0 %v3476
        %5088 = vmatpush1.msra.mxu0 %v3475
        %5089 = vmatprep.subr.mxu0 %v3480
        %5090 = vmatpush1.msra.mxu0 %v3479
        %5091 = vmatprep.subr.mxu0 %v3484
        %5092 = vmatpush1.msra.mxu0 %v3483
        %5093 = vmatprep.subr.mxu0 %v3488
        %5094 = vmatpush1.msra.mxu0 %v3487
        %5095 = vmatprep.subr.mxu0 %v3492
        %5096 = vmatpush1.msra.mxu0 %v3491
        %5097 = vmatprep.subr.mxu0 %v3496
        %5098 = vmatpush1.msra.mxu0 %v3495
        %5099 = vmatprep.subr.mxu0 %v3500
        %5100 = vmatpush1.msra.mxu0 %v3499
        %5101 = vmatprep.subr.mxu0 %v3504
        %5102 = vmatpush1.msra.mxu0 %v3503
        %5103 = vmatprep.subr.mxu0 %v3508
        %5104 = vmatpush1.msra.mxu0 %v3507
        %5105 = vmatprep.subr.mxu0 %v3512
        %5106 = vmatpush1.msra.mxu0 %v3511
        %5107 = vmatprep.subr.mxu0 %v3516
        %5108 = vmatpush1.msra.mxu0 %v3515
        %5109 = vmatprep.subr.mxu0 %v3520
        %5110 = vmatpush1.msra.mxu0 %v3519
        %5111 = vmatprep.subr.mxu0 %v3524
        %5112 = vmatpush1.msra.mxu0 %v3523
        %5113 = vmatprep.subr.mxu0 %v3528
        %5114 = vmatpush1.msra.mxu0 %v3527
        %5115 = vmatprep.subr.mxu0 %v3532
        %5116 = vmatpush1.msra.mxu0 %v3531
        %5117 = vmatprep.subr.mxu0 %v3536
        %5118 = vmatpush1.msra.mxu0 %v3535
        %5119 = vmatprep.subr.mxu0 %v3540
        %5120 = vmatpush1.msra.mxu0 %v3539
        %5121 = vmatprep.subr.mxu0 %v3544
        %5122 = vmatpush1.msra.mxu0 %v3543
        %5123 = vmatprep.subr.mxu0 %v3548
        %5124 = vmatpush1.msra.mxu0 %v3547
        %5125 = vmatprep.mubr.f32.mxu0 %v3138
        %5126 = vmatmul.mubr.f32.gmra.mrb[0].mxu0 %v3137
        %v5127 = vpop.f32.mrb[0].mxu0
        %v5128 = vadd.f32 %v4987, %v5127
        %v5129 = vpop.f32.mrb[0].mxu0
        %v5130 = vadd.f32 %v4989, %v5129
        %5131 = vmatprep.mubr.f32.mxu0 %v3142
        %5132 = vmatmul.mubr.f32.gmra.mrb[0].mxu0 %v3141
        %v5133 = vpop.f32.mrb[0].mxu0
        %v5134 = vadd.f32 %v4993, %v5133
        %v5135 = vpop.f32.mrb[0].mxu0
        %v5136 = vadd.f32 %v4995, %v5135
        %5137 = vmatprep.mubr.f32.mxu0 %v3146
        %5138 = vmatmul.mubr.f32.gmra.mrb[0].mxu0 %v3145
        %v5139 = vpop.f32.mrb[0].mxu0
        %v5140 = vadd.f32 %v4999, %v5139
        %v5141 = vpop.f32.mrb[0].mxu0
        %v5142 = vadd.f32 %v5001, %v5141
        %5143 = vmatprep.mubr.f32.mxu0 %v3150
        %5144 = vmatmul.mubr.f32.gmra.mrb[0].mxu0 %v3149
        %v5145 = vpop.f32.mrb[0].mxu0
        %v5146 = vadd.f32 %v5005, %v5145
        %v5147 = vpop.f32.mrb[0].mxu0
        %v5148 = vadd.f32 %v5007, %v5147
        %5149 = vmatprep.mubr.f32.mxu0 %v3154
        %5150 = vmatmul.mubr.f32.gmra.mrb[0].mxu0 %v3153
        %v5151 = vpop.f32.mrb[0].mxu0
        %v5152 = vadd.f32 %v5011, %v5151
        %v5153 = vpop.f32.mrb[0].mxu0
        %v5154 = vadd.f32 %v5013, %v5153
        %5155 = vmatprep.mubr.f32.mxu0 %v3158
        %5156 = vmatmul.mubr.f32.gmra.mrb[0].mxu0 %v3157
        %v5157 = vpop.f32.mrb[0].mxu0
        %v5158 = vpop.f32.mrb[0].mxu0
        %5159 = vmatprep.mubr.f32.mxu0 %v3162
        %5160 = vmatmul.mubr.f32.gmra.mrb[0].mxu0 %v3161
        %v5161 = vpop.f32.mrb[0].mxu0
        %v5162 = vpop.f32.mrb[0].mxu0
        %5163 = vmatprep.mubr.f32.mxu0 %v3058
        %5164 = vmatmul.mubr.f32.gmra.mrb[0].mxu0 %v3057
        %v5165 = vpop.f32.mrb[0].mxu0
        %v5166 = vadd.f32 %v5025, %v5165
        %v5167 = vpop.f32.mrb[0].mxu0
        %v5168 = vadd.f32 %v5027, %v5167
        %5169 = vmatprep.mubr.f32.mxu0 %v3062
        %5170 = vmatmul.mubr.f32.gmra.mrb[0].mxu0 %v3061
        %v5171 = vpop.f32.mrb[0].mxu0
        %v5172 = vadd.f32 %v5031, %v5171
        %v5173 = vpop.f32.mrb[0].mxu0
        %v5174 = vadd.f32 %v5033, %v5173
        %5175 = vmatprep.mubr.f32.mxu0 %v3066
        %5176 = vmatmul.mubr.f32.gmra.mrb[0].mxu0 %v3065
        %v5177 = vpop.f32.mrb[0].mxu0
        %v5178 = vadd.f32 %v5037, %v5177
        %v5179 = vpop.f32.mrb[0].mxu0
        %v5180 = vadd.f32 %v5039, %v5179
        %5181 = vmatprep.mubr.f32.mxu0 %v3070
        %5182 = vmatmul.mubr.f32.gmra.mrb[0].mxu0 %v3069
        %v5183 = vpop.f32.mrb[0].mxu0
        %v5184 = vadd.f32 %v5043, %v5183
        %v5185 = vpop.f32.mrb[0].mxu0
        %v5186 = vadd.f32 %v5045, %v5185
        %5187 = vmatprep.mubr.f32.mxu0 %v3074
        %5188 = vmatmul.mubr.f32.gmra.mrb[0].mxu0 %v3073
        %v5189 = vpop.f32.mrb[0].mxu0
        %v5190 = vadd.f32 %v5049, %v5189
        %v5191 = vpop.f32.mrb[0].mxu0
        %v5192 = vadd.f32 %v5051, %v5191
        %5193 = vmatprep.mubr.f32.mxu0 %v3078
        %5194 = vmatmul.mubr.f32.gmra.mrb[0].mxu0 %v3077
        %v5195 = vpop.f32.mrb[0].mxu0
        %v5196 = vpop.f32.mrb[0].mxu0
        %5197 = vmatprep.mubr.f32.mxu0 %v3054
        %5198 = vmatmul.mubr.f32.gmra.mrb[0].mxu0 %v3053
        %v5199 = vpop.f32.mrb[0].mxu0
        %v5200 = vpop.f32.mrb[0].mxu0
        %5201 = vdwg.mxu0
        %5202 = vmatprep.subr.mxu0 %v3552
        %5203 = vmatpush1.msra.mxu0 %v3551
        %5204 = vmatprep.subr.mxu0 %v3556
        %5205 = vmatpush1.msra.mxu0 %v3555
        %5206 = vmatprep.subr.mxu0 %v3560
        %5207 = vmatpush1.msra.mxu0 %v3559
        %5208 = vmatprep.subr.mxu0 %v3564
        %5209 = vmatpush1.msra.mxu0 %v3563
        %5210 = vmatprep.subr.mxu0 %v3568
        %5211 = vmatpush1.msra.mxu0 %v3567
        %5212 = vmatprep.subr.mxu0 %v3572
        %5213 = vmatpush1.msra.mxu0 %v3571
        %5214 = vmatprep.subr.mxu0 %v3576
        %5215 = vmatpush1.msra.mxu0 %v3575
        %5216 = vmatprep.subr.mxu0 %v3580
        %5217 = vmatpush1.msra.mxu0 %v3579
        %5218 = vmatprep.subr.mxu0 %v3584
        %5219 = vmatpush1.msra.mxu0 %v3583
        %5220 = vmatprep.subr.mxu0 %v3588
        %5221 = vmatpush1.msra.mxu0 %v3587
        %5222 = vmatprep.subr.mxu0 %v3592
        %5223 = vmatpush1.msra.mxu0 %v3591
        %5224 = vmatprep.subr.mxu0 %v3596
        %5225 = vmatpush1.msra.mxu0 %v3595
        %5226 = vmatprep.subr.mxu0 %v3600
        %5227 = vmatpush1.msra.mxu0 %v3599
        %5228 = vmatprep.subr.mxu0 %v3604
        %5229 = vmatpush1.msra.mxu0 %v3603
        %5230 = vmatprep.subr.mxu0 %v3608
        %5231 = vmatpush1.msra.mxu0 %v3607
        %5232 = vmatprep.subr.mxu0 %v3612
        %5233 = vmatpush1.msra.mxu0 %v3611
        %5234 = vmatprep.subr.mxu0 %v3616
        %5235 = vmatpush1.msra.mxu0 %v3615
        %5236 = vmatprep.subr.mxu0 %v3620
        %5237 = vmatpush1.msra.mxu0 %v3619
        %5238 = vmatprep.subr.mxu0 %v3624
        %5239 = vmatpush1.msra.mxu0 %v3623
        %5240 = vmatprep.subr.mxu0 %v3628
        %5241 = vmatpush1.msra.mxu0 %v3627
        %5242 = vmatprep.subr.mxu0 %v3632
        %5243 = vmatpush1.msra.mxu0 %v3631
        %5244 = vmatprep.subr.mxu0 %v3636
        %5245 = vmatpush1.msra.mxu0 %v3635
        %5246 = vmatprep.subr.mxu0 %v3640
        %5247 = vmatpush1.msra.mxu0 %v3639
        %5248 = vmatprep.subr.mxu0 %v3644
        %5249 = vmatpush1.msra.mxu0 %v3643
        %5250 = vmatprep.subr.mxu0 %v3648
        %5251 = vmatpush1.msra.mxu0 %v3647
        %5252 = vmatprep.subr.mxu0 %v3652
        %5253 = vmatpush1.msra.mxu0 %v3651
        %5254 = vmatprep.subr.mxu0 %v3656
        %5255 = vmatpush1.msra.mxu0 %v3655
        %5256 = vmatprep.subr.mxu0 %v3660
        %5257 = vmatpush1.msra.mxu0 %v3659
        %5258 = vmatprep.subr.mxu0 %v3664
        %5259 = vmatpush1.msra.mxu0 %v3663
        %5260 = vmatprep.subr.mxu0 %v3668
        %5261 = vmatpush1.msra.mxu0 %v3667
        %5262 = vmatprep.subr.mxu0 %v3672
        %5263 = vmatpush1.msra.mxu0 %v3671
        %5264 = vmatprep.subr.mxu0 %v3676
        %5265 = vmatpush1.msra.mxu0 %v3675
        %5266 = vmatprep.mubr.f32.mxu0 %v3140
        %5267 = vmatmul.mubr.f32.gmra.mrb[0].mxu0 %v3139
        %v5268 = vpop.f32.mrb[0].mxu0
        %v5269 = vadd.f32 %v5128, %v5268
        %v5270 = vpop.f32.mrb[0].mxu0
        %v5271 = vadd.f32 %v5130, %v5270
        %5272 = vmatprep.mubr.f32.mxu0 %v3144
        %5273 = vmatmul.mubr.f32.gmra.mrb[0].mxu0 %v3143
        %v5274 = vpop.f32.mrb[0].mxu0
        %v5275 = vadd.f32 %v5134, %v5274
        %v5276 = vpop.f32.mrb[0].mxu0
        %v5277 = vadd.f32 %v5136, %v5276
        %5278 = vmatprep.mubr.f32.mxu0 %v3148
        %5279 = vmatmul.mubr.f32.gmra.mrb[0].mxu0 %v3147
        %v5280 = vpop.f32.mrb[0].mxu0
        %v5281 = vadd.f32 %v5140, %v5280
        %v5282 = vpop.f32.mrb[0].mxu0
        %v5283 = vadd.f32 %v5142, %v5282
        %5284 = vmatprep.mubr.f32.mxu0 %v3152
        %5285 = vmatmul.mubr.f32.gmra.mrb[0].mxu0 %v3151
        %v5286 = vpop.f32.mrb[0].mxu0
        %v5287 = vadd.f32 %v5146, %v5286
        %v5288 = vpop.f32.mrb[0].mxu0
        %v5289 = vadd.f32 %v5148, %v5288
        %5290 = vmatprep.mubr.f32.mxu0 %v3156
        %5291 = vmatmul.mubr.f32.gmra.mrb[0].mxu0 %v3155
        %v5292 = vpop.f32.mrb[0].mxu0
        %v5293 = vadd.f32 %v5152, %v5292
        %v5294 = vpop.f32.mrb[0].mxu0
        %v5295 = vadd.f32 %v5154, %v5294
        %5296 = vmatprep.mubr.f32.mxu0 %v3160
        %5297 = vmatmul.mubr.f32.gmra.mrb[0].mxu0 %v3159
        %v5298 = vpop.f32.mrb[0].mxu0
        %v5299 = vpop.f32.mrb[0].mxu0
        %5300 = vmatprep.mubr.f32.mxu0 %v3164
        %5301 = vmatmul.mubr.f32.gmra.mrb[0].mxu0 %v3163
        %v5302 = vpop.f32.mrb[0].mxu0
        %v5303 = vpop.f32.mrb[0].mxu0
        %5304 = vmatprep.mubr.f32.mxu0 %v3060
        %5305 = vmatmul.mubr.f32.gmra.mrb[0].mxu0 %v3059
        %v5306 = vpop.f32.mrb[0].mxu0
        %v5307 = vadd.f32 %v5166, %v5306
        %v5308 = vpop.f32.mrb[0].mxu0
        %v5309 = vadd.f32 %v5168, %v5308
        %5310 = vmatprep.mubr.f32.mxu0 %v3064
        %5311 = vmatmul.mubr.f32.gmra.mrb[0].mxu0 %v3063
        %v5312 = vpop.f32.mrb[0].mxu0
        %v5313 = vadd.f32 %v5172, %v5312
        %v5314 = vpop.f32.mrb[0].mxu0
        %v5315 = vadd.f32 %v5174, %v5314
        %5316 = vmatprep.mubr.f32.mxu0 %v3068
        %5317 = vmatmul.mubr.f32.gmra.mrb[0].mxu0 %v3067
        %v5318 = vpop.f32.mrb[0].mxu0
        %v5319 = vadd.f32 %v5178, %v5318
        %v5320 = vpop.f32.mrb[0].mxu0
        %v5321 = vadd.f32 %v5180, %v5320
        %5322 = vmatprep.mubr.f32.mxu0 %v3072
        %5323 = vmatmul.mubr.f32.gmra.mrb[0].mxu0 %v3071
        %v5324 = vpop.f32.mrb[0].mxu0
        %v5325 = vadd.f32 %v5184, %v5324
        %v5326 = vpop.f32.mrb[0].mxu0
        %v5327 = vadd.f32 %v5186, %v5326
        %5328 = vmatprep.mubr.f32.mxu0 %v3076
        %5329 = vmatmul.mubr.f32.gmra.mrb[0].mxu0 %v3075
        %v5330 = vpop.f32.mrb[0].mxu0
        %v5331 = vadd.f32 %v5190, %v5330
        %v5332 = vpop.f32.mrb[0].mxu0
        %v5333 = vadd.f32 %v5192, %v5332
        %5334 = vmatprep.mubr.f32.mxu0 %v3080
        %5335 = vmatmul.mubr.f32.gmra.mrb[0].mxu0 %v3079
        %v5336 = vpop.f32.mrb[0].mxu0
        %v5337 = vpop.f32.mrb[0].mxu0
        %5338 = vmatprep.mubr.f32.mxu0 %v3056
        %5339 = vmatmul.mubr.f32.gmra.mrb[0].mxu0 %v3055
        %v5340 = vpop.f32.mrb[0].mxu0
        %v5341 = vpop.f32.mrb[0].mxu0
        %5342 = vdwg.mxu0
        %5343 = vmatprep.subr.mxu0 %v3680
        %5344 = vmatpush1.msra.mxu0 %v3679
        %5345 = vmatprep.subr.mxu0 %v3684
        %5346 = vmatpush1.msra.mxu0 %v3683
        %5347 = vmatprep.subr.mxu0 %v3688
        %5348 = vmatpush1.msra.mxu0 %v3687
        %5349 = vmatprep.subr.mxu0 %v3692
        %5350 = vmatpush1.msra.mxu0 %v3691
        %5351 = vmatprep.subr.mxu0 %v3696
        %5352 = vmatpush1.msra.mxu0 %v3695
        %5353 = vmatprep.subr.mxu0 %v3700
        %5354 = vmatpush1.msra.mxu0 %v3699
        %5355 = vmatprep.subr.mxu0 %v3704
        %5356 = vmatpush1.msra.mxu0 %v3703
        %5357 = vmatprep.subr.mxu0 %v3708
        %5358 = vmatpush1.msra.mxu0 %v3707
        %5359 = vmatprep.subr.mxu0 %v3712
        %5360 = vmatpush1.msra.mxu0 %v3711
        %5361 = vmatprep.subr.mxu0 %v3716
        %5362 = vmatpush1.msra.mxu0 %v3715
        %5363 = vmatprep.subr.mxu0 %v3720
        %5364 = vmatpush1.msra.mxu0 %v3719
        %5365 = vmatprep.subr.mxu0 %v3724
        %5366 = vmatpush1.msra.mxu0 %v3723
        %5367 = vmatprep.subr.mxu0 %v3728
        %5368 = vmatpush1.msra.mxu0 %v3727
        %5369 = vmatprep.subr.mxu0 %v3732
        %5370 = vmatpush1.msra.mxu0 %v3731
        %5371 = vmatprep.subr.mxu0 %v3736
        %5372 = vmatpush1.msra.mxu0 %v3735
        %5373 = vmatprep.subr.mxu0 %v3740
        %5374 = vmatpush1.msra.mxu0 %v3739
        %5375 = vmatprep.subr.mxu0 %v3744
        %5376 = vmatpush1.msra.mxu0 %v3743
        %5377 = vmatprep.subr.mxu0 %v3748
        %5378 = vmatpush1.msra.mxu0 %v3747
        %5379 = vmatprep.subr.mxu0 %v3752
        %5380 = vmatpush1.msra.mxu0 %v3751
        %5381 = vmatprep.subr.mxu0 %v3756
        %5382 = vmatpush1.msra.mxu0 %v3755
        %5383 = vmatprep.subr.mxu0 %v3760
        %5384 = vmatpush1.msra.mxu0 %v3759
        %5385 = vmatprep.subr.mxu0 %v3764
        %5386 = vmatpush1.msra.mxu0 %v3763
        %5387 = vmatprep.subr.mxu0 %v3768
        %5388 = vmatpush1.msra.mxu0 %v3767
        %5389 = vmatprep.subr.mxu0 %v3772
        %5390 = vmatpush1.msra.mxu0 %v3771
        %5391 = vmatprep.subr.mxu0 %v3776
        %5392 = vmatpush1.msra.mxu0 %v3775
        %5393 = vmatprep.subr.mxu0 %v3780
        %5394 = vmatpush1.msra.mxu0 %v3779
        %5395 = vmatprep.subr.mxu0 %v3784
        %5396 = vmatpush1.msra.mxu0 %v3783
        %5397 = vmatprep.subr.mxu0 %v3788
        %5398 = vmatpush1.msra.mxu0 %v3787
        %5399 = vmatprep.subr.mxu0 %v3792
        %5400 = vmatpush1.msra.mxu0 %v3791
        %5401 = vmatprep.subr.mxu0 %v3796
        %5402 = vmatpush1.msra.mxu0 %v3795
        %5403 = vmatprep.subr.mxu0 %v3800
        %5404 = vmatpush1.msra.mxu0 %v3799
        %5405 = vmatprep.subr.mxu0 %v3804
        %5406 = vmatpush1.msra.mxu0 %v3803
        %5407 = vmatprep.mubr.f32.mxu0 %v3058
        %5408 = vmatmul.mubr.f32.gmra.mrb[0].mxu0 %v3057
        %v5409 = vpop.f32.mrb[0].mxu0
        %v5410 = vadd.f32 %v5269, %v5409
        %v5411 = vpop.f32.mrb[0].mxu0
        %v5412 = vadd.f32 %v5271, %v5411
        %5413 = vmatprep.mubr.f32.mxu0 %v3062
        %5414 = vmatmul.mubr.f32.gmra.mrb[0].mxu0 %v3061
        %v5415 = vpop.f32.mrb[0].mxu0
        %v5416 = vadd.f32 %v5275, %v5415
        %v5417 = vpop.f32.mrb[0].mxu0
        %v5418 = vadd.f32 %v5277, %v5417
        %5419 = vmatprep.mubr.f32.mxu0 %v3066
        %5420 = vmatmul.mubr.f32.gmra.mrb[0].mxu0 %v3065
        %v5421 = vpop.f32.mrb[0].mxu0
        %v5422 = vadd.f32 %v5281, %v5421
        %v5423 = vpop.f32.mrb[0].mxu0
        %v5424 = vadd.f32 %v5283, %v5423
        %5425 = vmatprep.mubr.f32.mxu0 %v3070
        %5426 = vmatmul.mubr.f32.gmra.mrb[0].mxu0 %v3069
        %v5427 = vpop.f32.mrb[0].mxu0
        %v5428 = vadd.f32 %v5287, %v5427
        %v5429 = vpop.f32.mrb[0].mxu0
        %v5430 = vadd.f32 %v5289, %v5429
        %5431 = vmatprep.mubr.f32.mxu0 %v3074
        %5432 = vmatmul.mubr.f32.gmra.mrb[0].mxu0 %v3073
        %v5433 = vpop.f32.mrb[0].mxu0
        %v5434 = vadd.f32 %v5293, %v5433
        %v5435 = vpop.f32.mrb[0].mxu0
        %v5436 = vadd.f32 %v5295, %v5435
        %5437 = vmatprep.mubr.f32.mxu0 %v3078
        %5438 = vmatmul.mubr.f32.gmra.mrb[0].mxu0 %v3077
        %v5439 = vpop.f32.mrb[0].mxu0
        %v5440 = vpop.f32.mrb[0].mxu0
        %5441 = vmatprep.mubr.f32.mxu0 %v3054
        %5442 = vmatmul.mubr.f32.gmra.mrb[0].mxu0 %v3053
        %v5443 = vpop.f32.mrb[0].mxu0
        %v5444 = vpop.f32.mrb[0].mxu0
        %5445 = vmatprep.mubr.f32.mxu0 %v3142
        %5446 = vmatmul.mubr.f32.gmra.mrb[0].mxu0 %v3141
        %v5447 = vpop.f32.mrb[0].mxu0
        %v5448 = vadd.f32 %v5307, %v5447
        %v5449 = vpop.f32.mrb[0].mxu0
        %v5450 = vadd.f32 %v5309, %v5449
        %5451 = vmatprep.mubr.f32.mxu0 %v3146
        %5452 = vmatmul.mubr.f32.gmra.mrb[0].mxu0 %v3145
        %v5453 = vpop.f32.mrb[0].mxu0
        %v5454 = vadd.f32 %v5313, %v5453
        %v5455 = vpop.f32.mrb[0].mxu0
        %v5456 = vadd.f32 %v5315, %v5455
        %5457 = vmatprep.mubr.f32.mxu0 %v3150
        %5458 = vmatmul.mubr.f32.gmra.mrb[0].mxu0 %v3149
        %v5459 = vpop.f32.mrb[0].mxu0
        %v5460 = vadd.f32 %v5319, %v5459
        %v5461 = vpop.f32.mrb[0].mxu0
        %v5462 = vadd.f32 %v5321, %v5461
        %5463 = vmatprep.mubr.f32.mxu0 %v3154
        %5464 = vmatmul.mubr.f32.gmra.mrb[0].mxu0 %v3153
        %v5465 = vpop.f32.mrb[0].mxu0
        %v5466 = vadd.f32 %v5325, %v5465
        %v5467 = vpop.f32.mrb[0].mxu0
        %v5468 = vadd.f32 %v5327, %v5467
        %5469 = vmatprep.mubr.f32.mxu0 %v3158
        %5470 = vmatmul.mubr.f32.gmra.mrb[0].mxu0 %v3157
        %v5471 = vpop.f32.mrb[0].mxu0
        %v5472 = vadd.f32 %v5331, %v5471
        %v5473 = vpop.f32.mrb[0].mxu0
        %v5474 = vadd.f32 %v5333, %v5473
        %5475 = vmatprep.mubr.f32.mxu0 %v3162
        %5476 = vmatmul.mubr.f32.gmra.mrb[0].mxu0 %v3161
        %v5477 = vpop.f32.mrb[0].mxu0
        %v5478 = vpop.f32.mrb[0].mxu0
        %5479 = vmatprep.mubr.f32.mxu0 %v3138
        %5480 = vmatmul.mubr.f32.gmra.mrb[0].mxu0 %v3137
        %v5481 = vpop.f32.mrb[0].mxu0
        %v5482 = vpop.f32.mrb[0].mxu0
        %5483 = vdwg.mxu0
        %5484 = vmatprep.subr.mxu0 %v3808
        %5485 = vmatpush1.msra.mxu0 %v3807
        %5486 = vmatprep.subr.mxu0 %v3812
        %5487 = vmatpush1.msra.mxu0 %v3811
        %5488 = vmatprep.subr.mxu0 %v3816
        %5489 = vmatpush1.msra.mxu0 %v3815
        %5490 = vmatprep.subr.mxu0 %v3820
        %5491 = vmatpush1.msra.mxu0 %v3819
        %5492 = vmatprep.subr.mxu0 %v3824
        %5493 = vmatpush1.msra.mxu0 %v3823
        %5494 = vmatprep.subr.mxu0 %v3828
        %5495 = vmatpush1.msra.mxu0 %v3827
        %5496 = vmatprep.subr.mxu0 %v3832
        %5497 = vmatpush1.msra.mxu0 %v3831
        %5498 = vmatprep.subr.mxu0 %v3836
        %5499 = vmatpush1.msra.mxu0 %v3835
        %5500 = vmatprep.subr.mxu0 %v3840
        %5501 = vmatpush1.msra.mxu0 %v3839
        %5502 = vmatprep.subr.mxu0 %v3844
        %5503 = vmatpush1.msra.mxu0 %v3843
        %5504 = vmatprep.subr.mxu0 %v3848
        %5505 = vmatpush1.msra.mxu0 %v3847
        %5506 = vmatprep.subr.mxu0 %v3852
        %5507 = vmatpush1.msra.mxu0 %v3851
        %5508 = vmatprep.subr.mxu0 %v3856
        %5509 = vmatpush1.msra.mxu0 %v3855
        %5510 = vmatprep.subr.mxu0 %v3860
        %5511 = vmatpush1.msra.mxu0 %v3859
        %5512 = vmatprep.subr.mxu0 %v3864
        %5513 = vmatpush1.msra.mxu0 %v3863
        %5514 = vmatprep.subr.mxu0 %v3868
        %5515 = vmatpush1.msra.mxu0 %v3867
        %5516 = vmatprep.subr.mxu0 %v3872
        %5517 = vmatpush1.msra.mxu0 %v3871
        %5518 = vmatprep.subr.mxu0 %v3876
        %5519 = vmatpush1.msra.mxu0 %v3875
        %5520 = vmatprep.subr.mxu0 %v3880
        %5521 = vmatpush1.msra.mxu0 %v3879
        %5522 = vmatprep.subr.mxu0 %v3884
        %5523 = vmatpush1.msra.mxu0 %v3883
        %5524 = vmatprep.subr.mxu0 %v3888
        %5525 = vmatpush1.msra.mxu0 %v3887
        %5526 = vmatprep.subr.mxu0 %v3892
        %5527 = vmatpush1.msra.mxu0 %v3891
        %5528 = vmatprep.subr.mxu0 %v3896
        %5529 = vmatpush1.msra.mxu0 %v3895
        %5530 = vmatprep.subr.mxu0 %v3900
        %5531 = vmatpush1.msra.mxu0 %v3899
        %5532 = vmatprep.subr.mxu0 %v3904
        %5533 = vmatpush1.msra.mxu0 %v3903
        %5534 = vmatprep.subr.mxu0 %v3908
        %5535 = vmatpush1.msra.mxu0 %v3907
        %5536 = vmatprep.subr.mxu0 %v3912
        %5537 = vmatpush1.msra.mxu0 %v3911
        %5538 = vmatprep.subr.mxu0 %v3916
        %5539 = vmatpush1.msra.mxu0 %v3915
        %5540 = vmatprep.subr.mxu0 %v3920
        %5541 = vmatpush1.msra.mxu0 %v3919
        %5542 = vmatprep.subr.mxu0 %v3924
        %5543 = vmatpush1.msra.mxu0 %v3923
        %5544 = vmatprep.subr.mxu0 %v3928
        %5545 = vmatpush1.msra.mxu0 %v3927
        %5546 = vmatprep.subr.mxu0 %v3932
        %5547 = vmatpush1.msra.mxu0 %v3931
        %5548 = vmatprep.mubr.f32.mxu0 %v3060
        %5549 = vmatmul.mubr.f32.gmra.mrb[0].mxu0 %v3059
        %v5550 = vpop.f32.mrb[0].mxu0
        %v5551 = vadd.f32 %v5410, %v5550
        %v5552 = vpop.f32.mrb[0].mxu0
        %v5553 = vadd.f32 %v5412, %v5552
        %5554 = vmatprep.mubr.f32.mxu0 %v3064
        %5555 = vmatmul.mubr.f32.gmra.mrb[0].mxu0 %v3063
        %v5556 = vpop.f32.mrb[0].mxu0
        %v5557 = vadd.f32 %v5416, %v5556
        %v5558 = vpop.f32.mrb[0].mxu0
        %v5559 = vadd.f32 %v5418, %v5558
        %5560 = vmatprep.mubr.f32.mxu0 %v3068
        %5561 = vmatmul.mubr.f32.gmra.mrb[0].mxu0 %v3067
        %v5562 = vpop.f32.mrb[0].mxu0
        %v5563 = vadd.f32 %v5422, %v5562
        %v5564 = vpop.f32.mrb[0].mxu0
        %v5565 = vadd.f32 %v5424, %v5564
        %5566 = vmatprep.mubr.f32.mxu0 %v3072
        %5567 = vmatmul.mubr.f32.gmra.mrb[0].mxu0 %v3071
        %v5568 = vpop.f32.mrb[0].mxu0
        %v5569 = vadd.f32 %v5428, %v5568
        %v5570 = vpop.f32.mrb[0].mxu0
        %v5571 = vadd.f32 %v5430, %v5570
        %5572 = vmatprep.mubr.f32.mxu0 %v3076
        %5573 = vmatmul.mubr.f32.gmra.mrb[0].mxu0 %v3075
        %v5574 = vpop.f32.mrb[0].mxu0
        %v5575 = vadd.f32 %v5434, %v5574
        %v5576 = vpop.f32.mrb[0].mxu0
        %v5577 = vadd.f32 %v5436, %v5576
        %5578 = vmatprep.mubr.f32.mxu0 %v3080
        %5579 = vmatmul.mubr.f32.gmra.mrb[0].mxu0 %v3079
        %v5580 = vpop.f32.mrb[0].mxu0
        %v5581 = vpop.f32.mrb[0].mxu0
        %5582 = vmatprep.mubr.f32.mxu0 %v3056
        %5583 = vmatmul.mubr.f32.gmra.mrb[0].mxu0 %v3055
        %v5584 = vpop.f32.mrb[0].mxu0
        %v5585 = vpop.f32.mrb[0].mxu0
        %5586 = vmatprep.mubr.f32.mxu0 %v3144
        %5587 = vmatmul.mubr.f32.gmra.mrb[0].mxu0 %v3143
        %v5588 = vpop.f32.mrb[0].mxu0
        %v5589 = vadd.f32 %v5448, %v5588
        %v5590 = vpop.f32.mrb[0].mxu0
        %v5591 = vadd.f32 %v5450, %v5590
        %5592 = vmatprep.mubr.f32.mxu0 %v3148
        %5593 = vmatmul.mubr.f32.gmra.mrb[0].mxu0 %v3147
        %v5594 = vpop.f32.mrb[0].mxu0
        %v5595 = vadd.f32 %v5454, %v5594
        %v5596 = vpop.f32.mrb[0].mxu0
        %v5597 = vadd.f32 %v5456, %v5596
        %5598 = vmatprep.mubr.f32.mxu0 %v3152
        %5599 = vmatmul.mubr.f32.gmra.mrb[0].mxu0 %v3151
        %v5600 = vpop.f32.mrb[0].mxu0
        %v5601 = vadd.f32 %v5460, %v5600
        %v5602 = vpop.f32.mrb[0].mxu0
        %v5603 = vadd.f32 %v5462, %v5602
        %5604 = vmatprep.mubr.f32.mxu0 %v3156
        %5605 = vmatmul.mubr.f32.gmra.mrb[0].mxu0 %v3155
        %v5606 = vpop.f32.mrb[0].mxu0
        %v5607 = vadd.f32 %v5466, %v5606
        %v5608 = vpop.f32.mrb[0].mxu0
        %v5609 = vadd.f32 %v5468, %v5608
        %5610 = vmatprep.mubr.f32.mxu0 %v3160
        %5611 = vmatmul.mubr.f32.gmra.mrb[0].mxu0 %v3159
        %v5612 = vpop.f32.mrb[0].mxu0
        %v5613 = vadd.f32 %v5472, %v5612
        %v5614 = vpop.f32.mrb[0].mxu0
        %v5615 = vadd.f32 %v5474, %v5614
        %5616 = vmatprep.mubr.f32.mxu0 %v3164
        %5617 = vmatmul.mubr.f32.gmra.mrb[0].mxu0 %v3163
        %v5618 = vpop.f32.mrb[0].mxu0
        %v5619 = vpop.f32.mrb[0].mxu0
        %5620 = vmatprep.mubr.f32.mxu0 %v3140
        %5621 = vmatmul.mubr.f32.gmra.mrb[0].mxu0 %v3139
        %v5622 = vpop.f32.mrb[0].mxu0
        %v5623 = vpop.f32.mrb[0].mxu0
        %5624 = vdwg.mxu0
        %v5625 = vmax.f32 %v4705, %v4743
        %v5626 = vmax.f32 %v4707, %v4745
        %v5627 = vmax.f32 %v5551, %v5589
        %v5628 = vmax.f32 %v5553, %v5591
        %v5629 = vmax.f32 %v4711, %v4749
        %v5630 = vmax.f32 %v4713, %v4751
        %v5631 = vmax.f32 %v5557, %v5595
        %v5632 = vmax.f32 %v5559, %v5597
        %v5633 = vmax.f32 %v4717, %v4755
        %v5634 = vmax.f32 %v4719, %v4757
        %v5635 = vmax.f32 %v5563, %v5601
        %v5636 = vmax.f32 %v5565, %v5603
        %v5637 = vmax.f32 %v4723, %v4761
        %v5638 = vmax.f32 %v4725, %v4763
        %v5639 = vmax.f32 %v5569, %v5607
        %v5640 = vmax.f32 %v5571, %v5609
        %v5641 = vmax.f32 %v4729, %v4767
        %v5642 = vmax.f32 %v4731, %v4769
        %v5643 = vmax.f32 %v5575, %v5613
        %v5644 = vmax.f32 %v5577, %v5615
        %v5645 = vmax.f32 %v5625, %v5627
        %v5646 = vmax.f32 %v5626, %v5628
        %v5647 = vmax.f32 %v5629, %v5631
        %v5648 = vmax.f32 %v5630, %v5632
        %v5649 = vmax.f32 %v5633, %v5635
        %v5650 = vmax.f32 %v5634, %v5636
        %v5651 = vmax.f32 %v5637, %v5639
        %v5652 = vmax.f32 %v5638, %v5640
        %v5653 = vmax.f32 %v5641, %v5643
        %v5654 = vmax.f32 %v5642, %v5644
        %v5655 = vld [vmem:[#allocation8] sm:$0x3]
        %v5657 = vlaneseq
        %v5658 = vshrl.u32 %v5657, 7
        %v5659 = vsub.s32 0, %v5658
        %v5660 = vrot.slane %v5655, %v5659
        %v5661 = vlaneseq
        %v5662 = vshrl.u32 %v5661, 7
        %v5663 = vsub.s32 1, %v5662
        %v5664 = vrot.slane %v5655, %v5663
        %v5667 = vadd.f32 %v5645, %v5660
        %v5668 = vadd.f32 %v5646, %v5664
        %v5669 = vadd.f32 %v5647, %v5660
        %v5670 = vadd.f32 %v5648, %v5664
        %v5671 = vadd.f32 %v5649, %v5660
        %v5672 = vadd.f32 %v5650, %v5664
        %v5673 = vadd.f32 %v5651, %v5660
        %v5674 = vadd.f32 %v5652, %v5664
        %v5675 = vadd.f32 %v5653, %v5660
        %v5676 = vadd.f32 %v5654, %v5664
        %v5677 = vmax.f32 %v5667, 0.0
        %v5678 = vmax.f32 %v5668, 0.0
        %v5679 = vmax.f32 %v5669, 0.0
        %v5680 = vmax.f32 %v5670, 0.0
        %v5681 = vmax.f32 %v5671, 0.0
        %v5682 = vmax.f32 %v5672, 0.0
        %v5683 = vmax.f32 %v5673, 0.0
        %v5684 = vmax.f32 %v5674, 0.0
        %v5685 = vmax.f32 %v5675, 0.0
        %v5686 = vmax.f32 %v5676, 0.0
        %v5687 = vld [vmem:[#allocation10] sm:$0xff]
        %v5688 = vld [vmem:[#allocation10 + $0x8] sm:$0xff]
        %v5689 = vld [vmem:[#allocation10 + $0x10] sm:$0xff]
        %v5690 = vld [vmem:[#allocation10 + $0x18] sm:$0xff]
        %v5691 = vld [vmem:[#allocation10 + $0x20] sm:$0xff]
        %v5692 = vld [vmem:[#allocation10 + $0x28] sm:$0xff]
        %v5693 = vld [vmem:[#allocation10 + $0x30] sm:$0xff]
        %v5694 = vld [vmem:[#allocation10 + $0x38] sm:$0xff]
        %v5695 = vld [vmem:[#allocation10 + $0x40] sm:$0xff]
        %v5696 = vld [vmem:[#allocation10 + $0x48] sm:$0xff]
        %v5697 = vld [vmem:[#allocation10 + $0x50] sm:$0xff]
        %v5698 = vld [vmem:[#allocation10 + $0x58] sm:$0xff]
        %v5699 = vld [vmem:[#allocation10 + $0x60] sm:$0xff]
        %v5700 = vld [vmem:[#allocation10 + $0x68] sm:$0xff]
        %v5701 = vld [vmem:[#allocation10 + $0x70] sm:$0xff]
        %v5702 = vld [vmem:[#allocation10 + $0x78] sm:$0xff]
        %v5703 = vld [vmem:[#allocation10 + $0x80] sm:$0xff]
        %v5704 = vld [vmem:[#allocation10 + $0x88] sm:$0xff]
        %v5705 = vld [vmem:[#allocation10 + $0x90] sm:$0xff]
        %v5706 = vld [vmem:[#allocation10 + $0x98] sm:$0xff]
        %v5707 = vld [vmem:[#allocation10 + $0xa0] sm:$0xff]
        %v5708 = vld [vmem:[#allocation10 + $0xa8] sm:$0xff]
        %v5709 = vld [vmem:[#allocation10 + $0xb0] sm:$0xff]
        %v5710 = vld [vmem:[#allocation10 + $0xb8] sm:$0xff]
        %v5711 = vld [vmem:[#allocation10 + $0xc0] sm:$0xff]
        %v5712 = vld [vmem:[#allocation10 + $0xc8] sm:$0xff]
        %v5713 = vld [vmem:[#allocation10 + $0xd0] sm:$0xff]
        %v5714 = vld [vmem:[#allocation10 + $0xd8] sm:$0xff]
        %v5715 = vld [vmem:[#allocation10 + $0xe0] sm:$0xff]
        %v5716 = vld [vmem:[#allocation10 + $0xe8] sm:$0xff]
        %v5717 = vld [vmem:[#allocation10 + $0xf0] sm:$0xff]
        %v5718 = vld [vmem:[#allocation10 + $0xf8] sm:$0xff]
        %v5719 = vld [vmem:[#allocation10 + $0x100] sm:$0xff]
        %v5720 = vld [vmem:[#allocation10 + $0x108] sm:$0xff]
        %v5721 = vld [vmem:[#allocation10 + $0x110] sm:$0xff]
        %v5722 = vld [vmem:[#allocation10 + $0x118] sm:$0xff]
        %v5723 = vld [vmem:[#allocation10 + $0x120] sm:$0xff]
        %v5724 = vld [vmem:[#allocation10 + $0x128] sm:$0xff]
        %v5725 = vld [vmem:[#allocation10 + $0x130] sm:$0xff]
        %v5726 = vld [vmem:[#allocation10 + $0x138] sm:$0xff]
        %v5727 = vld [vmem:[#allocation10 + $0x140] sm:$0xff]
        %v5728 = vld [vmem:[#allocation10 + $0x148] sm:$0xff]
        %v5729 = vld [vmem:[#allocation10 + $0x150] sm:$0xff]
        %v5730 = vld [vmem:[#allocation10 + $0x158] sm:$0xff]
        %v5731 = vld [vmem:[#allocation10 + $0x160] sm:$0xff]
        %v5732 = vld [vmem:[#allocation10 + $0x168] sm:$0xff]
        %v5733 = vld [vmem:[#allocation10 + $0x170] sm:$0xff]
        %v5734 = vld [vmem:[#allocation10 + $0x178] sm:$0xff]
        %v5735 = vld [vmem:[#allocation10 + $0x180] sm:$0xff]
        %v5736 = vld [vmem:[#allocation10 + $0x188] sm:$0xff]
        %v5737 = vld [vmem:[#allocation10 + $0x190] sm:$0xff]
        %v5738 = vld [vmem:[#allocation10 + $0x198] sm:$0xff]
        %v5739 = vld [vmem:[#allocation10 + $0x1a0] sm:$0xff]
        %v5740 = vld [vmem:[#allocation10 + $0x1a8] sm:$0xff]
        %v5741 = vld [vmem:[#allocation10 + $0x1b0] sm:$0xff]
        %v5742 = vld [vmem:[#allocation10 + $0x1b8] sm:$0xff]
        %v5743 = vld [vmem:[#allocation10 + $0x1c0] sm:$0xff]
        %v5744 = vld [vmem:[#allocation10 + $0x1c8] sm:$0xff]
        %v5745 = vld [vmem:[#allocation10 + $0x1d0] sm:$0xff]
        %v5746 = vld [vmem:[#allocation10 + $0x1d8] sm:$0xff]
        %v5747 = vld [vmem:[#allocation10 + $0x1e0] sm:$0xff]
        %v5748 = vld [vmem:[#allocation10 + $0x1e8] sm:$0xff]
        %v5749 = vld [vmem:[#allocation10 + $0x1f0] sm:$0xff]
        %v5750 = vld [vmem:[#allocation10 + $0x1f8] sm:$0xff]
        %v5751 = vld [vmem:[#allocation10 + $0x200] sm:$0xff]
        %v5752 = vld [vmem:[#allocation10 + $0x208] sm:$0xff]
        %v5753 = vld [vmem:[#allocation10 + $0x210] sm:$0xff]
        %v5754 = vld [vmem:[#allocation10 + $0x218] sm:$0xff]
        %v5755 = vld [vmem:[#allocation10 + $0x220] sm:$0xff]
        %v5756 = vld [vmem:[#allocation10 + $0x228] sm:$0xff]
        %v5757 = vld [vmem:[#allocation10 + $0x230] sm:$0xff]
        %v5758 = vld [vmem:[#allocation10 + $0x238] sm:$0xff]
        %v5759 = vld [vmem:[#allocation10 + $0x240] sm:$0xff]
        %v5760 = vld [vmem:[#allocation10 + $0x248] sm:$0xff]
        %v5761 = vld [vmem:[#allocation10 + $0x250] sm:$0xff]
        %v5762 = vld [vmem:[#allocation10 + $0x258] sm:$0xff]
        %v5763 = vld [vmem:[#allocation10 + $0x260] sm:$0xff]
        %v5764 = vld [vmem:[#allocation10 + $0x268] sm:$0xff]
        %v5765 = vld [vmem:[#allocation10 + $0x270] sm:$0xff]
        %v5766 = vld [vmem:[#allocation10 + $0x278] sm:$0xff]
        %v5767 = vld [vmem:[#allocation10 + $0x280] sm:$0xff]
        %v5768 = vld [vmem:[#allocation10 + $0x288] sm:$0xff]
        %v5769 = vld [vmem:[#allocation10 + $0x290] sm:$0xff]
        %v5770 = vld [vmem:[#allocation10 + $0x298] sm:$0xff]
        %v5771 = vld [vmem:[#allocation10 + $0x2a0] sm:$0xff]
        %v5772 = vld [vmem:[#allocation10 + $0x2a8] sm:$0xff]
        %v5773 = vld [vmem:[#allocation10 + $0x2b0] sm:$0xff]
        %v5774 = vld [vmem:[#allocation10 + $0x2b8] sm:$0xff]
        %v5775 = vld [vmem:[#allocation10 + $0x2c0] sm:$0xff]
        %v5776 = vld [vmem:[#allocation10 + $0x2c8] sm:$0xff]
        %v5777 = vld [vmem:[#allocation10 + $0x2d0] sm:$0xff]
        %v5778 = vld [vmem:[#allocation10 + $0x2d8] sm:$0xff]
        %v5779 = vld [vmem:[#allocation10 + $0x2e0] sm:$0xff]
        %v5780 = vld [vmem:[#allocation10 + $0x2e8] sm:$0xff]
        %v5781 = vld [vmem:[#allocation10 + $0x2f0] sm:$0xff]
        %v5782 = vld [vmem:[#allocation10 + $0x2f8] sm:$0xff]
        %v5783 = vld [vmem:[#allocation10 + $0x300] sm:$0xff]
        %v5784 = vld [vmem:[#allocation10 + $0x308] sm:$0xff]
        %v5785 = vld [vmem:[#allocation10 + $0x310] sm:$0xff]
        %v5786 = vld [vmem:[#allocation10 + $0x318] sm:$0xff]
        %v5787 = vld [vmem:[#allocation10 + $0x320] sm:$0xff]
        %v5788 = vld [vmem:[#allocation10 + $0x328] sm:$0xff]
        %v5789 = vld [vmem:[#allocation10 + $0x330] sm:$0xff]
        %v5790 = vld [vmem:[#allocation10 + $0x338] sm:$0xff]
        %v5791 = vld [vmem:[#allocation10 + $0x340] sm:$0xff]
        %v5792 = vld [vmem:[#allocation10 + $0x348] sm:$0xff]
        %v5793 = vld [vmem:[#allocation10 + $0x350] sm:$0xff]
        %v5794 = vld [vmem:[#allocation10 + $0x358] sm:$0xff]
        %v5795 = vld [vmem:[#allocation10 + $0x360] sm:$0xff]
        %v5796 = vld [vmem:[#allocation10 + $0x368] sm:$0xff]
        %v5797 = vld [vmem:[#allocation10 + $0x370] sm:$0xff]
        %v5798 = vld [vmem:[#allocation10 + $0x378] sm:$0xff]
        %v5799 = vld [vmem:[#allocation10 + $0x380] sm:$0xff]
        %v5800 = vld [vmem:[#allocation10 + $0x388] sm:$0xff]
        %v5801 = vld [vmem:[#allocation10 + $0x390] sm:$0xff]
        %v5802 = vld [vmem:[#allocation10 + $0x398] sm:$0xff]
        %v5803 = vld [vmem:[#allocation10 + $0x3a0] sm:$0xff]
        %v5804 = vld [vmem:[#allocation10 + $0x3a8] sm:$0xff]
        %v5805 = vld [vmem:[#allocation10 + $0x3b0] sm:$0xff]
        %v5806 = vld [vmem:[#allocation10 + $0x3b8] sm:$0xff]
        %v5807 = vld [vmem:[#allocation10 + $0x3c0] sm:$0xff]
        %v5808 = vld [vmem:[#allocation10 + $0x3c8] sm:$0xff]
        %v5809 = vld [vmem:[#allocation10 + $0x3d0] sm:$0xff]
        %v5810 = vld [vmem:[#allocation10 + $0x3d8] sm:$0xff]
        %v5811 = vld [vmem:[#allocation10 + $0x3e0] sm:$0xff]
        %v5812 = vld [vmem:[#allocation10 + $0x3e8] sm:$0xff]
        %v5813 = vld [vmem:[#allocation10 + $0x3f0] sm:$0xff]
        %v5814 = vld [vmem:[#allocation10 + $0x3f8] sm:$0xff]
        %v5815 = vld [vmem:[#allocation10 + $0x400] sm:$0xff]
        %v5816 = vld [vmem:[#allocation10 + $0x408] sm:$0xff]
        %v5817 = vld [vmem:[#allocation10 + $0x410] sm:$0xff]
        %v5818 = vld [vmem:[#allocation10 + $0x418] sm:$0xff]
        %v5819 = vld [vmem:[#allocation10 + $0x420] sm:$0xff]
        %v5820 = vld [vmem:[#allocation10 + $0x428] sm:$0xff]
        %v5821 = vld [vmem:[#allocation10 + $0x430] sm:$0xff]
        %v5822 = vld [vmem:[#allocation10 + $0x438] sm:$0xff]
        %v5823 = vld [vmem:[#allocation10 + $0x440] sm:$0xff]
        %v5824 = vld [vmem:[#allocation10 + $0x448] sm:$0xff]
        %v5825 = vld [vmem:[#allocation10 + $0x450] sm:$0xff]
        %v5826 = vld [vmem:[#allocation10 + $0x458] sm:$0xff]
        %v5827 = vld [vmem:[#allocation10 + $0x460] sm:$0xff]
        %v5828 = vld [vmem:[#allocation10 + $0x468] sm:$0xff]
        %v5829 = vld [vmem:[#allocation10 + $0x470] sm:$0xff]
        %v5830 = vld [vmem:[#allocation10 + $0x478] sm:$0xff]
        %v5831 = vld [vmem:[#allocation10 + $0x480] sm:$0xff]
        %v5832 = vld [vmem:[#allocation10 + $0x488] sm:$0xff]
        %v5833 = vld [vmem:[#allocation10 + $0x490] sm:$0xff]
        %v5834 = vld [vmem:[#allocation10 + $0x498] sm:$0xff]
        %v5835 = vld [vmem:[#allocation10 + $0x4a0] sm:$0xff]
        %v5836 = vld [vmem:[#allocation10 + $0x4a8] sm:$0xff]
        %v5837 = vld [vmem:[#allocation10 + $0x4b0] sm:$0xff]
        %v5838 = vld [vmem:[#allocation10 + $0x4b8] sm:$0xff]
        %v5839 = vld [vmem:[#allocation10 + $0x4c0] sm:$0xff]
        %v5840 = vld [vmem:[#allocation10 + $0x4c8] sm:$0xff]
        %v5841 = vld [vmem:[#allocation10 + $0x4d0] sm:$0xff]
        %v5842 = vld [vmem:[#allocation10 + $0x4d8] sm:$0xff]
        %v5843 = vld [vmem:[#allocation10 + $0x4e0] sm:$0xff]
        %v5844 = vld [vmem:[#allocation10 + $0x4e8] sm:$0xff]
        %v5845 = vld [vmem:[#allocation10 + $0x4f0] sm:$0xff]
        %v5846 = vld [vmem:[#allocation10 + $0x4f8] sm:$0xff]
        %v5847 = vld [vmem:[#allocation11] sm:$0x1]
        %v5849 = vlaneseq
        %v5850 = vshrl.u32 %v5849, 7
        %v5851 = vsub.s32 0, %v5850
        %v5852 = vrot.slane %v5847, %v5851
        %5854 = vmatprep.subr.mxu0 0.0
        %5855 = vmatpush1.msra.mxu0 %v5687
        %5856 = vmatprep.subr.mxu0 0.0
        %5857 = vmatpush1.msra.mxu0 %v5688
        %5858 = vmatprep.subr.mxu0 0.0
        %5859 = vmatpush1.msra.mxu0 %v5689
        %5860 = vmatprep.subr.mxu0 0.0
        %5861 = vmatpush1.msra.mxu0 %v5690
        %5862 = vmatprep.subr.mxu0 0.0
        %5863 = vmatpush1.msra.mxu0 %v5691
        %5864 = vmatprep.subr.mxu0 0.0
        %5865 = vmatpush1.msra.mxu0 %v5692
        %5866 = vmatprep.subr.mxu0 0.0
        %5867 = vmatpush1.msra.mxu0 %v5693
        %5868 = vmatprep.subr.mxu0 0.0
        %5869 = vmatpush1.msra.mxu0 %v5694
        %5870 = vmatprep.subr.mxu0 0.0
        %5871 = vmatpush1.msra.mxu0 %v5695
        %5872 = vmatprep.subr.mxu0 0.0
        %5873 = vmatpush1.msra.mxu0 %v5696
        %5874 = vmatprep.subr.mxu0 0.0
        %5875 = vmatpush1.msra.mxu0 %v5697
        %5876 = vmatprep.subr.mxu0 0.0
        %5877 = vmatpush1.msra.mxu0 %v5698
        %5878 = vmatprep.subr.mxu0 0.0
        %5879 = vmatpush1.msra.mxu0 %v5699
        %5880 = vmatprep.subr.mxu0 0.0
        %5881 = vmatpush1.msra.mxu0 %v5700
        %5882 = vmatprep.subr.mxu0 0.0
        %5883 = vmatpush1.msra.mxu0 %v5701
        %5884 = vmatprep.subr.mxu0 0.0
        %5885 = vmatpush1.msra.mxu0 %v5702
        %5886 = vmatprep.subr.mxu0 0.0
        %5887 = vmatpush1.msra.mxu0 %v5703
        %5888 = vmatprep.subr.mxu0 0.0
        %5889 = vmatpush1.msra.mxu0 %v5704
        %5890 = vmatprep.subr.mxu0 0.0
        %5891 = vmatpush1.msra.mxu0 %v5705
        %5892 = vmatprep.subr.mxu0 0.0
        %5893 = vmatpush1.msra.mxu0 %v5706
        %5894 = vmatprep.subr.mxu0 0.0
        %5895 = vmatpush1.msra.mxu0 %v5707
        %5896 = vmatprep.subr.mxu0 0.0
        %5897 = vmatpush1.msra.mxu0 %v5708
        %5898 = vmatprep.subr.mxu0 0.0
        %5899 = vmatpush1.msra.mxu0 %v5709
        %5900 = vmatprep.subr.mxu0 0.0
        %5901 = vmatpush1.msra.mxu0 %v5710
        %5902 = vmatprep.subr.mxu0 0.0
        %5903 = vmatpush1.msra.mxu0 %v5711
        %5904 = vmatprep.subr.mxu0 0.0
        %5905 = vmatpush1.msra.mxu0 %v5712
        %5906 = vmatprep.subr.mxu0 0.0
        %5907 = vmatpush1.msra.mxu0 %v5713
        %5908 = vmatprep.subr.mxu0 0.0
        %5909 = vmatpush1.msra.mxu0 %v5714
        %5910 = vmatprep.subr.mxu0 0.0
        %5911 = vmatpush1.msra.mxu0 %v5715
        %5912 = vmatprep.subr.mxu0 0.0
        %5913 = vmatpush1.msra.mxu0 %v5716
        %5914 = vmatprep.subr.mxu0 0.0
        %5915 = vmatpush1.msra.mxu0 %v5717
        %5916 = vmatprep.subr.mxu0 0.0
        %5917 = vmatpush1.msra.mxu0 %v5718
        %5918 = vmatprep.mubr.f32.mxu0 %v5678
        %5919 = vmatmul.mubr.f32.gmra.mrb[0].mxu0 %v5677
        %v5920 = vpop.f32.mrb[0].mxu0
        %v5921 = vadd.f32 %v5852, %v5920
        %v5922 = vpop.f32.mrb[0].mxu0
        %5923 = vdwg.mxu0
        %5924 = vmatprep.subr.mxu0 0.0
        %5925 = vmatpush1.msra.mxu0 %v5719
        %5926 = vmatprep.subr.mxu0 0.0
        %5927 = vmatpush1.msra.mxu0 %v5720
        %5928 = vmatprep.subr.mxu0 0.0
        %5929 = vmatpush1.msra.mxu0 %v5721
        %5930 = vmatprep.subr.mxu0 0.0
        %5931 = vmatpush1.msra.mxu0 %v5722
        %5932 = vmatprep.subr.mxu0 0.0
        %5933 = vmatpush1.msra.mxu0 %v5723
        %5934 = vmatprep.subr.mxu0 0.0
        %5935 = vmatpush1.msra.mxu0 %v5724
        %5936 = vmatprep.subr.mxu0 0.0
        %5937 = vmatpush1.msra.mxu0 %v5725
        %5938 = vmatprep.subr.mxu0 0.0
        %5939 = vmatpush1.msra.mxu0 %v5726
        %5940 = vmatprep.subr.mxu0 0.0
        %5941 = vmatpush1.msra.mxu0 %v5727
        %5942 = vmatprep.subr.mxu0 0.0
        %5943 = vmatpush1.msra.mxu0 %v5728
        %5944 = vmatprep.subr.mxu0 0.0
        %5945 = vmatpush1.msra.mxu0 %v5729
        %5946 = vmatprep.subr.mxu0 0.0
        %5947 = vmatpush1.msra.mxu0 %v5730
        %5948 = vmatprep.subr.mxu0 0.0
        %5949 = vmatpush1.msra.mxu0 %v5731
        %5950 = vmatprep.subr.mxu0 0.0
        %5951 = vmatpush1.msra.mxu0 %v5732
        %5952 = vmatprep.subr.mxu0 0.0
        %5953 = vmatpush1.msra.mxu0 %v5733
        %5954 = vmatprep.subr.mxu0 0.0
        %5955 = vmatpush1.msra.mxu0 %v5734
        %5956 = vmatprep.subr.mxu0 0.0
        %5957 = vmatpush1.msra.mxu0 %v5735
        %5958 = vmatprep.subr.mxu0 0.0
        %5959 = vmatpush1.msra.mxu0 %v5736
        %5960 = vmatprep.subr.mxu0 0.0
        %5961 = vmatpush1.msra.mxu0 %v5737
        %5962 = vmatprep.subr.mxu0 0.0
        %5963 = vmatpush1.msra.mxu0 %v5738
        %5964 = vmatprep.subr.mxu0 0.0
        %5965 = vmatpush1.msra.mxu0 %v5739
        %5966 = vmatprep.subr.mxu0 0.0
        %5967 = vmatpush1.msra.mxu0 %v5740
        %5968 = vmatprep.subr.mxu0 0.0
        %5969 = vmatpush1.msra.mxu0 %v5741
        %5970 = vmatprep.subr.mxu0 0.0
        %5971 = vmatpush1.msra.mxu0 %v5742
        %5972 = vmatprep.subr.mxu0 0.0
        %5973 = vmatpush1.msra.mxu0 %v5743
        %5974 = vmatprep.subr.mxu0 0.0
        %5975 = vmatpush1.msra.mxu0 %v5744
        %5976 = vmatprep.subr.mxu0 0.0
        %5977 = vmatpush1.msra.mxu0 %v5745
        %5978 = vmatprep.subr.mxu0 0.0
        %5979 = vmatpush1.msra.mxu0 %v5746
        %5980 = vmatprep.subr.mxu0 0.0
        %5981 = vmatpush1.msra.mxu0 %v5747
        %5982 = vmatprep.subr.mxu0 0.0
        %5983 = vmatpush1.msra.mxu0 %v5748
        %5984 = vmatprep.subr.mxu0 0.0
        %5985 = vmatpush1.msra.mxu0 %v5749
        %5986 = vmatprep.subr.mxu0 0.0
        %5987 = vmatpush1.msra.mxu0 %v5750
        %5988 = vmatprep.mubr.f32.mxu0 %v5680
        %5989 = vmatmul.mubr.f32.gmra.mrb[0].mxu0 %v5679
        %v5990 = vpop.f32.mrb[0].mxu0
        %v5991 = vadd.f32 %v5921, %v5990
        %v5992 = vpop.f32.mrb[0].mxu0
        %5993 = vdwg.mxu0
        %5994 = vmatprep.subr.mxu0 0.0
        %5995 = vmatpush1.msra.mxu0 %v5751
        %5996 = vmatprep.subr.mxu0 0.0
        %5997 = vmatpush1.msra.mxu0 %v5752
        %5998 = vmatprep.subr.mxu0 0.0
        %5999 = vmatpush1.msra.mxu0 %v5753
        %6000 = vmatprep.subr.mxu0 0.0
        %6001 = vmatpush1.msra.mxu0 %v5754
        %6002 = vmatprep.subr.mxu0 0.0
        %6003 = vmatpush1.msra.mxu0 %v5755
        %6004 = vmatprep.subr.mxu0 0.0
        %6005 = vmatpush1.msra.mxu0 %v5756
        %6006 = vmatprep.subr.mxu0 0.0
        %6007 = vmatpush1.msra.mxu0 %v5757
        %6008 = vmatprep.subr.mxu0 0.0
        %6009 = vmatpush1.msra.mxu0 %v5758
        %6010 = vmatprep.subr.mxu0 0.0
        %6011 = vmatpush1.msra.mxu0 %v5759
        %6012 = vmatprep.subr.mxu0 0.0
        %6013 = vmatpush1.msra.mxu0 %v5760
        %6014 = vmatprep.subr.mxu0 0.0
        %6015 = vmatpush1.msra.mxu0 %v5761
        %6016 = vmatprep.subr.mxu0 0.0
        %6017 = vmatpush1.msra.mxu0 %v5762
        %6018 = vmatprep.subr.mxu0 0.0
        %6019 = vmatpush1.msra.mxu0 %v5763
        %6020 = vmatprep.subr.mxu0 0.0
        %6021 = vmatpush1.msra.mxu0 %v5764
        %6022 = vmatprep.subr.mxu0 0.0
        %6023 = vmatpush1.msra.mxu0 %v5765
        %6024 = vmatprep.subr.mxu0 0.0
        %6025 = vmatpush1.msra.mxu0 %v5766
        %6026 = vmatprep.subr.mxu0 0.0
        %6027 = vmatpush1.msra.mxu0 %v5767
        %6028 = vmatprep.subr.mxu0 0.0
        %6029 = vmatpush1.msra.mxu0 %v5768
        %6030 = vmatprep.subr.mxu0 0.0
        %6031 = vmatpush1.msra.mxu0 %v5769
        %6032 = vmatprep.subr.mxu0 0.0
        %6033 = vmatpush1.msra.mxu0 %v5770
        %6034 = vmatprep.subr.mxu0 0.0
        %6035 = vmatpush1.msra.mxu0 %v5771
        %6036 = vmatprep.subr.mxu0 0.0
        %6037 = vmatpush1.msra.mxu0 %v5772
        %6038 = vmatprep.subr.mxu0 0.0
        %6039 = vmatpush1.msra.mxu0 %v5773
        %6040 = vmatprep.subr.mxu0 0.0
        %6041 = vmatpush1.msra.mxu0 %v5774
        %6042 = vmatprep.subr.mxu0 0.0
        %6043 = vmatpush1.msra.mxu0 %v5775
        %6044 = vmatprep.subr.mxu0 0.0
        %6045 = vmatpush1.msra.mxu0 %v5776
        %6046 = vmatprep.subr.mxu0 0.0
        %6047 = vmatpush1.msra.mxu0 %v5777
        %6048 = vmatprep.subr.mxu0 0.0
        %6049 = vmatpush1.msra.mxu0 %v5778
        %6050 = vmatprep.subr.mxu0 0.0
        %6051 = vmatpush1.msra.mxu0 %v5779
        %6052 = vmatprep.subr.mxu0 0.0
        %6053 = vmatpush1.msra.mxu0 %v5780
        %6054 = vmatprep.subr.mxu0 0.0
        %6055 = vmatpush1.msra.mxu0 %v5781
        %6056 = vmatprep.subr.mxu0 0.0
        %6057 = vmatpush1.msra.mxu0 %v5782
        %6058 = vmatprep.mubr.f32.mxu0 %v5682
        %6059 = vmatmul.mubr.f32.gmra.mrb[0].mxu0 %v5681
        %v6060 = vpop.f32.mrb[0].mxu0
        %v6061 = vadd.f32 %v5991, %v6060
        %v6062 = vpop.f32.mrb[0].mxu0
        %6063 = vdwg.mxu0
        %6064 = vmatprep.subr.mxu0 0.0
        %6065 = vmatpush1.msra.mxu0 %v5783
        %6066 = vmatprep.subr.mxu0 0.0
        %6067 = vmatpush1.msra.mxu0 %v5784
        %6068 = vmatprep.subr.mxu0 0.0
        %6069 = vmatpush1.msra.mxu0 %v5785
        %6070 = vmatprep.subr.mxu0 0.0
        %6071 = vmatpush1.msra.mxu0 %v5786
        %6072 = vmatprep.subr.mxu0 0.0
        %6073 = vmatpush1.msra.mxu0 %v5787
        %6074 = vmatprep.subr.mxu0 0.0
        %6075 = vmatpush1.msra.mxu0 %v5788
        %6076 = vmatprep.subr.mxu0 0.0
        %6077 = vmatpush1.msra.mxu0 %v5789
        %6078 = vmatprep.subr.mxu0 0.0
        %6079 = vmatpush1.msra.mxu0 %v5790
        %6080 = vmatprep.subr.mxu0 0.0
        %6081 = vmatpush1.msra.mxu0 %v5791
        %6082 = vmatprep.subr.mxu0 0.0
        %6083 = vmatpush1.msra.mxu0 %v5792
        %6084 = vmatprep.subr.mxu0 0.0
        %6085 = vmatpush1.msra.mxu0 %v5793
        %6086 = vmatprep.subr.mxu0 0.0
        %6087 = vmatpush1.msra.mxu0 %v5794
        %6088 = vmatprep.subr.mxu0 0.0
        %6089 = vmatpush1.msra.mxu0 %v5795
        %6090 = vmatprep.subr.mxu0 0.0
        %6091 = vmatpush1.msra.mxu0 %v5796
        %6092 = vmatprep.subr.mxu0 0.0
        %6093 = vmatpush1.msra.mxu0 %v5797
        %6094 = vmatprep.subr.mxu0 0.0
        %6095 = vmatpush1.msra.mxu0 %v5798
        %6096 = vmatprep.subr.mxu0 0.0
        %6097 = vmatpush1.msra.mxu0 %v5799
        %6098 = vmatprep.subr.mxu0 0.0
        %6099 = vmatpush1.msra.mxu0 %v5800
        %6100 = vmatprep.subr.mxu0 0.0
        %6101 = vmatpush1.msra.mxu0 %v5801
        %6102 = vmatprep.subr.mxu0 0.0
        %6103 = vmatpush1.msra.mxu0 %v5802
        %6104 = vmatprep.subr.mxu0 0.0
        %6105 = vmatpush1.msra.mxu0 %v5803
        %6106 = vmatprep.subr.mxu0 0.0
        %6107 = vmatpush1.msra.mxu0 %v5804
        %6108 = vmatprep.subr.mxu0 0.0
        %6109 = vmatpush1.msra.mxu0 %v5805
        %6110 = vmatprep.subr.mxu0 0.0
        %6111 = vmatpush1.msra.mxu0 %v5806
        %6112 = vmatprep.subr.mxu0 0.0
        %6113 = vmatpush1.msra.mxu0 %v5807
        %6114 = vmatprep.subr.mxu0 0.0
        %6115 = vmatpush1.msra.mxu0 %v5808
        %6116 = vmatprep.subr.mxu0 0.0
        %6117 = vmatpush1.msra.mxu0 %v5809
        %6118 = vmatprep.subr.mxu0 0.0
        %6119 = vmatpush1.msra.mxu0 %v5810
        %6120 = vmatprep.subr.mxu0 0.0
        %6121 = vmatpush1.msra.mxu0 %v5811
        %6122 = vmatprep.subr.mxu0 0.0
        %6123 = vmatpush1.msra.mxu0 %v5812
        %6124 = vmatprep.subr.mxu0 0.0
        %6125 = vmatpush1.msra.mxu0 %v5813
        %6126 = vmatprep.subr.mxu0 0.0
        %6127 = vmatpush1.msra.mxu0 %v5814
        %6128 = vmatprep.mubr.f32.mxu0 %v5684
        %6129 = vmatmul.mubr.f32.gmra.mrb[0].mxu0 %v5683
        %v6130 = vpop.f32.mrb[0].mxu0
        %v6131 = vadd.f32 %v6061, %v6130
        %v6132 = vpop.f32.mrb[0].mxu0
        %6133 = vdwg.mxu0
        %6134 = vmatprep.subr.mxu0 0.0
        %6135 = vmatpush1.msra.mxu0 %v5815
        %6136 = vmatprep.subr.mxu0 0.0
        %6137 = vmatpush1.msra.mxu0 %v5816
        %6138 = vmatprep.subr.mxu0 0.0
        %6139 = vmatpush1.msra.mxu0 %v5817
        %6140 = vmatprep.subr.mxu0 0.0
        %6141 = vmatpush1.msra.mxu0 %v5818
        %6142 = vmatprep.subr.mxu0 0.0
        %6143 = vmatpush1.msra.mxu0 %v5819
        %6144 = vmatprep.subr.mxu0 0.0
        %6145 = vmatpush1.msra.mxu0 %v5820
        %6146 = vmatprep.subr.mxu0 0.0
        %6147 = vmatpush1.msra.mxu0 %v5821
        %6148 = vmatprep.subr.mxu0 0.0
        %6149 = vmatpush1.msra.mxu0 %v5822
        %6150 = vmatprep.subr.mxu0 0.0
        %6151 = vmatpush1.msra.mxu0 %v5823
        %6152 = vmatprep.subr.mxu0 0.0
        %6153 = vmatpush1.msra.mxu0 %v5824
        %6154 = vmatprep.subr.mxu0 0.0
        %6155 = vmatpush1.msra.mxu0 %v5825
        %6156 = vmatprep.subr.mxu0 0.0
        %6157 = vmatpush1.msra.mxu0 %v5826
        %6158 = vmatprep.subr.mxu0 0.0
        %6159 = vmatpush1.msra.mxu0 %v5827
        %6160 = vmatprep.subr.mxu0 0.0
        %6161 = vmatpush1.msra.mxu0 %v5828
        %6162 = vmatprep.subr.mxu0 0.0
        %6163 = vmatpush1.msra.mxu0 %v5829
        %6164 = vmatprep.subr.mxu0 0.0
        %6165 = vmatpush1.msra.mxu0 %v5830
        %6166 = vmatprep.subr.mxu0 0.0
        %6167 = vmatpush1.msra.mxu0 %v5831
        %6168 = vmatprep.subr.mxu0 0.0
        %6169 = vmatpush1.msra.mxu0 %v5832
        %6170 = vmatprep.subr.mxu0 0.0
        %6171 = vmatpush1.msra.mxu0 %v5833
        %6172 = vmatprep.subr.mxu0 0.0
        %6173 = vmatpush1.msra.mxu0 %v5834
        %6174 = vmatprep.subr.mxu0 0.0
        %6175 = vmatpush1.msra.mxu0 %v5835
        %6176 = vmatprep.subr.mxu0 0.0
        %6177 = vmatpush1.msra.mxu0 %v5836
        %6178 = vmatprep.subr.mxu0 0.0
        %6179 = vmatpush1.msra.mxu0 %v5837
        %6180 = vmatprep.subr.mxu0 0.0
        %6181 = vmatpush1.msra.mxu0 %v5838
        %6182 = vmatprep.subr.mxu0 0.0
        %6183 = vmatpush1.msra.mxu0 %v5839
        %6184 = vmatprep.subr.mxu0 0.0
        %6185 = vmatpush1.msra.mxu0 %v5840
        %6186 = vmatprep.subr.mxu0 0.0
        %6187 = vmatpush1.msra.mxu0 %v5841
        %6188 = vmatprep.subr.mxu0 0.0
        %6189 = vmatpush1.msra.mxu0 %v5842
        %6190 = vmatprep.subr.mxu0 0.0
        %6191 = vmatpush1.msra.mxu0 %v5843
        %6192 = vmatprep.subr.mxu0 0.0
        %6193 = vmatpush1.msra.mxu0 %v5844
        %6194 = vmatprep.subr.mxu0 0.0
        %6195 = vmatpush1.msra.mxu0 %v5845
        %6196 = vmatprep.subr.mxu0 0.0
        %6197 = vmatpush1.msra.mxu0 %v5846
        %6198 = vmatprep.mubr.f32.mxu0 %v5686
        %6199 = vmatmul.mubr.f32.gmra.mrb[0].mxu0 %v5685
        %v6200 = vpop.f32.mrb[0].mxu0
        %v6201 = vadd.f32 %v6131, %v6200
        %v6202 = vpop.f32.mrb[0].mxu0
        %6203 = vdwg.mxu0
        %v6204 = vmax.f32 %v6201, 0.0
        %v6205 = vld [vmem:[#allocation13] sm:$0xff]
        %v6206 = vld [vmem:[#allocation13 + $0x8] sm:$0xff]
        %v6207 = vld [vmem:[#allocation13 + $0x10] sm:$0xff]
        %v6208 = vld [vmem:[#allocation13 + $0x18] sm:$0xff]
        %v6209 = vld [vmem:[#allocation13 + $0x20] sm:$0xff]
        %v6210 = vld [vmem:[#allocation13 + $0x28] sm:$0xff]
        %v6211 = vld [vmem:[#allocation13 + $0x30] sm:$0xff]
        %v6212 = vld [vmem:[#allocation13 + $0x38] sm:$0xff]
        %v6213 = vld [vmem:[#allocation13 + $0x40] sm:$0xff]
        %v6214 = vld [vmem:[#allocation13 + $0x48] sm:$0xff]
        %v6215 = vld [vmem:[#allocation13 + $0x50] sm:$0xff]
        %v6216 = vld [vmem:[#allocation13 + $0x58] sm:$0xff]
        %v6217 = vld [vmem:[#allocation13 + $0x60] sm:$0xff]
        %v6218 = vld [vmem:[#allocation13 + $0x68] sm:$0xff]
        %v6219 = vld [vmem:[#allocation13 + $0x70] sm:$0xff]
        %v6220 = vld [vmem:[#allocation13 + $0x78] sm:$0xff]
        %v6221 = vld [vmem:[#allocation14] sm:$0x1]
        %v6223 = vlaneseq
        %v6224 = vshrl.u32 %v6223, 7
        %v6225 = vsub.s32 0, %v6224
        %v6226 = vrot.slane %v6221, %v6225
        %6228 = vmatprep.subr.mxu0 0.0
        %6229 = vmatpush1.msra.mxu0 %v6205
        %6230 = vmatprep.subr.mxu0 0.0
        %6231 = vmatpush1.msra.mxu0 %v6206
        %6232 = vmatprep.subr.mxu0 0.0
        %6233 = vmatpush1.msra.mxu0 %v6207
        %6234 = vmatprep.subr.mxu0 0.0
        %6235 = vmatpush1.msra.mxu0 %v6208
        %6236 = vmatprep.subr.mxu0 0.0
        %6237 = vmatpush1.msra.mxu0 %v6209
        %6238 = vmatprep.subr.mxu0 0.0
        %6239 = vmatpush1.msra.mxu0 %v6210
        %6240 = vmatprep.subr.mxu0 0.0
        %6241 = vmatpush1.msra.mxu0 %v6211
        %6242 = vmatprep.subr.mxu0 0.0
        %6243 = vmatpush1.msra.mxu0 %v6212
        %6244 = vmatprep.subr.mxu0 0.0
        %6245 = vmatpush1.msra.mxu0 %v6213
        %6246 = vmatprep.subr.mxu0 0.0
        %6247 = vmatpush1.msra.mxu0 %v6214
        %6248 = vmatprep.subr.mxu0 0.0
        %6249 = vmatpush1.msra.mxu0 %v6215
        %6250 = vmatprep.subr.mxu0 0.0
        %6251 = vmatpush1.msra.mxu0 %v6216
        %6252 = vmatprep.subr.mxu0 0.0
        %6253 = vmatpush1.msra.mxu0 %v6217
        %6254 = vmatprep.subr.mxu0 0.0
        %6255 = vmatpush1.msra.mxu0 %v6218
        %6256 = vmatprep.subr.mxu0 0.0
        %6257 = vmatpush1.msra.mxu0 %v6219
        %6258 = vmatprep.subr.mxu0 0.0
        %6259 = vmatpush1.msra.mxu0 %v6220
        %6260 = vmatprep.subr.mxu0 0.0
        %6261 = vmatpush1.msra.mxu0 0.0
        %6262 = vmatprep.subr.mxu0 0.0
        %6263 = vmatpush1.msra.mxu0 0.0
        %6264 = vmatprep.subr.mxu0 0.0
        %6265 = vmatpush1.msra.mxu0 0.0
        %6266 = vmatprep.subr.mxu0 0.0
        %6267 = vmatpush1.msra.mxu0 0.0
        %6268 = vmatprep.subr.mxu0 0.0
        %6269 = vmatpush1.msra.mxu0 0.0
        %6270 = vmatprep.subr.mxu0 0.0
        %6271 = vmatpush1.msra.mxu0 0.0
        %6272 = vmatprep.subr.mxu0 0.0
        %6273 = vmatpush1.msra.mxu0 0.0
        %6274 = vmatprep.subr.mxu0 0.0
        %6275 = vmatpush1.msra.mxu0 0.0
        %6276 = vmatprep.subr.mxu0 0.0
        %6277 = vmatpush1.msra.mxu0 0.0
        %6278 = vmatprep.subr.mxu0 0.0
        %6279 = vmatpush1.msra.mxu0 0.0
        %6280 = vmatprep.subr.mxu0 0.0
        %6281 = vmatpush1.msra.mxu0 0.0
        %6282 = vmatprep.subr.mxu0 0.0
        %6283 = vmatpush1.msra.mxu0 0.0
        %6284 = vmatprep.subr.mxu0 0.0
        %6285 = vmatpush1.msra.mxu0 0.0
        %6286 = vmatprep.subr.mxu0 0.0
        %6287 = vmatpush1.msra.mxu0 0.0
        %6288 = vmatprep.subr.mxu0 0.0
        %6289 = vmatpush1.msra.mxu0 0.0
        %6290 = vmatprep.subr.mxu0 0.0
        %6291 = vmatpush1.msra.mxu0 0.0
        %6292 = vmatprep.mubr.f32.mxu0 0.0
        %6293 = vmatmul.mubr.f32.gmra.mrb[0].mxu0 %v6204
        %v6294 = vpop.f32.mrb[0].mxu0
        %v6295 = vadd.f32 %v6226, %v6294
        %v6296 = vpop.f32.mrb[0].mxu0
        %6297 = vdwg.mxu0
        %6298 = vst [vmem:[%s583] sm:$0xff] %v6295
        %p6299 = scmp.lt.s32.totalorder %s25, 1
        %s6300 = scalar_select %p6299, %s25, 1
        %s6301 = smul.addr %s6300, 8
        %s6302 = scalar_lea.vmem %s9, %s6301
        // Predicated region
        $region127: #{cnn_forward.1} parent=89 // pred_check
          %p6303 = pneg %p237
        $region128: #{cnn_forward.1} parent=89 // pred_check_branch
          %6305 = sbr.rel (%p6303) target = $region130
        $region129: #{cnn_forward.1} parent=89 // pred_region
          _
        $region130: #{cnn_forward.1} parent=89 // pred_fallthru
          _
      $region90: #{cnn_forward.1} parent=5 // pred_fallthru
        _
      %p6306 = scmp.le.s32.totalorder 2, %s20
      // Predicated region
      $region131: #{cnn_forward.1} parent=5 // pred_check
        %p6307 = pneg %p6306
      $region132: #{cnn_forward.1} parent=5 // pred_check_branch
        %6309 = sbr.rel (%p6307) target = $region134
      $region133: #{cnn_forward.1} parent=5 // pred_region
        %s6310 = ssub.s32 %s20, 2
        // Predicated region
        $region135: #{cnn_forward.1} parent=133 // pred_check
          %p6311 = pneg %p243
        $region136: #{cnn_forward.1} parent=133 // pred_check_branch
          %6313 = sbr.rel (%p6311) target = $region138
        $region137: #{cnn_forward.1} parent=133 // pred_region
          %p6314 = scmp.lt.s32.totalorder %s26, 1
          %s6315 = scalar_select %p6314, %s26, 1
          %s6316 = smul.addr %s6315, 8
          %s6317 = scalar_lea.vmem %s9, %s6316
        $region138: #{cnn_forward.1} parent=133 // pred_fallthru
          _
      $region134: #{cnn_forward.1} parent=5 // pred_fallthru
        _
    $region6: #{cnn_forward.1} parent=1 // loop_footer
      %s24 = sadd.s32 1, %s20
    $region7: #{cnn_forward.1} parent=1 // loop_footer_branch
      %19 = sbr.rel target = $region3
    $region8: #{cnn_forward.1} parent=1 // loop_exit
      _
    %6318 = vsyncpa [#allocation4], 1
    %s6319 = scalar_lea.sflag [#allocation4], 1
    %6320 = vsyncpa %s6319, 1
    %6321 = vsyncpa [#allocation6], 1
    %6322 = vsyncpa [#allocation9], 1
    %6323 = vsyncpa [#allocation12], 1
    %6324 = vsyncpa [#allocation15], 1

</llo_original>
